<compile_context>
chip_gen: v7x
topology: tpu7x:2x2x1
jax: 0.10.0
libtpu: 0.0.40
codegen_flags: <defaults>
</compile_context>

<pallas_src>
import jax
import jax.numpy as jnp
from jax.experimental import pallas as pl
from jax.experimental.pallas import tpu as pltpu

FP = 64   # padded feature / projection width (lanes); feats, hidden <= FP
GW = 64   # padded per-gate width (lanes);             hidden <= GW
BP = 8    # padded batch (sublanes)


# ----------------------------- fused Pallas kernel -----------------------------

def _brits_fused_kernel(x_ref,                       # (T*BP, FP)
                        in_w_ref, in_b_ref,          # (FP, FP), (1, FP)
                        w0x_ref, w0h_ref, b0_ref,    # (FP,4GW), (GW,4GW), (1,4GW)
                        w1x_ref, w1h_ref, b1_ref,
                        w2x_ref, w2h_ref, b2_ref,
                        w3x_ref, w3h_ref, b3_ref,
                        out_w_ref, out_b_ref,        # (FP, FP), (1, FP)
                        y_ref,                       # (T*BP, FP)  output
                        gx0_ref):                    # (T*BP, 4GW) VMEM scratch
    f32 = jnp.float32
    TB = x_ref.shape[0]
    T = TB // BP

    # ---- pre-loop GEMMs over the whole sequence (off the recurrent chain) ----
    z_all = (jnp.dot(x_ref[...], in_w_ref[...], preferred_element_type=f32)
             + in_b_ref[...])                                   # input_proj
    gx0_ref[...] = (jnp.dot(z_all, w0x_ref[...], preferred_element_type=f32)
                    + b0_ref[...])                              # enc0 x-side gates

    # loop-invariant bias broadcasts (hoisted; JAX does not CSE broadcast_in_dim)
    b1 = jnp.broadcast_to(b1_ref[...], (BP, 4 * GW))
    b2 = jnp.broadcast_to(b2_ref[...], (BP, 4 * GW))
    b3 = jnp.broadcast_to(b3_ref[...], (BP, 4 * GW))

    def cell(gates, c):
        # One wide tanh over the full gate tile; sigmoid(x) = 0.5*tanh(x/2)+0.5
        # with the 0.5 pre-scale already folded into the i/f/o weights & biases.
        a = jnp.tanh(gates)
        i_g = a[:, 0 * GW:1 * GW] * 0.5 + 0.5
        f_g = a[:, 1 * GW:2 * GW] * 0.5 + 0.5
        g_g = a[:, 2 * GW:3 * GW]
        o_g = a[:, 3 * GW:4 * GW] * 0.5 + 0.5
        c_new = f_g * c + i_g * g_g
        h_new = o_g * jnp.tanh(c_new)
        return h_new, c_new

    zeros = jnp.zeros((BP, GW), f32)
    h0 = c0 = h1 = c1 = h2 = c2 = h3 = c3 = zeros

    # T (= win_size) is small & static: fully unrolled straight-line code so the
    # scheduler can interleave the four layers' matmul->EUP chains across steps.
    # TODO(synk): for large T, switch to lax.fori_loop(unroll=2..4) plus a
    # time-chunked "arbitrary" grid axis (v7x VMEM budget) instead of full
    # sequence residency.
    for t in range(T):
        r = t * BP
        # encoder layer 0: x-side gates precomputed, only the W_hh matmul is on
        # the fresh dependence chain.
        g0 = (gx0_ref[r:r + BP, :]
              + jnp.dot(h0, w0h_ref[...], preferred_element_type=f32))
        h0, c0 = cell(g0, c0)
        # layers 1..3: split x-side / h-side matmuls; the h-side one only needs
        # h_{t-1} and can be issued a full layer earlier by the scheduler.
        g1 = (jnp.dot(h0, w1x_ref[...], preferred_element_type=f32)
              + jnp.dot(h1, w1h_ref[...], preferred_element_type=f32) + b1)
        h1, c1 = cell(g1, c1)
        g2 = (jnp.dot(h1, w2x_ref[...], preferred_element_type=f32)
              + jnp.dot(h2, w2h_ref[...], preferred_element_type=f32) + b2)
        h2, c2 = cell(g2, c2)
        g3 = (jnp.dot(h2, w3x_ref[...], preferred_element_type=f32)
              + jnp.dot(h3, w3h_ref[...], preferred_element_type=f32) + b3)
        h3, c3 = cell(g3, c3)
        y_ref[r:r + BP, :] = h3          # stash h3; projected below in one GEMM

    # ---- post-loop output projection over the whole sequence ----
    h3_all = y_ref[...]
    y_ref[...] = (jnp.dot(h3_all, out_w_ref[...], preferred_element_type=f32)
                  + out_b_ref[...])


def brits_forward(x, pp):
    """x: [B, T, feats] float32 -> [B, T, feats]. pp: padded params dict."""
    B, T, F = x.shape
    assert B <= BP and F <= FP

    # time-major, pad batch -> 8 sublanes / feats -> 64 lanes, flatten to 2-D
    x_tm = jnp.transpose(x, (1, 0, 2))
    x_pad = jnp.zeros((T, BP, FP), jnp.float32).at[:, :B, :F].set(x_tm)
    x_flat = x_pad.reshape(T * BP, FP)

    vmem = pl.BlockSpec(memory_space=pltpu.MemorySpace.VMEM)
    args = (x_flat,
            pp["in_w"], pp["in_b"],
            pp["enc0_wx"], pp["enc0_wh"], pp["enc0_b"],
            pp["enc1_wx"], pp["enc1_wh"], pp["enc1_b"],
            pp["dec0_wx"], pp["dec0_wh"], pp["dec0_b"],
            pp["dec1_wx"], pp["dec1_wh"], pp["dec1_b"],
            pp["out_w"], pp["out_b"])

    y_flat = pl.pallas_call(
        _brits_fused_kernel,
        out_shape=jax.ShapeDtypeStruct((T * BP, FP), jnp.float32),
        in_specs=[vmem] * len(args),
        out_specs=vmem,
        scratch_shapes=[pltpu.VMEM((T * BP, 4 * GW), jnp.float32)],
    )(*args)

    y = y_flat.reshape(T, BP, FP)[:, :B, :F]
    return jnp.transpose(y, (1, 0, 2))


# ----------------------------- parameter setup -----------------------------

def _uniform(key, shape, scale):
    return jax.random.uniform(key, shape, jnp.float32, minval=-scale, maxval=scale)


def init_params(key, feats, hidden=64):
    """Unpadded params matching BRITS.__init__ shapes (weights stored transposed)."""
    params = {}
    keys = jax.random.split(key, 20)
    ki = iter(range(20))

    s = 1.0 / (feats ** 0.5)
    params["in_w_t"] = _uniform(keys[next(ki)], (feats, feats), s)
    params["in_b"] = _uniform(keys[next(ki)], (feats,), s)
    params["out_w_t"] = _uniform(keys[next(ki)], (feats, feats), s)
    params["out_b"] = _uniform(keys[next(ki)], (feats,), s)

    def lstm_layer_params(prefix, din, h):
        sc = 1.0 / (h ** 0.5)
        # PyTorch stores W_ih [4H, Din], W_hh [4H, H]; we store transposed.
        params[f"{prefix}_wih_t"] = _uniform(keys[next(ki)], (din, 4 * h), sc)
        params[f"{prefix}_whh_t"] = _uniform(keys[next(ki)], (h, 4 * h), sc)
        b_ih = _uniform(keys[next(ki)], (4 * h,), sc)
        b_hh = _uniform(keys[next(ki)], (4 * h,), sc)
        params[f"{prefix}_b"] = b_ih + b_hh

    # encoder: LSTM(feats -> 64), 2 layers; decoder: LSTM(64 -> feats), 2 layers
    lstm_layer_params("enc0", feats, hidden)
    lstm_layer_params("enc1", hidden, hidden)
    lstm_layer_params("dec0", hidden, feats)
    lstm_layer_params("dec1", feats, feats)
    return params


_GATE_SCALE = (0.5, 0.5, 1.0, 0.5)   # i, f, g, o : sigmoid -> 0.5*tanh(x/2)+0.5 fold


def pad_params(params, feats, hidden=64):
    """Lane/sublane-aligned kernel weights.

    Projections padded to (FP, FP). LSTM weights split and stored transposed:
    W_ih^T -> (FP, 4*GW), W_hh^T -> (GW, 4*GW), each gate in its own 64-lane
    block. i/f/o gate columns and biases are pre-scaled by 0.5 so the kernel can
    use one wide tanh. All padding is zero, which keeps padded lanes of h and c
    exactly 0 through the recurrence (tanh(0)=0; 0.5*0+0.5=0.5 gates multiply a
    zero c / zero g).
    """
    def pad_proj(w_t, b):
        w = jnp.zeros((FP, FP), jnp.float32).at[:w_t.shape[0], :w_t.shape[1]].set(w_t)
        bb = jnp.zeros((1, FP), jnp.float32).at[0, :b.shape[0]].set(b)
        return w, bb

    def pad_gate_w(w_t, din, h):
        out = jnp.zeros((FP, 4 * GW), jnp.float32)
        for g in range(4):
            out = out.at[:din, g * GW:g * GW + h].set(
                w_t[:, g * h:(g + 1) * h] * _GATE_SCALE[g])
        return out

    def pad_gate_b(b, h):
        bb = jnp.zeros((1, 4 * GW), jnp.float32)
        for g in range(4):
            bb = bb.at[0, g * GW:g * GW + h].set(b[g * h:(g + 1) * h] * _GATE_SCALE[g])
        return bb

    pp = {}
    pp["in_w"], pp["in_b"] = pad_proj(params["in_w_t"], params["in_b"])
    pp["out_w"], pp["out_b"] = pad_proj(params["out_w_t"], params["out_b"])
    dims = {"enc0": (feats, hidden), "enc1": (hidden, hidden),
            "dec0": (hidden, feats), "dec1": (feats, feats)}
    for name, (din, h) in dims.items():
        pp[f"{name}_wx"] = pad_gate_w(params[f"{name}_wih_t"], din, h)
        pp[f"{name}_wh"] = pad_gate_w(params[f"{name}_whh_t"], h, h)
        pp[f"{name}_b"] = pad_gate_b(params[f"{name}_b"], h)
    return pp


# ----------------------------- pure-JAX reference -----------------------------

def _ref_lstm_layer(x_tbd, w_ih_t, w_hh_t, b):
    H = w_hh_t.shape[0]
    B = x_tbd.shape[1]

    def step(carry, x_t):
        h, c = carry
        gates = x_t @ w_ih_t + h @ w_hh_t + b
        i = jax.nn.sigmoid(gates[:, 0 * H:1 * H])
        f = jax.nn.sigmoid(gates[:, 1 * H:2 * H])
        g = jnp.tanh(gates[:, 2 * H:3 * H])
        o = jax.nn.sigmoid(gates[:, 3 * H:4 * H])
        c = f * c + i * g
        h = o * jnp.tanh(c)
        return (h, c), h

    init = (jnp.zeros((B, H), jnp.float32), jnp.zeros((B, H), jnp.float32))
    _, ys = jax.lax.scan(step, init, x_tbd)
    return ys


def brits_forward_ref(x, params):
    B, T, F = x.shape
    h = (x.reshape(B * T, F) @ params["in_w_t"] + params["in_b"]).reshape(B, T, F)
    y = jnp.transpose(h, (1, 0, 2))
    y = _ref_lstm_layer(y, params["enc0_wih_t"], params["enc0_whh_t"], params["enc0_b"])
    y = _ref_lstm_layer(y, params["enc1_wih_t"], params["enc1_whh_t"], params["enc1_b"])
    y = _ref_lstm_layer(y, params["dec0_wih_t"], params["dec0_whh_t"], params["dec0_b"])
    y = _ref_lstm_layer(y, params["dec1_wih_t"], params["dec1_whh_t"], params["dec1_b"])
    y = jnp.transpose(y, (1, 0, 2))
    out = (y.reshape(B * T, F) @ params["out_w_t"] + params["out_b"]).reshape(B, T, F)
    return out


# ----------------------------- main -----------------------------

if __name__ == "__main__":
    B, T, FEATS, HIDDEN = 2, 8, 8, 64  # batch=2, win_size=8, feats=8, LSTM hidden=64

    key = jax.random.PRNGKey(0)
    k_x, k_p = jax.random.split(key)
    x = jax.random.normal(k_x, (B, T, FEATS), jnp.float32)

    params = init_params(k_p, FEATS, HIDDEN)
    padded = pad_params(params, FEATS, HIDDEN)

    out = jax.block_until_ready(brits_forward(x, padded))
    ref = jax.block_until_ready(brits_forward_ref(x, params))

    assert out.shape == (B, T, FEATS)
    assert jnp.allclose(out, ref, rtol=1e-5, atol=1e-5), "Pallas output mismatch vs reference"

    print("KERNEL_OK")
</pallas_src>

<mosaic_0001>
module attributes {stable_mosaic.version = 11 : i64} {
  func.func @_brits_fused_kernel(%arg0: memref<64x64xf32, #tpu.memory_space<vmem>>, %arg1: memref<64x64xf32, #tpu.memory_space<vmem>>, %arg2: memref<1x64xf32, #tpu.memory_space<vmem>>, %arg3: memref<64x256xf32, #tpu.memory_space<vmem>>, %arg4: memref<64x256xf32, #tpu.memory_space<vmem>>, %arg5: memref<1x256xf32, #tpu.memory_space<vmem>>, %arg6: memref<64x256xf32, #tpu.memory_space<vmem>>, %arg7: memref<64x256xf32, #tpu.memory_space<vmem>>, %arg8: memref<1x256xf32, #tpu.memory_space<vmem>>, %arg9: memref<64x256xf32, #tpu.memory_space<vmem>>, %arg10: memref<64x256xf32, #tpu.memory_space<vmem>>, %arg11: memref<1x256xf32, #tpu.memory_space<vmem>>, %arg12: memref<64x256xf32, #tpu.memory_space<vmem>>, %arg13: memref<64x256xf32, #tpu.memory_space<vmem>>, %arg14: memref<1x256xf32, #tpu.memory_space<vmem>>, %arg15: memref<64x64xf32, #tpu.memory_space<vmem>>, %arg16: memref<1x64xf32, #tpu.memory_space<vmem>>, %arg17: memref<64x64xf32, #tpu.memory_space<vmem>>, %arg18: memref<64x256xf32, #tpu.memory_space<vmem>>) attributes {dimension_semantics = [], scalar_prefetch = 0 : i64, scratch_operands = 1 : i64, tpu.core_type = #tpu.core_type<tc>} {
    %c0 = arith.constant 0 : index
    %c0_0 = arith.constant 0 : index
    %0 = vector.load %arg0[%c0, %c0_0] : memref<64x64xf32, #tpu.memory_space<vmem>>, vector<64x64xf32>
    %c0_1 = arith.constant 0 : index
    %c0_2 = arith.constant 0 : index
    %1 = vector.load %arg1[%c0_1, %c0_2] : memref<64x64xf32, #tpu.memory_space<vmem>>, vector<64x64xf32>
    %cst = arith.constant dense<0.000000e+00> : vector<64x64xf32>
    %2 = tpu.matmul %0, %1, %cst {dimension_numbers = #tpu.dot_dimension_numbers<[1], [0], [0], [1], [0, 0, 1, 1], [], []>} : vector<64x64xf32>, vector<64x64xf32>, vector<64x64xf32> -> vector<64x64xf32>
    %c0_3 = arith.constant 0 : index
    %c0_4 = arith.constant 0 : index
    %3 = vector.load %arg2[%c0_3, %c0_4] : memref<1x64xf32, #tpu.memory_space<vmem>>, vector<1x64xf32>
    %4 = vector.broadcast %3 : vector<1x64xf32> to vector<64x64xf32>
    %5 = arith.addf %2, %4 : vector<64x64xf32>
    %c0_5 = arith.constant 0 : index
    %c0_6 = arith.constant 0 : index
    %6 = vector.load %arg3[%c0_5, %c0_6] : memref<64x256xf32, #tpu.memory_space<vmem>>, vector<64x256xf32>
    %cst_7 = arith.constant dense<0.000000e+00> : vector<64x256xf32>
    %7 = tpu.matmul %5, %6, %cst_7 {dimension_numbers = #tpu.dot_dimension_numbers<[1], [0], [0], [1], [0, 0, 1, 1], [], []>} : vector<64x64xf32>, vector<64x256xf32>, vector<64x256xf32> -> vector<64x256xf32>
    %c0_8 = arith.constant 0 : index
    %c0_9 = arith.constant 0 : index
    %8 = vector.load %arg5[%c0_8, %c0_9] : memref<1x256xf32, #tpu.memory_space<vmem>>, vector<1x256xf32>
    %9 = vector.broadcast %8 : vector<1x256xf32> to vector<64x256xf32>
    %10 = arith.addf %7, %9 : vector<64x256xf32>
    %c0_10 = arith.constant 0 : index
    %c0_11 = arith.constant 0 : index
    %11 = vector.load %arg18[%c0_10, %c0_11] : memref<64x256xf32, #tpu.memory_space<vmem>>, vector<64x256xf32>
    tpu.vector_store %arg18[%c0_10, %c0_11], %10 {strides = array<i32>} : memref<64x256xf32, #tpu.memory_space<vmem>>, vector<64x256xf32>,
    %c0_12 = arith.constant 0 : index
    %c0_13 = arith.constant 0 : index
    %12 = vector.load %arg8[%c0_12, %c0_13] : memref<1x256xf32, #tpu.memory_space<vmem>>, vector<1x256xf32>
    %13 = vector.shape_cast %12 : vector<1x256xf32> to vector<1x256xf32>
    %14 = vector.broadcast %13 : vector<1x256xf32> to vector<8x256xf32>
    %c0_14 = arith.constant 0 : index
    %c0_15 = arith.constant 0 : index
    %15 = vector.load %arg11[%c0_14, %c0_15] : memref<1x256xf32, #tpu.memory_space<vmem>>, vector<1x256xf32>
    %16 = vector.shape_cast %15 : vector<1x256xf32> to vector<1x256xf32>
    %17 = vector.broadcast %16 : vector<1x256xf32> to vector<8x256xf32>
    %c0_16 = arith.constant 0 : index
    %c0_17 = arith.constant 0 : index
    %18 = vector.load %arg14[%c0_16, %c0_17] : memref<1x256xf32, #tpu.memory_space<vmem>>, vector<1x256xf32>
    %19 = vector.shape_cast %18 : vector<1x256xf32> to vector<1x256xf32>
    %20 = vector.broadcast %19 : vector<1x256xf32> to vector<8x256xf32>
    %cst_18 = arith.constant 0.000000e+00 : f32
    %21 = vector.broadcast %cst_18 : f32 to vector<8x64xf32>
    %c0_19 = arith.constant 0 : index
    %c0_20 = arith.constant 0 : index
    %22 = vector.load %arg18[%c0_19, %c0_20] : memref<64x256xf32, #tpu.memory_space<vmem>>, vector<8x256xf32>
    %c0_21 = arith.constant 0 : index
    %c0_22 = arith.constant 0 : index
    %23 = vector.load %arg4[%c0_21, %c0_22] : memref<64x256xf32, #tpu.memory_space<vmem>>, vector<64x256xf32>
    %cst_23 = arith.constant dense<0.000000e+00> : vector<8x256xf32>
    %24 = tpu.matmul %21, %23, %cst_23 {dimension_numbers = #tpu.dot_dimension_numbers<[1], [0], [0], [1], [0, 0, 1, 1], [], []>} : vector<8x64xf32>, vector<64x256xf32>, vector<8x256xf32> -> vector<8x256xf32>
    %25 = arith.addf %22, %24 : vector<8x256xf32>
    %26 = math.tanh %25 : vector<8x256xf32>
    %27 = vector.extract_strided_slice %26 {offsets = [0, 0], sizes = [8, 64], strides = [1, 1]} : vector<8x256xf32> to vector<8x64xf32>
    %cst_24 = arith.constant 5.000000e-01 : f32
    %28 = vector.broadcast %cst_24 : f32 to vector<8x64xf32>
    %29 = arith.mulf %27, %28 : vector<8x64xf32>
    %cst_25 = arith.constant 5.000000e-01 : f32
    %30 = vector.broadcast %cst_25 : f32 to vector<8x64xf32>
    %31 = arith.addf %29, %30 : vector<8x64xf32>
    %32 = vector.extract_strided_slice %26 {offsets = [0, 64], sizes = [8, 64], strides = [1, 1]} : vector<8x256xf32> to vector<8x64xf32>
    %cst_26 = arith.constant 5.000000e-01 : f32
    %33 = vector.broadcast %cst_26 : f32 to vector<8x64xf32>
    %34 = arith.mulf %32, %33 : vector<8x64xf32>
    %cst_27 = arith.constant 5.000000e-01 : f32
    %35 = vector.broadcast %cst_27 : f32 to vector<8x64xf32>
    %36 = arith.addf %34, %35 : vector<8x64xf32>
    %37 = vector.extract_strided_slice %26 {offsets = [0, 128], sizes = [8, 64], strides = [1, 1]} : vector<8x256xf32> to vector<8x64xf32>
    %38 = vector.extract_strided_slice %26 {offsets = [0, 192], sizes = [8, 64], strides = [1, 1]} : vector<8x256xf32> to vector<8x64xf32>
    %cst_28 = arith.constant 5.000000e-01 : f32
    %39 = vector.broadcast %cst_28 : f32 to vector<8x64xf32>
    %40 = arith.mulf %38, %39 : vector<8x64xf32>
    %cst_29 = arith.constant 5.000000e-01 : f32
    %41 = vector.broadcast %cst_29 : f32 to vector<8x64xf32>
    %42 = arith.addf %40, %41 : vector<8x64xf32>
    %43 = arith.mulf %36, %21 : vector<8x64xf32>
    %44 = arith.mulf %31, %37 : vector<8x64xf32>
    %45 = arith.addf %43, %44 : vector<8x64xf32>
    %46 = math.tanh %45 : vector<8x64xf32>
    %47 = arith.mulf %42, %46 : vector<8x64xf32>
    %c0_30 = arith.constant 0 : index
    %c0_31 = arith.constant 0 : index
    %48 = vector.load %arg6[%c0_30, %c0_31] : memref<64x256xf32, #tpu.memory_space<vmem>>, vector<64x256xf32>
    %cst_32 = arith.constant dense<0.000000e+00> : vector<8x256xf32>
    %49 = tpu.matmul %47, %48, %cst_32 {dimension_numbers = #tpu.dot_dimension_numbers<[1], [0], [0], [1], [0, 0, 1, 1], [], []>} : vector<8x64xf32>, vector<64x256xf32>, vector<8x256xf32> -> vector<8x256xf32>
    %c0_33 = arith.constant 0 : index
    %c0_34 = arith.constant 0 : index
    %50 = vector.load %arg7[%c0_33, %c0_34] : memref<64x256xf32, #tpu.memory_space<vmem>>, vector<64x256xf32>
    %cst_35 = arith.constant dense<0.000000e+00> : vector<8x256xf32>
    %51 = tpu.matmul %21, %50, %cst_35 {dimension_numbers = #tpu.dot_dimension_numbers<[1], [0], [0], [1], [0, 0, 1, 1], [], []>} : vector<8x64xf32>, vector<64x256xf32>, vector<8x256xf32> -> vector<8x256xf32>
    %52 = arith.addf %49, %51 : vector<8x256xf32>
    %53 = arith.addf %52, %14 : vector<8x256xf32>
    %54 = math.tanh %53 : vector<8x256xf32>
    %55 = vector.extract_strided_slice %54 {offsets = [0, 0], sizes = [8, 64], strides = [1, 1]} : vector<8x256xf32> to vector<8x64xf32>
    %cst_36 = arith.constant 5.000000e-01 : f32
    %56 = vector.broadcast %cst_36 : f32 to vector<8x64xf32>
    %57 = arith.mulf %55, %56 : vector<8x64xf32>
    %cst_37 = arith.constant 5.000000e-01 : f32
    %58 = vector.broadcast %cst_37 : f32 to vector<8x64xf32>
    %59 = arith.addf %57, %58 : vector<8x64xf32>
    %60 = vector.extract_strided_slice %54 {offsets = [0, 64], sizes = [8, 64], strides = [1, 1]} : vector<8x256xf32> to vector<8x64xf32>
    %cst_38 = arith.constant 5.000000e-01 : f32
    %61 = vector.broadcast %cst_38 : f32 to vector<8x64xf32>
    %62 = arith.mulf %60, %61 : vector<8x64xf32>
    %cst_39 = arith.constant 5.000000e-01 : f32
    %63 = vector.broadcast %cst_39 : f32 to vector<8x64xf32>
    %64 = arith.addf %62, %63 : vector<8x64xf32>
    %65 = vector.extract_strided_slice %54 {offsets = [0, 128], sizes = [8, 64], strides = [1, 1]} : vector<8x256xf32> to vector<8x64xf32>
    %66 = vector.extract_strided_slice %54 {offsets = [0, 192], sizes = [8, 64], strides = [1, 1]} : vector<8x256xf32> to vector<8x64xf32>
    %cst_40 = arith.constant 5.000000e-01 : f32
    %67 = vector.broadcast %cst_40 : f32 to vector<8x64xf32>
    %68 = arith.mulf %66, %67 : vector<8x64xf32>
    %cst_41 = arith.constant 5.000000e-01 : f32
    %69 = vector.broadcast %cst_41 : f32 to vector<8x64xf32>
    %70 = arith.addf %68, %69 : vector<8x64xf32>
    %71 = arith.mulf %64, %21 : vector<8x64xf32>
    %72 = arith.mulf %59, %65 : vector<8x64xf32>
    %73 = arith.addf %71, %72 : vector<8x64xf32>
    %74 = math.tanh %73 : vector<8x64xf32>
    %75 = arith.mulf %70, %74 : vector<8x64xf32>
    %c0_42 = arith.constant 0 : index
    %c0_43 = arith.constant 0 : index
    %76 = vector.load %arg9[%c0_42, %c0_43] : memref<64x256xf32, #tpu.memory_space<vmem>>, vector<64x256xf32>
    %cst_44 = arith.constant dense<0.000000e+00> : vector<8x256xf32>
    %77 = tpu.matmul %75, %76, %cst_44 {dimension_numbers = #tpu.dot_dimension_numbers<[1], [0], [0], [1], [0, 0, 1, 1], [], []>} : vector<8x64xf32>, vector<64x256xf32>, vector<8x256xf32> -> vector<8x256xf32>
    %c0_45 = arith.constant 0 : index
    %c0_46 = arith.constant 0 : index
    %78 = vector.load %arg10[%c0_45, %c0_46] : memref<64x256xf32, #tpu.memory_space<vmem>>, vector<64x256xf32>
    %cst_47 = arith.constant dense<0.000000e+00> : vector<8x256xf32>
    %79 = tpu.matmul %21, %78, %cst_47 {dimension_numbers = #tpu.dot_dimension_numbers<[1], [0], [0], [1], [0, 0, 1, 1], [], []>} : vector<8x64xf32>, vector<64x256xf32>, vector<8x256xf32> -> vector<8x256xf32>
    %80 = arith.addf %77, %79 : vector<8x256xf32>
    %81 = arith.addf %80, %17 : vector<8x256xf32>
    %82 = math.tanh %81 : vector<8x256xf32>
    %83 = vector.extract_strided_slice %82 {offsets = [0, 0], sizes = [8, 64], strides = [1, 1]} : vector<8x256xf32> to vector<8x64xf32>
    %cst_48 = arith.constant 5.000000e-01 : f32
    %84 = vector.broadcast %cst_48 : f32 to vector<8x64xf32>
    %85 = arith.mulf %83, %84 : vector<8x64xf32>
    %cst_49 = arith.constant 5.000000e-01 : f32
    %86 = vector.broadcast %cst_49 : f32 to vector<8x64xf32>
    %87 = arith.addf %85, %86 : vector<8x64xf32>
    %88 = vector.extract_strided_slice %82 {offsets = [0, 64], sizes = [8, 64], strides = [1, 1]} : vector<8x256xf32> to vector<8x64xf32>
    %cst_50 = arith.constant 5.000000e-01 : f32
    %89 = vector.broadcast %cst_50 : f32 to vector<8x64xf32>
    %90 = arith.mulf %88, %89 : vector<8x64xf32>
    %cst_51 = arith.constant 5.000000e-01 : f32
    %91 = vector.broadcast %cst_51 : f32 to vector<8x64xf32>
    %92 = arith.addf %90, %91 : vector<8x64xf32>
    %93 = vector.extract_strided_slice %82 {offsets = [0, 128], sizes = [8, 64], strides = [1, 1]} : vector<8x256xf32> to vector<8x64xf32>
    %94 = vector.extract_strided_slice %82 {offsets = [0, 192], sizes = [8, 64], strides = [1, 1]} : vector<8x256xf32> to vector<8x64xf32>
    %cst_52 = arith.constant 5.000000e-01 : f32
    %95 = vector.broadcast %cst_52 : f32 to vector<8x64xf32>
    %96 = arith.mulf %94, %95 : vector<8x64xf32>
    %cst_53 = arith.constant 5.000000e-01 : f32
    %97 = vector.broadcast %cst_53 : f32 to vector<8x64xf32>
    %98 = arith.addf %96, %97 : vector<8x64xf32>
    %99 = arith.mulf %92, %21 : vector<8x64xf32>
    %100 = arith.mulf %87, %93 : vector<8x64xf32>
    %101 = arith.addf %99, %100 : vector<8x64xf32>
    %102 = math.tanh %101 : vector<8x64xf32>
    %103 = arith.mulf %98, %102 : vector<8x64xf32>
    %c0_54 = arith.constant 0 : index
    %c0_55 = arith.constant 0 : index
    %104 = vector.load %arg12[%c0_54, %c0_55] : memref<64x256xf32, #tpu.memory_space<vmem>>, vector<64x256xf32>
    %cst_56 = arith.constant dense<0.000000e+00> : vector<8x256xf32>
    %105 = tpu.matmul %103, %104, %cst_56 {dimension_numbers = #tpu.dot_dimension_numbers<[1], [0], [0], [1], [0, 0, 1, 1], [], []>} : vector<8x64xf32>, vector<64x256xf32>, vector<8x256xf32> -> vector<8x256xf32>
    %c0_57 = arith.constant 0 : index
    %c0_58 = arith.constant 0 : index
    %106 = vector.load %arg13[%c0_57, %c0_58] : memref<64x256xf32, #tpu.memory_space<vmem>>, vector<64x256xf32>
    %cst_59 = arith.constant dense<0.000000e+00> : vector<8x256xf32>
    %107 = tpu.matmul %21, %106, %cst_59 {dimension_numbers = #tpu.dot_dimension_numbers<[1], [0], [0], [1], [0, 0, 1, 1], [], []>} : vector<8x64xf32>, vector<64x256xf32>, vector<8x256xf32> -> vector<8x256xf32>
    %108 = arith.addf %105, %107 : vector<8x256xf32>
    %109 = arith.addf %108, %20 : vector<8x256xf32>
    %110 = math.tanh %109 : vector<8x256xf32>
    %111 = vector.extract_strided_slice %110 {offsets = [0, 0], sizes = [8, 64], strides = [1, 1]} : vector<8x256xf32> to vector<8x64xf32>
    %cst_60 = arith.constant 5.000000e-01 : f32
    %112 = vector.broadcast %cst_60 : f32 to vector<8x64xf32>
    %113 = arith.mulf %111, %112 : vector<8x64xf32>
    %cst_61 = arith.constant 5.000000e-01 : f32
    %114 = vector.broadcast %cst_61 : f32 to vector<8x64xf32>
    %115 = arith.addf %113, %114 : vector<8x64xf32>
    %116 = vector.extract_strided_slice %110 {offsets = [0, 64], sizes = [8, 64], strides = [1, 1]} : vector<8x256xf32> to vector<8x64xf32>
    %cst_62 = arith.constant 5.000000e-01 : f32
    %117 = vector.broadcast %cst_62 : f32 to vector<8x64xf32>
    %118 = arith.mulf %116, %117 : vector<8x64xf32>
    %cst_63 = arith.constant 5.000000e-01 : f32
    %119 = vector.broadcast %cst_63 : f32 to vector<8x64xf32>
    %120 = arith.addf %118, %119 : vector<8x64xf32>
    %121 = vector.extract_strided_slice %110 {offsets = [0, 128], sizes = [8, 64], strides = [1, 1]} : vector<8x256xf32> to vector<8x64xf32>
    %122 = vector.extract_strided_slice %110 {offsets = [0, 192], sizes = [8, 64], strides = [1, 1]} : vector<8x256xf32> to vector<8x64xf32>
    %cst_64 = arith.constant 5.000000e-01 : f32
    %123 = vector.broadcast %cst_64 : f32 to vector<8x64xf32>
    %124 = arith.mulf %122, %123 : vector<8x64xf32>
    %cst_65 = arith.constant 5.000000e-01 : f32
    %125 = vector.broadcast %cst_65 : f32 to vector<8x64xf32>
    %126 = arith.addf %124, %125 : vector<8x64xf32>
    %127 = arith.mulf %120, %21 : vector<8x64xf32>
    %128 = arith.mulf %115, %121 : vector<8x64xf32>
    %129 = arith.addf %127, %128 : vector<8x64xf32>
    %130 = math.tanh %129 : vector<8x64xf32>
    %131 = arith.mulf %126, %130 : vector<8x64xf32>
    %c0_66 = arith.constant 0 : index
    %c0_67 = arith.constant 0 : index
    %132 = vector.load %arg17[%c0_66, %c0_67] : memref<64x64xf32, #tpu.memory_space<vmem>>, vector<8x64xf32>
    tpu.vector_store %arg17[%c0_66, %c0_67], %131 {strides = array<i32>} : memref<64x64xf32, #tpu.memory_space<vmem>>, vector<8x64xf32>,
    %c8 = arith.constant 8 : index
    %c0_68 = arith.constant 0 : index
    %133 = vector.load %arg18[%c8, %c0_68] : memref<64x256xf32, #tpu.memory_space<vmem>>, vector<8x256xf32>
    %c0_69 = arith.constant 0 : index
    %c0_70 = arith.constant 0 : index
    %134 = vector.load %arg4[%c0_69, %c0_70] : memref<64x256xf32, #tpu.memory_space<vmem>>, vector<64x256xf32>
    %cst_71 = arith.constant dense<0.000000e+00> : vector<8x256xf32>
    %135 = tpu.matmul %47, %134, %cst_71 {dimension_numbers = #tpu.dot_dimension_numbers<[1], [0], [0], [1], [0, 0, 1, 1], [], []>} : vector<8x64xf32>, vector<64x256xf32>, vector<8x256xf32> -> vector<8x256xf32>
    %136 = arith.addf %133, %135 : vector<8x256xf32>
    %137 = math.tanh %136 : vector<8x256xf32>
    %138 = vector.extract_strided_slice %137 {offsets = [0, 0], sizes = [8, 64], strides = [1, 1]} : vector<8x256xf32> to vector<8x64xf32>
    %cst_72 = arith.constant 5.000000e-01 : f32
    %139 = vector.broadcast %cst_72 : f32 to vector<8x64xf32>
    %140 = arith.mulf %138, %139 : vector<8x64xf32>
    %cst_73 = arith.constant 5.000000e-01 : f32
    %141 = vector.broadcast %cst_73 : f32 to vector<8x64xf32>
    %142 = arith.addf %140, %141 : vector<8x64xf32>
    %143 = vector.extract_strided_slice %137 {offsets = [0, 64], sizes = [8, 64], strides = [1, 1]} : vector<8x256xf32> to vector<8x64xf32>
    %cst_74 = arith.constant 5.000000e-01 : f32
    %144 = vector.broadcast %cst_74 : f32 to vector<8x64xf32>
    %145 = arith.mulf %143, %144 : vector<8x64xf32>
    %cst_75 = arith.constant 5.000000e-01 : f32
    %146 = vector.broadcast %cst_75 : f32 to vector<8x64xf32>
    %147 = arith.addf %145, %146 : vector<8x64xf32>
    %148 = vector.extract_strided_slice %137 {offsets = [0, 128], sizes = [8, 64], strides = [1, 1]} : vector<8x256xf32> to vector<8x64xf32>
    %149 = vector.extract_strided_slice %137 {offsets = [0, 192], sizes = [8, 64], strides = [1, 1]} : vector<8x256xf32> to vector<8x64xf32>
    %cst_76 = arith.constant 5.000000e-01 : f32
    %150 = vector.broadcast %cst_76 : f32 to vector<8x64xf32>
    %151 = arith.mulf %149, %150 : vector<8x64xf32>
    %cst_77 = arith.constant 5.000000e-01 : f32
    %152 = vector.broadcast %cst_77 : f32 to vector<8x64xf32>
    %153 = arith.addf %151, %152 : vector<8x64xf32>
    %154 = arith.mulf %147, %45 : vector<8x64xf32>
    %155 = arith.mulf %142, %148 : vector<8x64xf32>
    %156 = arith.addf %154, %155 : vector<8x64xf32>
    %157 = math.tanh %156 : vector<8x64xf32>
    %158 = arith.mulf %153, %157 : vector<8x64xf32>
    %c0_78 = arith.constant 0 : index
    %c0_79 = arith.constant 0 : index
    %159 = vector.load %arg6[%c0_78, %c0_79] : memref<64x256xf32, #tpu.memory_space<vmem>>, vector<64x256xf32>
    %cst_80 = arith.constant dense<0.000000e+00> : vector<8x256xf32>
    %160 = tpu.matmul %158, %159, %cst_80 {dimension_numbers = #tpu.dot_dimension_numbers<[1], [0], [0], [1], [0, 0, 1, 1], [], []>} : vector<8x64xf32>, vector<64x256xf32>, vector<8x256xf32> -> vector<8x256xf32>
    %c0_81 = arith.constant 0 : index
    %c0_82 = arith.constant 0 : index
    %161 = vector.load %arg7[%c0_81, %c0_82] : memref<64x256xf32, #tpu.memory_space<vmem>>, vector<64x256xf32>
    %cst_83 = arith.constant dense<0.000000e+00> : vector<8x256xf32>
    %162 = tpu.matmul %75, %161, %cst_83 {dimension_numbers = #tpu.dot_dimension_numbers<[1], [0], [0], [1], [0, 0, 1, 1], [], []>} : vector<8x64xf32>, vector<64x256xf32>, vector<8x256xf32> -> vector<8x256xf32>
    %163 = arith.addf %160, %162 : vector<8x256xf32>
    %164 = arith.addf %163, %14 : vector<8x256xf32>
    %165 = math.tanh %164 : vector<8x256xf32>
    %166 = vector.extract_strided_slice %165 {offsets = [0, 0], sizes = [8, 64], strides = [1, 1]} : vector<8x256xf32> to vector<8x64xf32>
    %cst_84 = arith.constant 5.000000e-01 : f32
    %167 = vector.broadcast %cst_84 : f32 to vector<8x64xf32>
    %168 = arith.mulf %166, %167 : vector<8x64xf32>
    %cst_85 = arith.constant 5.000000e-01 : f32
    %169 = vector.broadcast %cst_85 : f32 to vector<8x64xf32>
    %170 = arith.addf %168, %169 : vector<8x64xf32>
    %171 = vector.extract_strided_slice %165 {offsets = [0, 64], sizes = [8, 64], strides = [1, 1]} : vector<8x256xf32> to vector<8x64xf32>
    %cst_86 = arith.constant 5.000000e-01 : f32
    %172 = vector.broadcast %cst_86 : f32 to vector<8x64xf32>
    %173 = arith.mulf %171, %172 : vector<8x64xf32>
    %cst_87 = arith.constant 5.000000e-01 : f32
    %174 = vector.broadcast %cst_87 : f32 to vector<8x64xf32>
    %175 = arith.addf %173, %174 : vector<8x64xf32>
    %176 = vector.extract_strided_slice %165 {offsets = [0, 128], sizes = [8, 64], strides = [1, 1]} : vector<8x256xf32> to vector<8x64xf32>
    %177 = vector.extract_strided_slice %165 {offsets = [0, 192], sizes = [8, 64], strides = [1, 1]} : vector<8x256xf32> to vector<8x64xf32>
    %cst_88 = arith.constant 5.000000e-01 : f32
    %178 = vector.broadcast %cst_88 : f32 to vector<8x64xf32>
    %179 = arith.mulf %177, %178 : vector<8x64xf32>
    %cst_89 = arith.constant 5.000000e-01 : f32
    %180 = vector.broadcast %cst_89 : f32 to vector<8x64xf32>
    %181 = arith.addf %179, %180 : vector<8x64xf32>
    %182 = arith.mulf %175, %73 : vector<8x64xf32>
    %183 = arith.mulf %170, %176 : vector<8x64xf32>
    %184 = arith.addf %182, %183 : vector<8x64xf32>
    %185 = math.tanh %184 : vector<8x64xf32>
    %186 = arith.mulf %181, %185 : vector<8x64xf32>
    %c0_90 = arith.constant 0 : index
    %c0_91 = arith.constant 0 : index
    %187 = vector.load %arg9[%c0_90, %c0_91] : memref<64x256xf32, #tpu.memory_space<vmem>>, vector<64x256xf32>
    %cst_92 = arith.constant dense<0.000000e+00> : vector<8x256xf32>
    %188 = tpu.matmul %186, %187, %cst_92 {dimension_numbers = #tpu.dot_dimension_numbers<[1], [0], [0], [1], [0, 0, 1, 1], [], []>} : vector<8x64xf32>, vector<64x256xf32>, vector<8x256xf32> -> vector<8x256xf32>
    %c0_93 = arith.constant 0 : index
    %c0_94 = arith.constant 0 : index
    %189 = vector.load %arg10[%c0_93, %c0_94] : memref<64x256xf32, #tpu.memory_space<vmem>>, vector<64x256xf32>
    %cst_95 = arith.constant dense<0.000000e+00> : vector<8x256xf32>
    %190 = tpu.matmul %103, %189, %cst_95 {dimension_numbers = #tpu.dot_dimension_numbers<[1], [0], [0], [1], [0, 0, 1, 1], [], []>} : vector<8x64xf32>, vector<64x256xf32>, vector<8x256xf32> -> vector<8x256xf32>
    %191 = arith.addf %188, %190 : vector<8x256xf32>
    %192 = arith.addf %191, %17 : vector<8x256xf32>
    %193 = math.tanh %192 : vector<8x256xf32>
    %194 = vector.extract_strided_slice %193 {offsets = [0, 0], sizes = [8, 64], strides = [1, 1]} : vector<8x256xf32> to vector<8x64xf32>
    %cst_96 = arith.constant 5.000000e-01 : f32
    %195 = vector.broadcast %cst_96 : f32 to vector<8x64xf32>
    %196 = arith.mulf %194, %195 : vector<8x64xf32>
    %cst_97 = arith.constant 5.000000e-01 : f32
    %197 = vector.broadcast %cst_97 : f32 to vector<8x64xf32>
    %198 = arith.addf %196, %197 : vector<8x64xf32>
    %199 = vector.extract_strided_slice %193 {offsets = [0, 64], sizes = [8, 64], strides = [1, 1]} : vector<8x256xf32> to vector<8x64xf32>
    %cst_98 = arith.constant 5.000000e-01 : f32
    %200 = vector.broadcast %cst_98 : f32 to vector<8x64xf32>
    %201 = arith.mulf %199, %200 : vector<8x64xf32>
    %cst_99 = arith.constant 5.000000e-01 : f32
    %202 = vector.broadcast %cst_99 : f32 to vector<8x64xf32>
    %203 = arith.addf %201, %202 : vector<8x64xf32>
    %204 = vector.extract_strided_slice %193 {offsets = [0, 128], sizes = [8, 64], strides = [1, 1]} : vector<8x256xf32> to vector<8x64xf32>
    %205 = vector.extract_strided_slice %193 {offsets = [0, 192], sizes = [8, 64], strides = [1, 1]} : vector<8x256xf32> to vector<8x64xf32>
    %cst_100 = arith.constant 5.000000e-01 : f32
    %206 = vector.broadcast %cst_100 : f32 to vector<8x64xf32>
    %207 = arith.mulf %205, %206 : vector<8x64xf32>
    %cst_101 = arith.constant 5.000000e-01 : f32
    %208 = vector.broadcast %cst_101 : f32 to vector<8x64xf32>
    %209 = arith.addf %207, %208 : vector<8x64xf32>
    %210 = arith.mulf %203, %101 : vector<8x64xf32>
    %211 = arith.mulf %198, %204 : vector<8x64xf32>
    %212 = arith.addf %210, %211 : vector<8x64xf32>
    %213 = math.tanh %212 : vector<8x64xf32>
    %214 = arith.mulf %209, %213 : vector<8x64xf32>
    %c0_102 = arith.constant 0 : index
    %c0_103 = arith.constant 0 : index
    %215 = vector.load %arg12[%c0_102, %c0_103] : memref<64x256xf32, #tpu.memory_space<vmem>>, vector<64x256xf32>
    %cst_104 = arith.constant dense<0.000000e+00> : vector<8x256xf32>
    %216 = tpu.matmul %214, %215, %cst_104 {dimension_numbers = #tpu.dot_dimension_numbers<[1], [0], [0], [1], [0, 0, 1, 1], [], []>} : vector<8x64xf32>, vector<64x256xf32>, vector<8x256xf32> -> vector<8x256xf32>
    %c0_105 = arith.constant 0 : index
    %c0_106 = arith.constant 0 : index
    %217 = vector.load %arg13[%c0_105, %c0_106] : memref<64x256xf32, #tpu.memory_space<vmem>>, vector<64x256xf32>
    %cst_107 = arith.constant dense<0.000000e+00> : vector<8x256xf32>
    %218 = tpu.matmul %131, %217, %cst_107 {dimension_numbers = #tpu.dot_dimension_numbers<[1], [0], [0], [1], [0, 0, 1, 1], [], []>} : vector<8x64xf32>, vector<64x256xf32>, vector<8x256xf32> -> vector<8x256xf32>
    %219 = arith.addf %216, %218 : vector<8x256xf32>
    %220 = arith.addf %219, %20 : vector<8x256xf32>
    %221 = math.tanh %220 : vector<8x256xf32>
    %222 = vector.extract_strided_slice %221 {offsets = [0, 0], sizes = [8, 64], strides = [1, 1]} : vector<8x256xf32> to vector<8x64xf32>
    %cst_108 = arith.constant 5.000000e-01 : f32
    %223 = vector.broadcast %cst_108 : f32 to vector<8x64xf32>
    %224 = arith.mulf %222, %223 : vector<8x64xf32>
    %cst_109 = arith.constant 5.000000e-01 : f32
    %225 = vector.broadcast %cst_109 : f32 to vector<8x64xf32>
    %226 = arith.addf %224, %225 : vector<8x64xf32>
    %227 = vector.extract_strided_slice %221 {offsets = [0, 64], sizes = [8, 64], strides = [1, 1]} : vector<8x256xf32> to vector<8x64xf32>
    %cst_110 = arith.constant 5.000000e-01 : f32
    %228 = vector.broadcast %cst_110 : f32 to vector<8x64xf32>
    %229 = arith.mulf %227, %228 : vector<8x64xf32>
    %cst_111 = arith.constant 5.000000e-01 : f32
    %230 = vector.broadcast %cst_111 : f32 to vector<8x64xf32>
    %231 = arith.addf %229, %230 : vector<8x64xf32>
    %232 = vector.extract_strided_slice %221 {offsets = [0, 128], sizes = [8, 64], strides = [1, 1]} : vector<8x256xf32> to vector<8x64xf32>
    %233 = vector.extract_strided_slice %221 {offsets = [0, 192], sizes = [8, 64], strides = [1, 1]} : vector<8x256xf32> to vector<8x64xf32>
    %cst_112 = arith.constant 5.000000e-01 : f32
    %234 = vector.broadcast %cst_112 : f32 to vector<8x64xf32>
    %235 = arith.mulf %233, %234 : vector<8x64xf32>
    %cst_113 = arith.constant 5.000000e-01 : f32
    %236 = vector.broadcast %cst_113 : f32 to vector<8x64xf32>
    %237 = arith.addf %235, %236 : vector<8x64xf32>
    %238 = arith.mulf %231, %129 : vector<8x64xf32>
    %239 = arith.mulf %226, %232 : vector<8x64xf32>
    %240 = arith.addf %238, %239 : vector<8x64xf32>
    %241 = math.tanh %240 : vector<8x64xf32>
    %242 = arith.mulf %237, %241 : vector<8x64xf32>
    %c8_114 = arith.constant 8 : index
    %c0_115 = arith.constant 0 : index
    %243 = vector.load %arg17[%c8_114, %c0_115] : memref<64x64xf32, #tpu.memory_space<vmem>>, vector<8x64xf32>
    tpu.vector_store %arg17[%c8_114, %c0_115], %242 {strides = array<i32>} : memref<64x64xf32, #tpu.memory_space<vmem>>, vector<8x64xf32>,
    %c16 = arith.constant 16 : index
    %c0_116 = arith.constant 0 : index
    %244 = vector.load %arg18[%c16, %c0_116] : memref<64x256xf32, #tpu.memory_space<vmem>>, vector<8x256xf32>
    %c0_117 = arith.constant 0 : index
    %c0_118 = arith.constant 0 : index
    %245 = vector.load %arg4[%c0_117, %c0_118] : memref<64x256xf32, #tpu.memory_space<vmem>>, vector<64x256xf32>
    %cst_119 = arith.constant dense<0.000000e+00> : vector<8x256xf32>
    %246 = tpu.matmul %158, %245, %cst_119 {dimension_numbers = #tpu.dot_dimension_numbers<[1], [0], [0], [1], [0, 0, 1, 1], [], []>} : vector<8x64xf32>, vector<64x256xf32>, vector<8x256xf32> -> vector<8x256xf32>
    %247 = arith.addf %244, %246 : vector<8x256xf32>
    %248 = math.tanh %247 : vector<8x256xf32>
    %249 = vector.extract_strided_slice %248 {offsets = [0, 0], sizes = [8, 64], strides = [1, 1]} : vector<8x256xf32> to vector<8x64xf32>
    %cst_120 = arith.constant 5.000000e-01 : f32
    %250 = vector.broadcast %cst_120 : f32 to vector<8x64xf32>
    %251 = arith.mulf %249, %250 : vector<8x64xf32>
    %cst_121 = arith.constant 5.000000e-01 : f32
    %252 = vector.broadcast %cst_121 : f32 to vector<8x64xf32>
    %253 = arith.addf %251, %252 : vector<8x64xf32>
    %254 = vector.extract_strided_slice %248 {offsets = [0, 64], sizes = [8, 64], strides = [1, 1]} : vector<8x256xf32> to vector<8x64xf32>
    %cst_122 = arith.constant 5.000000e-01 : f32
    %255 = vector.broadcast %cst_122 : f32 to vector<8x64xf32>
    %256 = arith.mulf %254, %255 : vector<8x64xf32>
    %cst_123 = arith.constant 5.000000e-01 : f32
    %257 = vector.broadcast %cst_123 : f32 to vector<8x64xf32>
    %258 = arith.addf %256, %257 : vector<8x64xf32>
    %259 = vector.extract_strided_slice %248 {offsets = [0, 128], sizes = [8, 64], strides = [1, 1]} : vector<8x256xf32> to vector<8x64xf32>
    %260 = vector.extract_strided_slice %248 {offsets = [0, 192], sizes = [8, 64], strides = [1, 1]} : vector<8x256xf32> to vector<8x64xf32>
    %cst_124 = arith.constant 5.000000e-01 : f32
    %261 = vector.broadcast %cst_124 : f32 to vector<8x64xf32>
    %262 = arith.mulf %260, %261 : vector<8x64xf32>
    %cst_125 = arith.constant 5.000000e-01 : f32
    %263 = vector.broadcast %cst_125 : f32 to vector<8x64xf32>
    %264 = arith.addf %262, %263 : vector<8x64xf32>
    %265 = arith.mulf %258, %156 : vector<8x64xf32>
    %266 = arith.mulf %253, %259 : vector<8x64xf32>
    %267 = arith.addf %265, %266 : vector<8x64xf32>
    %268 = math.tanh %267 : vector<8x64xf32>
    %269 = arith.mulf %264, %268 : vector<8x64xf32>
    %c0_126 = arith.constant 0 : index
    %c0_127 = arith.constant 0 : index
    %270 = vector.load %arg6[%c0_126, %c0_127] : memref<64x256xf32, #tpu.memory_space<vmem>>, vector<64x256xf32>
    %cst_128 = arith.constant dense<0.000000e+00> : vector<8x256xf32>
    %271 = tpu.matmul %269, %270, %cst_128 {dimension_numbers = #tpu.dot_dimension_numbers<[1], [0], [0], [1], [0, 0, 1, 1], [], []>} : vector<8x64xf32>, vector<64x256xf32>, vector<8x256xf32> -> vector<8x256xf32>
    %c0_129 = arith.constant 0 : index
    %c0_130 = arith.constant 0 : index
    %272 = vector.load %arg7[%c0_129, %c0_130] : memref<64x256xf32, #tpu.memory_space<vmem>>, vector<64x256xf32>
    %cst_131 = arith.constant dense<0.000000e+00> : vector<8x256xf32>
    %273 = tpu.matmul %186, %272, %cst_131 {dimension_numbers = #tpu.dot_dimension_numbers<[1], [0], [0], [1], [0, 0, 1, 1], [], []>} : vector<8x64xf32>, vector<64x256xf32>, vector<8x256xf32> -> vector<8x256xf32>
    %274 = arith.addf %271, %273 : vector<8x256xf32>
    %275 = arith.addf %274, %14 : vector<8x256xf32>
    %276 = math.tanh %275 : vector<8x256xf32>
    %277 = vector.extract_strided_slice %276 {offsets = [0, 0], sizes = [8, 64], strides = [1, 1]} : vector<8x256xf32> to vector<8x64xf32>
    %cst_132 = arith.constant 5.000000e-01 : f32
    %278 = vector.broadcast %cst_132 : f32 to vector<8x64xf32>
    %279 = arith.mulf %277, %278 : vector<8x64xf32>
    %cst_133 = arith.constant 5.000000e-01 : f32
    %280 = vector.broadcast %cst_133 : f32 to vector<8x64xf32>
    %281 = arith.addf %279, %280 : vector<8x64xf32>
    %282 = vector.extract_strided_slice %276 {offsets = [0, 64], sizes = [8, 64], strides = [1, 1]} : vector<8x256xf32> to vector<8x64xf32>
    %cst_134 = arith.constant 5.000000e-01 : f32
    %283 = vector.broadcast %cst_134 : f32 to vector<8x64xf32>
    %284 = arith.mulf %282, %283 : vector<8x64xf32>
    %cst_135 = arith.constant 5.000000e-01 : f32
    %285 = vector.broadcast %cst_135 : f32 to vector<8x64xf32>
    %286 = arith.addf %284, %285 : vector<8x64xf32>
    %287 = vector.extract_strided_slice %276 {offsets = [0, 128], sizes = [8, 64], strides = [1, 1]} : vector<8x256xf32> to vector<8x64xf32>
    %288 = vector.extract_strided_slice %276 {offsets = [0, 192], sizes = [8, 64], strides = [1, 1]} : vector<8x256xf32> to vector<8x64xf32>
    %cst_136 = arith.constant 5.000000e-01 : f32
    %289 = vector.broadcast %cst_136 : f32 to vector<8x64xf32>
    %290 = arith.mulf %288, %289 : vector<8x64xf32>
    %cst_137 = arith.constant 5.000000e-01 : f32
    %291 = vector.broadcast %cst_137 : f32 to vector<8x64xf32>
    %292 = arith.addf %290, %291 : vector<8x64xf32>
    %293 = arith.mulf %286, %184 : vector<8x64xf32>
    %294 = arith.mulf %281, %287 : vector<8x64xf32>
    %295 = arith.addf %293, %294 : vector<8x64xf32>
    %296 = math.tanh %295 : vector<8x64xf32>
    %297 = arith.mulf %292, %296 : vector<8x64xf32>
    %c0_138 = arith.constant 0 : index
    %c0_139 = arith.constant 0 : index
    %298 = vector.load %arg9[%c0_138, %c0_139] : memref<64x256xf32, #tpu.memory_space<vmem>>, vector<64x256xf32>
    %cst_140 = arith.constant dense<0.000000e+00> : vector<8x256xf32>
    %299 = tpu.matmul %297, %298, %cst_140 {dimension_numbers = #tpu.dot_dimension_numbers<[1], [0], [0], [1], [0, 0, 1, 1], [], []>} : vector<8x64xf32>, vector<64x256xf32>, vector<8x256xf32> -> vector<8x256xf32>
    %c0_141 = arith.constant 0 : index
    %c0_142 = arith.constant 0 : index
    %300 = vector.load %arg10[%c0_141, %c0_142] : memref<64x256xf32, #tpu.memory_space<vmem>>, vector<64x256xf32>
    %cst_143 = arith.constant dense<0.000000e+00> : vector<8x256xf32>
    %301 = tpu.matmul %214, %300, %cst_143 {dimension_numbers = #tpu.dot_dimension_numbers<[1], [0], [0], [1], [0, 0, 1, 1], [], []>} : vector<8x64xf32>, vector<64x256xf32>, vector<8x256xf32> -> vector<8x256xf32>
    %302 = arith.addf %299, %301 : vector<8x256xf32>
    %303 = arith.addf %302, %17 : vector<8x256xf32>
    %304 = math.tanh %303 : vector<8x256xf32>
    %305 = vector.extract_strided_slice %304 {offsets = [0, 0], sizes = [8, 64], strides = [1, 1]} : vector<8x256xf32> to vector<8x64xf32>
    %cst_144 = arith.constant 5.000000e-01 : f32
    %306 = vector.broadcast %cst_144 : f32 to vector<8x64xf32>
    %307 = arith.mulf %305, %306 : vector<8x64xf32>
    %cst_145 = arith.constant 5.000000e-01 : f32
    %308 = vector.broadcast %cst_145 : f32 to vector<8x64xf32>
    %309 = arith.addf %307, %308 : vector<8x64xf32>
    %310 = vector.extract_strided_slice %304 {offsets = [0, 64], sizes = [8, 64], strides = [1, 1]} : vector<8x256xf32> to vector<8x64xf32>
    %cst_146 = arith.constant 5.000000e-01 : f32
    %311 = vector.broadcast %cst_146 : f32 to vector<8x64xf32>
    %312 = arith.mulf %310, %311 : vector<8x64xf32>
    %cst_147 = arith.constant 5.000000e-01 : f32
    %313 = vector.broadcast %cst_147 : f32 to vector<8x64xf32>
    %314 = arith.addf %312, %313 : vector<8x64xf32>
    %315 = vector.extract_strided_slice %304 {offsets = [0, 128], sizes = [8, 64], strides = [1, 1]} : vector<8x256xf32> to vector<8x64xf32>
    %316 = vector.extract_strided_slice %304 {offsets = [0, 192], sizes = [8, 64], strides = [1, 1]} : vector<8x256xf32> to vector<8x64xf32>
    %cst_148 = arith.constant 5.000000e-01 : f32
    %317 = vector.broadcast %cst_148 : f32 to vector<8x64xf32>
    %318 = arith.mulf %316, %317 : vector<8x64xf32>
    %cst_149 = arith.constant 5.000000e-01 : f32
    %319 = vector.broadcast %cst_149 : f32 to vector<8x64xf32>
    %320 = arith.addf %318, %319 : vector<8x64xf32>
    %321 = arith.mulf %314, %212 : vector<8x64xf32>
    %322 = arith.mulf %309, %315 : vector<8x64xf32>
    %323 = arith.addf %321, %322 : vector<8x64xf32>
    %324 = math.tanh %323 : vector<8x64xf32>
    %325 = arith.mulf %320, %324 : vector<8x64xf32>
    %c0_150 = arith.constant 0 : index
    %c0_151 = arith.constant 0 : index
    %326 = vector.load %arg12[%c0_150, %c0_151] : memref<64x256xf32, #tpu.memory_space<vmem>>, vector<64x256xf32>
    %cst_152 = arith.constant dense<0.000000e+00> : vector<8x256xf32>
    %327 = tpu.matmul %325, %326, %cst_152 {dimension_numbers = #tpu.dot_dimension_numbers<[1], [0], [0], [1], [0, 0, 1, 1], [], []>} : vector<8x64xf32>, vector<64x256xf32>, vector<8x256xf32> -> vector<8x256xf32>
    %c0_153 = arith.constant 0 : index
    %c0_154 = arith.constant 0 : index
    %328 = vector.load %arg13[%c0_153, %c0_154] : memref<64x256xf32, #tpu.memory_space<vmem>>, vector<64x256xf32>
    %cst_155 = arith.constant dense<0.000000e+00> : vector<8x256xf32>
    %329 = tpu.matmul %242, %328, %cst_155 {dimension_numbers = #tpu.dot_dimension_numbers<[1], [0], [0], [1], [0, 0, 1, 1], [], []>} : vector<8x64xf32>, vector<64x256xf32>, vector<8x256xf32> -> vector<8x256xf32>
    %330 = arith.addf %327, %329 : vector<8x256xf32>
    %331 = arith.addf %330, %20 : vector<8x256xf32>
    %332 = math.tanh %331 : vector<8x256xf32>
    %333 = vector.extract_strided_slice %332 {offsets = [0, 0], sizes = [8, 64], strides = [1, 1]} : vector<8x256xf32> to vector<8x64xf32>
    %cst_156 = arith.constant 5.000000e-01 : f32
    %334 = vector.broadcast %cst_156 : f32 to vector<8x64xf32>
    %335 = arith.mulf %333, %334 : vector<8x64xf32>
    %cst_157 = arith.constant 5.000000e-01 : f32
    %336 = vector.broadcast %cst_157 : f32 to vector<8x64xf32>
    %337 = arith.addf %335, %336 : vector<8x64xf32>
    %338 = vector.extract_strided_slice %332 {offsets = [0, 64], sizes = [8, 64], strides = [1, 1]} : vector<8x256xf32> to vector<8x64xf32>
    %cst_158 = arith.constant 5.000000e-01 : f32
    %339 = vector.broadcast %cst_158 : f32 to vector<8x64xf32>
    %340 = arith.mulf %338, %339 : vector<8x64xf32>
    %cst_159 = arith.constant 5.000000e-01 : f32
    %341 = vector.broadcast %cst_159 : f32 to vector<8x64xf32>
    %342 = arith.addf %340, %341 : vector<8x64xf32>
    %343 = vector.extract_strided_slice %332 {offsets = [0, 128], sizes = [8, 64], strides = [1, 1]} : vector<8x256xf32> to vector<8x64xf32>
    %344 = vector.extract_strided_slice %332 {offsets = [0, 192], sizes = [8, 64], strides = [1, 1]} : vector<8x256xf32> to vector<8x64xf32>
    %cst_160 = arith.constant 5.000000e-01 : f32
    %345 = vector.broadcast %cst_160 : f32 to vector<8x64xf32>
    %346 = arith.mulf %344, %345 : vector<8x64xf32>
    %cst_161 = arith.constant 5.000000e-01 : f32
    %347 = vector.broadcast %cst_161 : f32 to vector<8x64xf32>
    %348 = arith.addf %346, %347 : vector<8x64xf32>
    %349 = arith.mulf %342, %240 : vector<8x64xf32>
    %350 = arith.mulf %337, %343 : vector<8x64xf32>
    %351 = arith.addf %349, %350 : vector<8x64xf32>
    %352 = math.tanh %351 : vector<8x64xf32>
    %353 = arith.mulf %348, %352 : vector<8x64xf32>
    %c16_162 = arith.constant 16 : index
    %c0_163 = arith.constant 0 : index
    %354 = vector.load %arg17[%c16_162, %c0_163] : memref<64x64xf32, #tpu.memory_space<vmem>>, vector<8x64xf32>
    tpu.vector_store %arg17[%c16_162, %c0_163], %353 {strides = array<i32>} : memref<64x64xf32, #tpu.memory_space<vmem>>, vector<8x64xf32>,
    %c24 = arith.constant 24 : index
    %c0_164 = arith.constant 0 : index
    %355 = vector.load %arg18[%c24, %c0_164] : memref<64x256xf32, #tpu.memory_space<vmem>>, vector<8x256xf32>
    %c0_165 = arith.constant 0 : index
    %c0_166 = arith.constant 0 : index
    %356 = vector.load %arg4[%c0_165, %c0_166] : memref<64x256xf32, #tpu.memory_space<vmem>>, vector<64x256xf32>
    %cst_167 = arith.constant dense<0.000000e+00> : vector<8x256xf32>
    %357 = tpu.matmul %269, %356, %cst_167 {dimension_numbers = #tpu.dot_dimension_numbers<[1], [0], [0], [1], [0, 0, 1, 1], [], []>} : vector<8x64xf32>, vector<64x256xf32>, vector<8x256xf32> -> vector<8x256xf32>
    %358 = arith.addf %355, %357 : vector<8x256xf32>
    %359 = math.tanh %358 : vector<8x256xf32>
    %360 = vector.extract_strided_slice %359 {offsets = [0, 0], sizes = [8, 64], strides = [1, 1]} : vector<8x256xf32> to vector<8x64xf32>
    %cst_168 = arith.constant 5.000000e-01 : f32
    %361 = vector.broadcast %cst_168 : f32 to vector<8x64xf32>
    %362 = arith.mulf %360, %361 : vector<8x64xf32>
    %cst_169 = arith.constant 5.000000e-01 : f32
    %363 = vector.broadcast %cst_169 : f32 to vector<8x64xf32>
    %364 = arith.addf %362, %363 : vector<8x64xf32>
    %365 = vector.extract_strided_slice %359 {offsets = [0, 64], sizes = [8, 64], strides = [1, 1]} : vector<8x256xf32> to vector<8x64xf32>
    %cst_170 = arith.constant 5.000000e-01 : f32
    %366 = vector.broadcast %cst_170 : f32 to vector<8x64xf32>
    %367 = arith.mulf %365, %366 : vector<8x64xf32>
    %cst_171 = arith.constant 5.000000e-01 : f32
    %368 = vector.broadcast %cst_171 : f32 to vector<8x64xf32>
    %369 = arith.addf %367, %368 : vector<8x64xf32>
    %370 = vector.extract_strided_slice %359 {offsets = [0, 128], sizes = [8, 64], strides = [1, 1]} : vector<8x256xf32> to vector<8x64xf32>
    %371 = vector.extract_strided_slice %359 {offsets = [0, 192], sizes = [8, 64], strides = [1, 1]} : vector<8x256xf32> to vector<8x64xf32>
    %cst_172 = arith.constant 5.000000e-01 : f32
    %372 = vector.broadcast %cst_172 : f32 to vector<8x64xf32>
    %373 = arith.mulf %371, %372 : vector<8x64xf32>
    %cst_173 = arith.constant 5.000000e-01 : f32
    %374 = vector.broadcast %cst_173 : f32 to vector<8x64xf32>
    %375 = arith.addf %373, %374 : vector<8x64xf32>
    %376 = arith.mulf %369, %267 : vector<8x64xf32>
    %377 = arith.mulf %364, %370 : vector<8x64xf32>
    %378 = arith.addf %376, %377 : vector<8x64xf32>
    %379 = math.tanh %378 : vector<8x64xf32>
    %380 = arith.mulf %375, %379 : vector<8x64xf32>
    %c0_174 = arith.constant 0 : index
    %c0_175 = arith.constant 0 : index
    %381 = vector.load %arg6[%c0_174, %c0_175] : memref<64x256xf32, #tpu.memory_space<vmem>>, vector<64x256xf32>
    %cst_176 = arith.constant dense<0.000000e+00> : vector<8x256xf32>
    %382 = tpu.matmul %380, %381, %cst_176 {dimension_numbers = #tpu.dot_dimension_numbers<[1], [0], [0], [1], [0, 0, 1, 1], [], []>} : vector<8x64xf32>, vector<64x256xf32>, vector<8x256xf32> -> vector<8x256xf32>
    %c0_177 = arith.constant 0 : index
    %c0_178 = arith.constant 0 : index
    %383 = vector.load %arg7[%c0_177, %c0_178] : memref<64x256xf32, #tpu.memory_space<vmem>>, vector<64x256xf32>
    %cst_179 = arith.constant dense<0.000000e+00> : vector<8x256xf32>
    %384 = tpu.matmul %297, %383, %cst_179 {dimension_numbers = #tpu.dot_dimension_numbers<[1], [0], [0], [1], [0, 0, 1, 1], [], []>} : vector<8x64xf32>, vector<64x256xf32>, vector<8x256xf32> -> vector<8x256xf32>
    %385 = arith.addf %382, %384 : vector<8x256xf32>
    %386 = arith.addf %385, %14 : vector<8x256xf32>
    %387 = math.tanh %386 : vector<8x256xf32>
    %388 = vector.extract_strided_slice %387 {offsets = [0, 0], sizes = [8, 64], strides = [1, 1]} : vector<8x256xf32> to vector<8x64xf32>
    %cst_180 = arith.constant 5.000000e-01 : f32
    %389 = vector.broadcast %cst_180 : f32 to vector<8x64xf32>
    %390 = arith.mulf %388, %389 : vector<8x64xf32>
    %cst_181 = arith.constant 5.000000e-01 : f32
    %391 = vector.broadcast %cst_181 : f32 to vector<8x64xf32>
    %392 = arith.addf %390, %391 : vector<8x64xf32>
    %393 = vector.extract_strided_slice %387 {offsets = [0, 64], sizes = [8, 64], strides = [1, 1]} : vector<8x256xf32> to vector<8x64xf32>
    %cst_182 = arith.constant 5.000000e-01 : f32
    %394 = vector.broadcast %cst_182 : f32 to vector<8x64xf32>
    %395 = arith.mulf %393, %394 : vector<8x64xf32>
    %cst_183 = arith.constant 5.000000e-01 : f32
    %396 = vector.broadcast %cst_183 : f32 to vector<8x64xf32>
    %397 = arith.addf %395, %396 : vector<8x64xf32>
    %398 = vector.extract_strided_slice %387 {offsets = [0, 128], sizes = [8, 64], strides = [1, 1]} : vector<8x256xf32> to vector<8x64xf32>
    %399 = vector.extract_strided_slice %387 {offsets = [0, 192], sizes = [8, 64], strides = [1, 1]} : vector<8x256xf32> to vector<8x64xf32>
    %cst_184 = arith.constant 5.000000e-01 : f32
    %400 = vector.broadcast %cst_184 : f32 to vector<8x64xf32>
    %401 = arith.mulf %399, %400 : vector<8x64xf32>
    %cst_185 = arith.constant 5.000000e-01 : f32
    %402 = vector.broadcast %cst_185 : f32 to vector<8x64xf32>
    %403 = arith.addf %401, %402 : vector<8x64xf32>
    %404 = arith.mulf %397, %295 : vector<8x64xf32>
    %405 = arith.mulf %392, %398 : vector<8x64xf32>
    %406 = arith.addf %404, %405 : vector<8x64xf32>
    %407 = math.tanh %406 : vector<8x64xf32>
    %408 = arith.mulf %403, %407 : vector<8x64xf32>
    %c0_186 = arith.constant 0 : index
    %c0_187 = arith.constant 0 : index
    %409 = vector.load %arg9[%c0_186, %c0_187] : memref<64x256xf32, #tpu.memory_space<vmem>>, vector<64x256xf32>
    %cst_188 = arith.constant dense<0.000000e+00> : vector<8x256xf32>
    %410 = tpu.matmul %408, %409, %cst_188 {dimension_numbers = #tpu.dot_dimension_numbers<[1], [0], [0], [1], [0, 0, 1, 1], [], []>} : vector<8x64xf32>, vector<64x256xf32>, vector<8x256xf32> -> vector<8x256xf32>
    %c0_189 = arith.constant 0 : index
    %c0_190 = arith.constant 0 : index
    %411 = vector.load %arg10[%c0_189, %c0_190] : memref<64x256xf32, #tpu.memory_space<vmem>>, vector<64x256xf32>
    %cst_191 = arith.constant dense<0.000000e+00> : vector<8x256xf32>
    %412 = tpu.matmul %325, %411, %cst_191 {dimension_numbers = #tpu.dot_dimension_numbers<[1], [0], [0], [1], [0, 0, 1, 1], [], []>} : vector<8x64xf32>, vector<64x256xf32>, vector<8x256xf32> -> vector<8x256xf32>
    %413 = arith.addf %410, %412 : vector<8x256xf32>
    %414 = arith.addf %413, %17 : vector<8x256xf32>
    %415 = math.tanh %414 : vector<8x256xf32>
    %416 = vector.extract_strided_slice %415 {offsets = [0, 0], sizes = [8, 64], strides = [1, 1]} : vector<8x256xf32> to vector<8x64xf32>
    %cst_192 = arith.constant 5.000000e-01 : f32
    %417 = vector.broadcast %cst_192 : f32 to vector<8x64xf32>
    %418 = arith.mulf %416, %417 : vector<8x64xf32>
    %cst_193 = arith.constant 5.000000e-01 : f32
    %419 = vector.broadcast %cst_193 : f32 to vector<8x64xf32>
    %420 = arith.addf %418, %419 : vector<8x64xf32>
    %421 = vector.extract_strided_slice %415 {offsets = [0, 64], sizes = [8, 64], strides = [1, 1]} : vector<8x256xf32> to vector<8x64xf32>
    %cst_194 = arith.constant 5.000000e-01 : f32
    %422 = vector.broadcast %cst_194 : f32 to vector<8x64xf32>
    %423 = arith.mulf %421, %422 : vector<8x64xf32>
    %cst_195 = arith.constant 5.000000e-01 : f32
    %424 = vector.broadcast %cst_195 : f32 to vector<8x64xf32>
    %425 = arith.addf %423, %424 : vector<8x64xf32>
    %426 = vector.extract_strided_slice %415 {offsets = [0, 128], sizes = [8, 64], strides = [1, 1]} : vector<8x256xf32> to vector<8x64xf32>
    %427 = vector.extract_strided_slice %415 {offsets = [0, 192], sizes = [8, 64], strides = [1, 1]} : vector<8x256xf32> to vector<8x64xf32>
    %cst_196 = arith.constant 5.000000e-01 : f32
    %428 = vector.broadcast %cst_196 : f32 to vector<8x64xf32>
    %429 = arith.mulf %427, %428 : vector<8x64xf32>
    %cst_197 = arith.constant 5.000000e-01 : f32
    %430 = vector.broadcast %cst_197 : f32 to vector<8x64xf32>
    %431 = arith.addf %429, %430 : vector<8x64xf32>
    %432 = arith.mulf %425, %323 : vector<8x64xf32>
    %433 = arith.mulf %420, %426 : vector<8x64xf32>
    %434 = arith.addf %432, %433 : vector<8x64xf32>
    %435 = math.tanh %434 : vector<8x64xf32>
    %436 = arith.mulf %431, %435 : vector<8x64xf32>
    %c0_198 = arith.constant 0 : index
    %c0_199 = arith.constant 0 : index
    %437 = vector.load %arg12[%c0_198, %c0_199] : memref<64x256xf32, #tpu.memory_space<vmem>>, vector<64x256xf32>
    %cst_200 = arith.constant dense<0.000000e+00> : vector<8x256xf32>
    %438 = tpu.matmul %436, %437, %cst_200 {dimension_numbers = #tpu.dot_dimension_numbers<[1], [0], [0], [1], [0, 0, 1, 1], [], []>} : vector<8x64xf32>, vector<64x256xf32>, vector<8x256xf32> -> vector<8x256xf32>
    %c0_201 = arith.constant 0 : index
    %c0_202 = arith.constant 0 : index
    %439 = vector.load %arg13[%c0_201, %c0_202] : memref<64x256xf32, #tpu.memory_space<vmem>>, vector<64x256xf32>
    %cst_203 = arith.constant dense<0.000000e+00> : vector<8x256xf32>
    %440 = tpu.matmul %353, %439, %cst_203 {dimension_numbers = #tpu.dot_dimension_numbers<[1], [0], [0], [1], [0, 0, 1, 1], [], []>} : vector<8x64xf32>, vector<64x256xf32>, vector<8x256xf32> -> vector<8x256xf32>
    %441 = arith.addf %438, %440 : vector<8x256xf32>
    %442 = arith.addf %441, %20 : vector<8x256xf32>
    %443 = math.tanh %442 : vector<8x256xf32>
    %444 = vector.extract_strided_slice %443 {offsets = [0, 0], sizes = [8, 64], strides = [1, 1]} : vector<8x256xf32> to vector<8x64xf32>
    %cst_204 = arith.constant 5.000000e-01 : f32
    %445 = vector.broadcast %cst_204 : f32 to vector<8x64xf32>
    %446 = arith.mulf %444, %445 : vector<8x64xf32>
    %cst_205 = arith.constant 5.000000e-01 : f32
    %447 = vector.broadcast %cst_205 : f32 to vector<8x64xf32>
    %448 = arith.addf %446, %447 : vector<8x64xf32>
    %449 = vector.extract_strided_slice %443 {offsets = [0, 64], sizes = [8, 64], strides = [1, 1]} : vector<8x256xf32> to vector<8x64xf32>
    %cst_206 = arith.constant 5.000000e-01 : f32
    %450 = vector.broadcast %cst_206 : f32 to vector<8x64xf32>
    %451 = arith.mulf %449, %450 : vector<8x64xf32>
    %cst_207 = arith.constant 5.000000e-01 : f32
    %452 = vector.broadcast %cst_207 : f32 to vector<8x64xf32>
    %453 = arith.addf %451, %452 : vector<8x64xf32>
    %454 = vector.extract_strided_slice %443 {offsets = [0, 128], sizes = [8, 64], strides = [1, 1]} : vector<8x256xf32> to vector<8x64xf32>
    %455 = vector.extract_strided_slice %443 {offsets = [0, 192], sizes = [8, 64], strides = [1, 1]} : vector<8x256xf32> to vector<8x64xf32>
    %cst_208 = arith.constant 5.000000e-01 : f32
    %456 = vector.broadcast %cst_208 : f32 to vector<8x64xf32>
    %457 = arith.mulf %455, %456 : vector<8x64xf32>
    %cst_209 = arith.constant 5.000000e-01 : f32
    %458 = vector.broadcast %cst_209 : f32 to vector<8x64xf32>
    %459 = arith.addf %457, %458 : vector<8x64xf32>
    %460 = arith.mulf %453, %351 : vector<8x64xf32>
    %461 = arith.mulf %448, %454 : vector<8x64xf32>
    %462 = arith.addf %460, %461 : vector<8x64xf32>
    %463 = math.tanh %462 : vector<8x64xf32>
    %464 = arith.mulf %459, %463 : vector<8x64xf32>
    %c24_210 = arith.constant 24 : index
    %c0_211 = arith.constant 0 : index
    %465 = vector.load %arg17[%c24_210, %c0_211] : memref<64x64xf32, #tpu.memory_space<vmem>>, vector<8x64xf32>
    tpu.vector_store %arg17[%c24_210, %c0_211], %464 {strides = array<i32>} : memref<64x64xf32, #tpu.memory_space<vmem>>, vector<8x64xf32>,
    %c32 = arith.constant 32 : index
    %c0_212 = arith.constant 0 : index
    %466 = vector.load %arg18[%c32, %c0_212] : memref<64x256xf32, #tpu.memory_space<vmem>>, vector<8x256xf32>
    %c0_213 = arith.constant 0 : index
    %c0_214 = arith.constant 0 : index
    %467 = vector.load %arg4[%c0_213, %c0_214] : memref<64x256xf32, #tpu.memory_space<vmem>>, vector<64x256xf32>
    %cst_215 = arith.constant dense<0.000000e+00> : vector<8x256xf32>
    %468 = tpu.matmul %380, %467, %cst_215 {dimension_numbers = #tpu.dot_dimension_numbers<[1], [0], [0], [1], [0, 0, 1, 1], [], []>} : vector<8x64xf32>, vector<64x256xf32>, vector<8x256xf32> -> vector<8x256xf32>
    %469 = arith.addf %466, %468 : vector<8x256xf32>
    %470 = math.tanh %469 : vector<8x256xf32>
    %471 = vector.extract_strided_slice %470 {offsets = [0, 0], sizes = [8, 64], strides = [1, 1]} : vector<8x256xf32> to vector<8x64xf32>
    %cst_216 = arith.constant 5.000000e-01 : f32
    %472 = vector.broadcast %cst_216 : f32 to vector<8x64xf32>
    %473 = arith.mulf %471, %472 : vector<8x64xf32>
    %cst_217 = arith.constant 5.000000e-01 : f32
    %474 = vector.broadcast %cst_217 : f32 to vector<8x64xf32>
    %475 = arith.addf %473, %474 : vector<8x64xf32>
    %476 = vector.extract_strided_slice %470 {offsets = [0, 64], sizes = [8, 64], strides = [1, 1]} : vector<8x256xf32> to vector<8x64xf32>
    %cst_218 = arith.constant 5.000000e-01 : f32
    %477 = vector.broadcast %cst_218 : f32 to vector<8x64xf32>
    %478 = arith.mulf %476, %477 : vector<8x64xf32>
    %cst_219 = arith.constant 5.000000e-01 : f32
    %479 = vector.broadcast %cst_219 : f32 to vector<8x64xf32>
    %480 = arith.addf %478, %479 : vector<8x64xf32>
    %481 = vector.extract_strided_slice %470 {offsets = [0, 128], sizes = [8, 64], strides = [1, 1]} : vector<8x256xf32> to vector<8x64xf32>
    %482 = vector.extract_strided_slice %470 {offsets = [0, 192], sizes = [8, 64], strides = [1, 1]} : vector<8x256xf32> to vector<8x64xf32>
    %cst_220 = arith.constant 5.000000e-01 : f32
    %483 = vector.broadcast %cst_220 : f32 to vector<8x64xf32>
    %484 = arith.mulf %482, %483 : vector<8x64xf32>
    %cst_221 = arith.constant 5.000000e-01 : f32
    %485 = vector.broadcast %cst_221 : f32 to vector<8x64xf32>
    %486 = arith.addf %484, %485 : vector<8x64xf32>
    %487 = arith.mulf %480, %378 : vector<8x64xf32>
    %488 = arith.mulf %475, %481 : vector<8x64xf32>
    %489 = arith.addf %487, %488 : vector<8x64xf32>
    %490 = math.tanh %489 : vector<8x64xf32>
    %491 = arith.mulf %486, %490 : vector<8x64xf32>
    %c0_222 = arith.constant 0 : index
    %c0_223 = arith.constant 0 : index
    %492 = vector.load %arg6[%c0_222, %c0_223] : memref<64x256xf32, #tpu.memory_space<vmem>>, vector<64x256xf32>
    %cst_224 = arith.constant dense<0.000000e+00> : vector<8x256xf32>
    %493 = tpu.matmul %491, %492, %cst_224 {dimension_numbers = #tpu.dot_dimension_numbers<[1], [0], [0], [1], [0, 0, 1, 1], [], []>} : vector<8x64xf32>, vector<64x256xf32>, vector<8x256xf32> -> vector<8x256xf32>
    %c0_225 = arith.constant 0 : index
    %c0_226 = arith.constant 0 : index
    %494 = vector.load %arg7[%c0_225, %c0_226] : memref<64x256xf32, #tpu.memory_space<vmem>>, vector<64x256xf32>
    %cst_227 = arith.constant dense<0.000000e+00> : vector<8x256xf32>
    %495 = tpu.matmul %408, %494, %cst_227 {dimension_numbers = #tpu.dot_dimension_numbers<[1], [0], [0], [1], [0, 0, 1, 1], [], []>} : vector<8x64xf32>, vector<64x256xf32>, vector<8x256xf32> -> vector<8x256xf32>
    %496 = arith.addf %493, %495 : vector<8x256xf32>
    %497 = arith.addf %496, %14 : vector<8x256xf32>
    %498 = math.tanh %497 : vector<8x256xf32>
    %499 = vector.extract_strided_slice %498 {offsets = [0, 0], sizes = [8, 64], strides = [1, 1]} : vector<8x256xf32> to vector<8x64xf32>
    %cst_228 = arith.constant 5.000000e-01 : f32
    %500 = vector.broadcast %cst_228 : f32 to vector<8x64xf32>
    %501 = arith.mulf %499, %500 : vector<8x64xf32>
    %cst_229 = arith.constant 5.000000e-01 : f32
    %502 = vector.broadcast %cst_229 : f32 to vector<8x64xf32>
    %503 = arith.addf %501, %502 : vector<8x64xf32>
    %504 = vector.extract_strided_slice %498 {offsets = [0, 64], sizes = [8, 64], strides = [1, 1]} : vector<8x256xf32> to vector<8x64xf32>
    %cst_230 = arith.constant 5.000000e-01 : f32
    %505 = vector.broadcast %cst_230 : f32 to vector<8x64xf32>
    %506 = arith.mulf %504, %505 : vector<8x64xf32>
    %cst_231 = arith.constant 5.000000e-01 : f32
    %507 = vector.broadcast %cst_231 : f32 to vector<8x64xf32>
    %508 = arith.addf %506, %507 : vector<8x64xf32>
    %509 = vector.extract_strided_slice %498 {offsets = [0, 128], sizes = [8, 64], strides = [1, 1]} : vector<8x256xf32> to vector<8x64xf32>
    %510 = vector.extract_strided_slice %498 {offsets = [0, 192], sizes = [8, 64], strides = [1, 1]} : vector<8x256xf32> to vector<8x64xf32>
    %cst_232 = arith.constant 5.000000e-01 : f32
    %511 = vector.broadcast %cst_232 : f32 to vector<8x64xf32>
    %512 = arith.mulf %510, %511 : vector<8x64xf32>
    %cst_233 = arith.constant 5.000000e-01 : f32
    %513 = vector.broadcast %cst_233 : f32 to vector<8x64xf32>
    %514 = arith.addf %512, %513 : vector<8x64xf32>
    %515 = arith.mulf %508, %406 : vector<8x64xf32>
    %516 = arith.mulf %503, %509 : vector<8x64xf32>
    %517 = arith.addf %515, %516 : vector<8x64xf32>
    %518 = math.tanh %517 : vector<8x64xf32>
    %519 = arith.mulf %514, %518 : vector<8x64xf32>
    %c0_234 = arith.constant 0 : index
    %c0_235 = arith.constant 0 : index
    %520 = vector.load %arg9[%c0_234, %c0_235] : memref<64x256xf32, #tpu.memory_space<vmem>>, vector<64x256xf32>
    %cst_236 = arith.constant dense<0.000000e+00> : vector<8x256xf32>
    %521 = tpu.matmul %519, %520, %cst_236 {dimension_numbers = #tpu.dot_dimension_numbers<[1], [0], [0], [1], [0, 0, 1, 1], [], []>} : vector<8x64xf32>, vector<64x256xf32>, vector<8x256xf32> -> vector<8x256xf32>
    %c0_237 = arith.constant 0 : index
    %c0_238 = arith.constant 0 : index
    %522 = vector.load %arg10[%c0_237, %c0_238] : memref<64x256xf32, #tpu.memory_space<vmem>>, vector<64x256xf32>
    %cst_239 = arith.constant dense<0.000000e+00> : vector<8x256xf32>
    %523 = tpu.matmul %436, %522, %cst_239 {dimension_numbers = #tpu.dot_dimension_numbers<[1], [0], [0], [1], [0, 0, 1, 1], [], []>} : vector<8x64xf32>, vector<64x256xf32>, vector<8x256xf32> -> vector<8x256xf32>
    %524 = arith.addf %521, %523 : vector<8x256xf32>
    %525 = arith.addf %524, %17 : vector<8x256xf32>
    %526 = math.tanh %525 : vector<8x256xf32>
    %527 = vector.extract_strided_slice %526 {offsets = [0, 0], sizes = [8, 64], strides = [1, 1]} : vector<8x256xf32> to vector<8x64xf32>
    %cst_240 = arith.constant 5.000000e-01 : f32
    %528 = vector.broadcast %cst_240 : f32 to vector<8x64xf32>
    %529 = arith.mulf %527, %528 : vector<8x64xf32>
    %cst_241 = arith.constant 5.000000e-01 : f32
    %530 = vector.broadcast %cst_241 : f32 to vector<8x64xf32>
    %531 = arith.addf %529, %530 : vector<8x64xf32>
    %532 = vector.extract_strided_slice %526 {offsets = [0, 64], sizes = [8, 64], strides = [1, 1]} : vector<8x256xf32> to vector<8x64xf32>
    %cst_242 = arith.constant 5.000000e-01 : f32
    %533 = vector.broadcast %cst_242 : f32 to vector<8x64xf32>
    %534 = arith.mulf %532, %533 : vector<8x64xf32>
    %cst_243 = arith.constant 5.000000e-01 : f32
    %535 = vector.broadcast %cst_243 : f32 to vector<8x64xf32>
    %536 = arith.addf %534, %535 : vector<8x64xf32>
    %537 = vector.extract_strided_slice %526 {offsets = [0, 128], sizes = [8, 64], strides = [1, 1]} : vector<8x256xf32> to vector<8x64xf32>
    %538 = vector.extract_strided_slice %526 {offsets = [0, 192], sizes = [8, 64], strides = [1, 1]} : vector<8x256xf32> to vector<8x64xf32>
    %cst_244 = arith.constant 5.000000e-01 : f32
    %539 = vector.broadcast %cst_244 : f32 to vector<8x64xf32>
    %540 = arith.mulf %538, %539 : vector<8x64xf32>
    %cst_245 = arith.constant 5.000000e-01 : f32
    %541 = vector.broadcast %cst_245 : f32 to vector<8x64xf32>
    %542 = arith.addf %540, %541 : vector<8x64xf32>
    %543 = arith.mulf %536, %434 : vector<8x64xf32>
    %544 = arith.mulf %531, %537 : vector<8x64xf32>
    %545 = arith.addf %543, %544 : vector<8x64xf32>
    %546 = math.tanh %545 : vector<8x64xf32>
    %547 = arith.mulf %542, %546 : vector<8x64xf32>
    %c0_246 = arith.constant 0 : index
    %c0_247 = arith.constant 0 : index
    %548 = vector.load %arg12[%c0_246, %c0_247] : memref<64x256xf32, #tpu.memory_space<vmem>>, vector<64x256xf32>
    %cst_248 = arith.constant dense<0.000000e+00> : vector<8x256xf32>
    %549 = tpu.matmul %547, %548, %cst_248 {dimension_numbers = #tpu.dot_dimension_numbers<[1], [0], [0], [1], [0, 0, 1, 1], [], []>} : vector<8x64xf32>, vector<64x256xf32>, vector<8x256xf32> -> vector<8x256xf32>
    %c0_249 = arith.constant 0 : index
    %c0_250 = arith.constant 0 : index
    %550 = vector.load %arg13[%c0_249, %c0_250] : memref<64x256xf32, #tpu.memory_space<vmem>>, vector<64x256xf32>
    %cst_251 = arith.constant dense<0.000000e+00> : vector<8x256xf32>
    %551 = tpu.matmul %464, %550, %cst_251 {dimension_numbers = #tpu.dot_dimension_numbers<[1], [0], [0], [1], [0, 0, 1, 1], [], []>} : vector<8x64xf32>, vector<64x256xf32>, vector<8x256xf32> -> vector<8x256xf32>
    %552 = arith.addf %549, %551 : vector<8x256xf32>
    %553 = arith.addf %552, %20 : vector<8x256xf32>
    %554 = math.tanh %553 : vector<8x256xf32>
    %555 = vector.extract_strided_slice %554 {offsets = [0, 0], sizes = [8, 64], strides = [1, 1]} : vector<8x256xf32> to vector<8x64xf32>
    %cst_252 = arith.constant 5.000000e-01 : f32
    %556 = vector.broadcast %cst_252 : f32 to vector<8x64xf32>
    %557 = arith.mulf %555, %556 : vector<8x64xf32>
    %cst_253 = arith.constant 5.000000e-01 : f32
    %558 = vector.broadcast %cst_253 : f32 to vector<8x64xf32>
    %559 = arith.addf %557, %558 : vector<8x64xf32>
    %560 = vector.extract_strided_slice %554 {offsets = [0, 64], sizes = [8, 64], strides = [1, 1]} : vector<8x256xf32> to vector<8x64xf32>
    %cst_254 = arith.constant 5.000000e-01 : f32
    %561 = vector.broadcast %cst_254 : f32 to vector<8x64xf32>
    %562 = arith.mulf %560, %561 : vector<8x64xf32>
    %cst_255 = arith.constant 5.000000e-01 : f32
    %563 = vector.broadcast %cst_255 : f32 to vector<8x64xf32>
    %564 = arith.addf %562, %563 : vector<8x64xf32>
    %565 = vector.extract_strided_slice %554 {offsets = [0, 128], sizes = [8, 64], strides = [1, 1]} : vector<8x256xf32> to vector<8x64xf32>
    %566 = vector.extract_strided_slice %554 {offsets = [0, 192], sizes = [8, 64], strides = [1, 1]} : vector<8x256xf32> to vector<8x64xf32>
    %cst_256 = arith.constant 5.000000e-01 : f32
    %567 = vector.broadcast %cst_256 : f32 to vector<8x64xf32>
    %568 = arith.mulf %566, %567 : vector<8x64xf32>
    %cst_257 = arith.constant 5.000000e-01 : f32
    %569 = vector.broadcast %cst_257 : f32 to vector<8x64xf32>
    %570 = arith.addf %568, %569 : vector<8x64xf32>
    %571 = arith.mulf %564, %462 : vector<8x64xf32>
    %572 = arith.mulf %559, %565 : vector<8x64xf32>
    %573 = arith.addf %571, %572 : vector<8x64xf32>
    %574 = math.tanh %573 : vector<8x64xf32>
    %575 = arith.mulf %570, %574 : vector<8x64xf32>
    %c32_258 = arith.constant 32 : index
    %c0_259 = arith.constant 0 : index
    %576 = vector.load %arg17[%c32_258, %c0_259] : memref<64x64xf32, #tpu.memory_space<vmem>>, vector<8x64xf32>
    tpu.vector_store %arg17[%c32_258, %c0_259], %575 {strides = array<i32>} : memref<64x64xf32, #tpu.memory_space<vmem>>, vector<8x64xf32>,
    %c40 = arith.constant 40 : index
    %c0_260 = arith.constant 0 : index
    %577 = vector.load %arg18[%c40, %c0_260] : memref<64x256xf32, #tpu.memory_space<vmem>>, vector<8x256xf32>
    %c0_261 = arith.constant 0 : index
    %c0_262 = arith.constant 0 : index
    %578 = vector.load %arg4[%c0_261, %c0_262] : memref<64x256xf32, #tpu.memory_space<vmem>>, vector<64x256xf32>
    %cst_263 = arith.constant dense<0.000000e+00> : vector<8x256xf32>
    %579 = tpu.matmul %491, %578, %cst_263 {dimension_numbers = #tpu.dot_dimension_numbers<[1], [0], [0], [1], [0, 0, 1, 1], [], []>} : vector<8x64xf32>, vector<64x256xf32>, vector<8x256xf32> -> vector<8x256xf32>
    %580 = arith.addf %577, %579 : vector<8x256xf32>
    %581 = math.tanh %580 : vector<8x256xf32>
    %582 = vector.extract_strided_slice %581 {offsets = [0, 0], sizes = [8, 64], strides = [1, 1]} : vector<8x256xf32> to vector<8x64xf32>
    %cst_264 = arith.constant 5.000000e-01 : f32
    %583 = vector.broadcast %cst_264 : f32 to vector<8x64xf32>
    %584 = arith.mulf %582, %583 : vector<8x64xf32>
    %cst_265 = arith.constant 5.000000e-01 : f32
    %585 = vector.broadcast %cst_265 : f32 to vector<8x64xf32>
    %586 = arith.addf %584, %585 : vector<8x64xf32>
    %587 = vector.extract_strided_slice %581 {offsets = [0, 64], sizes = [8, 64], strides = [1, 1]} : vector<8x256xf32> to vector<8x64xf32>
    %cst_266 = arith.constant 5.000000e-01 : f32
    %588 = vector.broadcast %cst_266 : f32 to vector<8x64xf32>
    %589 = arith.mulf %587, %588 : vector<8x64xf32>
    %cst_267 = arith.constant 5.000000e-01 : f32
    %590 = vector.broadcast %cst_267 : f32 to vector<8x64xf32>
    %591 = arith.addf %589, %590 : vector<8x64xf32>
    %592 = vector.extract_strided_slice %581 {offsets = [0, 128], sizes = [8, 64], strides = [1, 1]} : vector<8x256xf32> to vector<8x64xf32>
    %593 = vector.extract_strided_slice %581 {offsets = [0, 192], sizes = [8, 64], strides = [1, 1]} : vector<8x256xf32> to vector<8x64xf32>
    %cst_268 = arith.constant 5.000000e-01 : f32
    %594 = vector.broadcast %cst_268 : f32 to vector<8x64xf32>
    %595 = arith.mulf %593, %594 : vector<8x64xf32>
    %cst_269 = arith.constant 5.000000e-01 : f32
    %596 = vector.broadcast %cst_269 : f32 to vector<8x64xf32>
    %597 = arith.addf %595, %596 : vector<8x64xf32>
    %598 = arith.mulf %591, %489 : vector<8x64xf32>
    %599 = arith.mulf %586, %592 : vector<8x64xf32>
    %600 = arith.addf %598, %599 : vector<8x64xf32>
    %601 = math.tanh %600 : vector<8x64xf32>
    %602 = arith.mulf %597, %601 : vector<8x64xf32>
    %c0_270 = arith.constant 0 : index
    %c0_271 = arith.constant 0 : index
    %603 = vector.load %arg6[%c0_270, %c0_271] : memref<64x256xf32, #tpu.memory_space<vmem>>, vector<64x256xf32>
    %cst_272 = arith.constant dense<0.000000e+00> : vector<8x256xf32>
    %604 = tpu.matmul %602, %603, %cst_272 {dimension_numbers = #tpu.dot_dimension_numbers<[1], [0], [0], [1], [0, 0, 1, 1], [], []>} : vector<8x64xf32>, vector<64x256xf32>, vector<8x256xf32> -> vector<8x256xf32>
    %c0_273 = arith.constant 0 : index
    %c0_274 = arith.constant 0 : index
    %605 = vector.load %arg7[%c0_273, %c0_274] : memref<64x256xf32, #tpu.memory_space<vmem>>, vector<64x256xf32>
    %cst_275 = arith.constant dense<0.000000e+00> : vector<8x256xf32>
    %606 = tpu.matmul %519, %605, %cst_275 {dimension_numbers = #tpu.dot_dimension_numbers<[1], [0], [0], [1], [0, 0, 1, 1], [], []>} : vector<8x64xf32>, vector<64x256xf32>, vector<8x256xf32> -> vector<8x256xf32>
    %607 = arith.addf %604, %606 : vector<8x256xf32>
    %608 = arith.addf %607, %14 : vector<8x256xf32>
    %609 = math.tanh %608 : vector<8x256xf32>
    %610 = vector.extract_strided_slice %609 {offsets = [0, 0], sizes = [8, 64], strides = [1, 1]} : vector<8x256xf32> to vector<8x64xf32>
    %cst_276 = arith.constant 5.000000e-01 : f32
    %611 = vector.broadcast %cst_276 : f32 to vector<8x64xf32>
    %612 = arith.mulf %610, %611 : vector<8x64xf32>
    %cst_277 = arith.constant 5.000000e-01 : f32
    %613 = vector.broadcast %cst_277 : f32 to vector<8x64xf32>
    %614 = arith.addf %612, %613 : vector<8x64xf32>
    %615 = vector.extract_strided_slice %609 {offsets = [0, 64], sizes = [8, 64], strides = [1, 1]} : vector<8x256xf32> to vector<8x64xf32>
    %cst_278 = arith.constant 5.000000e-01 : f32
    %616 = vector.broadcast %cst_278 : f32 to vector<8x64xf32>
    %617 = arith.mulf %615, %616 : vector<8x64xf32>
    %cst_279 = arith.constant 5.000000e-01 : f32
    %618 = vector.broadcast %cst_279 : f32 to vector<8x64xf32>
    %619 = arith.addf %617, %618 : vector<8x64xf32>
    %620 = vector.extract_strided_slice %609 {offsets = [0, 128], sizes = [8, 64], strides = [1, 1]} : vector<8x256xf32> to vector<8x64xf32>
    %621 = vector.extract_strided_slice %609 {offsets = [0, 192], sizes = [8, 64], strides = [1, 1]} : vector<8x256xf32> to vector<8x64xf32>
    %cst_280 = arith.constant 5.000000e-01 : f32
    %622 = vector.broadcast %cst_280 : f32 to vector<8x64xf32>
    %623 = arith.mulf %621, %622 : vector<8x64xf32>
    %cst_281 = arith.constant 5.000000e-01 : f32
    %624 = vector.broadcast %cst_281 : f32 to vector<8x64xf32>
    %625 = arith.addf %623, %624 : vector<8x64xf32>
    %626 = arith.mulf %619, %517 : vector<8x64xf32>
    %627 = arith.mulf %614, %620 : vector<8x64xf32>
    %628 = arith.addf %626, %627 : vector<8x64xf32>
    %629 = math.tanh %628 : vector<8x64xf32>
    %630 = arith.mulf %625, %629 : vector<8x64xf32>
    %c0_282 = arith.constant 0 : index
    %c0_283 = arith.constant 0 : index
    %631 = vector.load %arg9[%c0_282, %c0_283] : memref<64x256xf32, #tpu.memory_space<vmem>>, vector<64x256xf32>
    %cst_284 = arith.constant dense<0.000000e+00> : vector<8x256xf32>
    %632 = tpu.matmul %630, %631, %cst_284 {dimension_numbers = #tpu.dot_dimension_numbers<[1], [0], [0], [1], [0, 0, 1, 1], [], []>} : vector<8x64xf32>, vector<64x256xf32>, vector<8x256xf32> -> vector<8x256xf32>
    %c0_285 = arith.constant 0 : index
    %c0_286 = arith.constant 0 : index
    %633 = vector.load %arg10[%c0_285, %c0_286] : memref<64x256xf32, #tpu.memory_space<vmem>>, vector<64x256xf32>
    %cst_287 = arith.constant dense<0.000000e+00> : vector<8x256xf32>
    %634 = tpu.matmul %547, %633, %cst_287 {dimension_numbers = #tpu.dot_dimension_numbers<[1], [0], [0], [1], [0, 0, 1, 1], [], []>} : vector<8x64xf32>, vector<64x256xf32>, vector<8x256xf32> -> vector<8x256xf32>
    %635 = arith.addf %632, %634 : vector<8x256xf32>
    %636 = arith.addf %635, %17 : vector<8x256xf32>
    %637 = math.tanh %636 : vector<8x256xf32>
    %638 = vector.extract_strided_slice %637 {offsets = [0, 0], sizes = [8, 64], strides = [1, 1]} : vector<8x256xf32> to vector<8x64xf32>
    %cst_288 = arith.constant 5.000000e-01 : f32
    %639 = vector.broadcast %cst_288 : f32 to vector<8x64xf32>
    %640 = arith.mulf %638, %639 : vector<8x64xf32>
    %cst_289 = arith.constant 5.000000e-01 : f32
    %641 = vector.broadcast %cst_289 : f32 to vector<8x64xf32>
    %642 = arith.addf %640, %641 : vector<8x64xf32>
    %643 = vector.extract_strided_slice %637 {offsets = [0, 64], sizes = [8, 64], strides = [1, 1]} : vector<8x256xf32> to vector<8x64xf32>
    %cst_290 = arith.constant 5.000000e-01 : f32
    %644 = vector.broadcast %cst_290 : f32 to vector<8x64xf32>
    %645 = arith.mulf %643, %644 : vector<8x64xf32>
    %cst_291 = arith.constant 5.000000e-01 : f32
    %646 = vector.broadcast %cst_291 : f32 to vector<8x64xf32>
    %647 = arith.addf %645, %646 : vector<8x64xf32>
    %648 = vector.extract_strided_slice %637 {offsets = [0, 128], sizes = [8, 64], strides = [1, 1]} : vector<8x256xf32> to vector<8x64xf32>
    %649 = vector.extract_strided_slice %637 {offsets = [0, 192], sizes = [8, 64], strides = [1, 1]} : vector<8x256xf32> to vector<8x64xf32>
    %cst_292 = arith.constant 5.000000e-01 : f32
    %650 = vector.broadcast %cst_292 : f32 to vector<8x64xf32>
    %651 = arith.mulf %649, %650 : vector<8x64xf32>
    %cst_293 = arith.constant 5.000000e-01 : f32
    %652 = vector.broadcast %cst_293 : f32 to vector<8x64xf32>
    %653 = arith.addf %651, %652 : vector<8x64xf32>
    %654 = arith.mulf %647, %545 : vector<8x64xf32>
    %655 = arith.mulf %642, %648 : vector<8x64xf32>
    %656 = arith.addf %654, %655 : vector<8x64xf32>
    %657 = math.tanh %656 : vector<8x64xf32>
    %658 = arith.mulf %653, %657 : vector<8x64xf32>
    %c0_294 = arith.constant 0 : index
    %c0_295 = arith.constant 0 : index
    %659 = vector.load %arg12[%c0_294, %c0_295] : memref<64x256xf32, #tpu.memory_space<vmem>>, vector<64x256xf32>
    %cst_296 = arith.constant dense<0.000000e+00> : vector<8x256xf32>
    %660 = tpu.matmul %658, %659, %cst_296 {dimension_numbers = #tpu.dot_dimension_numbers<[1], [0], [0], [1], [0, 0, 1, 1], [], []>} : vector<8x64xf32>, vector<64x256xf32>, vector<8x256xf32> -> vector<8x256xf32>
    %c0_297 = arith.constant 0 : index
    %c0_298 = arith.constant 0 : index
    %661 = vector.load %arg13[%c0_297, %c0_298] : memref<64x256xf32, #tpu.memory_space<vmem>>, vector<64x256xf32>
    %cst_299 = arith.constant dense<0.000000e+00> : vector<8x256xf32>
    %662 = tpu.matmul %575, %661, %cst_299 {dimension_numbers = #tpu.dot_dimension_numbers<[1], [0], [0], [1], [0, 0, 1, 1], [], []>} : vector<8x64xf32>, vector<64x256xf32>, vector<8x256xf32> -> vector<8x256xf32>
    %663 = arith.addf %660, %662 : vector<8x256xf32>
    %664 = arith.addf %663, %20 : vector<8x256xf32>
    %665 = math.tanh %664 : vector<8x256xf32>
    %666 = vector.extract_strided_slice %665 {offsets = [0, 0], sizes = [8, 64], strides = [1, 1]} : vector<8x256xf32> to vector<8x64xf32>
    %cst_300 = arith.constant 5.000000e-01 : f32
    %667 = vector.broadcast %cst_300 : f32 to vector<8x64xf32>
    %668 = arith.mulf %666, %667 : vector<8x64xf32>
    %cst_301 = arith.constant 5.000000e-01 : f32
    %669 = vector.broadcast %cst_301 : f32 to vector<8x64xf32>
    %670 = arith.addf %668, %669 : vector<8x64xf32>
    %671 = vector.extract_strided_slice %665 {offsets = [0, 64], sizes = [8, 64], strides = [1, 1]} : vector<8x256xf32> to vector<8x64xf32>
    %cst_302 = arith.constant 5.000000e-01 : f32
    %672 = vector.broadcast %cst_302 : f32 to vector<8x64xf32>
    %673 = arith.mulf %671, %672 : vector<8x64xf32>
    %cst_303 = arith.constant 5.000000e-01 : f32
    %674 = vector.broadcast %cst_303 : f32 to vector<8x64xf32>
    %675 = arith.addf %673, %674 : vector<8x64xf32>
    %676 = vector.extract_strided_slice %665 {offsets = [0, 128], sizes = [8, 64], strides = [1, 1]} : vector<8x256xf32> to vector<8x64xf32>
    %677 = vector.extract_strided_slice %665 {offsets = [0, 192], sizes = [8, 64], strides = [1, 1]} : vector<8x256xf32> to vector<8x64xf32>
    %cst_304 = arith.constant 5.000000e-01 : f32
    %678 = vector.broadcast %cst_304 : f32 to vector<8x64xf32>
    %679 = arith.mulf %677, %678 : vector<8x64xf32>
    %cst_305 = arith.constant 5.000000e-01 : f32
    %680 = vector.broadcast %cst_305 : f32 to vector<8x64xf32>
    %681 = arith.addf %679, %680 : vector<8x64xf32>
    %682 = arith.mulf %675, %573 : vector<8x64xf32>
    %683 = arith.mulf %670, %676 : vector<8x64xf32>
    %684 = arith.addf %682, %683 : vector<8x64xf32>
    %685 = math.tanh %684 : vector<8x64xf32>
    %686 = arith.mulf %681, %685 : vector<8x64xf32>
    %c40_306 = arith.constant 40 : index
    %c0_307 = arith.constant 0 : index
    %687 = vector.load %arg17[%c40_306, %c0_307] : memref<64x64xf32, #tpu.memory_space<vmem>>, vector<8x64xf32>
    tpu.vector_store %arg17[%c40_306, %c0_307], %686 {strides = array<i32>} : memref<64x64xf32, #tpu.memory_space<vmem>>, vector<8x64xf32>,
    %c48 = arith.constant 48 : index
    %c0_308 = arith.constant 0 : index
    %688 = vector.load %arg18[%c48, %c0_308] : memref<64x256xf32, #tpu.memory_space<vmem>>, vector<8x256xf32>
    %c0_309 = arith.constant 0 : index
    %c0_310 = arith.constant 0 : index
    %689 = vector.load %arg4[%c0_309, %c0_310] : memref<64x256xf32, #tpu.memory_space<vmem>>, vector<64x256xf32>
    %cst_311 = arith.constant dense<0.000000e+00> : vector<8x256xf32>
    %690 = tpu.matmul %602, %689, %cst_311 {dimension_numbers = #tpu.dot_dimension_numbers<[1], [0], [0], [1], [0, 0, 1, 1], [], []>} : vector<8x64xf32>, vector<64x256xf32>, vector<8x256xf32> -> vector<8x256xf32>
    %691 = arith.addf %688, %690 : vector<8x256xf32>
    %692 = math.tanh %691 : vector<8x256xf32>
    %693 = vector.extract_strided_slice %692 {offsets = [0, 0], sizes = [8, 64], strides = [1, 1]} : vector<8x256xf32> to vector<8x64xf32>
    %cst_312 = arith.constant 5.000000e-01 : f32
    %694 = vector.broadcast %cst_312 : f32 to vector<8x64xf32>
    %695 = arith.mulf %693, %694 : vector<8x64xf32>
    %cst_313 = arith.constant 5.000000e-01 : f32
    %696 = vector.broadcast %cst_313 : f32 to vector<8x64xf32>
    %697 = arith.addf %695, %696 : vector<8x64xf32>
    %698 = vector.extract_strided_slice %692 {offsets = [0, 64], sizes = [8, 64], strides = [1, 1]} : vector<8x256xf32> to vector<8x64xf32>
    %cst_314 = arith.constant 5.000000e-01 : f32
    %699 = vector.broadcast %cst_314 : f32 to vector<8x64xf32>
    %700 = arith.mulf %698, %699 : vector<8x64xf32>
    %cst_315 = arith.constant 5.000000e-01 : f32
    %701 = vector.broadcast %cst_315 : f32 to vector<8x64xf32>
    %702 = arith.addf %700, %701 : vector<8x64xf32>
    %703 = vector.extract_strided_slice %692 {offsets = [0, 128], sizes = [8, 64], strides = [1, 1]} : vector<8x256xf32> to vector<8x64xf32>
    %704 = vector.extract_strided_slice %692 {offsets = [0, 192], sizes = [8, 64], strides = [1, 1]} : vector<8x256xf32> to vector<8x64xf32>
    %cst_316 = arith.constant 5.000000e-01 : f32
    %705 = vector.broadcast %cst_316 : f32 to vector<8x64xf32>
    %706 = arith.mulf %704, %705 : vector<8x64xf32>
    %cst_317 = arith.constant 5.000000e-01 : f32
    %707 = vector.broadcast %cst_317 : f32 to vector<8x64xf32>
    %708 = arith.addf %706, %707 : vector<8x64xf32>
    %709 = arith.mulf %702, %600 : vector<8x64xf32>
    %710 = arith.mulf %697, %703 : vector<8x64xf32>
    %711 = arith.addf %709, %710 : vector<8x64xf32>
    %712 = math.tanh %711 : vector<8x64xf32>
    %713 = arith.mulf %708, %712 : vector<8x64xf32>
    %c0_318 = arith.constant 0 : index
    %c0_319 = arith.constant 0 : index
    %714 = vector.load %arg6[%c0_318, %c0_319] : memref<64x256xf32, #tpu.memory_space<vmem>>, vector<64x256xf32>
    %cst_320 = arith.constant dense<0.000000e+00> : vector<8x256xf32>
    %715 = tpu.matmul %713, %714, %cst_320 {dimension_numbers = #tpu.dot_dimension_numbers<[1], [0], [0], [1], [0, 0, 1, 1], [], []>} : vector<8x64xf32>, vector<64x256xf32>, vector<8x256xf32> -> vector<8x256xf32>
    %c0_321 = arith.constant 0 : index
    %c0_322 = arith.constant 0 : index
    %716 = vector.load %arg7[%c0_321, %c0_322] : memref<64x256xf32, #tpu.memory_space<vmem>>, vector<64x256xf32>
    %cst_323 = arith.constant dense<0.000000e+00> : vector<8x256xf32>
    %717 = tpu.matmul %630, %716, %cst_323 {dimension_numbers = #tpu.dot_dimension_numbers<[1], [0], [0], [1], [0, 0, 1, 1], [], []>} : vector<8x64xf32>, vector<64x256xf32>, vector<8x256xf32> -> vector<8x256xf32>
    %718 = arith.addf %715, %717 : vector<8x256xf32>
    %719 = arith.addf %718, %14 : vector<8x256xf32>
    %720 = math.tanh %719 : vector<8x256xf32>
    %721 = vector.extract_strided_slice %720 {offsets = [0, 0], sizes = [8, 64], strides = [1, 1]} : vector<8x256xf32> to vector<8x64xf32>
    %cst_324 = arith.constant 5.000000e-01 : f32
    %722 = vector.broadcast %cst_324 : f32 to vector<8x64xf32>
    %723 = arith.mulf %721, %722 : vector<8x64xf32>
    %cst_325 = arith.constant 5.000000e-01 : f32
    %724 = vector.broadcast %cst_325 : f32 to vector<8x64xf32>
    %725 = arith.addf %723, %724 : vector<8x64xf32>
    %726 = vector.extract_strided_slice %720 {offsets = [0, 64], sizes = [8, 64], strides = [1, 1]} : vector<8x256xf32> to vector<8x64xf32>
    %cst_326 = arith.constant 5.000000e-01 : f32
    %727 = vector.broadcast %cst_326 : f32 to vector<8x64xf32>
    %728 = arith.mulf %726, %727 : vector<8x64xf32>
    %cst_327 = arith.constant 5.000000e-01 : f32
    %729 = vector.broadcast %cst_327 : f32 to vector<8x64xf32>
    %730 = arith.addf %728, %729 : vector<8x64xf32>
    %731 = vector.extract_strided_slice %720 {offsets = [0, 128], sizes = [8, 64], strides = [1, 1]} : vector<8x256xf32> to vector<8x64xf32>
    %732 = vector.extract_strided_slice %720 {offsets = [0, 192], sizes = [8, 64], strides = [1, 1]} : vector<8x256xf32> to vector<8x64xf32>
    %cst_328 = arith.constant 5.000000e-01 : f32
    %733 = vector.broadcast %cst_328 : f32 to vector<8x64xf32>
    %734 = arith.mulf %732, %733 : vector<8x64xf32>
    %cst_329 = arith.constant 5.000000e-01 : f32
    %735 = vector.broadcast %cst_329 : f32 to vector<8x64xf32>
    %736 = arith.addf %734, %735 : vector<8x64xf32>
    %737 = arith.mulf %730, %628 : vector<8x64xf32>
    %738 = arith.mulf %725, %731 : vector<8x64xf32>
    %739 = arith.addf %737, %738 : vector<8x64xf32>
    %740 = math.tanh %739 : vector<8x64xf32>
    %741 = arith.mulf %736, %740 : vector<8x64xf32>
    %c0_330 = arith.constant 0 : index
    %c0_331 = arith.constant 0 : index
    %742 = vector.load %arg9[%c0_330, %c0_331] : memref<64x256xf32, #tpu.memory_space<vmem>>, vector<64x256xf32>
    %cst_332 = arith.constant dense<0.000000e+00> : vector<8x256xf32>
    %743 = tpu.matmul %741, %742, %cst_332 {dimension_numbers = #tpu.dot_dimension_numbers<[1], [0], [0], [1], [0, 0, 1, 1], [], []>} : vector<8x64xf32>, vector<64x256xf32>, vector<8x256xf32> -> vector<8x256xf32>
    %c0_333 = arith.constant 0 : index
    %c0_334 = arith.constant 0 : index
    %744 = vector.load %arg10[%c0_333, %c0_334] : memref<64x256xf32, #tpu.memory_space<vmem>>, vector<64x256xf32>
    %cst_335 = arith.constant dense<0.000000e+00> : vector<8x256xf32>
    %745 = tpu.matmul %658, %744, %cst_335 {dimension_numbers = #tpu.dot_dimension_numbers<[1], [0], [0], [1], [0, 0, 1, 1], [], []>} : vector<8x64xf32>, vector<64x256xf32>, vector<8x256xf32> -> vector<8x256xf32>
    %746 = arith.addf %743, %745 : vector<8x256xf32>
    %747 = arith.addf %746, %17 : vector<8x256xf32>
    %748 = math.tanh %747 : vector<8x256xf32>
    %749 = vector.extract_strided_slice %748 {offsets = [0, 0], sizes = [8, 64], strides = [1, 1]} : vector<8x256xf32> to vector<8x64xf32>
    %cst_336 = arith.constant 5.000000e-01 : f32
    %750 = vector.broadcast %cst_336 : f32 to vector<8x64xf32>
    %751 = arith.mulf %749, %750 : vector<8x64xf32>
    %cst_337 = arith.constant 5.000000e-01 : f32
    %752 = vector.broadcast %cst_337 : f32 to vector<8x64xf32>
    %753 = arith.addf %751, %752 : vector<8x64xf32>
    %754 = vector.extract_strided_slice %748 {offsets = [0, 64], sizes = [8, 64], strides = [1, 1]} : vector<8x256xf32> to vector<8x64xf32>
    %cst_338 = arith.constant 5.000000e-01 : f32
    %755 = vector.broadcast %cst_338 : f32 to vector<8x64xf32>
    %756 = arith.mulf %754, %755 : vector<8x64xf32>
    %cst_339 = arith.constant 5.000000e-01 : f32
    %757 = vector.broadcast %cst_339 : f32 to vector<8x64xf32>
    %758 = arith.addf %756, %757 : vector<8x64xf32>
    %759 = vector.extract_strided_slice %748 {offsets = [0, 128], sizes = [8, 64], strides = [1, 1]} : vector<8x256xf32> to vector<8x64xf32>
    %760 = vector.extract_strided_slice %748 {offsets = [0, 192], sizes = [8, 64], strides = [1, 1]} : vector<8x256xf32> to vector<8x64xf32>
    %cst_340 = arith.constant 5.000000e-01 : f32
    %761 = vector.broadcast %cst_340 : f32 to vector<8x64xf32>
    %762 = arith.mulf %760, %761 : vector<8x64xf32>
    %cst_341 = arith.constant 5.000000e-01 : f32
    %763 = vector.broadcast %cst_341 : f32 to vector<8x64xf32>
    %764 = arith.addf %762, %763 : vector<8x64xf32>
    %765 = arith.mulf %758, %656 : vector<8x64xf32>
    %766 = arith.mulf %753, %759 : vector<8x64xf32>
    %767 = arith.addf %765, %766 : vector<8x64xf32>
    %768 = math.tanh %767 : vector<8x64xf32>
    %769 = arith.mulf %764, %768 : vector<8x64xf32>
    %c0_342 = arith.constant 0 : index
    %c0_343 = arith.constant 0 : index
    %770 = vector.load %arg12[%c0_342, %c0_343] : memref<64x256xf32, #tpu.memory_space<vmem>>, vector<64x256xf32>
    %cst_344 = arith.constant dense<0.000000e+00> : vector<8x256xf32>
    %771 = tpu.matmul %769, %770, %cst_344 {dimension_numbers = #tpu.dot_dimension_numbers<[1], [0], [0], [1], [0, 0, 1, 1], [], []>} : vector<8x64xf32>, vector<64x256xf32>, vector<8x256xf32> -> vector<8x256xf32>
    %c0_345 = arith.constant 0 : index
    %c0_346 = arith.constant 0 : index
    %772 = vector.load %arg13[%c0_345, %c0_346] : memref<64x256xf32, #tpu.memory_space<vmem>>, vector<64x256xf32>
    %cst_347 = arith.constant dense<0.000000e+00> : vector<8x256xf32>
    %773 = tpu.matmul %686, %772, %cst_347 {dimension_numbers = #tpu.dot_dimension_numbers<[1], [0], [0], [1], [0, 0, 1, 1], [], []>} : vector<8x64xf32>, vector<64x256xf32>, vector<8x256xf32> -> vector<8x256xf32>
    %774 = arith.addf %771, %773 : vector<8x256xf32>
    %775 = arith.addf %774, %20 : vector<8x256xf32>
    %776 = math.tanh %775 : vector<8x256xf32>
    %777 = vector.extract_strided_slice %776 {offsets = [0, 0], sizes = [8, 64], strides = [1, 1]} : vector<8x256xf32> to vector<8x64xf32>
    %cst_348 = arith.constant 5.000000e-01 : f32
    %778 = vector.broadcast %cst_348 : f32 to vector<8x64xf32>
    %779 = arith.mulf %777, %778 : vector<8x64xf32>
    %cst_349 = arith.constant 5.000000e-01 : f32
    %780 = vector.broadcast %cst_349 : f32 to vector<8x64xf32>
    %781 = arith.addf %779, %780 : vector<8x64xf32>
    %782 = vector.extract_strided_slice %776 {offsets = [0, 64], sizes = [8, 64], strides = [1, 1]} : vector<8x256xf32> to vector<8x64xf32>
    %cst_350 = arith.constant 5.000000e-01 : f32
    %783 = vector.broadcast %cst_350 : f32 to vector<8x64xf32>
    %784 = arith.mulf %782, %783 : vector<8x64xf32>
    %cst_351 = arith.constant 5.000000e-01 : f32
    %785 = vector.broadcast %cst_351 : f32 to vector<8x64xf32>
    %786 = arith.addf %784, %785 : vector<8x64xf32>
    %787 = vector.extract_strided_slice %776 {offsets = [0, 128], sizes = [8, 64], strides = [1, 1]} : vector<8x256xf32> to vector<8x64xf32>
    %788 = vector.extract_strided_slice %776 {offsets = [0, 192], sizes = [8, 64], strides = [1, 1]} : vector<8x256xf32> to vector<8x64xf32>
    %cst_352 = arith.constant 5.000000e-01 : f32
    %789 = vector.broadcast %cst_352 : f32 to vector<8x64xf32>
    %790 = arith.mulf %788, %789 : vector<8x64xf32>
    %cst_353 = arith.constant 5.000000e-01 : f32
    %791 = vector.broadcast %cst_353 : f32 to vector<8x64xf32>
    %792 = arith.addf %790, %791 : vector<8x64xf32>
    %793 = arith.mulf %786, %684 : vector<8x64xf32>
    %794 = arith.mulf %781, %787 : vector<8x64xf32>
    %795 = arith.addf %793, %794 : vector<8x64xf32>
    %796 = math.tanh %795 : vector<8x64xf32>
    %797 = arith.mulf %792, %796 : vector<8x64xf32>
    %c48_354 = arith.constant 48 : index
    %c0_355 = arith.constant 0 : index
    %798 = vector.load %arg17[%c48_354, %c0_355] : memref<64x64xf32, #tpu.memory_space<vmem>>, vector<8x64xf32>
    tpu.vector_store %arg17[%c48_354, %c0_355], %797 {strides = array<i32>} : memref<64x64xf32, #tpu.memory_space<vmem>>, vector<8x64xf32>,
    %c56 = arith.constant 56 : index
    %c0_356 = arith.constant 0 : index
    %799 = vector.load %arg18[%c56, %c0_356] : memref<64x256xf32, #tpu.memory_space<vmem>>, vector<8x256xf32>
    %c0_357 = arith.constant 0 : index
    %c0_358 = arith.constant 0 : index
    %800 = vector.load %arg4[%c0_357, %c0_358] : memref<64x256xf32, #tpu.memory_space<vmem>>, vector<64x256xf32>
    %cst_359 = arith.constant dense<0.000000e+00> : vector<8x256xf32>
    %801 = tpu.matmul %713, %800, %cst_359 {dimension_numbers = #tpu.dot_dimension_numbers<[1], [0], [0], [1], [0, 0, 1, 1], [], []>} : vector<8x64xf32>, vector<64x256xf32>, vector<8x256xf32> -> vector<8x256xf32>
    %802 = arith.addf %799, %801 : vector<8x256xf32>
    %803 = math.tanh %802 : vector<8x256xf32>
    %804 = vector.extract_strided_slice %803 {offsets = [0, 0], sizes = [8, 64], strides = [1, 1]} : vector<8x256xf32> to vector<8x64xf32>
    %cst_360 = arith.constant 5.000000e-01 : f32
    %805 = vector.broadcast %cst_360 : f32 to vector<8x64xf32>
    %806 = arith.mulf %804, %805 : vector<8x64xf32>
    %cst_361 = arith.constant 5.000000e-01 : f32
    %807 = vector.broadcast %cst_361 : f32 to vector<8x64xf32>
    %808 = arith.addf %806, %807 : vector<8x64xf32>
    %809 = vector.extract_strided_slice %803 {offsets = [0, 64], sizes = [8, 64], strides = [1, 1]} : vector<8x256xf32> to vector<8x64xf32>
    %cst_362 = arith.constant 5.000000e-01 : f32
    %810 = vector.broadcast %cst_362 : f32 to vector<8x64xf32>
    %811 = arith.mulf %809, %810 : vector<8x64xf32>
    %cst_363 = arith.constant 5.000000e-01 : f32
    %812 = vector.broadcast %cst_363 : f32 to vector<8x64xf32>
    %813 = arith.addf %811, %812 : vector<8x64xf32>
    %814 = vector.extract_strided_slice %803 {offsets = [0, 128], sizes = [8, 64], strides = [1, 1]} : vector<8x256xf32> to vector<8x64xf32>
    %815 = vector.extract_strided_slice %803 {offsets = [0, 192], sizes = [8, 64], strides = [1, 1]} : vector<8x256xf32> to vector<8x64xf32>
    %cst_364 = arith.constant 5.000000e-01 : f32
    %816 = vector.broadcast %cst_364 : f32 to vector<8x64xf32>
    %817 = arith.mulf %815, %816 : vector<8x64xf32>
    %cst_365 = arith.constant 5.000000e-01 : f32
    %818 = vector.broadcast %cst_365 : f32 to vector<8x64xf32>
    %819 = arith.addf %817, %818 : vector<8x64xf32>
    %820 = arith.mulf %813, %711 : vector<8x64xf32>
    %821 = arith.mulf %808, %814 : vector<8x64xf32>
    %822 = arith.addf %820, %821 : vector<8x64xf32>
    %823 = math.tanh %822 : vector<8x64xf32>
    %824 = arith.mulf %819, %823 : vector<8x64xf32>
    %c0_366 = arith.constant 0 : index
    %c0_367 = arith.constant 0 : index
    %825 = vector.load %arg6[%c0_366, %c0_367] : memref<64x256xf32, #tpu.memory_space<vmem>>, vector<64x256xf32>
    %cst_368 = arith.constant dense<0.000000e+00> : vector<8x256xf32>
    %826 = tpu.matmul %824, %825, %cst_368 {dimension_numbers = #tpu.dot_dimension_numbers<[1], [0], [0], [1], [0, 0, 1, 1], [], []>} : vector<8x64xf32>, vector<64x256xf32>, vector<8x256xf32> -> vector<8x256xf32>
    %c0_369 = arith.constant 0 : index
    %c0_370 = arith.constant 0 : index
    %827 = vector.load %arg7[%c0_369, %c0_370] : memref<64x256xf32, #tpu.memory_space<vmem>>, vector<64x256xf32>
    %cst_371 = arith.constant dense<0.000000e+00> : vector<8x256xf32>
    %828 = tpu.matmul %741, %827, %cst_371 {dimension_numbers = #tpu.dot_dimension_numbers<[1], [0], [0], [1], [0, 0, 1, 1], [], []>} : vector<8x64xf32>, vector<64x256xf32>, vector<8x256xf32> -> vector<8x256xf32>
    %829 = arith.addf %826, %828 : vector<8x256xf32>
    %830 = arith.addf %829, %14 : vector<8x256xf32>
    %831 = math.tanh %830 : vector<8x256xf32>
    %832 = vector.extract_strided_slice %831 {offsets = [0, 0], sizes = [8, 64], strides = [1, 1]} : vector<8x256xf32> to vector<8x64xf32>
    %cst_372 = arith.constant 5.000000e-01 : f32
    %833 = vector.broadcast %cst_372 : f32 to vector<8x64xf32>
    %834 = arith.mulf %832, %833 : vector<8x64xf32>
    %cst_373 = arith.constant 5.000000e-01 : f32
    %835 = vector.broadcast %cst_373 : f32 to vector<8x64xf32>
    %836 = arith.addf %834, %835 : vector<8x64xf32>
    %837 = vector.extract_strided_slice %831 {offsets = [0, 64], sizes = [8, 64], strides = [1, 1]} : vector<8x256xf32> to vector<8x64xf32>
    %cst_374 = arith.constant 5.000000e-01 : f32
    %838 = vector.broadcast %cst_374 : f32 to vector<8x64xf32>
    %839 = arith.mulf %837, %838 : vector<8x64xf32>
    %cst_375 = arith.constant 5.000000e-01 : f32
    %840 = vector.broadcast %cst_375 : f32 to vector<8x64xf32>
    %841 = arith.addf %839, %840 : vector<8x64xf32>
    %842 = vector.extract_strided_slice %831 {offsets = [0, 128], sizes = [8, 64], strides = [1, 1]} : vector<8x256xf32> to vector<8x64xf32>
    %843 = vector.extract_strided_slice %831 {offsets = [0, 192], sizes = [8, 64], strides = [1, 1]} : vector<8x256xf32> to vector<8x64xf32>
    %cst_376 = arith.constant 5.000000e-01 : f32
    %844 = vector.broadcast %cst_376 : f32 to vector<8x64xf32>
    %845 = arith.mulf %843, %844 : vector<8x64xf32>
    %cst_377 = arith.constant 5.000000e-01 : f32
    %846 = vector.broadcast %cst_377 : f32 to vector<8x64xf32>
    %847 = arith.addf %845, %846 : vector<8x64xf32>
    %848 = arith.mulf %841, %739 : vector<8x64xf32>
    %849 = arith.mulf %836, %842 : vector<8x64xf32>
    %850 = arith.addf %848, %849 : vector<8x64xf32>
    %851 = math.tanh %850 : vector<8x64xf32>
    %852 = arith.mulf %847, %851 : vector<8x64xf32>
    %c0_378 = arith.constant 0 : index
    %c0_379 = arith.constant 0 : index
    %853 = vector.load %arg9[%c0_378, %c0_379] : memref<64x256xf32, #tpu.memory_space<vmem>>, vector<64x256xf32>
    %cst_380 = arith.constant dense<0.000000e+00> : vector<8x256xf32>
    %854 = tpu.matmul %852, %853, %cst_380 {dimension_numbers = #tpu.dot_dimension_numbers<[1], [0], [0], [1], [0, 0, 1, 1], [], []>} : vector<8x64xf32>, vector<64x256xf32>, vector<8x256xf32> -> vector<8x256xf32>
    %c0_381 = arith.constant 0 : index
    %c0_382 = arith.constant 0 : index
    %855 = vector.load %arg10[%c0_381, %c0_382] : memref<64x256xf32, #tpu.memory_space<vmem>>, vector<64x256xf32>
    %cst_383 = arith.constant dense<0.000000e+00> : vector<8x256xf32>
    %856 = tpu.matmul %769, %855, %cst_383 {dimension_numbers = #tpu.dot_dimension_numbers<[1], [0], [0], [1], [0, 0, 1, 1], [], []>} : vector<8x64xf32>, vector<64x256xf32>, vector<8x256xf32> -> vector<8x256xf32>
    %857 = arith.addf %854, %856 : vector<8x256xf32>
    %858 = arith.addf %857, %17 : vector<8x256xf32>
    %859 = math.tanh %858 : vector<8x256xf32>
    %860 = vector.extract_strided_slice %859 {offsets = [0, 0], sizes = [8, 64], strides = [1, 1]} : vector<8x256xf32> to vector<8x64xf32>
    %cst_384 = arith.constant 5.000000e-01 : f32
    %861 = vector.broadcast %cst_384 : f32 to vector<8x64xf32>
    %862 = arith.mulf %860, %861 : vector<8x64xf32>
    %cst_385 = arith.constant 5.000000e-01 : f32
    %863 = vector.broadcast %cst_385 : f32 to vector<8x64xf32>
    %864 = arith.addf %862, %863 : vector<8x64xf32>
    %865 = vector.extract_strided_slice %859 {offsets = [0, 64], sizes = [8, 64], strides = [1, 1]} : vector<8x256xf32> to vector<8x64xf32>
    %cst_386 = arith.constant 5.000000e-01 : f32
    %866 = vector.broadcast %cst_386 : f32 to vector<8x64xf32>
    %867 = arith.mulf %865, %866 : vector<8x64xf32>
    %cst_387 = arith.constant 5.000000e-01 : f32
    %868 = vector.broadcast %cst_387 : f32 to vector<8x64xf32>
    %869 = arith.addf %867, %868 : vector<8x64xf32>
    %870 = vector.extract_strided_slice %859 {offsets = [0, 128], sizes = [8, 64], strides = [1, 1]} : vector<8x256xf32> to vector<8x64xf32>
    %871 = vector.extract_strided_slice %859 {offsets = [0, 192], sizes = [8, 64], strides = [1, 1]} : vector<8x256xf32> to vector<8x64xf32>
    %cst_388 = arith.constant 5.000000e-01 : f32
    %872 = vector.broadcast %cst_388 : f32 to vector<8x64xf32>
    %873 = arith.mulf %871, %872 : vector<8x64xf32>
    %cst_389 = arith.constant 5.000000e-01 : f32
    %874 = vector.broadcast %cst_389 : f32 to vector<8x64xf32>
    %875 = arith.addf %873, %874 : vector<8x64xf32>
    %876 = arith.mulf %869, %767 : vector<8x64xf32>
    %877 = arith.mulf %864, %870 : vector<8x64xf32>
    %878 = arith.addf %876, %877 : vector<8x64xf32>
    %879 = math.tanh %878 : vector<8x64xf32>
    %880 = arith.mulf %875, %879 : vector<8x64xf32>
    %c0_390 = arith.constant 0 : index
    %c0_391 = arith.constant 0 : index
    %881 = vector.load %arg12[%c0_390, %c0_391] : memref<64x256xf32, #tpu.memory_space<vmem>>, vector<64x256xf32>
    %cst_392 = arith.constant dense<0.000000e+00> : vector<8x256xf32>
    %882 = tpu.matmul %880, %881, %cst_392 {dimension_numbers = #tpu.dot_dimension_numbers<[1], [0], [0], [1], [0, 0, 1, 1], [], []>} : vector<8x64xf32>, vector<64x256xf32>, vector<8x256xf32> -> vector<8x256xf32>
    %c0_393 = arith.constant 0 : index
    %c0_394 = arith.constant 0 : index
    %883 = vector.load %arg13[%c0_393, %c0_394] : memref<64x256xf32, #tpu.memory_space<vmem>>, vector<64x256xf32>
    %cst_395 = arith.constant dense<0.000000e+00> : vector<8x256xf32>
    %884 = tpu.matmul %797, %883, %cst_395 {dimension_numbers = #tpu.dot_dimension_numbers<[1], [0], [0], [1], [0, 0, 1, 1], [], []>} : vector<8x64xf32>, vector<64x256xf32>, vector<8x256xf32> -> vector<8x256xf32>
    %885 = arith.addf %882, %884 : vector<8x256xf32>
    %886 = arith.addf %885, %20 : vector<8x256xf32>
    %887 = math.tanh %886 : vector<8x256xf32>
    %888 = vector.extract_strided_slice %887 {offsets = [0, 0], sizes = [8, 64], strides = [1, 1]} : vector<8x256xf32> to vector<8x64xf32>
    %cst_396 = arith.constant 5.000000e-01 : f32
    %889 = vector.broadcast %cst_396 : f32 to vector<8x64xf32>
    %890 = arith.mulf %888, %889 : vector<8x64xf32>
    %cst_397 = arith.constant 5.000000e-01 : f32
    %891 = vector.broadcast %cst_397 : f32 to vector<8x64xf32>
    %892 = arith.addf %890, %891 : vector<8x64xf32>
    %893 = vector.extract_strided_slice %887 {offsets = [0, 64], sizes = [8, 64], strides = [1, 1]} : vector<8x256xf32> to vector<8x64xf32>
    %cst_398 = arith.constant 5.000000e-01 : f32
    %894 = vector.broadcast %cst_398 : f32 to vector<8x64xf32>
    %895 = arith.mulf %893, %894 : vector<8x64xf32>
    %cst_399 = arith.constant 5.000000e-01 : f32
    %896 = vector.broadcast %cst_399 : f32 to vector<8x64xf32>
    %897 = arith.addf %895, %896 : vector<8x64xf32>
    %898 = vector.extract_strided_slice %887 {offsets = [0, 128], sizes = [8, 64], strides = [1, 1]} : vector<8x256xf32> to vector<8x64xf32>
    %899 = vector.extract_strided_slice %887 {offsets = [0, 192], sizes = [8, 64], strides = [1, 1]} : vector<8x256xf32> to vector<8x64xf32>
    %cst_400 = arith.constant 5.000000e-01 : f32
    %900 = vector.broadcast %cst_400 : f32 to vector<8x64xf32>
    %901 = arith.mulf %899, %900 : vector<8x64xf32>
    %cst_401 = arith.constant 5.000000e-01 : f32
    %902 = vector.broadcast %cst_401 : f32 to vector<8x64xf32>
    %903 = arith.addf %901, %902 : vector<8x64xf32>
    %904 = arith.mulf %897, %795 : vector<8x64xf32>
    %905 = arith.mulf %892, %898 : vector<8x64xf32>
    %906 = arith.addf %904, %905 : vector<8x64xf32>
    %907 = math.tanh %906 : vector<8x64xf32>
    %908 = arith.mulf %903, %907 : vector<8x64xf32>
    %c56_402 = arith.constant 56 : index
    %c0_403 = arith.constant 0 : index
    %909 = vector.load %arg17[%c56_402, %c0_403] : memref<64x64xf32, #tpu.memory_space<vmem>>, vector<8x64xf32>
    tpu.vector_store %arg17[%c56_402, %c0_403], %908 {strides = array<i32>} : memref<64x64xf32, #tpu.memory_space<vmem>>, vector<8x64xf32>,
    %c0_404 = arith.constant 0 : index
    %c0_405 = arith.constant 0 : index
    %910 = vector.load %arg17[%c0_404, %c0_405] : memref<64x64xf32, #tpu.memory_space<vmem>>, vector<64x64xf32>
    %c0_406 = arith.constant 0 : index
    %c0_407 = arith.constant 0 : index
    %911 = vector.load %arg15[%c0_406, %c0_407] : memref<64x64xf32, #tpu.memory_space<vmem>>, vector<64x64xf32>
    %cst_408 = arith.constant dense<0.000000e+00> : vector<64x64xf32>
    %912 = tpu.matmul %910, %911, %cst_408 {dimension_numbers = #tpu.dot_dimension_numbers<[1], [0], [0], [1], [0, 0, 1, 1], [], []>} : vector<64x64xf32>, vector<64x64xf32>, vector<64x64xf32> -> vector<64x64xf32>
    %c0_409 = arith.constant 0 : index
    %c0_410 = arith.constant 0 : index
    %913 = vector.load %arg16[%c0_409, %c0_410] : memref<1x64xf32, #tpu.memory_space<vmem>>, vector<1x64xf32>
    %914 = vector.broadcast %913 : vector<1x64xf32> to vector<64x64xf32>
    %915 = arith.addf %912, %914 : vector<64x64xf32>
    %c0_411 = arith.constant 0 : index
    %c0_412 = arith.constant 0 : index
    %916 = vector.load %arg17[%c0_411, %c0_412] : memref<64x64xf32, #tpu.memory_space<vmem>>, vector<64x64xf32>
    tpu.vector_store %arg17[%c0_411, %c0_412], %915 {strides = array<i32>} : memref<64x64xf32, #tpu.memory_space<vmem>>, vector<64x64xf32>,
    return
  }
}

</mosaic_0001>

<llo_original>
// kernel: tpu_custom_call.1
$region0: #{tpu_custom_call.1}
  #allocation0 [shape = 'u32[]', space=smem, size = 0x4, offset = 0x4, fixed_abs, tag = 'smem constant byte address 0x4 - core index']
  #allocation1 [shape = 'u32[144,128]{1,0:T(1,128)}', space=vmem, size = 0x12000, scoped, tag = 'internal scratch']
  #allocation2 [shape = 'f32[64,256]{1,0:T(8,128)}', space=vmem, size = 0x10000, scoped, tag = 'scratch operand']
  %s0 = inlined_call_operand.hbm [shape: f32[64,64], index: 0, kind: input, shape index: {}]
  %s1 = inlined_call_operand.hbm [shape: f32[64,64], index: 1, kind: input, shape index: {}]
  %s2 = inlined_call_operand.vmem [shape: f32[1,64], index: 2, kind: input, shape index: {}]
  %s3 = inlined_call_operand.hbm [shape: f32[64,256], index: 3, kind: input, shape index: {}]
  %s4 = inlined_call_operand.hbm [shape: f32[64,256], index: 4, kind: input, shape index: {}]
  %s5 = inlined_call_operand.vmem [shape: f32[1,256], index: 5, kind: input, shape index: {}]
  %s6 = inlined_call_operand.hbm [shape: f32[64,256], index: 6, kind: input, shape index: {}]
  %s7 = inlined_call_operand.hbm [shape: f32[64,256], index: 7, kind: input, shape index: {}]
  %s8 = inlined_call_operand.vmem [shape: f32[1,256], index: 8, kind: input, shape index: {}]
  %s9 = inlined_call_operand.hbm [shape: f32[64,256], index: 9, kind: input, shape index: {}]
  %s10 = inlined_call_operand.hbm [shape: f32[64,256], index: 10, kind: input, shape index: {}]
  %s11 = inlined_call_operand.vmem [shape: f32[1,256], index: 11, kind: input, shape index: {}]
  %s12 = inlined_call_operand.hbm [shape: f32[64,256], index: 12, kind: input, shape index: {}]
  %s13 = inlined_call_operand.hbm [shape: f32[64,256], index: 13, kind: input, shape index: {}]
  %s14 = inlined_call_operand.vmem [shape: f32[1,256], index: 14, kind: input, shape index: {}]
  %s15 = inlined_call_operand.hbm [shape: f32[64,64], index: 15, kind: input, shape index: {}]
  %s16 = inlined_call_operand.vmem [shape: f32[1,64], index: 16, kind: input, shape index: {}]
  %s17 = inlined_call_operand.hbm [shape: f32[64,64], index: 17, kind: output, shape index: {}]
  %s18 = sld [smem:[#allocation0]]
  $region122: #{tpu_custom_call.1} parent=0
    _
  %s20 = ssub.s32 1, %s18
  %s21 = scalar_select 0, %s20, %s18
  $region1: #{tpu_custom_call.1} parent=0
    #allocation3 [shape = 'u8[32768]{0}', space=vmem, size = 0x8000, scoped, tag = 'input window, operand 0, single buffered']
    #allocation4 [shape = 's32[1]{0}', space=sflag, size = 0x4, scoped, tag = 'scoped memory for tpu_custom_call.1']
    #allocation5 [shape = 's32[1]{0}', space=sflag, size = 0x4, scoped, tag = 'scoped memory for tpu_custom_call.1']
    #allocation6 [shape = 'u8[32768]{0}', space=vmem, size = 0x8000, scoped, tag = 'input window, operand 1, single buffered']
    #allocation7 [shape = 's32[1]{0}', space=sflag, size = 0x4, scoped, tag = 'scoped memory for tpu_custom_call.1']
    #allocation8 [shape = 'u8[65536]{0}', space=vmem, size = 0x10000, scoped, tag = 'input window, operand 3, single buffered']
    #allocation9 [shape = 'u8[65536]{0}', space=vmem, size = 0x10000, scoped, tag = 'input window, operand 4, single buffered']
    #allocation10 [shape = 's32[1]{0}', space=sflag, size = 0x4, scoped, tag = 'scoped memory for tpu_custom_call.1']
    #allocation11 [shape = 'u8[65536]{0}', space=vmem, size = 0x10000, scoped, tag = 'input window, operand 6, single buffered']
    #allocation12 [shape = 'u8[65536]{0}', space=vmem, size = 0x10000, scoped, tag = 'input window, operand 7, single buffered']
    #allocation13 [shape = 's32[1]{0}', space=sflag, size = 0x4, scoped, tag = 'scoped memory for tpu_custom_call.1']
    #allocation14 [shape = 'u8[65536]{0}', space=vmem, size = 0x10000, scoped, tag = 'input window, operand 9, single buffered']
    #allocation15 [shape = 'u8[65536]{0}', space=vmem, size = 0x10000, scoped, tag = 'input window, operand 10, single buffered']
    #allocation16 [shape = 's32[1]{0}', space=sflag, size = 0x4, scoped, tag = 'scoped memory for tpu_custom_call.1']
    #allocation17 [shape = 'u8[65536]{0}', space=vmem, size = 0x10000, scoped, tag = 'input window, operand 12, single buffered']
    #allocation18 [shape = 'u8[65536]{0}', space=vmem, size = 0x10000, scoped, tag = 'input window, operand 13, single buffered']
    #allocation19 [shape = 's32[1]{0}', space=sflag, size = 0x4, scoped, tag = 'scoped memory for tpu_custom_call.1']
    #allocation20 [shape = 'u8[32768]{0}', space=vmem, size = 0x8000, scoped, tag = 'input window, operand 15, single buffered']
    #allocation21 [shape = 'u8[32768]{0}', space=vmem, size = 0x8000, scoped, tag = 'output window, operand 0, single buffered']
    %22 = vsyncpa [#allocation4], 0
    %23 = vsyncpa [#allocation7], 0
    %24 = vsyncpa [#allocation10], 0
    %25 = vsyncpa [#allocation13], 0
    %26 = vsyncpa [#allocation16], 0
    %27 = vsyncpa [#allocation19], 0
    %28 = vsyncpa [#allocation5], 0
    // Predicated region
    $region2: #{tpu_custom_call.1} parent=1 // pred_check
      _
    $region3: #{tpu_custom_call.1} parent=1 // pred_check_branch
      %30 = sbr.rel (0) target = $region5
    $region4: #{tpu_custom_call.1} parent=1 // pred_region
      %s32 = ssub.s32 1024, 1024
      %33 = vsyncadd [#allocation4], %s32
      %s34 = sshll.u32 [#allocation3], 4
      %s35 = int_to_ptr.vmem [resolvable:$true] %s34
      %40 = dma.hbm_to_vmem [thread:$0]  %s0, 1024, %s35, [#allocation4], 128, 128, 8
    $region5: #{tpu_custom_call.1} parent=1 // pred_fallthru
      _
    // Predicated region
    $region6: #{tpu_custom_call.1} parent=1 // pred_check
      _
    $region7: #{tpu_custom_call.1} parent=1 // pred_check_branch
      %42 = sbr.rel (0) target = $region9
    $region8: #{tpu_custom_call.1} parent=1 // pred_region
      %s44 = ssub.s32 1024, 1024
      %45 = vsyncadd [#allocation7], %s44
      %s46 = sshll.u32 [#allocation6], 4
      %s47 = int_to_ptr.vmem [resolvable:$true] %s46
      %52 = dma.hbm_to_vmem [thread:$0]  %s1, 1024, %s47, [#allocation7], 128, 128, 8
    $region9: #{tpu_custom_call.1} parent=1 // pred_fallthru
      _
    // Predicated region
    $region10: #{tpu_custom_call.1} parent=1 // pred_check
      _
    $region11: #{tpu_custom_call.1} parent=1 // pred_check_branch
      %54 = sbr.rel (0) target = $region13
    $region12: #{tpu_custom_call.1} parent=1 // pred_region
      _
    $region13: #{tpu_custom_call.1} parent=1 // pred_fallthru
      _
    // Predicated region
    $region14: #{tpu_custom_call.1} parent=1 // pred_check
      _
    $region15: #{tpu_custom_call.1} parent=1 // pred_check_branch
      %56 = sbr.rel (0) target = $region17
    $region16: #{tpu_custom_call.1} parent=1 // pred_region
      %s58 = ssub.s32 2048, 2048
      %59 = vsyncadd [#allocation7], %s58
      %s60 = sshll.u32 [#allocation8], 4
      %s61 = int_to_ptr.vmem [resolvable:$true] %s60
      %66 = dma.hbm_to_vmem [thread:$0]  %s3, 2048, %s61, [#allocation7], 256, 256, 16
    $region17: #{tpu_custom_call.1} parent=1 // pred_fallthru
      _
    // Predicated region
    $region18: #{tpu_custom_call.1} parent=1 // pred_check
      _
    $region19: #{tpu_custom_call.1} parent=1 // pred_check_branch
      %68 = sbr.rel (0) target = $region21
    $region20: #{tpu_custom_call.1} parent=1 // pred_region
      %s70 = ssub.s32 2048, 2048
      %71 = vsyncadd [#allocation10], %s70
      %s72 = sshll.u32 [#allocation9], 4
      %s73 = int_to_ptr.vmem [resolvable:$true] %s72
      %78 = dma.hbm_to_vmem [thread:$0]  %s4, 2048, %s73, [#allocation10], 256, 256, 16
    $region21: #{tpu_custom_call.1} parent=1 // pred_fallthru
      _
    // Predicated region
    $region22: #{tpu_custom_call.1} parent=1 // pred_check
      _
    $region23: #{tpu_custom_call.1} parent=1 // pred_check_branch
      %80 = sbr.rel (0) target = $region25
    $region24: #{tpu_custom_call.1} parent=1 // pred_region
      _
    $region25: #{tpu_custom_call.1} parent=1 // pred_fallthru
      _
    // Predicated region
    $region26: #{tpu_custom_call.1} parent=1 // pred_check
      _
    $region27: #{tpu_custom_call.1} parent=1 // pred_check_branch
      %82 = sbr.rel (0) target = $region29
    $region28: #{tpu_custom_call.1} parent=1 // pred_region
      %s84 = ssub.s32 2048, 2048
      %85 = vsyncadd [#allocation10], %s84
      %s86 = sshll.u32 [#allocation11], 4
      %s87 = int_to_ptr.vmem [resolvable:$true] %s86
      %92 = dma.hbm_to_vmem [thread:$0]  %s6, 2048, %s87, [#allocation10], 256, 256, 16
    $region29: #{tpu_custom_call.1} parent=1 // pred_fallthru
      _
    // Predicated region
    $region30: #{tpu_custom_call.1} parent=1 // pred_check
      _
    $region31: #{tpu_custom_call.1} parent=1 // pred_check_branch
      %94 = sbr.rel (0) target = $region33
    $region32: #{tpu_custom_call.1} parent=1 // pred_region
      %s96 = ssub.s32 2048, 2048
      %97 = vsyncadd [#allocation13], %s96
      %s98 = sshll.u32 [#allocation12], 4
      %s99 = int_to_ptr.vmem [resolvable:$true] %s98
      %104 = dma.hbm_to_vmem [thread:$0]  %s7, 2048, %s99, [#allocation13], 256, 256, 16
    $region33: #{tpu_custom_call.1} parent=1 // pred_fallthru
      _
    // Predicated region
    $region34: #{tpu_custom_call.1} parent=1 // pred_check
      _
    $region35: #{tpu_custom_call.1} parent=1 // pred_check_branch
      %106 = sbr.rel (0) target = $region37
    $region36: #{tpu_custom_call.1} parent=1 // pred_region
      _
    $region37: #{tpu_custom_call.1} parent=1 // pred_fallthru
      _
    // Predicated region
    $region38: #{tpu_custom_call.1} parent=1 // pred_check
      _
    $region39: #{tpu_custom_call.1} parent=1 // pred_check_branch
      %108 = sbr.rel (0) target = $region41
    $region40: #{tpu_custom_call.1} parent=1 // pred_region
      %s110 = ssub.s32 2048, 2048
      %111 = vsyncadd [#allocation13], %s110
      %s112 = sshll.u32 [#allocation14], 4
      %s113 = int_to_ptr.vmem [resolvable:$true] %s112
      %118 = dma.hbm_to_vmem [thread:$0]  %s9, 2048, %s113, [#allocation13], 256, 256, 16
    $region41: #{tpu_custom_call.1} parent=1 // pred_fallthru
      _
    // Predicated region
    $region42: #{tpu_custom_call.1} parent=1 // pred_check
      _
    $region43: #{tpu_custom_call.1} parent=1 // pred_check_branch
      %120 = sbr.rel (0) target = $region45
    $region44: #{tpu_custom_call.1} parent=1 // pred_region
      %s122 = ssub.s32 2048, 2048
      %123 = vsyncadd [#allocation16], %s122
      %s124 = sshll.u32 [#allocation15], 4
      %s125 = int_to_ptr.vmem [resolvable:$true] %s124
      %130 = dma.hbm_to_vmem [thread:$0]  %s10, 2048, %s125, [#allocation16], 256, 256, 16
    $region45: #{tpu_custom_call.1} parent=1 // pred_fallthru
      _
    // Predicated region
    $region46: #{tpu_custom_call.1} parent=1 // pred_check
      _
    $region47: #{tpu_custom_call.1} parent=1 // pred_check_branch
      %132 = sbr.rel (0) target = $region49
    $region48: #{tpu_custom_call.1} parent=1 // pred_region
      _
    $region49: #{tpu_custom_call.1} parent=1 // pred_fallthru
      _
    // Predicated region
    $region50: #{tpu_custom_call.1} parent=1 // pred_check
      _
    $region51: #{tpu_custom_call.1} parent=1 // pred_check_branch
      %134 = sbr.rel (0) target = $region53
    $region52: #{tpu_custom_call.1} parent=1 // pred_region
      %s136 = ssub.s32 2048, 2048
      %137 = vsyncadd [#allocation16], %s136
      %s138 = sshll.u32 [#allocation17], 4
      %s139 = int_to_ptr.vmem [resolvable:$true] %s138
      %144 = dma.hbm_to_vmem [thread:$0]  %s12, 2048, %s139, [#allocation16], 256, 256, 16
    $region53: #{tpu_custom_call.1} parent=1 // pred_fallthru
      _
    // Predicated region
    $region54: #{tpu_custom_call.1} parent=1 // pred_check
      _
    $region55: #{tpu_custom_call.1} parent=1 // pred_check_branch
      %146 = sbr.rel (0) target = $region57
    $region56: #{tpu_custom_call.1} parent=1 // pred_region
      %s148 = ssub.s32 2048, 2048
      %149 = vsyncadd [#allocation19], %s148
      %s150 = sshll.u32 [#allocation18], 4
      %s151 = int_to_ptr.vmem [resolvable:$true] %s150
      %156 = dma.hbm_to_vmem [thread:$0]  %s13, 2048, %s151, [#allocation19], 256, 256, 16
    $region57: #{tpu_custom_call.1} parent=1 // pred_fallthru
      _
    // Predicated region
    $region58: #{tpu_custom_call.1} parent=1 // pred_check
      _
    $region59: #{tpu_custom_call.1} parent=1 // pred_check_branch
      %158 = sbr.rel (0) target = $region61
    $region60: #{tpu_custom_call.1} parent=1 // pred_region
      _
    $region61: #{tpu_custom_call.1} parent=1 // pred_fallthru
      _
    // Predicated region
    $region62: #{tpu_custom_call.1} parent=1 // pred_check
      _
    $region63: #{tpu_custom_call.1} parent=1 // pred_check_branch
      %160 = sbr.rel (0) target = $region65
    $region64: #{tpu_custom_call.1} parent=1 // pred_region
      %s162 = ssub.s32 1024, 1024
      %163 = vsyncadd [#allocation19], %s162
      %s164 = sshll.u32 [#allocation20], 4
      %s165 = int_to_ptr.vmem [resolvable:$true] %s164
      %170 = dma.hbm_to_vmem [thread:$0]  %s15, 1024, %s165, [#allocation19], 128, 128, 8
    $region65: #{tpu_custom_call.1} parent=1 // pred_fallthru
      _
    // Predicated region
    $region66: #{tpu_custom_call.1} parent=1 // pred_check
      _
    $region67: #{tpu_custom_call.1} parent=1 // pred_check_branch
      %172 = sbr.rel (0) target = $region69
    $region68: #{tpu_custom_call.1} parent=1 // pred_region
      _
    $region69: #{tpu_custom_call.1} parent=1 // pred_fallthru
      _
    // Predicated region
    $region70: #{tpu_custom_call.1} parent=1 // pred_check
      _
    $region71: #{tpu_custom_call.1} parent=1 // pred_check_branch
      %174 = sbr.rel (0) target = $region73
    $region72: #{tpu_custom_call.1} parent=1 // pred_region
      %175 = dma.done [#allocation4], 1024
    $region73: #{tpu_custom_call.1} parent=1 // pred_fallthru
      _
    // Predicated region
    $region74: #{tpu_custom_call.1} parent=1 // pred_check
      _
    $region75: #{tpu_custom_call.1} parent=1 // pred_check_branch
      %177 = sbr.rel (0) target = $region77
    $region76: #{tpu_custom_call.1} parent=1 // pred_region
      %178 = dma.done [#allocation7], 1024
    $region77: #{tpu_custom_call.1} parent=1 // pred_fallthru
      _
    // Predicated region
    $region78: #{tpu_custom_call.1} parent=1 // pred_check
      _
    $region79: #{tpu_custom_call.1} parent=1 // pred_check_branch
      %180 = sbr.rel (0) target = $region81
    $region80: #{tpu_custom_call.1} parent=1 // pred_region
      %181 = dma.done [#allocation7], 2048
    $region81: #{tpu_custom_call.1} parent=1 // pred_fallthru
      _
    // Predicated region
    $region82: #{tpu_custom_call.1} parent=1 // pred_check
      _
    $region83: #{tpu_custom_call.1} parent=1 // pred_check_branch
      %183 = sbr.rel (0) target = $region85
    $region84: #{tpu_custom_call.1} parent=1 // pred_region
      %184 = dma.done [#allocation10], 2048
    $region85: #{tpu_custom_call.1} parent=1 // pred_fallthru
      _
    // Predicated region
    $region86: #{tpu_custom_call.1} parent=1 // pred_check
      _
    $region87: #{tpu_custom_call.1} parent=1 // pred_check_branch
      %186 = sbr.rel (0) target = $region89
    $region88: #{tpu_custom_call.1} parent=1 // pred_region
      %187 = dma.done [#allocation10], 2048
    $region89: #{tpu_custom_call.1} parent=1 // pred_fallthru
      _
    // Predicated region
    $region90: #{tpu_custom_call.1} parent=1 // pred_check
      _
    $region91: #{tpu_custom_call.1} parent=1 // pred_check_branch
      %189 = sbr.rel (0) target = $region93
    $region92: #{tpu_custom_call.1} parent=1 // pred_region
      %190 = dma.done [#allocation13], 2048
    $region93: #{tpu_custom_call.1} parent=1 // pred_fallthru
      _
    // Predicated region
    $region94: #{tpu_custom_call.1} parent=1 // pred_check
      _
    $region95: #{tpu_custom_call.1} parent=1 // pred_check_branch
      %192 = sbr.rel (0) target = $region97
    $region96: #{tpu_custom_call.1} parent=1 // pred_region
      %193 = dma.done [#allocation13], 2048
    $region97: #{tpu_custom_call.1} parent=1 // pred_fallthru
      _
    // Predicated region
    $region98: #{tpu_custom_call.1} parent=1 // pred_check
      _
    $region99: #{tpu_custom_call.1} parent=1 // pred_check_branch
      %195 = sbr.rel (0) target = $region101
    $region100: #{tpu_custom_call.1} parent=1 // pred_region
      %196 = dma.done [#allocation16], 2048
    $region101: #{tpu_custom_call.1} parent=1 // pred_fallthru
      _
    // Predicated region
    $region102: #{tpu_custom_call.1} parent=1 // pred_check
      _
    $region103: #{tpu_custom_call.1} parent=1 // pred_check_branch
      %198 = sbr.rel (0) target = $region105
    $region104: #{tpu_custom_call.1} parent=1 // pred_region
      %199 = dma.done [#allocation16], 2048
    $region105: #{tpu_custom_call.1} parent=1 // pred_fallthru
      _
    // Predicated region
    $region106: #{tpu_custom_call.1} parent=1 // pred_check
      _
    $region107: #{tpu_custom_call.1} parent=1 // pred_check_branch
      %201 = sbr.rel (0) target = $region109
    $region108: #{tpu_custom_call.1} parent=1 // pred_region
      %202 = dma.done [#allocation19], 2048
    $region109: #{tpu_custom_call.1} parent=1 // pred_fallthru
      _
    // Predicated region
    $region110: #{tpu_custom_call.1} parent=1 // pred_check
      _
    $region111: #{tpu_custom_call.1} parent=1 // pred_check_branch
      %204 = sbr.rel (0) target = $region113
    $region112: #{tpu_custom_call.1} parent=1 // pred_region
      %205 = dma.done [#allocation19], 1024
    $region113: #{tpu_custom_call.1} parent=1 // pred_fallthru
      _
    %v206 = vld [vmem:[#allocation3] sm:$0xff]
    %v207 = vld [vmem:[#allocation3 + $0x8] sm:$0xff]
    %v208 = vld [vmem:[#allocation3 + $0x10] sm:$0xff]
    %v209 = vld [vmem:[#allocation3 + $0x18] sm:$0xff]
    %v210 = vld [vmem:[#allocation3 + $0x20] sm:$0xff]
    %v211 = vld [vmem:[#allocation3 + $0x28] sm:$0xff]
    %v212 = vld [vmem:[#allocation3 + $0x30] sm:$0xff]
    %v213 = vld [vmem:[#allocation3 + $0x38] sm:$0xff]
    %v214 = vld [vmem:[#allocation6] sm:$0xff]
    %v215 = vld [vmem:[#allocation6 + $0x8] sm:$0xff]
    %v216 = vld [vmem:[#allocation6 + $0x10] sm:$0xff]
    %v217 = vld [vmem:[#allocation6 + $0x18] sm:$0xff]
    %v218 = vld [vmem:[#allocation6 + $0x20] sm:$0xff]
    %v219 = vld [vmem:[#allocation6 + $0x28] sm:$0xff]
    %v220 = vld [vmem:[#allocation6 + $0x30] sm:$0xff]
    %v221 = vld [vmem:[#allocation6 + $0x38] sm:$0xff]
    %v222 = vld [vmem:[%s2] sm:$0x1]
    %v224 = vlaneseq
    %v225 = vshrl.u32 %v224, 7
    %v226 = vsub.s32 0, %v225
    %v227 = vrot.slane %v222, %v226
    %vm229 = vcmask 523264
    %v231 = vsel %vm229, %v206, 0
    %v234 = vsel %vm229, %v207, 0
    %v237 = vsel %vm229, %v208, 0
    %v240 = vsel %vm229, %v209, 0
    %v243 = vsel %vm229, %v210, 0
    %v246 = vsel %vm229, %v211, 0
    %v249 = vsel %vm229, %v212, 0
    %v252 = vsel %vm229, %v213, 0
    %254 = vmatprep.subr.mxu0 0.0
    %255 = vmatpush1.msra.mxu0 %v214
    %256 = vmatprep.subr.mxu0 0.0
    %257 = vmatpush1.msra.mxu0 %v215
    %258 = vmatprep.subr.mxu0 0.0
    %259 = vmatpush1.msra.mxu0 %v216
    %260 = vmatprep.subr.mxu0 0.0
    %261 = vmatpush1.msra.mxu0 %v217
    %262 = vmatprep.subr.mxu0 0.0
    %263 = vmatpush1.msra.mxu0 %v218
    %264 = vmatprep.subr.mxu0 0.0
    %265 = vmatpush1.msra.mxu0 %v219
    %266 = vmatprep.subr.mxu0 0.0
    %267 = vmatpush1.msra.mxu0 %v220
    %268 = vmatprep.subr.mxu0 0.0
    %269 = vmatpush1.msra.mxu0 %v221
    %270 = vmatprep.subr.mxu0 0.0
    %271 = vmatpush1.msra.mxu0 0.0
    %272 = vmatprep.subr.mxu0 0.0
    %273 = vmatpush1.msra.mxu0 0.0
    %274 = vmatprep.subr.mxu0 0.0
    %275 = vmatpush1.msra.mxu0 0.0
    %276 = vmatprep.subr.mxu0 0.0
    %277 = vmatpush1.msra.mxu0 0.0
    %278 = vmatprep.subr.mxu0 0.0
    %279 = vmatpush1.msra.mxu0 0.0
    %280 = vmatprep.subr.mxu0 0.0
    %281 = vmatpush1.msra.mxu0 0.0
    %282 = vmatprep.subr.mxu0 0.0
    %283 = vmatpush1.msra.mxu0 0.0
    %284 = vmatprep.subr.mxu0 0.0
    %285 = vmatpush1.msra.mxu0 0.0
    %286 = vmatprep.subr.mxu0 0.0
    %287 = vmatpush1.msra.mxu0 0.0
    %288 = vmatprep.subr.mxu0 0.0
    %289 = vmatpush1.msra.mxu0 0.0
    %290 = vmatprep.subr.mxu0 0.0
    %291 = vmatpush1.msra.mxu0 0.0
    %292 = vmatprep.subr.mxu0 0.0
    %293 = vmatpush1.msra.mxu0 0.0
    %294 = vmatprep.subr.mxu0 0.0
    %295 = vmatpush1.msra.mxu0 0.0
    %296 = vmatprep.subr.mxu0 0.0
    %297 = vmatpush1.msra.mxu0 0.0
    %298 = vmatprep.subr.mxu0 0.0
    %299 = vmatpush1.msra.mxu0 0.0
    %300 = vmatprep.subr.mxu0 0.0
    %301 = vmatpush1.msra.mxu0 0.0
    %302 = vmatprep.subr.mxu0 0.0
    %303 = vmatpush1.msra.mxu0 0.0
    %304 = vmatprep.subr.mxu0 0.0
    %305 = vmatpush1.msra.mxu0 0.0
    %306 = vmatprep.subr.mxu0 0.0
    %307 = vmatpush1.msra.mxu0 0.0
    %308 = vmatprep.subr.mxu0 0.0
    %309 = vmatpush1.msra.mxu0 0.0
    %310 = vmatprep.subr.mxu0 0.0
    %311 = vmatpush1.msra.mxu0 0.0
    %312 = vmatprep.subr.mxu0 0.0
    %313 = vmatpush1.msra.mxu0 0.0
    %314 = vmatprep.subr.mxu0 0.0
    %315 = vmatpush1.msra.mxu0 0.0
    %316 = vmatprep.subr.mxu0 0.0
    %317 = vmatpush1.msra.mxu0 0.0
    %318 = vmatprep.mubr.f32.mxu0 0.0
    %319 = vmatmul.mubr.f32.gmra.mrb[0].mxu0 %v231
    %v320 = vpop.f32.mrb[0].mxu0
    %v321 = vadd.f32 %v227, %v320
    %v322 = vpop.f32.mrb[0].mxu0
    %323 = vmatprep.mubr.f32.mxu0 0.0
    %324 = vmatmul.mubr.f32.gmra.mrb[0].mxu0 %v234
    %v325 = vpop.f32.mrb[0].mxu0
    %v326 = vadd.f32 %v227, %v325
    %v327 = vpop.f32.mrb[0].mxu0
    %328 = vmatprep.mubr.f32.mxu0 0.0
    %329 = vmatmul.mubr.f32.gmra.mrb[0].mxu0 %v237
    %v330 = vpop.f32.mrb[0].mxu0
    %v331 = vadd.f32 %v227, %v330
    %v332 = vpop.f32.mrb[0].mxu0
    %333 = vmatprep.mubr.f32.mxu0 0.0
    %334 = vmatmul.mubr.f32.gmra.mrb[0].mxu0 %v240
    %v335 = vpop.f32.mrb[0].mxu0
    %v336 = vadd.f32 %v227, %v335
    %v337 = vpop.f32.mrb[0].mxu0
    %338 = vmatprep.mubr.f32.mxu0 0.0
    %339 = vmatmul.mubr.f32.gmra.mrb[0].mxu0 %v243
    %v340 = vpop.f32.mrb[0].mxu0
    %v341 = vadd.f32 %v227, %v340
    %v342 = vpop.f32.mrb[0].mxu0
    %343 = vmatprep.mubr.f32.mxu0 0.0
    %344 = vmatmul.mubr.f32.gmra.mrb[0].mxu0 %v246
    %v345 = vpop.f32.mrb[0].mxu0
    %v346 = vadd.f32 %v227, %v345
    %v347 = vpop.f32.mrb[0].mxu0
    %348 = vmatprep.mubr.f32.mxu0 0.0
    %349 = vmatmul.mubr.f32.gmra.mrb[0].mxu0 %v249
    %v350 = vpop.f32.mrb[0].mxu0
    %v351 = vadd.f32 %v227, %v350
    %v352 = vpop.f32.mrb[0].mxu0
    %353 = vmatprep.mubr.f32.mxu0 0.0
    %354 = vmatmul.mubr.f32.gmra.mrb[0].mxu0 %v252
    %v355 = vpop.f32.mrb[0].mxu0
    %v356 = vadd.f32 %v227, %v355
    %v357 = vpop.f32.mrb[0].mxu0
    %358 = vdwg.mxu0
    %v359 = vld [vmem:[#allocation8] sm:$0xff]
    %v360 = vld [vmem:[#allocation8 + $0x8] sm:$0xff]
    %v361 = vld [vmem:[#allocation8 + $0x10] sm:$0xff]
    %v362 = vld [vmem:[#allocation8 + $0x18] sm:$0xff]
    %v363 = vld [vmem:[#allocation8 + $0x20] sm:$0xff]
    %v364 = vld [vmem:[#allocation8 + $0x28] sm:$0xff]
    %v365 = vld [vmem:[#allocation8 + $0x30] sm:$0xff]
    %v366 = vld [vmem:[#allocation8 + $0x38] sm:$0xff]
    %v367 = vld [vmem:[#allocation8 + $0x40] sm:$0xff]
    %v368 = vld [vmem:[#allocation8 + $0x48] sm:$0xff]
    %v369 = vld [vmem:[#allocation8 + $0x50] sm:$0xff]
    %v370 = vld [vmem:[#allocation8 + $0x58] sm:$0xff]
    %v371 = vld [vmem:[#allocation8 + $0x60] sm:$0xff]
    %v372 = vld [vmem:[#allocation8 + $0x68] sm:$0xff]
    %v373 = vld [vmem:[#allocation8 + $0x70] sm:$0xff]
    %v374 = vld [vmem:[#allocation8 + $0x78] sm:$0xff]
    %v375 = vld [vmem:[%s5] sm:$0x3]
    %v377 = vlaneseq
    %v378 = vshrl.u32 %v377, 7
    %v379 = vsub.s32 0, %v378
    %v380 = vrot.slane %v375, %v379
    %v381 = vlaneseq
    %v382 = vshrl.u32 %v381, 7
    %v383 = vsub.s32 1, %v382
    %v384 = vrot.slane %v375, %v383
    %v388 = vsel %vm229, %v321, 0
    %v391 = vsel %vm229, %v326, 0
    %v394 = vsel %vm229, %v331, 0
    %v397 = vsel %vm229, %v336, 0
    %v400 = vsel %vm229, %v341, 0
    %v403 = vsel %vm229, %v346, 0
    %v406 = vsel %vm229, %v351, 0
    %v409 = vsel %vm229, %v356, 0
    %411 = vmatprep.subr.mxu0 %v360
    %412 = vmatpush1.msra.mxu0 %v359
    %413 = vmatprep.subr.mxu0 %v362
    %414 = vmatpush1.msra.mxu0 %v361
    %415 = vmatprep.subr.mxu0 %v364
    %416 = vmatpush1.msra.mxu0 %v363
    %417 = vmatprep.subr.mxu0 %v366
    %418 = vmatpush1.msra.mxu0 %v365
    %419 = vmatprep.subr.mxu0 %v368
    %420 = vmatpush1.msra.mxu0 %v367
    %421 = vmatprep.subr.mxu0 %v370
    %422 = vmatpush1.msra.mxu0 %v369
    %423 = vmatprep.subr.mxu0 %v372
    %424 = vmatpush1.msra.mxu0 %v371
    %425 = vmatprep.subr.mxu0 %v374
    %426 = vmatpush1.msra.mxu0 %v373
    %427 = vmatprep.subr.mxu0 0.0
    %428 = vmatpush1.msra.mxu0 0.0
    %429 = vmatprep.subr.mxu0 0.0
    %430 = vmatpush1.msra.mxu0 0.0
    %431 = vmatprep.subr.mxu0 0.0
    %432 = vmatpush1.msra.mxu0 0.0
    %433 = vmatprep.subr.mxu0 0.0
    %434 = vmatpush1.msra.mxu0 0.0
    %435 = vmatprep.subr.mxu0 0.0
    %436 = vmatpush1.msra.mxu0 0.0
    %437 = vmatprep.subr.mxu0 0.0
    %438 = vmatpush1.msra.mxu0 0.0
    %439 = vmatprep.subr.mxu0 0.0
    %440 = vmatpush1.msra.mxu0 0.0
    %441 = vmatprep.subr.mxu0 0.0
    %442 = vmatpush1.msra.mxu0 0.0
    %443 = vmatprep.subr.mxu0 0.0
    %444 = vmatpush1.msra.mxu0 0.0
    %445 = vmatprep.subr.mxu0 0.0
    %446 = vmatpush1.msra.mxu0 0.0
    %447 = vmatprep.subr.mxu0 0.0
    %448 = vmatpush1.msra.mxu0 0.0
    %449 = vmatprep.subr.mxu0 0.0
    %450 = vmatpush1.msra.mxu0 0.0
    %451 = vmatprep.subr.mxu0 0.0
    %452 = vmatpush1.msra.mxu0 0.0
    %453 = vmatprep.subr.mxu0 0.0
    %454 = vmatpush1.msra.mxu0 0.0
    %455 = vmatprep.subr.mxu0 0.0
    %456 = vmatpush1.msra.mxu0 0.0
    %457 = vmatprep.subr.mxu0 0.0
    %458 = vmatpush1.msra.mxu0 0.0
    %459 = vmatprep.subr.mxu0 0.0
    %460 = vmatpush1.msra.mxu0 0.0
    %461 = vmatprep.subr.mxu0 0.0
    %462 = vmatpush1.msra.mxu0 0.0
    %463 = vmatprep.subr.mxu0 0.0
    %464 = vmatpush1.msra.mxu0 0.0
    %465 = vmatprep.subr.mxu0 0.0
    %466 = vmatpush1.msra.mxu0 0.0
    %467 = vmatprep.subr.mxu0 0.0
    %468 = vmatpush1.msra.mxu0 0.0
    %469 = vmatprep.subr.mxu0 0.0
    %470 = vmatpush1.msra.mxu0 0.0
    %471 = vmatprep.subr.mxu0 0.0
    %472 = vmatpush1.msra.mxu0 0.0
    %473 = vmatprep.subr.mxu0 0.0
    %474 = vmatpush1.msra.mxu0 0.0
    %475 = vmatprep.mubr.f32.mxu0 0.0
    %476 = vmatmul.mubr.f32.gmra.mrb[0].mxu0 %v388
    %v477 = vpop.f32.mrb[0].mxu0
    %v478 = vadd.f32 %v380, %v477
    %v479 = vpop.f32.mrb[0].mxu0
    %v480 = vadd.f32 %v384, %v479
    %481 = vmatprep.mubr.f32.mxu0 0.0
    %482 = vmatmul.mubr.f32.gmra.mrb[0].mxu0 %v391
    %v483 = vpop.f32.mrb[0].mxu0
    %v484 = vadd.f32 %v380, %v483
    %v485 = vpop.f32.mrb[0].mxu0
    %v486 = vadd.f32 %v384, %v485
    %487 = vmatprep.mubr.f32.mxu0 0.0
    %488 = vmatmul.mubr.f32.gmra.mrb[0].mxu0 %v394
    %v489 = vpop.f32.mrb[0].mxu0
    %v490 = vadd.f32 %v380, %v489
    %v491 = vpop.f32.mrb[0].mxu0
    %v492 = vadd.f32 %v384, %v491
    %493 = vmatprep.mubr.f32.mxu0 0.0
    %494 = vmatmul.mubr.f32.gmra.mrb[0].mxu0 %v397
    %v495 = vpop.f32.mrb[0].mxu0
    %v496 = vadd.f32 %v380, %v495
    %v497 = vpop.f32.mrb[0].mxu0
    %v498 = vadd.f32 %v384, %v497
    %499 = vmatprep.mubr.f32.mxu0 0.0
    %500 = vmatmul.mubr.f32.gmra.mrb[0].mxu0 %v400
    %v501 = vpop.f32.mrb[0].mxu0
    %v502 = vadd.f32 %v380, %v501
    %v503 = vpop.f32.mrb[0].mxu0
    %v504 = vadd.f32 %v384, %v503
    %505 = vmatprep.mubr.f32.mxu0 0.0
    %506 = vmatmul.mubr.f32.gmra.mrb[0].mxu0 %v403
    %v507 = vpop.f32.mrb[0].mxu0
    %v508 = vadd.f32 %v380, %v507
    %v509 = vpop.f32.mrb[0].mxu0
    %v510 = vadd.f32 %v384, %v509
    %511 = vmatprep.mubr.f32.mxu0 0.0
    %512 = vmatmul.mubr.f32.gmra.mrb[0].mxu0 %v406
    %v513 = vpop.f32.mrb[0].mxu0
    %v514 = vadd.f32 %v380, %v513
    %v515 = vpop.f32.mrb[0].mxu0
    %v516 = vadd.f32 %v384, %v515
    %517 = vmatprep.mubr.f32.mxu0 0.0
    %518 = vmatmul.mubr.f32.gmra.mrb[0].mxu0 %v409
    %v519 = vpop.f32.mrb[0].mxu0
    %v520 = vadd.f32 %v380, %v519
    %v521 = vpop.f32.mrb[0].mxu0
    %v522 = vadd.f32 %v384, %v521
    %523 = vdwg.mxu0
    %524 = vst [vmem:[#allocation2] sm:$0xff] %v478
    %525 = vst [vmem:[#allocation2 + $0x8] sm:$0xff] %v480
    %526 = vst [vmem:[#allocation2 + $0x10] sm:$0xff] %v484
    %527 = vst [vmem:[#allocation2 + $0x18] sm:$0xff] %v486
    %528 = vst [vmem:[#allocation2 + $0x20] sm:$0xff] %v490
    %529 = vst [vmem:[#allocation2 + $0x28] sm:$0xff] %v492
    %530 = vst [vmem:[#allocation2 + $0x30] sm:$0xff] %v496
    %531 = vst [vmem:[#allocation2 + $0x38] sm:$0xff] %v498
    %532 = vst [vmem:[#allocation2 + $0x40] sm:$0xff] %v502
    %533 = vst [vmem:[#allocation2 + $0x48] sm:$0xff] %v504
    %534 = vst [vmem:[#allocation2 + $0x50] sm:$0xff] %v508
    %535 = vst [vmem:[#allocation2 + $0x58] sm:$0xff] %v510
    %536 = vst [vmem:[#allocation2 + $0x60] sm:$0xff] %v514
    %537 = vst [vmem:[#allocation2 + $0x68] sm:$0xff] %v516
    %538 = vst [vmem:[#allocation2 + $0x70] sm:$0xff] %v520
    %539 = vst [vmem:[#allocation2 + $0x78] sm:$0xff] %v522
    %v540 = vld [vmem:[%s8] sm:$0x3]
    %v542 = vlaneseq
    %v543 = vshrl.u32 %v542, 7
    %v544 = vsub.s32 0, %v543
    %v545 = vrot.slane %v540, %v544
    %v546 = vlaneseq
    %v547 = vshrl.u32 %v546, 7
    %v548 = vsub.s32 1, %v547
    %v549 = vrot.slane %v540, %v548
    %v552 = vld [vmem:[%s11] sm:$0x3]
    %v554 = vlaneseq
    %v555 = vshrl.u32 %v554, 7
    %v556 = vsub.s32 0, %v555
    %v557 = vrot.slane %v552, %v556
    %v558 = vlaneseq
    %v559 = vshrl.u32 %v558, 7
    %v560 = vsub.s32 1, %v559
    %v561 = vrot.slane %v552, %v560
    %v564 = vld [vmem:[%s14] sm:$0x3]
    %v566 = vlaneseq
    %v567 = vshrl.u32 %v566, 7
    %v568 = vsub.s32 0, %v567
    %v569 = vrot.slane %v564, %v568
    %v570 = vlaneseq
    %v571 = vshrl.u32 %v570, 7
    %v572 = vsub.s32 1, %v571
    %v573 = vrot.slane %v564, %v572
    %v576 = vld [vmem:[#allocation2] sm:$0xff]
    %v577 = vld [vmem:[#allocation2 + $0x8] sm:$0xff]
    %v578 = vld [vmem:[#allocation9] sm:$0xff]
    %v579 = vld [vmem:[#allocation9 + $0x8] sm:$0xff]
    %v580 = vld [vmem:[#allocation9 + $0x10] sm:$0xff]
    %v581 = vld [vmem:[#allocation9 + $0x18] sm:$0xff]
    %v582 = vld [vmem:[#allocation9 + $0x20] sm:$0xff]
    %v583 = vld [vmem:[#allocation9 + $0x28] sm:$0xff]
    %v584 = vld [vmem:[#allocation9 + $0x30] sm:$0xff]
    %v585 = vld [vmem:[#allocation9 + $0x38] sm:$0xff]
    %v586 = vld [vmem:[#allocation9 + $0x40] sm:$0xff]
    %v587 = vld [vmem:[#allocation9 + $0x48] sm:$0xff]
    %v588 = vld [vmem:[#allocation9 + $0x50] sm:$0xff]
    %v589 = vld [vmem:[#allocation9 + $0x58] sm:$0xff]
    %v590 = vld [vmem:[#allocation9 + $0x60] sm:$0xff]
    %v591 = vld [vmem:[#allocation9 + $0x68] sm:$0xff]
    %v592 = vld [vmem:[#allocation9 + $0x70] sm:$0xff]
    %v593 = vld [vmem:[#allocation9 + $0x78] sm:$0xff]
    %v595 = vsel %vm229, 0.0, 0
    %597 = vmatprep.subr.mxu0 %v579
    %598 = vmatpush1.msra.mxu0 %v578
    %599 = vmatprep.subr.mxu0 %v581
    %600 = vmatpush1.msra.mxu0 %v580
    %601 = vmatprep.subr.mxu0 %v583
    %602 = vmatpush1.msra.mxu0 %v582
    %603 = vmatprep.subr.mxu0 %v585
    %604 = vmatpush1.msra.mxu0 %v584
    %605 = vmatprep.subr.mxu0 %v587
    %606 = vmatpush1.msra.mxu0 %v586
    %607 = vmatprep.subr.mxu0 %v589
    %608 = vmatpush1.msra.mxu0 %v588
    %609 = vmatprep.subr.mxu0 %v591
    %610 = vmatpush1.msra.mxu0 %v590
    %611 = vmatprep.subr.mxu0 %v593
    %612 = vmatpush1.msra.mxu0 %v592
    %613 = vmatprep.subr.mxu0 0.0
    %614 = vmatpush1.msra.mxu0 0.0
    %615 = vmatprep.subr.mxu0 0.0
    %616 = vmatpush1.msra.mxu0 0.0
    %617 = vmatprep.subr.mxu0 0.0
    %618 = vmatpush1.msra.mxu0 0.0
    %619 = vmatprep.subr.mxu0 0.0
    %620 = vmatpush1.msra.mxu0 0.0
    %621 = vmatprep.subr.mxu0 0.0
    %622 = vmatpush1.msra.mxu0 0.0
    %623 = vmatprep.subr.mxu0 0.0
    %624 = vmatpush1.msra.mxu0 0.0
    %625 = vmatprep.subr.mxu0 0.0
    %626 = vmatpush1.msra.mxu0 0.0
    %627 = vmatprep.subr.mxu0 0.0
    %628 = vmatpush1.msra.mxu0 0.0
    %629 = vmatprep.subr.mxu0 0.0
    %630 = vmatpush1.msra.mxu0 0.0
    %631 = vmatprep.subr.mxu0 0.0
    %632 = vmatpush1.msra.mxu0 0.0
    %633 = vmatprep.subr.mxu0 0.0
    %634 = vmatpush1.msra.mxu0 0.0
    %635 = vmatprep.subr.mxu0 0.0
    %636 = vmatpush1.msra.mxu0 0.0
    %637 = vmatprep.subr.mxu0 0.0
    %638 = vmatpush1.msra.mxu0 0.0
    %639 = vmatprep.subr.mxu0 0.0
    %640 = vmatpush1.msra.mxu0 0.0
    %641 = vmatprep.subr.mxu0 0.0
    %642 = vmatpush1.msra.mxu0 0.0
    %643 = vmatprep.subr.mxu0 0.0
    %644 = vmatpush1.msra.mxu0 0.0
    %645 = vmatprep.subr.mxu0 0.0
    %646 = vmatpush1.msra.mxu0 0.0
    %647 = vmatprep.subr.mxu0 0.0
    %648 = vmatpush1.msra.mxu0 0.0
    %649 = vmatprep.subr.mxu0 0.0
    %650 = vmatpush1.msra.mxu0 0.0
    %651 = vmatprep.subr.mxu0 0.0
    %652 = vmatpush1.msra.mxu0 0.0
    %653 = vmatprep.subr.mxu0 0.0
    %654 = vmatpush1.msra.mxu0 0.0
    %655 = vmatprep.subr.mxu0 0.0
    %656 = vmatpush1.msra.mxu0 0.0
    %657 = vmatprep.subr.mxu0 0.0
    %658 = vmatpush1.msra.mxu0 0.0
    %659 = vmatprep.subr.mxu0 0.0
    %660 = vmatpush1.msra.mxu0 0.0
    %661 = vmatprep.mubr.f32.mxu0 0.0
    %662 = vmatmul.mubr.f32.gmra.mrb[0].mxu0 %v595
    %v663 = vpop.f32.mrb[0].mxu0
    %v664 = vadd.f32 0.0, %v663
    %v665 = vpop.f32.mrb[0].mxu0
    %v666 = vadd.f32 0.0, %v665
    %667 = vdwg.mxu0
    %v668 = vadd.f32 %v576, %v664
    %v669 = vadd.f32 %v577, %v666
    %v670 = vtanh.pop %v668
    %v671 = vtanh.pop %v669
    %v672 = vmul.f32 %v670, 0.5
    %v673 = vadd.f32 %v672, 0.5
    %v674 = vmul.f32 %v671, 0.5
    %v675 = vadd.f32 %v674, 0.5
    %v676 = vmul.f32 %v673, 0.0
    %v677 = vmul.f32 %v673, %v671
    %679 = vrot.lane.b32.xlu0 %v677, 64
    %v680 = vpop.permute.xlu0 %679
    %v682 = vadd.f32 %v676, %v680
    %v683 = vtanh.pop %v682
    %v684 = vmul.f32 %v675, %v683
    %v685 = vld [vmem:[#allocation11] sm:$0xff]
    %v686 = vld [vmem:[#allocation11 + $0x8] sm:$0xff]
    %v687 = vld [vmem:[#allocation11 + $0x10] sm:$0xff]
    %v688 = vld [vmem:[#allocation11 + $0x18] sm:$0xff]
    %v689 = vld [vmem:[#allocation11 + $0x20] sm:$0xff]
    %v690 = vld [vmem:[#allocation11 + $0x28] sm:$0xff]
    %v691 = vld [vmem:[#allocation11 + $0x30] sm:$0xff]
    %v692 = vld [vmem:[#allocation11 + $0x38] sm:$0xff]
    %v693 = vld [vmem:[#allocation11 + $0x40] sm:$0xff]
    %v694 = vld [vmem:[#allocation11 + $0x48] sm:$0xff]
    %v695 = vld [vmem:[#allocation11 + $0x50] sm:$0xff]
    %v696 = vld [vmem:[#allocation11 + $0x58] sm:$0xff]
    %v697 = vld [vmem:[#allocation11 + $0x60] sm:$0xff]
    %v698 = vld [vmem:[#allocation11 + $0x68] sm:$0xff]
    %v699 = vld [vmem:[#allocation11 + $0x70] sm:$0xff]
    %v700 = vld [vmem:[#allocation11 + $0x78] sm:$0xff]
    %v701 = vld [vmem:[#allocation12] sm:$0xff]
    %v702 = vld [vmem:[#allocation12 + $0x8] sm:$0xff]
    %v703 = vld [vmem:[#allocation12 + $0x10] sm:$0xff]
    %v704 = vld [vmem:[#allocation12 + $0x18] sm:$0xff]
    %v705 = vld [vmem:[#allocation12 + $0x20] sm:$0xff]
    %v706 = vld [vmem:[#allocation12 + $0x28] sm:$0xff]
    %v707 = vld [vmem:[#allocation12 + $0x30] sm:$0xff]
    %v708 = vld [vmem:[#allocation12 + $0x38] sm:$0xff]
    %v709 = vld [vmem:[#allocation12 + $0x40] sm:$0xff]
    %v710 = vld [vmem:[#allocation12 + $0x48] sm:$0xff]
    %v711 = vld [vmem:[#allocation12 + $0x50] sm:$0xff]
    %v712 = vld [vmem:[#allocation12 + $0x58] sm:$0xff]
    %v713 = vld [vmem:[#allocation12 + $0x60] sm:$0xff]
    %v714 = vld [vmem:[#allocation12 + $0x68] sm:$0xff]
    %v715 = vld [vmem:[#allocation12 + $0x70] sm:$0xff]
    %v716 = vld [vmem:[#allocation12 + $0x78] sm:$0xff]
    %717 = vmatprep.subr.mxu0 %v702
    %718 = vmatpush1.msra.mxu0 %v701
    %719 = vmatprep.subr.mxu0 %v704
    %720 = vmatpush1.msra.mxu0 %v703
    %721 = vmatprep.subr.mxu0 %v706
    %722 = vmatpush1.msra.mxu0 %v705
    %723 = vmatprep.subr.mxu0 %v708
    %724 = vmatpush1.msra.mxu0 %v707
    %725 = vmatprep.subr.mxu0 %v710
    %726 = vmatpush1.msra.mxu0 %v709
    %727 = vmatprep.subr.mxu0 %v712
    %728 = vmatpush1.msra.mxu0 %v711
    %729 = vmatprep.subr.mxu0 %v714
    %730 = vmatpush1.msra.mxu0 %v713
    %731 = vmatprep.subr.mxu0 %v716
    %732 = vmatpush1.msra.mxu0 %v715
    %733 = vmatprep.subr.mxu0 0.0
    %734 = vmatpush1.msra.mxu0 0.0
    %735 = vmatprep.subr.mxu0 0.0
    %736 = vmatpush1.msra.mxu0 0.0
    %737 = vmatprep.subr.mxu0 0.0
    %738 = vmatpush1.msra.mxu0 0.0
    %739 = vmatprep.subr.mxu0 0.0
    %740 = vmatpush1.msra.mxu0 0.0
    %741 = vmatprep.subr.mxu0 0.0
    %742 = vmatpush1.msra.mxu0 0.0
    %743 = vmatprep.subr.mxu0 0.0
    %744 = vmatpush1.msra.mxu0 0.0
    %745 = vmatprep.subr.mxu0 0.0
    %746 = vmatpush1.msra.mxu0 0.0
    %747 = vmatprep.subr.mxu0 0.0
    %748 = vmatpush1.msra.mxu0 0.0
    %749 = vmatprep.subr.mxu0 0.0
    %750 = vmatpush1.msra.mxu0 0.0
    %751 = vmatprep.subr.mxu0 0.0
    %752 = vmatpush1.msra.mxu0 0.0
    %753 = vmatprep.subr.mxu0 0.0
    %754 = vmatpush1.msra.mxu0 0.0
    %755 = vmatprep.subr.mxu0 0.0
    %756 = vmatpush1.msra.mxu0 0.0
    %757 = vmatprep.subr.mxu0 0.0
    %758 = vmatpush1.msra.mxu0 0.0
    %759 = vmatprep.subr.mxu0 0.0
    %760 = vmatpush1.msra.mxu0 0.0
    %761 = vmatprep.subr.mxu0 0.0
    %762 = vmatpush1.msra.mxu0 0.0
    %763 = vmatprep.subr.mxu0 0.0
    %764 = vmatpush1.msra.mxu0 0.0
    %765 = vmatprep.subr.mxu0 0.0
    %766 = vmatpush1.msra.mxu0 0.0
    %767 = vmatprep.subr.mxu0 0.0
    %768 = vmatpush1.msra.mxu0 0.0
    %769 = vmatprep.subr.mxu0 0.0
    %770 = vmatpush1.msra.mxu0 0.0
    %771 = vmatprep.subr.mxu0 0.0
    %772 = vmatpush1.msra.mxu0 0.0
    %773 = vmatprep.subr.mxu0 0.0
    %774 = vmatpush1.msra.mxu0 0.0
    %775 = vmatprep.subr.mxu0 0.0
    %776 = vmatpush1.msra.mxu0 0.0
    %777 = vmatprep.subr.mxu0 0.0
    %778 = vmatpush1.msra.mxu0 0.0
    %779 = vmatprep.subr.mxu0 0.0
    %780 = vmatpush1.msra.mxu0 0.0
    %781 = vmatprep.mubr.f32.mxu0 0.0
    %782 = vmatmul.mubr.f32.gmra.mrb[0].mxu0 %v595
    %v783 = vpop.f32.mrb[0].mxu0
    %v784 = vadd.f32 0.0, %v783
    %v785 = vpop.f32.mrb[0].mxu0
    %v786 = vadd.f32 0.0, %v785
    %787 = vdwg.mxu0
    %789 = vrot.lane.b32.xlu0 %v684, 64
    %v790 = vpop.permute.xlu0 %789
    %v791 = vsel %vm229, %v790, 0
    %793 = vmatprep.subr.mxu0 %v686
    %794 = vmatpush1.msra.mxu0 %v685
    %795 = vmatprep.subr.mxu0 %v688
    %796 = vmatpush1.msra.mxu0 %v687
    %797 = vmatprep.subr.mxu0 %v690
    %798 = vmatpush1.msra.mxu0 %v689
    %799 = vmatprep.subr.mxu0 %v692
    %800 = vmatpush1.msra.mxu0 %v691
    %801 = vmatprep.subr.mxu0 %v694
    %802 = vmatpush1.msra.mxu0 %v693
    %803 = vmatprep.subr.mxu0 %v696
    %804 = vmatpush1.msra.mxu0 %v695
    %805 = vmatprep.subr.mxu0 %v698
    %806 = vmatpush1.msra.mxu0 %v697
    %807 = vmatprep.subr.mxu0 %v700
    %808 = vmatpush1.msra.mxu0 %v699
    %809 = vmatprep.subr.mxu0 0.0
    %810 = vmatpush1.msra.mxu0 0.0
    %811 = vmatprep.subr.mxu0 0.0
    %812 = vmatpush1.msra.mxu0 0.0
    %813 = vmatprep.subr.mxu0 0.0
    %814 = vmatpush1.msra.mxu0 0.0
    %815 = vmatprep.subr.mxu0 0.0
    %816 = vmatpush1.msra.mxu0 0.0
    %817 = vmatprep.subr.mxu0 0.0
    %818 = vmatpush1.msra.mxu0 0.0
    %819 = vmatprep.subr.mxu0 0.0
    %820 = vmatpush1.msra.mxu0 0.0
    %821 = vmatprep.subr.mxu0 0.0
    %822 = vmatpush1.msra.mxu0 0.0
    %823 = vmatprep.subr.mxu0 0.0
    %824 = vmatpush1.msra.mxu0 0.0
    %825 = vmatprep.subr.mxu0 0.0
    %826 = vmatpush1.msra.mxu0 0.0
    %827 = vmatprep.subr.mxu0 0.0
    %828 = vmatpush1.msra.mxu0 0.0
    %829 = vmatprep.subr.mxu0 0.0
    %830 = vmatpush1.msra.mxu0 0.0
    %831 = vmatprep.subr.mxu0 0.0
    %832 = vmatpush1.msra.mxu0 0.0
    %833 = vmatprep.subr.mxu0 0.0
    %834 = vmatpush1.msra.mxu0 0.0
    %835 = vmatprep.subr.mxu0 0.0
    %836 = vmatpush1.msra.mxu0 0.0
    %837 = vmatprep.subr.mxu0 0.0
    %838 = vmatpush1.msra.mxu0 0.0
    %839 = vmatprep.subr.mxu0 0.0
    %840 = vmatpush1.msra.mxu0 0.0
    %841 = vmatprep.subr.mxu0 0.0
    %842 = vmatpush1.msra.mxu0 0.0
    %843 = vmatprep.subr.mxu0 0.0
    %844 = vmatpush1.msra.mxu0 0.0
    %845 = vmatprep.subr.mxu0 0.0
    %846 = vmatpush1.msra.mxu0 0.0
    %847 = vmatprep.subr.mxu0 0.0
    %848 = vmatpush1.msra.mxu0 0.0
    %849 = vmatprep.subr.mxu0 0.0
    %850 = vmatpush1.msra.mxu0 0.0
    %851 = vmatprep.subr.mxu0 0.0
    %852 = vmatpush1.msra.mxu0 0.0
    %853 = vmatprep.subr.mxu0 0.0
    %854 = vmatpush1.msra.mxu0 0.0
    %855 = vmatprep.subr.mxu0 0.0
    %856 = vmatpush1.msra.mxu0 0.0
    %857 = vmatprep.mubr.f32.mxu0 0.0
    %858 = vmatmul.mubr.f32.gmra.mrb[0].mxu0 %v791
    %v859 = vpop.f32.mrb[0].mxu0
    %v860 = vadd.f32 %v784, %v859
    %v861 = vpop.f32.mrb[0].mxu0
    %v862 = vadd.f32 %v786, %v861
    %863 = vdwg.mxu0
    %v864 = vadd.f32 %v860, %v545
    %v865 = vadd.f32 %v862, %v549
    %v866 = vtanh.pop %v864
    %v867 = vtanh.pop %v865
    %v868 = vmul.f32 %v866, 0.5
    %v869 = vadd.f32 %v868, 0.5
    %v870 = vmul.f32 %v867, 0.5
    %v871 = vadd.f32 %v870, 0.5
    %v872 = vmul.f32 %v869, 0.0
    %v873 = vmul.f32 %v869, %v867
    %875 = vrot.lane.b32.xlu0 %v873, 64
    %v876 = vpop.permute.xlu0 %875
    %v878 = vadd.f32 %v872, %v876
    %v879 = vtanh.pop %v878
    %v880 = vmul.f32 %v871, %v879
    %v881 = vld [vmem:[#allocation14] sm:$0xff]
    %v882 = vld [vmem:[#allocation14 + $0x8] sm:$0xff]
    %v883 = vld [vmem:[#allocation14 + $0x10] sm:$0xff]
    %v884 = vld [vmem:[#allocation14 + $0x18] sm:$0xff]
    %v885 = vld [vmem:[#allocation14 + $0x20] sm:$0xff]
    %v886 = vld [vmem:[#allocation14 + $0x28] sm:$0xff]
    %v887 = vld [vmem:[#allocation14 + $0x30] sm:$0xff]
    %v888 = vld [vmem:[#allocation14 + $0x38] sm:$0xff]
    %v889 = vld [vmem:[#allocation14 + $0x40] sm:$0xff]
    %v890 = vld [vmem:[#allocation14 + $0x48] sm:$0xff]
    %v891 = vld [vmem:[#allocation14 + $0x50] sm:$0xff]
    %v892 = vld [vmem:[#allocation14 + $0x58] sm:$0xff]
    %v893 = vld [vmem:[#allocation14 + $0x60] sm:$0xff]
    %v894 = vld [vmem:[#allocation14 + $0x68] sm:$0xff]
    %v895 = vld [vmem:[#allocation14 + $0x70] sm:$0xff]
    %v896 = vld [vmem:[#allocation14 + $0x78] sm:$0xff]
    %v897 = vld [vmem:[#allocation15] sm:$0xff]
    %v898 = vld [vmem:[#allocation15 + $0x8] sm:$0xff]
    %v899 = vld [vmem:[#allocation15 + $0x10] sm:$0xff]
    %v900 = vld [vmem:[#allocation15 + $0x18] sm:$0xff]
    %v901 = vld [vmem:[#allocation15 + $0x20] sm:$0xff]
    %v902 = vld [vmem:[#allocation15 + $0x28] sm:$0xff]
    %v903 = vld [vmem:[#allocation15 + $0x30] sm:$0xff]
    %v904 = vld [vmem:[#allocation15 + $0x38] sm:$0xff]
    %v905 = vld [vmem:[#allocation15 + $0x40] sm:$0xff]
    %v906 = vld [vmem:[#allocation15 + $0x48] sm:$0xff]
    %v907 = vld [vmem:[#allocation15 + $0x50] sm:$0xff]
    %v908 = vld [vmem:[#allocation15 + $0x58] sm:$0xff]
    %v909 = vld [vmem:[#allocation15 + $0x60] sm:$0xff]
    %v910 = vld [vmem:[#allocation15 + $0x68] sm:$0xff]
    %v911 = vld [vmem:[#allocation15 + $0x70] sm:$0xff]
    %v912 = vld [vmem:[#allocation15 + $0x78] sm:$0xff]
    %913 = vmatprep.subr.mxu0 %v898
    %914 = vmatpush1.msra.mxu0 %v897
    %915 = vmatprep.subr.mxu0 %v900
    %916 = vmatpush1.msra.mxu0 %v899
    %917 = vmatprep.subr.mxu0 %v902
    %918 = vmatpush1.msra.mxu0 %v901
    %919 = vmatprep.subr.mxu0 %v904
    %920 = vmatpush1.msra.mxu0 %v903
    %921 = vmatprep.subr.mxu0 %v906
    %922 = vmatpush1.msra.mxu0 %v905
    %923 = vmatprep.subr.mxu0 %v908
    %924 = vmatpush1.msra.mxu0 %v907
    %925 = vmatprep.subr.mxu0 %v910
    %926 = vmatpush1.msra.mxu0 %v909
    %927 = vmatprep.subr.mxu0 %v912
    %928 = vmatpush1.msra.mxu0 %v911
    %929 = vmatprep.subr.mxu0 0.0
    %930 = vmatpush1.msra.mxu0 0.0
    %931 = vmatprep.subr.mxu0 0.0
    %932 = vmatpush1.msra.mxu0 0.0
    %933 = vmatprep.subr.mxu0 0.0
    %934 = vmatpush1.msra.mxu0 0.0
    %935 = vmatprep.subr.mxu0 0.0
    %936 = vmatpush1.msra.mxu0 0.0
    %937 = vmatprep.subr.mxu0 0.0
    %938 = vmatpush1.msra.mxu0 0.0
    %939 = vmatprep.subr.mxu0 0.0
    %940 = vmatpush1.msra.mxu0 0.0
    %941 = vmatprep.subr.mxu0 0.0
    %942 = vmatpush1.msra.mxu0 0.0
    %943 = vmatprep.subr.mxu0 0.0
    %944 = vmatpush1.msra.mxu0 0.0
    %945 = vmatprep.subr.mxu0 0.0
    %946 = vmatpush1.msra.mxu0 0.0
    %947 = vmatprep.subr.mxu0 0.0
    %948 = vmatpush1.msra.mxu0 0.0
    %949 = vmatprep.subr.mxu0 0.0
    %950 = vmatpush1.msra.mxu0 0.0
    %951 = vmatprep.subr.mxu0 0.0
    %952 = vmatpush1.msra.mxu0 0.0
    %953 = vmatprep.subr.mxu0 0.0
    %954 = vmatpush1.msra.mxu0 0.0
    %955 = vmatprep.subr.mxu0 0.0
    %956 = vmatpush1.msra.mxu0 0.0
    %957 = vmatprep.subr.mxu0 0.0
    %958 = vmatpush1.msra.mxu0 0.0
    %959 = vmatprep.subr.mxu0 0.0
    %960 = vmatpush1.msra.mxu0 0.0
    %961 = vmatprep.subr.mxu0 0.0
    %962 = vmatpush1.msra.mxu0 0.0
    %963 = vmatprep.subr.mxu0 0.0
    %964 = vmatpush1.msra.mxu0 0.0
    %965 = vmatprep.subr.mxu0 0.0
    %966 = vmatpush1.msra.mxu0 0.0
    %967 = vmatprep.subr.mxu0 0.0
    %968 = vmatpush1.msra.mxu0 0.0
    %969 = vmatprep.subr.mxu0 0.0
    %970 = vmatpush1.msra.mxu0 0.0
    %971 = vmatprep.subr.mxu0 0.0
    %972 = vmatpush1.msra.mxu0 0.0
    %973 = vmatprep.subr.mxu0 0.0
    %974 = vmatpush1.msra.mxu0 0.0
    %975 = vmatprep.subr.mxu0 0.0
    %976 = vmatpush1.msra.mxu0 0.0
    %977 = vmatprep.mubr.f32.mxu0 0.0
    %978 = vmatmul.mubr.f32.gmra.mrb[0].mxu0 %v595
    %v979 = vpop.f32.mrb[0].mxu0
    %v980 = vadd.f32 0.0, %v979
    %v981 = vpop.f32.mrb[0].mxu0
    %v982 = vadd.f32 0.0, %v981
    %983 = vdwg.mxu0
    %985 = vrot.lane.b32.xlu0 %v880, 64
    %v986 = vpop.permute.xlu0 %985
    %v987 = vsel %vm229, %v986, 0
    %989 = vmatprep.subr.mxu0 %v882
    %990 = vmatpush1.msra.mxu0 %v881
    %991 = vmatprep.subr.mxu0 %v884
    %992 = vmatpush1.msra.mxu0 %v883
    %993 = vmatprep.subr.mxu0 %v886
    %994 = vmatpush1.msra.mxu0 %v885
    %995 = vmatprep.subr.mxu0 %v888
    %996 = vmatpush1.msra.mxu0 %v887
    %997 = vmatprep.subr.mxu0 %v890
    %998 = vmatpush1.msra.mxu0 %v889
    %999 = vmatprep.subr.mxu0 %v892
    %1000 = vmatpush1.msra.mxu0 %v891
    %1001 = vmatprep.subr.mxu0 %v894
    %1002 = vmatpush1.msra.mxu0 %v893
    %1003 = vmatprep.subr.mxu0 %v896
    %1004 = vmatpush1.msra.mxu0 %v895
    %1005 = vmatprep.subr.mxu0 0.0
    %1006 = vmatpush1.msra.mxu0 0.0
    %1007 = vmatprep.subr.mxu0 0.0
    %1008 = vmatpush1.msra.mxu0 0.0
    %1009 = vmatprep.subr.mxu0 0.0
    %1010 = vmatpush1.msra.mxu0 0.0
    %1011 = vmatprep.subr.mxu0 0.0
    %1012 = vmatpush1.msra.mxu0 0.0
    %1013 = vmatprep.subr.mxu0 0.0
    %1014 = vmatpush1.msra.mxu0 0.0
    %1015 = vmatprep.subr.mxu0 0.0
    %1016 = vmatpush1.msra.mxu0 0.0
    %1017 = vmatprep.subr.mxu0 0.0
    %1018 = vmatpush1.msra.mxu0 0.0
    %1019 = vmatprep.subr.mxu0 0.0
    %1020 = vmatpush1.msra.mxu0 0.0
    %1021 = vmatprep.subr.mxu0 0.0
    %1022 = vmatpush1.msra.mxu0 0.0
    %1023 = vmatprep.subr.mxu0 0.0
    %1024 = vmatpush1.msra.mxu0 0.0
    %1025 = vmatprep.subr.mxu0 0.0
    %1026 = vmatpush1.msra.mxu0 0.0
    %1027 = vmatprep.subr.mxu0 0.0
    %1028 = vmatpush1.msra.mxu0 0.0
    %1029 = vmatprep.subr.mxu0 0.0
    %1030 = vmatpush1.msra.mxu0 0.0
    %1031 = vmatprep.subr.mxu0 0.0
    %1032 = vmatpush1.msra.mxu0 0.0
    %1033 = vmatprep.subr.mxu0 0.0
    %1034 = vmatpush1.msra.mxu0 0.0
    %1035 = vmatprep.subr.mxu0 0.0
    %1036 = vmatpush1.msra.mxu0 0.0
    %1037 = vmatprep.subr.mxu0 0.0
    %1038 = vmatpush1.msra.mxu0 0.0
    %1039 = vmatprep.subr.mxu0 0.0
    %1040 = vmatpush1.msra.mxu0 0.0
    %1041 = vmatprep.subr.mxu0 0.0
    %1042 = vmatpush1.msra.mxu0 0.0
    %1043 = vmatprep.subr.mxu0 0.0
    %1044 = vmatpush1.msra.mxu0 0.0
    %1045 = vmatprep.subr.mxu0 0.0
    %1046 = vmatpush1.msra.mxu0 0.0
    %1047 = vmatprep.subr.mxu0 0.0
    %1048 = vmatpush1.msra.mxu0 0.0
    %1049 = vmatprep.subr.mxu0 0.0
    %1050 = vmatpush1.msra.mxu0 0.0
    %1051 = vmatprep.subr.mxu0 0.0
    %1052 = vmatpush1.msra.mxu0 0.0
    %1053 = vmatprep.mubr.f32.mxu0 0.0
    %1054 = vmatmul.mubr.f32.gmra.mrb[0].mxu0 %v987
    %v1055 = vpop.f32.mrb[0].mxu0
    %v1056 = vadd.f32 %v980, %v1055
    %v1057 = vpop.f32.mrb[0].mxu0
    %v1058 = vadd.f32 %v982, %v1057
    %1059 = vdwg.mxu0
    %v1060 = vadd.f32 %v1056, %v557
    %v1061 = vadd.f32 %v1058, %v561
    %v1062 = vtanh.pop %v1060
    %v1063 = vtanh.pop %v1061
    %v1064 = vmul.f32 %v1062, 0.5
    %v1065 = vadd.f32 %v1064, 0.5
    %v1066 = vmul.f32 %v1063, 0.5
    %v1067 = vadd.f32 %v1066, 0.5
    %v1068 = vmul.f32 %v1065, 0.0
    %v1069 = vmul.f32 %v1065, %v1063
    %1071 = vrot.lane.b32.xlu0 %v1069, 64
    %v1072 = vpop.permute.xlu0 %1071
    %v1074 = vadd.f32 %v1068, %v1072
    %v1075 = vtanh.pop %v1074
    %v1076 = vmul.f32 %v1067, %v1075
    %v1077 = vld [vmem:[#allocation17] sm:$0xff]
    %v1078 = vld [vmem:[#allocation17 + $0x8] sm:$0xff]
    %v1079 = vld [vmem:[#allocation17 + $0x10] sm:$0xff]
    %v1080 = vld [vmem:[#allocation17 + $0x18] sm:$0xff]
    %v1081 = vld [vmem:[#allocation17 + $0x20] sm:$0xff]
    %v1082 = vld [vmem:[#allocation17 + $0x28] sm:$0xff]
    %v1083 = vld [vmem:[#allocation17 + $0x30] sm:$0xff]
    %v1084 = vld [vmem:[#allocation17 + $0x38] sm:$0xff]
    %v1085 = vld [vmem:[#allocation17 + $0x40] sm:$0xff]
    %v1086 = vld [vmem:[#allocation17 + $0x48] sm:$0xff]
    %v1087 = vld [vmem:[#allocation17 + $0x50] sm:$0xff]
    %v1088 = vld [vmem:[#allocation17 + $0x58] sm:$0xff]
    %v1089 = vld [vmem:[#allocation17 + $0x60] sm:$0xff]
    %v1090 = vld [vmem:[#allocation17 + $0x68] sm:$0xff]
    %v1091 = vld [vmem:[#allocation17 + $0x70] sm:$0xff]
    %v1092 = vld [vmem:[#allocation17 + $0x78] sm:$0xff]
    %v1093 = vld [vmem:[#allocation18] sm:$0xff]
    %v1094 = vld [vmem:[#allocation18 + $0x8] sm:$0xff]
    %v1095 = vld [vmem:[#allocation18 + $0x10] sm:$0xff]
    %v1096 = vld [vmem:[#allocation18 + $0x18] sm:$0xff]
    %v1097 = vld [vmem:[#allocation18 + $0x20] sm:$0xff]
    %v1098 = vld [vmem:[#allocation18 + $0x28] sm:$0xff]
    %v1099 = vld [vmem:[#allocation18 + $0x30] sm:$0xff]
    %v1100 = vld [vmem:[#allocation18 + $0x38] sm:$0xff]
    %v1101 = vld [vmem:[#allocation18 + $0x40] sm:$0xff]
    %v1102 = vld [vmem:[#allocation18 + $0x48] sm:$0xff]
    %v1103 = vld [vmem:[#allocation18 + $0x50] sm:$0xff]
    %v1104 = vld [vmem:[#allocation18 + $0x58] sm:$0xff]
    %v1105 = vld [vmem:[#allocation18 + $0x60] sm:$0xff]
    %v1106 = vld [vmem:[#allocation18 + $0x68] sm:$0xff]
    %v1107 = vld [vmem:[#allocation18 + $0x70] sm:$0xff]
    %v1108 = vld [vmem:[#allocation18 + $0x78] sm:$0xff]
    %1109 = vmatprep.subr.mxu0 %v1094
    %1110 = vmatpush1.msra.mxu0 %v1093
    %1111 = vmatprep.subr.mxu0 %v1096
    %1112 = vmatpush1.msra.mxu0 %v1095
    %1113 = vmatprep.subr.mxu0 %v1098
    %1114 = vmatpush1.msra.mxu0 %v1097
    %1115 = vmatprep.subr.mxu0 %v1100
    %1116 = vmatpush1.msra.mxu0 %v1099
    %1117 = vmatprep.subr.mxu0 %v1102
    %1118 = vmatpush1.msra.mxu0 %v1101
    %1119 = vmatprep.subr.mxu0 %v1104
    %1120 = vmatpush1.msra.mxu0 %v1103
    %1121 = vmatprep.subr.mxu0 %v1106
    %1122 = vmatpush1.msra.mxu0 %v1105
    %1123 = vmatprep.subr.mxu0 %v1108
    %1124 = vmatpush1.msra.mxu0 %v1107
    %1125 = vmatprep.subr.mxu0 0.0
    %1126 = vmatpush1.msra.mxu0 0.0
    %1127 = vmatprep.subr.mxu0 0.0
    %1128 = vmatpush1.msra.mxu0 0.0
    %1129 = vmatprep.subr.mxu0 0.0
    %1130 = vmatpush1.msra.mxu0 0.0
    %1131 = vmatprep.subr.mxu0 0.0
    %1132 = vmatpush1.msra.mxu0 0.0
    %1133 = vmatprep.subr.mxu0 0.0
    %1134 = vmatpush1.msra.mxu0 0.0
    %1135 = vmatprep.subr.mxu0 0.0
    %1136 = vmatpush1.msra.mxu0 0.0
    %1137 = vmatprep.subr.mxu0 0.0
    %1138 = vmatpush1.msra.mxu0 0.0
    %1139 = vmatprep.subr.mxu0 0.0
    %1140 = vmatpush1.msra.mxu0 0.0
    %1141 = vmatprep.subr.mxu0 0.0
    %1142 = vmatpush1.msra.mxu0 0.0
    %1143 = vmatprep.subr.mxu0 0.0
    %1144 = vmatpush1.msra.mxu0 0.0
    %1145 = vmatprep.subr.mxu0 0.0
    %1146 = vmatpush1.msra.mxu0 0.0
    %1147 = vmatprep.subr.mxu0 0.0
    %1148 = vmatpush1.msra.mxu0 0.0
    %1149 = vmatprep.subr.mxu0 0.0
    %1150 = vmatpush1.msra.mxu0 0.0
    %1151 = vmatprep.subr.mxu0 0.0
    %1152 = vmatpush1.msra.mxu0 0.0
    %1153 = vmatprep.subr.mxu0 0.0
    %1154 = vmatpush1.msra.mxu0 0.0
    %1155 = vmatprep.subr.mxu0 0.0
    %1156 = vmatpush1.msra.mxu0 0.0
    %1157 = vmatprep.subr.mxu0 0.0
    %1158 = vmatpush1.msra.mxu0 0.0
    %1159 = vmatprep.subr.mxu0 0.0
    %1160 = vmatpush1.msra.mxu0 0.0
    %1161 = vmatprep.subr.mxu0 0.0
    %1162 = vmatpush1.msra.mxu0 0.0
    %1163 = vmatprep.subr.mxu0 0.0
    %1164 = vmatpush1.msra.mxu0 0.0
    %1165 = vmatprep.subr.mxu0 0.0
    %1166 = vmatpush1.msra.mxu0 0.0
    %1167 = vmatprep.subr.mxu0 0.0
    %1168 = vmatpush1.msra.mxu0 0.0
    %1169 = vmatprep.subr.mxu0 0.0
    %1170 = vmatpush1.msra.mxu0 0.0
    %1171 = vmatprep.subr.mxu0 0.0
    %1172 = vmatpush1.msra.mxu0 0.0
    %1173 = vmatprep.mubr.f32.mxu0 0.0
    %1174 = vmatmul.mubr.f32.gmra.mrb[0].mxu0 %v595
    %v1175 = vpop.f32.mrb[0].mxu0
    %v1176 = vadd.f32 0.0, %v1175
    %v1177 = vpop.f32.mrb[0].mxu0
    %v1178 = vadd.f32 0.0, %v1177
    %1179 = vdwg.mxu0
    %1181 = vrot.lane.b32.xlu0 %v1076, 64
    %v1182 = vpop.permute.xlu0 %1181
    %v1183 = vsel %vm229, %v1182, 0
    %1185 = vmatprep.subr.mxu0 %v1078
    %1186 = vmatpush1.msra.mxu0 %v1077
    %1187 = vmatprep.subr.mxu0 %v1080
    %1188 = vmatpush1.msra.mxu0 %v1079
    %1189 = vmatprep.subr.mxu0 %v1082
    %1190 = vmatpush1.msra.mxu0 %v1081
    %1191 = vmatprep.subr.mxu0 %v1084
    %1192 = vmatpush1.msra.mxu0 %v1083
    %1193 = vmatprep.subr.mxu0 %v1086
    %1194 = vmatpush1.msra.mxu0 %v1085
    %1195 = vmatprep.subr.mxu0 %v1088
    %1196 = vmatpush1.msra.mxu0 %v1087
    %1197 = vmatprep.subr.mxu0 %v1090
    %1198 = vmatpush1.msra.mxu0 %v1089
    %1199 = vmatprep.subr.mxu0 %v1092
    %1200 = vmatpush1.msra.mxu0 %v1091
    %1201 = vmatprep.subr.mxu0 0.0
    %1202 = vmatpush1.msra.mxu0 0.0
    %1203 = vmatprep.subr.mxu0 0.0
    %1204 = vmatpush1.msra.mxu0 0.0
    %1205 = vmatprep.subr.mxu0 0.0
    %1206 = vmatpush1.msra.mxu0 0.0
    %1207 = vmatprep.subr.mxu0 0.0
    %1208 = vmatpush1.msra.mxu0 0.0
    %1209 = vmatprep.subr.mxu0 0.0
    %1210 = vmatpush1.msra.mxu0 0.0
    %1211 = vmatprep.subr.mxu0 0.0
    %1212 = vmatpush1.msra.mxu0 0.0
    %1213 = vmatprep.subr.mxu0 0.0
    %1214 = vmatpush1.msra.mxu0 0.0
    %1215 = vmatprep.subr.mxu0 0.0
    %1216 = vmatpush1.msra.mxu0 0.0
    %1217 = vmatprep.subr.mxu0 0.0
    %1218 = vmatpush1.msra.mxu0 0.0
    %1219 = vmatprep.subr.mxu0 0.0
    %1220 = vmatpush1.msra.mxu0 0.0
    %1221 = vmatprep.subr.mxu0 0.0
    %1222 = vmatpush1.msra.mxu0 0.0
    %1223 = vmatprep.subr.mxu0 0.0
    %1224 = vmatpush1.msra.mxu0 0.0
    %1225 = vmatprep.subr.mxu0 0.0
    %1226 = vmatpush1.msra.mxu0 0.0
    %1227 = vmatprep.subr.mxu0 0.0
    %1228 = vmatpush1.msra.mxu0 0.0
    %1229 = vmatprep.subr.mxu0 0.0
    %1230 = vmatpush1.msra.mxu0 0.0
    %1231 = vmatprep.subr.mxu0 0.0
    %1232 = vmatpush1.msra.mxu0 0.0
    %1233 = vmatprep.subr.mxu0 0.0
    %1234 = vmatpush1.msra.mxu0 0.0
    %1235 = vmatprep.subr.mxu0 0.0
    %1236 = vmatpush1.msra.mxu0 0.0
    %1237 = vmatprep.subr.mxu0 0.0
    %1238 = vmatpush1.msra.mxu0 0.0
    %1239 = vmatprep.subr.mxu0 0.0
    %1240 = vmatpush1.msra.mxu0 0.0
    %1241 = vmatprep.subr.mxu0 0.0
    %1242 = vmatpush1.msra.mxu0 0.0
    %1243 = vmatprep.subr.mxu0 0.0
    %1244 = vmatpush1.msra.mxu0 0.0
    %1245 = vmatprep.subr.mxu0 0.0
    %1246 = vmatpush1.msra.mxu0 0.0
    %1247 = vmatprep.subr.mxu0 0.0
    %1248 = vmatpush1.msra.mxu0 0.0
    %1249 = vmatprep.mubr.f32.mxu0 0.0
    %1250 = vmatmul.mubr.f32.gmra.mrb[0].mxu0 %v1183
    %v1251 = vpop.f32.mrb[0].mxu0
    %v1252 = vadd.f32 %v1176, %v1251
    %v1253 = vpop.f32.mrb[0].mxu0
    %v1254 = vadd.f32 %v1178, %v1253
    %1255 = vdwg.mxu0
    %v1256 = vadd.f32 %v1252, %v569
    %v1257 = vadd.f32 %v1254, %v573
    %v1258 = vtanh.pop %v1256
    %v1259 = vtanh.pop %v1257
    %v1260 = vmul.f32 %v1258, 0.5
    %v1261 = vadd.f32 %v1260, 0.5
    %v1262 = vmul.f32 %v1259, 0.5
    %v1263 = vadd.f32 %v1262, 0.5
    %v1264 = vmul.f32 %v1261, 0.0
    %v1265 = vmul.f32 %v1261, %v1259
    %1267 = vrot.lane.b32.xlu0 %v1265, 64
    %v1268 = vpop.permute.xlu0 %1267
    %v1270 = vadd.f32 %v1264, %v1268
    %v1271 = vtanh.pop %v1270
    %v1272 = vmul.f32 %v1263, %v1271
    %1274 = vrot.lane.b32.xlu0 %v1272, 64
    %v1275 = vpop.permute.xlu0 %1274
    %1277 = vst.msk [vmem:[#allocation21] sm:$0xff] %vm229, %v1275
    %v1278 = vld [vmem:[#allocation2 + $0x10] sm:$0xff]
    %v1279 = vld [vmem:[#allocation2 + $0x18] sm:$0xff]
    %v1280 = vld [vmem:[#allocation9] sm:$0xff]
    %v1281 = vld [vmem:[#allocation9 + $0x8] sm:$0xff]
    %v1282 = vld [vmem:[#allocation9 + $0x10] sm:$0xff]
    %v1283 = vld [vmem:[#allocation9 + $0x18] sm:$0xff]
    %v1284 = vld [vmem:[#allocation9 + $0x20] sm:$0xff]
    %v1285 = vld [vmem:[#allocation9 + $0x28] sm:$0xff]
    %v1286 = vld [vmem:[#allocation9 + $0x30] sm:$0xff]
    %v1287 = vld [vmem:[#allocation9 + $0x38] sm:$0xff]
    %v1288 = vld [vmem:[#allocation9 + $0x40] sm:$0xff]
    %v1289 = vld [vmem:[#allocation9 + $0x48] sm:$0xff]
    %v1290 = vld [vmem:[#allocation9 + $0x50] sm:$0xff]
    %v1291 = vld [vmem:[#allocation9 + $0x58] sm:$0xff]
    %v1292 = vld [vmem:[#allocation9 + $0x60] sm:$0xff]
    %v1293 = vld [vmem:[#allocation9 + $0x68] sm:$0xff]
    %v1294 = vld [vmem:[#allocation9 + $0x70] sm:$0xff]
    %v1295 = vld [vmem:[#allocation9 + $0x78] sm:$0xff]
    %1296 = vmatprep.subr.mxu0 %v1281
    %1297 = vmatpush1.msra.mxu0 %v1280
    %1298 = vmatprep.subr.mxu0 %v1283
    %1299 = vmatpush1.msra.mxu0 %v1282
    %1300 = vmatprep.subr.mxu0 %v1285
    %1301 = vmatpush1.msra.mxu0 %v1284
    %1302 = vmatprep.subr.mxu0 %v1287
    %1303 = vmatpush1.msra.mxu0 %v1286
    %1304 = vmatprep.subr.mxu0 %v1289
    %1305 = vmatpush1.msra.mxu0 %v1288
    %1306 = vmatprep.subr.mxu0 %v1291
    %1307 = vmatpush1.msra.mxu0 %v1290
    %1308 = vmatprep.subr.mxu0 %v1293
    %1309 = vmatpush1.msra.mxu0 %v1292
    %1310 = vmatprep.subr.mxu0 %v1295
    %1311 = vmatpush1.msra.mxu0 %v1294
    %1312 = vmatprep.subr.mxu0 0.0
    %1313 = vmatpush1.msra.mxu0 0.0
    %1314 = vmatprep.subr.mxu0 0.0
    %1315 = vmatpush1.msra.mxu0 0.0
    %1316 = vmatprep.subr.mxu0 0.0
    %1317 = vmatpush1.msra.mxu0 0.0
    %1318 = vmatprep.subr.mxu0 0.0
    %1319 = vmatpush1.msra.mxu0 0.0
    %1320 = vmatprep.subr.mxu0 0.0
    %1321 = vmatpush1.msra.mxu0 0.0
    %1322 = vmatprep.subr.mxu0 0.0
    %1323 = vmatpush1.msra.mxu0 0.0
    %1324 = vmatprep.subr.mxu0 0.0
    %1325 = vmatpush1.msra.mxu0 0.0
    %1326 = vmatprep.subr.mxu0 0.0
    %1327 = vmatpush1.msra.mxu0 0.0
    %1328 = vmatprep.subr.mxu0 0.0
    %1329 = vmatpush1.msra.mxu0 0.0
    %1330 = vmatprep.subr.mxu0 0.0
    %1331 = vmatpush1.msra.mxu0 0.0
    %1332 = vmatprep.subr.mxu0 0.0
    %1333 = vmatpush1.msra.mxu0 0.0
    %1334 = vmatprep.subr.mxu0 0.0
    %1335 = vmatpush1.msra.mxu0 0.0
    %1336 = vmatprep.subr.mxu0 0.0
    %1337 = vmatpush1.msra.mxu0 0.0
    %1338 = vmatprep.subr.mxu0 0.0
    %1339 = vmatpush1.msra.mxu0 0.0
    %1340 = vmatprep.subr.mxu0 0.0
    %1341 = vmatpush1.msra.mxu0 0.0
    %1342 = vmatprep.subr.mxu0 0.0
    %1343 = vmatpush1.msra.mxu0 0.0
    %1344 = vmatprep.subr.mxu0 0.0
    %1345 = vmatpush1.msra.mxu0 0.0
    %1346 = vmatprep.subr.mxu0 0.0
    %1347 = vmatpush1.msra.mxu0 0.0
    %1348 = vmatprep.subr.mxu0 0.0
    %1349 = vmatpush1.msra.mxu0 0.0
    %1350 = vmatprep.subr.mxu0 0.0
    %1351 = vmatpush1.msra.mxu0 0.0
    %1352 = vmatprep.subr.mxu0 0.0
    %1353 = vmatpush1.msra.mxu0 0.0
    %1354 = vmatprep.subr.mxu0 0.0
    %1355 = vmatpush1.msra.mxu0 0.0
    %1356 = vmatprep.subr.mxu0 0.0
    %1357 = vmatpush1.msra.mxu0 0.0
    %1358 = vmatprep.subr.mxu0 0.0
    %1359 = vmatpush1.msra.mxu0 0.0
    %1360 = vmatprep.mubr.f32.mxu0 0.0
    %1361 = vmatmul.mubr.f32.gmra.mrb[0].mxu0 %v791
    %v1362 = vpop.f32.mrb[0].mxu0
    %v1363 = vadd.f32 0.0, %v1362
    %v1364 = vpop.f32.mrb[0].mxu0
    %v1365 = vadd.f32 0.0, %v1364
    %1366 = vdwg.mxu0
    %v1367 = vadd.f32 %v1278, %v1363
    %v1368 = vadd.f32 %v1279, %v1365
    %v1369 = vtanh.pop %v1367
    %v1370 = vtanh.pop %v1368
    %v1371 = vmul.f32 %v1369, 0.5
    %v1372 = vadd.f32 %v1371, 0.5
    %v1373 = vmul.f32 %v1370, 0.5
    %v1374 = vadd.f32 %v1373, 0.5
    %v1375 = vmul.f32 %v1372, %v682
    %v1376 = vmul.f32 %v1372, %v1370
    %1378 = vrot.lane.b32.xlu0 %v1376, 64
    %v1379 = vpop.permute.xlu0 %1378
    %v1381 = vadd.f32 %v1375, %v1379
    %v1382 = vtanh.pop %v1381
    %v1383 = vmul.f32 %v1374, %v1382
    %v1384 = vld [vmem:[#allocation11] sm:$0xff]
    %v1385 = vld [vmem:[#allocation11 + $0x8] sm:$0xff]
    %v1386 = vld [vmem:[#allocation11 + $0x10] sm:$0xff]
    %v1387 = vld [vmem:[#allocation11 + $0x18] sm:$0xff]
    %v1388 = vld [vmem:[#allocation11 + $0x20] sm:$0xff]
    %v1389 = vld [vmem:[#allocation11 + $0x28] sm:$0xff]
    %v1390 = vld [vmem:[#allocation11 + $0x30] sm:$0xff]
    %v1391 = vld [vmem:[#allocation11 + $0x38] sm:$0xff]
    %v1392 = vld [vmem:[#allocation11 + $0x40] sm:$0xff]
    %v1393 = vld [vmem:[#allocation11 + $0x48] sm:$0xff]
    %v1394 = vld [vmem:[#allocation11 + $0x50] sm:$0xff]
    %v1395 = vld [vmem:[#allocation11 + $0x58] sm:$0xff]
    %v1396 = vld [vmem:[#allocation11 + $0x60] sm:$0xff]
    %v1397 = vld [vmem:[#allocation11 + $0x68] sm:$0xff]
    %v1398 = vld [vmem:[#allocation11 + $0x70] sm:$0xff]
    %v1399 = vld [vmem:[#allocation11 + $0x78] sm:$0xff]
    %v1400 = vld [vmem:[#allocation12] sm:$0xff]
    %v1401 = vld [vmem:[#allocation12 + $0x8] sm:$0xff]
    %v1402 = vld [vmem:[#allocation12 + $0x10] sm:$0xff]
    %v1403 = vld [vmem:[#allocation12 + $0x18] sm:$0xff]
    %v1404 = vld [vmem:[#allocation12 + $0x20] sm:$0xff]
    %v1405 = vld [vmem:[#allocation12 + $0x28] sm:$0xff]
    %v1406 = vld [vmem:[#allocation12 + $0x30] sm:$0xff]
    %v1407 = vld [vmem:[#allocation12 + $0x38] sm:$0xff]
    %v1408 = vld [vmem:[#allocation12 + $0x40] sm:$0xff]
    %v1409 = vld [vmem:[#allocation12 + $0x48] sm:$0xff]
    %v1410 = vld [vmem:[#allocation12 + $0x50] sm:$0xff]
    %v1411 = vld [vmem:[#allocation12 + $0x58] sm:$0xff]
    %v1412 = vld [vmem:[#allocation12 + $0x60] sm:$0xff]
    %v1413 = vld [vmem:[#allocation12 + $0x68] sm:$0xff]
    %v1414 = vld [vmem:[#allocation12 + $0x70] sm:$0xff]
    %v1415 = vld [vmem:[#allocation12 + $0x78] sm:$0xff]
    %1416 = vmatprep.subr.mxu0 %v1401
    %1417 = vmatpush1.msra.mxu0 %v1400
    %1418 = vmatprep.subr.mxu0 %v1403
    %1419 = vmatpush1.msra.mxu0 %v1402
    %1420 = vmatprep.subr.mxu0 %v1405
    %1421 = vmatpush1.msra.mxu0 %v1404
    %1422 = vmatprep.subr.mxu0 %v1407
    %1423 = vmatpush1.msra.mxu0 %v1406
    %1424 = vmatprep.subr.mxu0 %v1409
    %1425 = vmatpush1.msra.mxu0 %v1408
    %1426 = vmatprep.subr.mxu0 %v1411
    %1427 = vmatpush1.msra.mxu0 %v1410
    %1428 = vmatprep.subr.mxu0 %v1413
    %1429 = vmatpush1.msra.mxu0 %v1412
    %1430 = vmatprep.subr.mxu0 %v1415
    %1431 = vmatpush1.msra.mxu0 %v1414
    %1432 = vmatprep.subr.mxu0 0.0
    %1433 = vmatpush1.msra.mxu0 0.0
    %1434 = vmatprep.subr.mxu0 0.0
    %1435 = vmatpush1.msra.mxu0 0.0
    %1436 = vmatprep.subr.mxu0 0.0
    %1437 = vmatpush1.msra.mxu0 0.0
    %1438 = vmatprep.subr.mxu0 0.0
    %1439 = vmatpush1.msra.mxu0 0.0
    %1440 = vmatprep.subr.mxu0 0.0
    %1441 = vmatpush1.msra.mxu0 0.0
    %1442 = vmatprep.subr.mxu0 0.0
    %1443 = vmatpush1.msra.mxu0 0.0
    %1444 = vmatprep.subr.mxu0 0.0
    %1445 = vmatpush1.msra.mxu0 0.0
    %1446 = vmatprep.subr.mxu0 0.0
    %1447 = vmatpush1.msra.mxu0 0.0
    %1448 = vmatprep.subr.mxu0 0.0
    %1449 = vmatpush1.msra.mxu0 0.0
    %1450 = vmatprep.subr.mxu0 0.0
    %1451 = vmatpush1.msra.mxu0 0.0
    %1452 = vmatprep.subr.mxu0 0.0
    %1453 = vmatpush1.msra.mxu0 0.0
    %1454 = vmatprep.subr.mxu0 0.0
    %1455 = vmatpush1.msra.mxu0 0.0
    %1456 = vmatprep.subr.mxu0 0.0
    %1457 = vmatpush1.msra.mxu0 0.0
    %1458 = vmatprep.subr.mxu0 0.0
    %1459 = vmatpush1.msra.mxu0 0.0
    %1460 = vmatprep.subr.mxu0 0.0
    %1461 = vmatpush1.msra.mxu0 0.0
    %1462 = vmatprep.subr.mxu0 0.0
    %1463 = vmatpush1.msra.mxu0 0.0
    %1464 = vmatprep.subr.mxu0 0.0
    %1465 = vmatpush1.msra.mxu0 0.0
    %1466 = vmatprep.subr.mxu0 0.0
    %1467 = vmatpush1.msra.mxu0 0.0
    %1468 = vmatprep.subr.mxu0 0.0
    %1469 = vmatpush1.msra.mxu0 0.0
    %1470 = vmatprep.subr.mxu0 0.0
    %1471 = vmatpush1.msra.mxu0 0.0
    %1472 = vmatprep.subr.mxu0 0.0
    %1473 = vmatpush1.msra.mxu0 0.0
    %1474 = vmatprep.subr.mxu0 0.0
    %1475 = vmatpush1.msra.mxu0 0.0
    %1476 = vmatprep.subr.mxu0 0.0
    %1477 = vmatpush1.msra.mxu0 0.0
    %1478 = vmatprep.subr.mxu0 0.0
    %1479 = vmatpush1.msra.mxu0 0.0
    %1480 = vmatprep.mubr.f32.mxu0 0.0
    %1481 = vmatmul.mubr.f32.gmra.mrb[0].mxu0 %v987
    %v1482 = vpop.f32.mrb[0].mxu0
    %v1483 = vadd.f32 0.0, %v1482
    %v1484 = vpop.f32.mrb[0].mxu0
    %v1485 = vadd.f32 0.0, %v1484
    %1486 = vdwg.mxu0
    %1488 = vrot.lane.b32.xlu0 %v1383, 64
    %v1489 = vpop.permute.xlu0 %1488
    %v1490 = vsel %vm229, %v1489, 0
    %1492 = vmatprep.subr.mxu0 %v1385
    %1493 = vmatpush1.msra.mxu0 %v1384
    %1494 = vmatprep.subr.mxu0 %v1387
    %1495 = vmatpush1.msra.mxu0 %v1386
    %1496 = vmatprep.subr.mxu0 %v1389
    %1497 = vmatpush1.msra.mxu0 %v1388
    %1498 = vmatprep.subr.mxu0 %v1391
    %1499 = vmatpush1.msra.mxu0 %v1390
    %1500 = vmatprep.subr.mxu0 %v1393
    %1501 = vmatpush1.msra.mxu0 %v1392
    %1502 = vmatprep.subr.mxu0 %v1395
    %1503 = vmatpush1.msra.mxu0 %v1394
    %1504 = vmatprep.subr.mxu0 %v1397
    %1505 = vmatpush1.msra.mxu0 %v1396
    %1506 = vmatprep.subr.mxu0 %v1399
    %1507 = vmatpush1.msra.mxu0 %v1398
    %1508 = vmatprep.subr.mxu0 0.0
    %1509 = vmatpush1.msra.mxu0 0.0
    %1510 = vmatprep.subr.mxu0 0.0
    %1511 = vmatpush1.msra.mxu0 0.0
    %1512 = vmatprep.subr.mxu0 0.0
    %1513 = vmatpush1.msra.mxu0 0.0
    %1514 = vmatprep.subr.mxu0 0.0
    %1515 = vmatpush1.msra.mxu0 0.0
    %1516 = vmatprep.subr.mxu0 0.0
    %1517 = vmatpush1.msra.mxu0 0.0
    %1518 = vmatprep.subr.mxu0 0.0
    %1519 = vmatpush1.msra.mxu0 0.0
    %1520 = vmatprep.subr.mxu0 0.0
    %1521 = vmatpush1.msra.mxu0 0.0
    %1522 = vmatprep.subr.mxu0 0.0
    %1523 = vmatpush1.msra.mxu0 0.0
    %1524 = vmatprep.subr.mxu0 0.0
    %1525 = vmatpush1.msra.mxu0 0.0
    %1526 = vmatprep.subr.mxu0 0.0
    %1527 = vmatpush1.msra.mxu0 0.0
    %1528 = vmatprep.subr.mxu0 0.0
    %1529 = vmatpush1.msra.mxu0 0.0
    %1530 = vmatprep.subr.mxu0 0.0
    %1531 = vmatpush1.msra.mxu0 0.0
    %1532 = vmatprep.subr.mxu0 0.0
    %1533 = vmatpush1.msra.mxu0 0.0
    %1534 = vmatprep.subr.mxu0 0.0
    %1535 = vmatpush1.msra.mxu0 0.0
    %1536 = vmatprep.subr.mxu0 0.0
    %1537 = vmatpush1.msra.mxu0 0.0
    %1538 = vmatprep.subr.mxu0 0.0
    %1539 = vmatpush1.msra.mxu0 0.0
    %1540 = vmatprep.subr.mxu0 0.0
    %1541 = vmatpush1.msra.mxu0 0.0
    %1542 = vmatprep.subr.mxu0 0.0
    %1543 = vmatpush1.msra.mxu0 0.0
    %1544 = vmatprep.subr.mxu0 0.0
    %1545 = vmatpush1.msra.mxu0 0.0
    %1546 = vmatprep.subr.mxu0 0.0
    %1547 = vmatpush1.msra.mxu0 0.0
    %1548 = vmatprep.subr.mxu0 0.0
    %1549 = vmatpush1.msra.mxu0 0.0
    %1550 = vmatprep.subr.mxu0 0.0
    %1551 = vmatpush1.msra.mxu0 0.0
    %1552 = vmatprep.subr.mxu0 0.0
    %1553 = vmatpush1.msra.mxu0 0.0
    %1554 = vmatprep.subr.mxu0 0.0
    %1555 = vmatpush1.msra.mxu0 0.0
    %1556 = vmatprep.mubr.f32.mxu0 0.0
    %1557 = vmatmul.mubr.f32.gmra.mrb[0].mxu0 %v1490
    %v1558 = vpop.f32.mrb[0].mxu0
    %v1559 = vadd.f32 %v1483, %v1558
    %v1560 = vpop.f32.mrb[0].mxu0
    %v1561 = vadd.f32 %v1485, %v1560
    %1562 = vdwg.mxu0
    %v1563 = vadd.f32 %v1559, %v545
    %v1564 = vadd.f32 %v1561, %v549
    %v1565 = vtanh.pop %v1563
    %v1566 = vtanh.pop %v1564
    %v1567 = vmul.f32 %v1565, 0.5
    %v1568 = vadd.f32 %v1567, 0.5
    %v1569 = vmul.f32 %v1566, 0.5
    %v1570 = vadd.f32 %v1569, 0.5
    %v1571 = vmul.f32 %v1568, %v878
    %v1572 = vmul.f32 %v1568, %v1566
    %1574 = vrot.lane.b32.xlu0 %v1572, 64
    %v1575 = vpop.permute.xlu0 %1574
    %v1577 = vadd.f32 %v1571, %v1575
    %v1578 = vtanh.pop %v1577
    %v1579 = vmul.f32 %v1570, %v1578
    %v1580 = vld [vmem:[#allocation14] sm:$0xff]
    %v1581 = vld [vmem:[#allocation14 + $0x8] sm:$0xff]
    %v1582 = vld [vmem:[#allocation14 + $0x10] sm:$0xff]
    %v1583 = vld [vmem:[#allocation14 + $0x18] sm:$0xff]
    %v1584 = vld [vmem:[#allocation14 + $0x20] sm:$0xff]
    %v1585 = vld [vmem:[#allocation14 + $0x28] sm:$0xff]
    %v1586 = vld [vmem:[#allocation14 + $0x30] sm:$0xff]
    %v1587 = vld [vmem:[#allocation14 + $0x38] sm:$0xff]
    %v1588 = vld [vmem:[#allocation14 + $0x40] sm:$0xff]
    %v1589 = vld [vmem:[#allocation14 + $0x48] sm:$0xff]
    %v1590 = vld [vmem:[#allocation14 + $0x50] sm:$0xff]
    %v1591 = vld [vmem:[#allocation14 + $0x58] sm:$0xff]
    %v1592 = vld [vmem:[#allocation14 + $0x60] sm:$0xff]
    %v1593 = vld [vmem:[#allocation14 + $0x68] sm:$0xff]
    %v1594 = vld [vmem:[#allocation14 + $0x70] sm:$0xff]
    %v1595 = vld [vmem:[#allocation14 + $0x78] sm:$0xff]
    %v1596 = vld [vmem:[#allocation15] sm:$0xff]
    %v1597 = vld [vmem:[#allocation15 + $0x8] sm:$0xff]
    %v1598 = vld [vmem:[#allocation15 + $0x10] sm:$0xff]
    %v1599 = vld [vmem:[#allocation15 + $0x18] sm:$0xff]
    %v1600 = vld [vmem:[#allocation15 + $0x20] sm:$0xff]
    %v1601 = vld [vmem:[#allocation15 + $0x28] sm:$0xff]
    %v1602 = vld [vmem:[#allocation15 + $0x30] sm:$0xff]
    %v1603 = vld [vmem:[#allocation15 + $0x38] sm:$0xff]
    %v1604 = vld [vmem:[#allocation15 + $0x40] sm:$0xff]
    %v1605 = vld [vmem:[#allocation15 + $0x48] sm:$0xff]
    %v1606 = vld [vmem:[#allocation15 + $0x50] sm:$0xff]
    %v1607 = vld [vmem:[#allocation15 + $0x58] sm:$0xff]
    %v1608 = vld [vmem:[#allocation15 + $0x60] sm:$0xff]
    %v1609 = vld [vmem:[#allocation15 + $0x68] sm:$0xff]
    %v1610 = vld [vmem:[#allocation15 + $0x70] sm:$0xff]
    %v1611 = vld [vmem:[#allocation15 + $0x78] sm:$0xff]
    %1612 = vmatprep.subr.mxu0 %v1597
    %1613 = vmatpush1.msra.mxu0 %v1596
    %1614 = vmatprep.subr.mxu0 %v1599
    %1615 = vmatpush1.msra.mxu0 %v1598
    %1616 = vmatprep.subr.mxu0 %v1601
    %1617 = vmatpush1.msra.mxu0 %v1600
    %1618 = vmatprep.subr.mxu0 %v1603
    %1619 = vmatpush1.msra.mxu0 %v1602
    %1620 = vmatprep.subr.mxu0 %v1605
    %1621 = vmatpush1.msra.mxu0 %v1604
    %1622 = vmatprep.subr.mxu0 %v1607
    %1623 = vmatpush1.msra.mxu0 %v1606
    %1624 = vmatprep.subr.mxu0 %v1609
    %1625 = vmatpush1.msra.mxu0 %v1608
    %1626 = vmatprep.subr.mxu0 %v1611
    %1627 = vmatpush1.msra.mxu0 %v1610
    %1628 = vmatprep.subr.mxu0 0.0
    %1629 = vmatpush1.msra.mxu0 0.0
    %1630 = vmatprep.subr.mxu0 0.0
    %1631 = vmatpush1.msra.mxu0 0.0
    %1632 = vmatprep.subr.mxu0 0.0
    %1633 = vmatpush1.msra.mxu0 0.0
    %1634 = vmatprep.subr.mxu0 0.0
    %1635 = vmatpush1.msra.mxu0 0.0
    %1636 = vmatprep.subr.mxu0 0.0
    %1637 = vmatpush1.msra.mxu0 0.0
    %1638 = vmatprep.subr.mxu0 0.0
    %1639 = vmatpush1.msra.mxu0 0.0
    %1640 = vmatprep.subr.mxu0 0.0
    %1641 = vmatpush1.msra.mxu0 0.0
    %1642 = vmatprep.subr.mxu0 0.0
    %1643 = vmatpush1.msra.mxu0 0.0
    %1644 = vmatprep.subr.mxu0 0.0
    %1645 = vmatpush1.msra.mxu0 0.0
    %1646 = vmatprep.subr.mxu0 0.0
    %1647 = vmatpush1.msra.mxu0 0.0
    %1648 = vmatprep.subr.mxu0 0.0
    %1649 = vmatpush1.msra.mxu0 0.0
    %1650 = vmatprep.subr.mxu0 0.0
    %1651 = vmatpush1.msra.mxu0 0.0
    %1652 = vmatprep.subr.mxu0 0.0
    %1653 = vmatpush1.msra.mxu0 0.0
    %1654 = vmatprep.subr.mxu0 0.0
    %1655 = vmatpush1.msra.mxu0 0.0
    %1656 = vmatprep.subr.mxu0 0.0
    %1657 = vmatpush1.msra.mxu0 0.0
    %1658 = vmatprep.subr.mxu0 0.0
    %1659 = vmatpush1.msra.mxu0 0.0
    %1660 = vmatprep.subr.mxu0 0.0
    %1661 = vmatpush1.msra.mxu0 0.0
    %1662 = vmatprep.subr.mxu0 0.0
    %1663 = vmatpush1.msra.mxu0 0.0
    %1664 = vmatprep.subr.mxu0 0.0
    %1665 = vmatpush1.msra.mxu0 0.0
    %1666 = vmatprep.subr.mxu0 0.0
    %1667 = vmatpush1.msra.mxu0 0.0
    %1668 = vmatprep.subr.mxu0 0.0
    %1669 = vmatpush1.msra.mxu0 0.0
    %1670 = vmatprep.subr.mxu0 0.0
    %1671 = vmatpush1.msra.mxu0 0.0
    %1672 = vmatprep.subr.mxu0 0.0
    %1673 = vmatpush1.msra.mxu0 0.0
    %1674 = vmatprep.subr.mxu0 0.0
    %1675 = vmatpush1.msra.mxu0 0.0
    %1676 = vmatprep.mubr.f32.mxu0 0.0
    %1677 = vmatmul.mubr.f32.gmra.mrb[0].mxu0 %v1183
    %v1678 = vpop.f32.mrb[0].mxu0
    %v1679 = vadd.f32 0.0, %v1678
    %v1680 = vpop.f32.mrb[0].mxu0
    %v1681 = vadd.f32 0.0, %v1680
    %1682 = vdwg.mxu0
    %1684 = vrot.lane.b32.xlu0 %v1579, 64
    %v1685 = vpop.permute.xlu0 %1684
    %v1686 = vsel %vm229, %v1685, 0
    %1688 = vmatprep.subr.mxu0 %v1581
    %1689 = vmatpush1.msra.mxu0 %v1580
    %1690 = vmatprep.subr.mxu0 %v1583
    %1691 = vmatpush1.msra.mxu0 %v1582
    %1692 = vmatprep.subr.mxu0 %v1585
    %1693 = vmatpush1.msra.mxu0 %v1584
    %1694 = vmatprep.subr.mxu0 %v1587
    %1695 = vmatpush1.msra.mxu0 %v1586
    %1696 = vmatprep.subr.mxu0 %v1589
    %1697 = vmatpush1.msra.mxu0 %v1588
    %1698 = vmatprep.subr.mxu0 %v1591
    %1699 = vmatpush1.msra.mxu0 %v1590
    %1700 = vmatprep.subr.mxu0 %v1593
    %1701 = vmatpush1.msra.mxu0 %v1592
    %1702 = vmatprep.subr.mxu0 %v1595
    %1703 = vmatpush1.msra.mxu0 %v1594
    %1704 = vmatprep.subr.mxu0 0.0
    %1705 = vmatpush1.msra.mxu0 0.0
    %1706 = vmatprep.subr.mxu0 0.0
    %1707 = vmatpush1.msra.mxu0 0.0
    %1708 = vmatprep.subr.mxu0 0.0
    %1709 = vmatpush1.msra.mxu0 0.0
    %1710 = vmatprep.subr.mxu0 0.0
    %1711 = vmatpush1.msra.mxu0 0.0
    %1712 = vmatprep.subr.mxu0 0.0
    %1713 = vmatpush1.msra.mxu0 0.0
    %1714 = vmatprep.subr.mxu0 0.0
    %1715 = vmatpush1.msra.mxu0 0.0
    %1716 = vmatprep.subr.mxu0 0.0
    %1717 = vmatpush1.msra.mxu0 0.0
    %1718 = vmatprep.subr.mxu0 0.0
    %1719 = vmatpush1.msra.mxu0 0.0
    %1720 = vmatprep.subr.mxu0 0.0
    %1721 = vmatpush1.msra.mxu0 0.0
    %1722 = vmatprep.subr.mxu0 0.0
    %1723 = vmatpush1.msra.mxu0 0.0
    %1724 = vmatprep.subr.mxu0 0.0
    %1725 = vmatpush1.msra.mxu0 0.0
    %1726 = vmatprep.subr.mxu0 0.0
    %1727 = vmatpush1.msra.mxu0 0.0
    %1728 = vmatprep.subr.mxu0 0.0
    %1729 = vmatpush1.msra.mxu0 0.0
    %1730 = vmatprep.subr.mxu0 0.0
    %1731 = vmatpush1.msra.mxu0 0.0
    %1732 = vmatprep.subr.mxu0 0.0
    %1733 = vmatpush1.msra.mxu0 0.0
    %1734 = vmatprep.subr.mxu0 0.0
    %1735 = vmatpush1.msra.mxu0 0.0
    %1736 = vmatprep.subr.mxu0 0.0
    %1737 = vmatpush1.msra.mxu0 0.0
    %1738 = vmatprep.subr.mxu0 0.0
    %1739 = vmatpush1.msra.mxu0 0.0
    %1740 = vmatprep.subr.mxu0 0.0
    %1741 = vmatpush1.msra.mxu0 0.0
    %1742 = vmatprep.subr.mxu0 0.0
    %1743 = vmatpush1.msra.mxu0 0.0
    %1744 = vmatprep.subr.mxu0 0.0
    %1745 = vmatpush1.msra.mxu0 0.0
    %1746 = vmatprep.subr.mxu0 0.0
    %1747 = vmatpush1.msra.mxu0 0.0
    %1748 = vmatprep.subr.mxu0 0.0
    %1749 = vmatpush1.msra.mxu0 0.0
    %1750 = vmatprep.subr.mxu0 0.0
    %1751 = vmatpush1.msra.mxu0 0.0
    %1752 = vmatprep.mubr.f32.mxu0 0.0
    %1753 = vmatmul.mubr.f32.gmra.mrb[0].mxu0 %v1686
    %v1754 = vpop.f32.mrb[0].mxu0
    %v1755 = vadd.f32 %v1679, %v1754
    %v1756 = vpop.f32.mrb[0].mxu0
    %v1757 = vadd.f32 %v1681, %v1756
    %1758 = vdwg.mxu0
    %v1759 = vadd.f32 %v1755, %v557
    %v1760 = vadd.f32 %v1757, %v561
    %v1761 = vtanh.pop %v1759
    %v1762 = vtanh.pop %v1760
    %v1763 = vmul.f32 %v1761, 0.5
    %v1764 = vadd.f32 %v1763, 0.5
    %v1765 = vmul.f32 %v1762, 0.5
    %v1766 = vadd.f32 %v1765, 0.5
    %v1767 = vmul.f32 %v1764, %v1074
    %v1768 = vmul.f32 %v1764, %v1762
    %1770 = vrot.lane.b32.xlu0 %v1768, 64
    %v1771 = vpop.permute.xlu0 %1770
    %v1773 = vadd.f32 %v1767, %v1771
    %v1774 = vtanh.pop %v1773
    %v1775 = vmul.f32 %v1766, %v1774
    %v1776 = vld [vmem:[#allocation17] sm:$0xff]
    %v1777 = vld [vmem:[#allocation17 + $0x8] sm:$0xff]
    %v1778 = vld [vmem:[#allocation17 + $0x10] sm:$0xff]
    %v1779 = vld [vmem:[#allocation17 + $0x18] sm:$0xff]
    %v1780 = vld [vmem:[#allocation17 + $0x20] sm:$0xff]
    %v1781 = vld [vmem:[#allocation17 + $0x28] sm:$0xff]
    %v1782 = vld [vmem:[#allocation17 + $0x30] sm:$0xff]
    %v1783 = vld [vmem:[#allocation17 + $0x38] sm:$0xff]
    %v1784 = vld [vmem:[#allocation17 + $0x40] sm:$0xff]
    %v1785 = vld [vmem:[#allocation17 + $0x48] sm:$0xff]
    %v1786 = vld [vmem:[#allocation17 + $0x50] sm:$0xff]
    %v1787 = vld [vmem:[#allocation17 + $0x58] sm:$0xff]
    %v1788 = vld [vmem:[#allocation17 + $0x60] sm:$0xff]
    %v1789 = vld [vmem:[#allocation17 + $0x68] sm:$0xff]
    %v1790 = vld [vmem:[#allocation17 + $0x70] sm:$0xff]
    %v1791 = vld [vmem:[#allocation17 + $0x78] sm:$0xff]
    %v1792 = vld [vmem:[#allocation18] sm:$0xff]
    %v1793 = vld [vmem:[#allocation18 + $0x8] sm:$0xff]
    %v1794 = vld [vmem:[#allocation18 + $0x10] sm:$0xff]
    %v1795 = vld [vmem:[#allocation18 + $0x18] sm:$0xff]
    %v1796 = vld [vmem:[#allocation18 + $0x20] sm:$0xff]
    %v1797 = vld [vmem:[#allocation18 + $0x28] sm:$0xff]
    %v1798 = vld [vmem:[#allocation18 + $0x30] sm:$0xff]
    %v1799 = vld [vmem:[#allocation18 + $0x38] sm:$0xff]
    %v1800 = vld [vmem:[#allocation18 + $0x40] sm:$0xff]
    %v1801 = vld [vmem:[#allocation18 + $0x48] sm:$0xff]
    %v1802 = vld [vmem:[#allocation18 + $0x50] sm:$0xff]
    %v1803 = vld [vmem:[#allocation18 + $0x58] sm:$0xff]
    %v1804 = vld [vmem:[#allocation18 + $0x60] sm:$0xff]
    %v1805 = vld [vmem:[#allocation18 + $0x68] sm:$0xff]
    %v1806 = vld [vmem:[#allocation18 + $0x70] sm:$0xff]
    %v1807 = vld [vmem:[#allocation18 + $0x78] sm:$0xff]
    %v1808 = vsel %vm229, %v1275, 0
    %1810 = vmatprep.subr.mxu0 %v1793
    %1811 = vmatpush1.msra.mxu0 %v1792
    %1812 = vmatprep.subr.mxu0 %v1795
    %1813 = vmatpush1.msra.mxu0 %v1794
    %1814 = vmatprep.subr.mxu0 %v1797
    %1815 = vmatpush1.msra.mxu0 %v1796
    %1816 = vmatprep.subr.mxu0 %v1799
    %1817 = vmatpush1.msra.mxu0 %v1798
    %1818 = vmatprep.subr.mxu0 %v1801
    %1819 = vmatpush1.msra.mxu0 %v1800
    %1820 = vmatprep.subr.mxu0 %v1803
    %1821 = vmatpush1.msra.mxu0 %v1802
    %1822 = vmatprep.subr.mxu0 %v1805
    %1823 = vmatpush1.msra.mxu0 %v1804
    %1824 = vmatprep.subr.mxu0 %v1807
    %1825 = vmatpush1.msra.mxu0 %v1806
    %1826 = vmatprep.subr.mxu0 0.0
    %1827 = vmatpush1.msra.mxu0 0.0
    %1828 = vmatprep.subr.mxu0 0.0
    %1829 = vmatpush1.msra.mxu0 0.0
    %1830 = vmatprep.subr.mxu0 0.0
    %1831 = vmatpush1.msra.mxu0 0.0
    %1832 = vmatprep.subr.mxu0 0.0
    %1833 = vmatpush1.msra.mxu0 0.0
    %1834 = vmatprep.subr.mxu0 0.0
    %1835 = vmatpush1.msra.mxu0 0.0
    %1836 = vmatprep.subr.mxu0 0.0
    %1837 = vmatpush1.msra.mxu0 0.0
    %1838 = vmatprep.subr.mxu0 0.0
    %1839 = vmatpush1.msra.mxu0 0.0
    %1840 = vmatprep.subr.mxu0 0.0
    %1841 = vmatpush1.msra.mxu0 0.0
    %1842 = vmatprep.subr.mxu0 0.0
    %1843 = vmatpush1.msra.mxu0 0.0
    %1844 = vmatprep.subr.mxu0 0.0
    %1845 = vmatpush1.msra.mxu0 0.0
    %1846 = vmatprep.subr.mxu0 0.0
    %1847 = vmatpush1.msra.mxu0 0.0
    %1848 = vmatprep.subr.mxu0 0.0
    %1849 = vmatpush1.msra.mxu0 0.0
    %1850 = vmatprep.subr.mxu0 0.0
    %1851 = vmatpush1.msra.mxu0 0.0
    %1852 = vmatprep.subr.mxu0 0.0
    %1853 = vmatpush1.msra.mxu0 0.0
    %1854 = vmatprep.subr.mxu0 0.0
    %1855 = vmatpush1.msra.mxu0 0.0
    %1856 = vmatprep.subr.mxu0 0.0
    %1857 = vmatpush1.msra.mxu0 0.0
    %1858 = vmatprep.subr.mxu0 0.0
    %1859 = vmatpush1.msra.mxu0 0.0
    %1860 = vmatprep.subr.mxu0 0.0
    %1861 = vmatpush1.msra.mxu0 0.0
    %1862 = vmatprep.subr.mxu0 0.0
    %1863 = vmatpush1.msra.mxu0 0.0
    %1864 = vmatprep.subr.mxu0 0.0
    %1865 = vmatpush1.msra.mxu0 0.0
    %1866 = vmatprep.subr.mxu0 0.0
    %1867 = vmatpush1.msra.mxu0 0.0
    %1868 = vmatprep.subr.mxu0 0.0
    %1869 = vmatpush1.msra.mxu0 0.0
    %1870 = vmatprep.subr.mxu0 0.0
    %1871 = vmatpush1.msra.mxu0 0.0
    %1872 = vmatprep.subr.mxu0 0.0
    %1873 = vmatpush1.msra.mxu0 0.0
    %1874 = vmatprep.mubr.f32.mxu0 0.0
    %1875 = vmatmul.mubr.f32.gmra.mrb[0].mxu0 %v1808
    %v1876 = vpop.f32.mrb[0].mxu0
    %v1877 = vadd.f32 0.0, %v1876
    %v1878 = vpop.f32.mrb[0].mxu0
    %v1879 = vadd.f32 0.0, %v1878
    %1880 = vdwg.mxu0
    %1882 = vrot.lane.b32.xlu0 %v1775, 64
    %v1883 = vpop.permute.xlu0 %1882
    %v1884 = vsel %vm229, %v1883, 0
    %1886 = vmatprep.subr.mxu0 %v1777
    %1887 = vmatpush1.msra.mxu0 %v1776
    %1888 = vmatprep.subr.mxu0 %v1779
    %1889 = vmatpush1.msra.mxu0 %v1778
    %1890 = vmatprep.subr.mxu0 %v1781
    %1891 = vmatpush1.msra.mxu0 %v1780
    %1892 = vmatprep.subr.mxu0 %v1783
    %1893 = vmatpush1.msra.mxu0 %v1782
    %1894 = vmatprep.subr.mxu0 %v1785
    %1895 = vmatpush1.msra.mxu0 %v1784
    %1896 = vmatprep.subr.mxu0 %v1787
    %1897 = vmatpush1.msra.mxu0 %v1786
    %1898 = vmatprep.subr.mxu0 %v1789
    %1899 = vmatpush1.msra.mxu0 %v1788
    %1900 = vmatprep.subr.mxu0 %v1791
    %1901 = vmatpush1.msra.mxu0 %v1790
    %1902 = vmatprep.subr.mxu0 0.0
    %1903 = vmatpush1.msra.mxu0 0.0
    %1904 = vmatprep.subr.mxu0 0.0
    %1905 = vmatpush1.msra.mxu0 0.0
    %1906 = vmatprep.subr.mxu0 0.0
    %1907 = vmatpush1.msra.mxu0 0.0
    %1908 = vmatprep.subr.mxu0 0.0
    %1909 = vmatpush1.msra.mxu0 0.0
    %1910 = vmatprep.subr.mxu0 0.0
    %1911 = vmatpush1.msra.mxu0 0.0
    %1912 = vmatprep.subr.mxu0 0.0
    %1913 = vmatpush1.msra.mxu0 0.0
    %1914 = vmatprep.subr.mxu0 0.0
    %1915 = vmatpush1.msra.mxu0 0.0
    %1916 = vmatprep.subr.mxu0 0.0
    %1917 = vmatpush1.msra.mxu0 0.0
    %1918 = vmatprep.subr.mxu0 0.0
    %1919 = vmatpush1.msra.mxu0 0.0
    %1920 = vmatprep.subr.mxu0 0.0
    %1921 = vmatpush1.msra.mxu0 0.0
    %1922 = vmatprep.subr.mxu0 0.0
    %1923 = vmatpush1.msra.mxu0 0.0
    %1924 = vmatprep.subr.mxu0 0.0
    %1925 = vmatpush1.msra.mxu0 0.0
    %1926 = vmatprep.subr.mxu0 0.0
    %1927 = vmatpush1.msra.mxu0 0.0
    %1928 = vmatprep.subr.mxu0 0.0
    %1929 = vmatpush1.msra.mxu0 0.0
    %1930 = vmatprep.subr.mxu0 0.0
    %1931 = vmatpush1.msra.mxu0 0.0
    %1932 = vmatprep.subr.mxu0 0.0
    %1933 = vmatpush1.msra.mxu0 0.0
    %1934 = vmatprep.subr.mxu0 0.0
    %1935 = vmatpush1.msra.mxu0 0.0
    %1936 = vmatprep.subr.mxu0 0.0
    %1937 = vmatpush1.msra.mxu0 0.0
    %1938 = vmatprep.subr.mxu0 0.0
    %1939 = vmatpush1.msra.mxu0 0.0
    %1940 = vmatprep.subr.mxu0 0.0
    %1941 = vmatpush1.msra.mxu0 0.0
    %1942 = vmatprep.subr.mxu0 0.0
    %1943 = vmatpush1.msra.mxu0 0.0
    %1944 = vmatprep.subr.mxu0 0.0
    %1945 = vmatpush1.msra.mxu0 0.0
    %1946 = vmatprep.subr.mxu0 0.0
    %1947 = vmatpush1.msra.mxu0 0.0
    %1948 = vmatprep.subr.mxu0 0.0
    %1949 = vmatpush1.msra.mxu0 0.0
    %1950 = vmatprep.mubr.f32.mxu0 0.0
    %1951 = vmatmul.mubr.f32.gmra.mrb[0].mxu0 %v1884
    %v1952 = vpop.f32.mrb[0].mxu0
    %v1953 = vadd.f32 %v1877, %v1952
    %v1954 = vpop.f32.mrb[0].mxu0
    %v1955 = vadd.f32 %v1879, %v1954
    %1956 = vdwg.mxu0
    %v1957 = vadd.f32 %v1953, %v569
    %v1958 = vadd.f32 %v1955, %v573
    %v1959 = vtanh.pop %v1957
    %v1960 = vtanh.pop %v1958
    %v1961 = vmul.f32 %v1959, 0.5
    %v1962 = vadd.f32 %v1961, 0.5
    %v1963 = vmul.f32 %v1960, 0.5
    %v1964 = vadd.f32 %v1963, 0.5
    %v1965 = vmul.f32 %v1962, %v1270
    %v1966 = vmul.f32 %v1962, %v1960
    %1968 = vrot.lane.b32.xlu0 %v1966, 64
    %v1969 = vpop.permute.xlu0 %1968
    %v1971 = vadd.f32 %v1965, %v1969
    %v1972 = vtanh.pop %v1971
    %v1973 = vmul.f32 %v1964, %v1972
    %1975 = vrot.lane.b32.xlu0 %v1973, 64
    %v1976 = vpop.permute.xlu0 %1975
    %1978 = vst.msk [vmem:[#allocation21 + $0x8] sm:$0xff] %vm229, %v1976
    %v1979 = vld [vmem:[#allocation2 + $0x20] sm:$0xff]
    %v1980 = vld [vmem:[#allocation2 + $0x28] sm:$0xff]
    %v1981 = vld [vmem:[#allocation9] sm:$0xff]
    %v1982 = vld [vmem:[#allocation9 + $0x8] sm:$0xff]
    %v1983 = vld [vmem:[#allocation9 + $0x10] sm:$0xff]
    %v1984 = vld [vmem:[#allocation9 + $0x18] sm:$0xff]
    %v1985 = vld [vmem:[#allocation9 + $0x20] sm:$0xff]
    %v1986 = vld [vmem:[#allocation9 + $0x28] sm:$0xff]
    %v1987 = vld [vmem:[#allocation9 + $0x30] sm:$0xff]
    %v1988 = vld [vmem:[#allocation9 + $0x38] sm:$0xff]
    %v1989 = vld [vmem:[#allocation9 + $0x40] sm:$0xff]
    %v1990 = vld [vmem:[#allocation9 + $0x48] sm:$0xff]
    %v1991 = vld [vmem:[#allocation9 + $0x50] sm:$0xff]
    %v1992 = vld [vmem:[#allocation9 + $0x58] sm:$0xff]
    %v1993 = vld [vmem:[#allocation9 + $0x60] sm:$0xff]
    %v1994 = vld [vmem:[#allocation9 + $0x68] sm:$0xff]
    %v1995 = vld [vmem:[#allocation9 + $0x70] sm:$0xff]
    %v1996 = vld [vmem:[#allocation9 + $0x78] sm:$0xff]
    %1997 = vmatprep.subr.mxu0 %v1982
    %1998 = vmatpush1.msra.mxu0 %v1981
    %1999 = vmatprep.subr.mxu0 %v1984
    %2000 = vmatpush1.msra.mxu0 %v1983
    %2001 = vmatprep.subr.mxu0 %v1986
    %2002 = vmatpush1.msra.mxu0 %v1985
    %2003 = vmatprep.subr.mxu0 %v1988
    %2004 = vmatpush1.msra.mxu0 %v1987
    %2005 = vmatprep.subr.mxu0 %v1990
    %2006 = vmatpush1.msra.mxu0 %v1989
    %2007 = vmatprep.subr.mxu0 %v1992
    %2008 = vmatpush1.msra.mxu0 %v1991
    %2009 = vmatprep.subr.mxu0 %v1994
    %2010 = vmatpush1.msra.mxu0 %v1993
    %2011 = vmatprep.subr.mxu0 %v1996
    %2012 = vmatpush1.msra.mxu0 %v1995
    %2013 = vmatprep.subr.mxu0 0.0
    %2014 = vmatpush1.msra.mxu0 0.0
    %2015 = vmatprep.subr.mxu0 0.0
    %2016 = vmatpush1.msra.mxu0 0.0
    %2017 = vmatprep.subr.mxu0 0.0
    %2018 = vmatpush1.msra.mxu0 0.0
    %2019 = vmatprep.subr.mxu0 0.0
    %2020 = vmatpush1.msra.mxu0 0.0
    %2021 = vmatprep.subr.mxu0 0.0
    %2022 = vmatpush1.msra.mxu0 0.0
    %2023 = vmatprep.subr.mxu0 0.0
    %2024 = vmatpush1.msra.mxu0 0.0
    %2025 = vmatprep.subr.mxu0 0.0
    %2026 = vmatpush1.msra.mxu0 0.0
    %2027 = vmatprep.subr.mxu0 0.0
    %2028 = vmatpush1.msra.mxu0 0.0
    %2029 = vmatprep.subr.mxu0 0.0
    %2030 = vmatpush1.msra.mxu0 0.0
    %2031 = vmatprep.subr.mxu0 0.0
    %2032 = vmatpush1.msra.mxu0 0.0
    %2033 = vmatprep.subr.mxu0 0.0
    %2034 = vmatpush1.msra.mxu0 0.0
    %2035 = vmatprep.subr.mxu0 0.0
    %2036 = vmatpush1.msra.mxu0 0.0
    %2037 = vmatprep.subr.mxu0 0.0
    %2038 = vmatpush1.msra.mxu0 0.0
    %2039 = vmatprep.subr.mxu0 0.0
    %2040 = vmatpush1.msra.mxu0 0.0
    %2041 = vmatprep.subr.mxu0 0.0
    %2042 = vmatpush1.msra.mxu0 0.0
    %2043 = vmatprep.subr.mxu0 0.0
    %2044 = vmatpush1.msra.mxu0 0.0
    %2045 = vmatprep.subr.mxu0 0.0
    %2046 = vmatpush1.msra.mxu0 0.0
    %2047 = vmatprep.subr.mxu0 0.0
    %2048 = vmatpush1.msra.mxu0 0.0
    %2049 = vmatprep.subr.mxu0 0.0
    %2050 = vmatpush1.msra.mxu0 0.0
    %2051 = vmatprep.subr.mxu0 0.0
    %2052 = vmatpush1.msra.mxu0 0.0
    %2053 = vmatprep.subr.mxu0 0.0
    %2054 = vmatpush1.msra.mxu0 0.0
    %2055 = vmatprep.subr.mxu0 0.0
    %2056 = vmatpush1.msra.mxu0 0.0
    %2057 = vmatprep.subr.mxu0 0.0
    %2058 = vmatpush1.msra.mxu0 0.0
    %2059 = vmatprep.subr.mxu0 0.0
    %2060 = vmatpush1.msra.mxu0 0.0
    %2061 = vmatprep.mubr.f32.mxu0 0.0
    %2062 = vmatmul.mubr.f32.gmra.mrb[0].mxu0 %v1490
    %v2063 = vpop.f32.mrb[0].mxu0
    %v2064 = vadd.f32 0.0, %v2063
    %v2065 = vpop.f32.mrb[0].mxu0
    %v2066 = vadd.f32 0.0, %v2065
    %2067 = vdwg.mxu0
    %v2068 = vadd.f32 %v1979, %v2064
    %v2069 = vadd.f32 %v1980, %v2066
    %v2070 = vtanh.pop %v2068
    %v2071 = vtanh.pop %v2069
    %v2072 = vmul.f32 %v2070, 0.5
    %v2073 = vadd.f32 %v2072, 0.5
    %v2074 = vmul.f32 %v2071, 0.5
    %v2075 = vadd.f32 %v2074, 0.5
    %v2076 = vmul.f32 %v2073, %v1381
    %v2077 = vmul.f32 %v2073, %v2071
    %2079 = vrot.lane.b32.xlu0 %v2077, 64
    %v2080 = vpop.permute.xlu0 %2079
    %v2082 = vadd.f32 %v2076, %v2080
    %v2083 = vtanh.pop %v2082
    %v2084 = vmul.f32 %v2075, %v2083
    %v2085 = vld [vmem:[#allocation11] sm:$0xff]
    %v2086 = vld [vmem:[#allocation11 + $0x8] sm:$0xff]
    %v2087 = vld [vmem:[#allocation11 + $0x10] sm:$0xff]
    %v2088 = vld [vmem:[#allocation11 + $0x18] sm:$0xff]
    %v2089 = vld [vmem:[#allocation11 + $0x20] sm:$0xff]
    %v2090 = vld [vmem:[#allocation11 + $0x28] sm:$0xff]
    %v2091 = vld [vmem:[#allocation11 + $0x30] sm:$0xff]
    %v2092 = vld [vmem:[#allocation11 + $0x38] sm:$0xff]
    %v2093 = vld [vmem:[#allocation11 + $0x40] sm:$0xff]
    %v2094 = vld [vmem:[#allocation11 + $0x48] sm:$0xff]
    %v2095 = vld [vmem:[#allocation11 + $0x50] sm:$0xff]
    %v2096 = vld [vmem:[#allocation11 + $0x58] sm:$0xff]
    %v2097 = vld [vmem:[#allocation11 + $0x60] sm:$0xff]
    %v2098 = vld [vmem:[#allocation11 + $0x68] sm:$0xff]
    %v2099 = vld [vmem:[#allocation11 + $0x70] sm:$0xff]
    %v2100 = vld [vmem:[#allocation11 + $0x78] sm:$0xff]
    %v2101 = vld [vmem:[#allocation12] sm:$0xff]
    %v2102 = vld [vmem:[#allocation12 + $0x8] sm:$0xff]
    %v2103 = vld [vmem:[#allocation12 + $0x10] sm:$0xff]
    %v2104 = vld [vmem:[#allocation12 + $0x18] sm:$0xff]
    %v2105 = vld [vmem:[#allocation12 + $0x20] sm:$0xff]
    %v2106 = vld [vmem:[#allocation12 + $0x28] sm:$0xff]
    %v2107 = vld [vmem:[#allocation12 + $0x30] sm:$0xff]
    %v2108 = vld [vmem:[#allocation12 + $0x38] sm:$0xff]
    %v2109 = vld [vmem:[#allocation12 + $0x40] sm:$0xff]
    %v2110 = vld [vmem:[#allocation12 + $0x48] sm:$0xff]
    %v2111 = vld [vmem:[#allocation12 + $0x50] sm:$0xff]
    %v2112 = vld [vmem:[#allocation12 + $0x58] sm:$0xff]
    %v2113 = vld [vmem:[#allocation12 + $0x60] sm:$0xff]
    %v2114 = vld [vmem:[#allocation12 + $0x68] sm:$0xff]
    %v2115 = vld [vmem:[#allocation12 + $0x70] sm:$0xff]
    %v2116 = vld [vmem:[#allocation12 + $0x78] sm:$0xff]
    %2117 = vmatprep.subr.mxu0 %v2102
    %2118 = vmatpush1.msra.mxu0 %v2101
    %2119 = vmatprep.subr.mxu0 %v2104
    %2120 = vmatpush1.msra.mxu0 %v2103
    %2121 = vmatprep.subr.mxu0 %v2106
    %2122 = vmatpush1.msra.mxu0 %v2105
    %2123 = vmatprep.subr.mxu0 %v2108
    %2124 = vmatpush1.msra.mxu0 %v2107
    %2125 = vmatprep.subr.mxu0 %v2110
    %2126 = vmatpush1.msra.mxu0 %v2109
    %2127 = vmatprep.subr.mxu0 %v2112
    %2128 = vmatpush1.msra.mxu0 %v2111
    %2129 = vmatprep.subr.mxu0 %v2114
    %2130 = vmatpush1.msra.mxu0 %v2113
    %2131 = vmatprep.subr.mxu0 %v2116
    %2132 = vmatpush1.msra.mxu0 %v2115
    %2133 = vmatprep.subr.mxu0 0.0
    %2134 = vmatpush1.msra.mxu0 0.0
    %2135 = vmatprep.subr.mxu0 0.0
    %2136 = vmatpush1.msra.mxu0 0.0
    %2137 = vmatprep.subr.mxu0 0.0
    %2138 = vmatpush1.msra.mxu0 0.0
    %2139 = vmatprep.subr.mxu0 0.0
    %2140 = vmatpush1.msra.mxu0 0.0
    %2141 = vmatprep.subr.mxu0 0.0
    %2142 = vmatpush1.msra.mxu0 0.0
    %2143 = vmatprep.subr.mxu0 0.0
    %2144 = vmatpush1.msra.mxu0 0.0
    %2145 = vmatprep.subr.mxu0 0.0
    %2146 = vmatpush1.msra.mxu0 0.0
    %2147 = vmatprep.subr.mxu0 0.0
    %2148 = vmatpush1.msra.mxu0 0.0
    %2149 = vmatprep.subr.mxu0 0.0
    %2150 = vmatpush1.msra.mxu0 0.0
    %2151 = vmatprep.subr.mxu0 0.0
    %2152 = vmatpush1.msra.mxu0 0.0
    %2153 = vmatprep.subr.mxu0 0.0
    %2154 = vmatpush1.msra.mxu0 0.0
    %2155 = vmatprep.subr.mxu0 0.0
    %2156 = vmatpush1.msra.mxu0 0.0
    %2157 = vmatprep.subr.mxu0 0.0
    %2158 = vmatpush1.msra.mxu0 0.0
    %2159 = vmatprep.subr.mxu0 0.0
    %2160 = vmatpush1.msra.mxu0 0.0
    %2161 = vmatprep.subr.mxu0 0.0
    %2162 = vmatpush1.msra.mxu0 0.0
    %2163 = vmatprep.subr.mxu0 0.0
    %2164 = vmatpush1.msra.mxu0 0.0
    %2165 = vmatprep.subr.mxu0 0.0
    %2166 = vmatpush1.msra.mxu0 0.0
    %2167 = vmatprep.subr.mxu0 0.0
    %2168 = vmatpush1.msra.mxu0 0.0
    %2169 = vmatprep.subr.mxu0 0.0
    %2170 = vmatpush1.msra.mxu0 0.0
    %2171 = vmatprep.subr.mxu0 0.0
    %2172 = vmatpush1.msra.mxu0 0.0
    %2173 = vmatprep.subr.mxu0 0.0
    %2174 = vmatpush1.msra.mxu0 0.0
    %2175 = vmatprep.subr.mxu0 0.0
    %2176 = vmatpush1.msra.mxu0 0.0
    %2177 = vmatprep.subr.mxu0 0.0
    %2178 = vmatpush1.msra.mxu0 0.0
    %2179 = vmatprep.subr.mxu0 0.0
    %2180 = vmatpush1.msra.mxu0 0.0
    %2181 = vmatprep.mubr.f32.mxu0 0.0
    %2182 = vmatmul.mubr.f32.gmra.mrb[0].mxu0 %v1686
    %v2183 = vpop.f32.mrb[0].mxu0
    %v2184 = vadd.f32 0.0, %v2183
    %v2185 = vpop.f32.mrb[0].mxu0
    %v2186 = vadd.f32 0.0, %v2185
    %2187 = vdwg.mxu0
    %2189 = vrot.lane.b32.xlu0 %v2084, 64
    %v2190 = vpop.permute.xlu0 %2189
    %v2191 = vsel %vm229, %v2190, 0
    %2193 = vmatprep.subr.mxu0 %v2086
    %2194 = vmatpush1.msra.mxu0 %v2085
    %2195 = vmatprep.subr.mxu0 %v2088
    %2196 = vmatpush1.msra.mxu0 %v2087
    %2197 = vmatprep.subr.mxu0 %v2090
    %2198 = vmatpush1.msra.mxu0 %v2089
    %2199 = vmatprep.subr.mxu0 %v2092
    %2200 = vmatpush1.msra.mxu0 %v2091
    %2201 = vmatprep.subr.mxu0 %v2094
    %2202 = vmatpush1.msra.mxu0 %v2093
    %2203 = vmatprep.subr.mxu0 %v2096
    %2204 = vmatpush1.msra.mxu0 %v2095
    %2205 = vmatprep.subr.mxu0 %v2098
    %2206 = vmatpush1.msra.mxu0 %v2097
    %2207 = vmatprep.subr.mxu0 %v2100
    %2208 = vmatpush1.msra.mxu0 %v2099
    %2209 = vmatprep.subr.mxu0 0.0
    %2210 = vmatpush1.msra.mxu0 0.0
    %2211 = vmatprep.subr.mxu0 0.0
    %2212 = vmatpush1.msra.mxu0 0.0
    %2213 = vmatprep.subr.mxu0 0.0
    %2214 = vmatpush1.msra.mxu0 0.0
    %2215 = vmatprep.subr.mxu0 0.0
    %2216 = vmatpush1.msra.mxu0 0.0
    %2217 = vmatprep.subr.mxu0 0.0
    %2218 = vmatpush1.msra.mxu0 0.0
    %2219 = vmatprep.subr.mxu0 0.0
    %2220 = vmatpush1.msra.mxu0 0.0
    %2221 = vmatprep.subr.mxu0 0.0
    %2222 = vmatpush1.msra.mxu0 0.0
    %2223 = vmatprep.subr.mxu0 0.0
    %2224 = vmatpush1.msra.mxu0 0.0
    %2225 = vmatprep.subr.mxu0 0.0
    %2226 = vmatpush1.msra.mxu0 0.0
    %2227 = vmatprep.subr.mxu0 0.0
    %2228 = vmatpush1.msra.mxu0 0.0
    %2229 = vmatprep.subr.mxu0 0.0
    %2230 = vmatpush1.msra.mxu0 0.0
    %2231 = vmatprep.subr.mxu0 0.0
    %2232 = vmatpush1.msra.mxu0 0.0
    %2233 = vmatprep.subr.mxu0 0.0
    %2234 = vmatpush1.msra.mxu0 0.0
    %2235 = vmatprep.subr.mxu0 0.0
    %2236 = vmatpush1.msra.mxu0 0.0
    %2237 = vmatprep.subr.mxu0 0.0
    %2238 = vmatpush1.msra.mxu0 0.0
    %2239 = vmatprep.subr.mxu0 0.0
    %2240 = vmatpush1.msra.mxu0 0.0
    %2241 = vmatprep.subr.mxu0 0.0
    %2242 = vmatpush1.msra.mxu0 0.0
    %2243 = vmatprep.subr.mxu0 0.0
    %2244 = vmatpush1.msra.mxu0 0.0
    %2245 = vmatprep.subr.mxu0 0.0
    %2246 = vmatpush1.msra.mxu0 0.0
    %2247 = vmatprep.subr.mxu0 0.0
    %2248 = vmatpush1.msra.mxu0 0.0
    %2249 = vmatprep.subr.mxu0 0.0
    %2250 = vmatpush1.msra.mxu0 0.0
    %2251 = vmatprep.subr.mxu0 0.0
    %2252 = vmatpush1.msra.mxu0 0.0
    %2253 = vmatprep.subr.mxu0 0.0
    %2254 = vmatpush1.msra.mxu0 0.0
    %2255 = vmatprep.subr.mxu0 0.0
    %2256 = vmatpush1.msra.mxu0 0.0
    %2257 = vmatprep.mubr.f32.mxu0 0.0
    %2258 = vmatmul.mubr.f32.gmra.mrb[0].mxu0 %v2191
    %v2259 = vpop.f32.mrb[0].mxu0
    %v2260 = vadd.f32 %v2184, %v2259
    %v2261 = vpop.f32.mrb[0].mxu0
    %v2262 = vadd.f32 %v2186, %v2261
    %2263 = vdwg.mxu0
    %v2264 = vadd.f32 %v2260, %v545
    %v2265 = vadd.f32 %v2262, %v549
    %v2266 = vtanh.pop %v2264
    %v2267 = vtanh.pop %v2265
    %v2268 = vmul.f32 %v2266, 0.5
    %v2269 = vadd.f32 %v2268, 0.5
    %v2270 = vmul.f32 %v2267, 0.5
    %v2271 = vadd.f32 %v2270, 0.5
    %v2272 = vmul.f32 %v2269, %v1577
    %v2273 = vmul.f32 %v2269, %v2267
    %2275 = vrot.lane.b32.xlu0 %v2273, 64
    %v2276 = vpop.permute.xlu0 %2275
    %v2278 = vadd.f32 %v2272, %v2276
    %v2279 = vtanh.pop %v2278
    %v2280 = vmul.f32 %v2271, %v2279
    %v2281 = vld [vmem:[#allocation14] sm:$0xff]
    %v2282 = vld [vmem:[#allocation14 + $0x8] sm:$0xff]
    %v2283 = vld [vmem:[#allocation14 + $0x10] sm:$0xff]
    %v2284 = vld [vmem:[#allocation14 + $0x18] sm:$0xff]
    %v2285 = vld [vmem:[#allocation14 + $0x20] sm:$0xff]
    %v2286 = vld [vmem:[#allocation14 + $0x28] sm:$0xff]
    %v2287 = vld [vmem:[#allocation14 + $0x30] sm:$0xff]
    %v2288 = vld [vmem:[#allocation14 + $0x38] sm:$0xff]
    %v2289 = vld [vmem:[#allocation14 + $0x40] sm:$0xff]
    %v2290 = vld [vmem:[#allocation14 + $0x48] sm:$0xff]
    %v2291 = vld [vmem:[#allocation14 + $0x50] sm:$0xff]
    %v2292 = vld [vmem:[#allocation14 + $0x58] sm:$0xff]
    %v2293 = vld [vmem:[#allocation14 + $0x60] sm:$0xff]
    %v2294 = vld [vmem:[#allocation14 + $0x68] sm:$0xff]
    %v2295 = vld [vmem:[#allocation14 + $0x70] sm:$0xff]
    %v2296 = vld [vmem:[#allocation14 + $0x78] sm:$0xff]
    %v2297 = vld [vmem:[#allocation15] sm:$0xff]
    %v2298 = vld [vmem:[#allocation15 + $0x8] sm:$0xff]
    %v2299 = vld [vmem:[#allocation15 + $0x10] sm:$0xff]
    %v2300 = vld [vmem:[#allocation15 + $0x18] sm:$0xff]
    %v2301 = vld [vmem:[#allocation15 + $0x20] sm:$0xff]
    %v2302 = vld [vmem:[#allocation15 + $0x28] sm:$0xff]
    %v2303 = vld [vmem:[#allocation15 + $0x30] sm:$0xff]
    %v2304 = vld [vmem:[#allocation15 + $0x38] sm:$0xff]
    %v2305 = vld [vmem:[#allocation15 + $0x40] sm:$0xff]
    %v2306 = vld [vmem:[#allocation15 + $0x48] sm:$0xff]
    %v2307 = vld [vmem:[#allocation15 + $0x50] sm:$0xff]
    %v2308 = vld [vmem:[#allocation15 + $0x58] sm:$0xff]
    %v2309 = vld [vmem:[#allocation15 + $0x60] sm:$0xff]
    %v2310 = vld [vmem:[#allocation15 + $0x68] sm:$0xff]
    %v2311 = vld [vmem:[#allocation15 + $0x70] sm:$0xff]
    %v2312 = vld [vmem:[#allocation15 + $0x78] sm:$0xff]
    %2313 = vmatprep.subr.mxu0 %v2298
    %2314 = vmatpush1.msra.mxu0 %v2297
    %2315 = vmatprep.subr.mxu0 %v2300
    %2316 = vmatpush1.msra.mxu0 %v2299
    %2317 = vmatprep.subr.mxu0 %v2302
    %2318 = vmatpush1.msra.mxu0 %v2301
    %2319 = vmatprep.subr.mxu0 %v2304
    %2320 = vmatpush1.msra.mxu0 %v2303
    %2321 = vmatprep.subr.mxu0 %v2306
    %2322 = vmatpush1.msra.mxu0 %v2305
    %2323 = vmatprep.subr.mxu0 %v2308
    %2324 = vmatpush1.msra.mxu0 %v2307
    %2325 = vmatprep.subr.mxu0 %v2310
    %2326 = vmatpush1.msra.mxu0 %v2309
    %2327 = vmatprep.subr.mxu0 %v2312
    %2328 = vmatpush1.msra.mxu0 %v2311
    %2329 = vmatprep.subr.mxu0 0.0
    %2330 = vmatpush1.msra.mxu0 0.0
    %2331 = vmatprep.subr.mxu0 0.0
    %2332 = vmatpush1.msra.mxu0 0.0
    %2333 = vmatprep.subr.mxu0 0.0
    %2334 = vmatpush1.msra.mxu0 0.0
    %2335 = vmatprep.subr.mxu0 0.0
    %2336 = vmatpush1.msra.mxu0 0.0
    %2337 = vmatprep.subr.mxu0 0.0
    %2338 = vmatpush1.msra.mxu0 0.0
    %2339 = vmatprep.subr.mxu0 0.0
    %2340 = vmatpush1.msra.mxu0 0.0
    %2341 = vmatprep.subr.mxu0 0.0
    %2342 = vmatpush1.msra.mxu0 0.0
    %2343 = vmatprep.subr.mxu0 0.0
    %2344 = vmatpush1.msra.mxu0 0.0
    %2345 = vmatprep.subr.mxu0 0.0
    %2346 = vmatpush1.msra.mxu0 0.0
    %2347 = vmatprep.subr.mxu0 0.0
    %2348 = vmatpush1.msra.mxu0 0.0
    %2349 = vmatprep.subr.mxu0 0.0
    %2350 = vmatpush1.msra.mxu0 0.0
    %2351 = vmatprep.subr.mxu0 0.0
    %2352 = vmatpush1.msra.mxu0 0.0
    %2353 = vmatprep.subr.mxu0 0.0
    %2354 = vmatpush1.msra.mxu0 0.0
    %2355 = vmatprep.subr.mxu0 0.0
    %2356 = vmatpush1.msra.mxu0 0.0
    %2357 = vmatprep.subr.mxu0 0.0
    %2358 = vmatpush1.msra.mxu0 0.0
    %2359 = vmatprep.subr.mxu0 0.0
    %2360 = vmatpush1.msra.mxu0 0.0
    %2361 = vmatprep.subr.mxu0 0.0
    %2362 = vmatpush1.msra.mxu0 0.0
    %2363 = vmatprep.subr.mxu0 0.0
    %2364 = vmatpush1.msra.mxu0 0.0
    %2365 = vmatprep.subr.mxu0 0.0
    %2366 = vmatpush1.msra.mxu0 0.0
    %2367 = vmatprep.subr.mxu0 0.0
    %2368 = vmatpush1.msra.mxu0 0.0
    %2369 = vmatprep.subr.mxu0 0.0
    %2370 = vmatpush1.msra.mxu0 0.0
    %2371 = vmatprep.subr.mxu0 0.0
    %2372 = vmatpush1.msra.mxu0 0.0
    %2373 = vmatprep.subr.mxu0 0.0
    %2374 = vmatpush1.msra.mxu0 0.0
    %2375 = vmatprep.subr.mxu0 0.0
    %2376 = vmatpush1.msra.mxu0 0.0
    %2377 = vmatprep.mubr.f32.mxu0 0.0
    %2378 = vmatmul.mubr.f32.gmra.mrb[0].mxu0 %v1884
    %v2379 = vpop.f32.mrb[0].mxu0
    %v2380 = vadd.f32 0.0, %v2379
    %v2381 = vpop.f32.mrb[0].mxu0
    %v2382 = vadd.f32 0.0, %v2381
    %2383 = vdwg.mxu0
    %2385 = vrot.lane.b32.xlu0 %v2280, 64
    %v2386 = vpop.permute.xlu0 %2385
    %v2387 = vsel %vm229, %v2386, 0
    %2389 = vmatprep.subr.mxu0 %v2282
    %2390 = vmatpush1.msra.mxu0 %v2281
    %2391 = vmatprep.subr.mxu0 %v2284
    %2392 = vmatpush1.msra.mxu0 %v2283
    %2393 = vmatprep.subr.mxu0 %v2286
    %2394 = vmatpush1.msra.mxu0 %v2285
    %2395 = vmatprep.subr.mxu0 %v2288
    %2396 = vmatpush1.msra.mxu0 %v2287
    %2397 = vmatprep.subr.mxu0 %v2290
    %2398 = vmatpush1.msra.mxu0 %v2289
    %2399 = vmatprep.subr.mxu0 %v2292
    %2400 = vmatpush1.msra.mxu0 %v2291
    %2401 = vmatprep.subr.mxu0 %v2294
    %2402 = vmatpush1.msra.mxu0 %v2293
    %2403 = vmatprep.subr.mxu0 %v2296
    %2404 = vmatpush1.msra.mxu0 %v2295
    %2405 = vmatprep.subr.mxu0 0.0
    %2406 = vmatpush1.msra.mxu0 0.0
    %2407 = vmatprep.subr.mxu0 0.0
    %2408 = vmatpush1.msra.mxu0 0.0
    %2409 = vmatprep.subr.mxu0 0.0
    %2410 = vmatpush1.msra.mxu0 0.0
    %2411 = vmatprep.subr.mxu0 0.0
    %2412 = vmatpush1.msra.mxu0 0.0
    %2413 = vmatprep.subr.mxu0 0.0
    %2414 = vmatpush1.msra.mxu0 0.0
    %2415 = vmatprep.subr.mxu0 0.0
    %2416 = vmatpush1.msra.mxu0 0.0
    %2417 = vmatprep.subr.mxu0 0.0
    %2418 = vmatpush1.msra.mxu0 0.0
    %2419 = vmatprep.subr.mxu0 0.0
    %2420 = vmatpush1.msra.mxu0 0.0
    %2421 = vmatprep.subr.mxu0 0.0
    %2422 = vmatpush1.msra.mxu0 0.0
    %2423 = vmatprep.subr.mxu0 0.0
    %2424 = vmatpush1.msra.mxu0 0.0
    %2425 = vmatprep.subr.mxu0 0.0
    %2426 = vmatpush1.msra.mxu0 0.0
    %2427 = vmatprep.subr.mxu0 0.0
    %2428 = vmatpush1.msra.mxu0 0.0
    %2429 = vmatprep.subr.mxu0 0.0
    %2430 = vmatpush1.msra.mxu0 0.0
    %2431 = vmatprep.subr.mxu0 0.0
    %2432 = vmatpush1.msra.mxu0 0.0
    %2433 = vmatprep.subr.mxu0 0.0
    %2434 = vmatpush1.msra.mxu0 0.0
    %2435 = vmatprep.subr.mxu0 0.0
    %2436 = vmatpush1.msra.mxu0 0.0
    %2437 = vmatprep.subr.mxu0 0.0
    %2438 = vmatpush1.msra.mxu0 0.0
    %2439 = vmatprep.subr.mxu0 0.0
    %2440 = vmatpush1.msra.mxu0 0.0
    %2441 = vmatprep.subr.mxu0 0.0
    %2442 = vmatpush1.msra.mxu0 0.0
    %2443 = vmatprep.subr.mxu0 0.0
    %2444 = vmatpush1.msra.mxu0 0.0
    %2445 = vmatprep.subr.mxu0 0.0
    %2446 = vmatpush1.msra.mxu0 0.0
    %2447 = vmatprep.subr.mxu0 0.0
    %2448 = vmatpush1.msra.mxu0 0.0
    %2449 = vmatprep.subr.mxu0 0.0
    %2450 = vmatpush1.msra.mxu0 0.0
    %2451 = vmatprep.subr.mxu0 0.0
    %2452 = vmatpush1.msra.mxu0 0.0
    %2453 = vmatprep.mubr.f32.mxu0 0.0
    %2454 = vmatmul.mubr.f32.gmra.mrb[0].mxu0 %v2387
    %v2455 = vpop.f32.mrb[0].mxu0
    %v2456 = vadd.f32 %v2380, %v2455
    %v2457 = vpop.f32.mrb[0].mxu0
    %v2458 = vadd.f32 %v2382, %v2457
    %2459 = vdwg.mxu0
    %v2460 = vadd.f32 %v2456, %v557
    %v2461 = vadd.f32 %v2458, %v561
    %v2462 = vtanh.pop %v2460
    %v2463 = vtanh.pop %v2461
    %v2464 = vmul.f32 %v2462, 0.5
    %v2465 = vadd.f32 %v2464, 0.5
    %v2466 = vmul.f32 %v2463, 0.5
    %v2467 = vadd.f32 %v2466, 0.5
    %v2468 = vmul.f32 %v2465, %v1773
    %v2469 = vmul.f32 %v2465, %v2463
    %2471 = vrot.lane.b32.xlu0 %v2469, 64
    %v2472 = vpop.permute.xlu0 %2471
    %v2474 = vadd.f32 %v2468, %v2472
    %v2475 = vtanh.pop %v2474
    %v2476 = vmul.f32 %v2467, %v2475
    %v2477 = vld [vmem:[#allocation17] sm:$0xff]
    %v2478 = vld [vmem:[#allocation17 + $0x8] sm:$0xff]
    %v2479 = vld [vmem:[#allocation17 + $0x10] sm:$0xff]
    %v2480 = vld [vmem:[#allocation17 + $0x18] sm:$0xff]
    %v2481 = vld [vmem:[#allocation17 + $0x20] sm:$0xff]
    %v2482 = vld [vmem:[#allocation17 + $0x28] sm:$0xff]
    %v2483 = vld [vmem:[#allocation17 + $0x30] sm:$0xff]
    %v2484 = vld [vmem:[#allocation17 + $0x38] sm:$0xff]
    %v2485 = vld [vmem:[#allocation17 + $0x40] sm:$0xff]
    %v2486 = vld [vmem:[#allocation17 + $0x48] sm:$0xff]
    %v2487 = vld [vmem:[#allocation17 + $0x50] sm:$0xff]
    %v2488 = vld [vmem:[#allocation17 + $0x58] sm:$0xff]
    %v2489 = vld [vmem:[#allocation17 + $0x60] sm:$0xff]
    %v2490 = vld [vmem:[#allocation17 + $0x68] sm:$0xff]
    %v2491 = vld [vmem:[#allocation17 + $0x70] sm:$0xff]
    %v2492 = vld [vmem:[#allocation17 + $0x78] sm:$0xff]
    %v2493 = vld [vmem:[#allocation18] sm:$0xff]
    %v2494 = vld [vmem:[#allocation18 + $0x8] sm:$0xff]
    %v2495 = vld [vmem:[#allocation18 + $0x10] sm:$0xff]
    %v2496 = vld [vmem:[#allocation18 + $0x18] sm:$0xff]
    %v2497 = vld [vmem:[#allocation18 + $0x20] sm:$0xff]
    %v2498 = vld [vmem:[#allocation18 + $0x28] sm:$0xff]
    %v2499 = vld [vmem:[#allocation18 + $0x30] sm:$0xff]
    %v2500 = vld [vmem:[#allocation18 + $0x38] sm:$0xff]
    %v2501 = vld [vmem:[#allocation18 + $0x40] sm:$0xff]
    %v2502 = vld [vmem:[#allocation18 + $0x48] sm:$0xff]
    %v2503 = vld [vmem:[#allocation18 + $0x50] sm:$0xff]
    %v2504 = vld [vmem:[#allocation18 + $0x58] sm:$0xff]
    %v2505 = vld [vmem:[#allocation18 + $0x60] sm:$0xff]
    %v2506 = vld [vmem:[#allocation18 + $0x68] sm:$0xff]
    %v2507 = vld [vmem:[#allocation18 + $0x70] sm:$0xff]
    %v2508 = vld [vmem:[#allocation18 + $0x78] sm:$0xff]
    %v2509 = vsel %vm229, %v1976, 0
    %2511 = vmatprep.subr.mxu0 %v2494
    %2512 = vmatpush1.msra.mxu0 %v2493
    %2513 = vmatprep.subr.mxu0 %v2496
    %2514 = vmatpush1.msra.mxu0 %v2495
    %2515 = vmatprep.subr.mxu0 %v2498
    %2516 = vmatpush1.msra.mxu0 %v2497
    %2517 = vmatprep.subr.mxu0 %v2500
    %2518 = vmatpush1.msra.mxu0 %v2499
    %2519 = vmatprep.subr.mxu0 %v2502
    %2520 = vmatpush1.msra.mxu0 %v2501
    %2521 = vmatprep.subr.mxu0 %v2504
    %2522 = vmatpush1.msra.mxu0 %v2503
    %2523 = vmatprep.subr.mxu0 %v2506
    %2524 = vmatpush1.msra.mxu0 %v2505
    %2525 = vmatprep.subr.mxu0 %v2508
    %2526 = vmatpush1.msra.mxu0 %v2507
    %2527 = vmatprep.subr.mxu0 0.0
    %2528 = vmatpush1.msra.mxu0 0.0
    %2529 = vmatprep.subr.mxu0 0.0
    %2530 = vmatpush1.msra.mxu0 0.0
    %2531 = vmatprep.subr.mxu0 0.0
    %2532 = vmatpush1.msra.mxu0 0.0
    %2533 = vmatprep.subr.mxu0 0.0
    %2534 = vmatpush1.msra.mxu0 0.0
    %2535 = vmatprep.subr.mxu0 0.0
    %2536 = vmatpush1.msra.mxu0 0.0
    %2537 = vmatprep.subr.mxu0 0.0
    %2538 = vmatpush1.msra.mxu0 0.0
    %2539 = vmatprep.subr.mxu0 0.0
    %2540 = vmatpush1.msra.mxu0 0.0
    %2541 = vmatprep.subr.mxu0 0.0
    %2542 = vmatpush1.msra.mxu0 0.0
    %2543 = vmatprep.subr.mxu0 0.0
    %2544 = vmatpush1.msra.mxu0 0.0
    %2545 = vmatprep.subr.mxu0 0.0
    %2546 = vmatpush1.msra.mxu0 0.0
    %2547 = vmatprep.subr.mxu0 0.0
    %2548 = vmatpush1.msra.mxu0 0.0
    %2549 = vmatprep.subr.mxu0 0.0
    %2550 = vmatpush1.msra.mxu0 0.0
    %2551 = vmatprep.subr.mxu0 0.0
    %2552 = vmatpush1.msra.mxu0 0.0
    %2553 = vmatprep.subr.mxu0 0.0
    %2554 = vmatpush1.msra.mxu0 0.0
    %2555 = vmatprep.subr.mxu0 0.0
    %2556 = vmatpush1.msra.mxu0 0.0
    %2557 = vmatprep.subr.mxu0 0.0
    %2558 = vmatpush1.msra.mxu0 0.0
    %2559 = vmatprep.subr.mxu0 0.0
    %2560 = vmatpush1.msra.mxu0 0.0
    %2561 = vmatprep.subr.mxu0 0.0
    %2562 = vmatpush1.msra.mxu0 0.0
    %2563 = vmatprep.subr.mxu0 0.0
    %2564 = vmatpush1.msra.mxu0 0.0
    %2565 = vmatprep.subr.mxu0 0.0
    %2566 = vmatpush1.msra.mxu0 0.0
    %2567 = vmatprep.subr.mxu0 0.0
    %2568 = vmatpush1.msra.mxu0 0.0
    %2569 = vmatprep.subr.mxu0 0.0
    %2570 = vmatpush1.msra.mxu0 0.0
    %2571 = vmatprep.subr.mxu0 0.0
    %2572 = vmatpush1.msra.mxu0 0.0
    %2573 = vmatprep.subr.mxu0 0.0
    %2574 = vmatpush1.msra.mxu0 0.0
    %2575 = vmatprep.mubr.f32.mxu0 0.0
    %2576 = vmatmul.mubr.f32.gmra.mrb[0].mxu0 %v2509
    %v2577 = vpop.f32.mrb[0].mxu0
    %v2578 = vadd.f32 0.0, %v2577
    %v2579 = vpop.f32.mrb[0].mxu0
    %v2580 = vadd.f32 0.0, %v2579
    %2581 = vdwg.mxu0
    %2583 = vrot.lane.b32.xlu0 %v2476, 64
    %v2584 = vpop.permute.xlu0 %2583
    %v2585 = vsel %vm229, %v2584, 0
    %2587 = vmatprep.subr.mxu0 %v2478
    %2588 = vmatpush1.msra.mxu0 %v2477
    %2589 = vmatprep.subr.mxu0 %v2480
    %2590 = vmatpush1.msra.mxu0 %v2479
    %2591 = vmatprep.subr.mxu0 %v2482
    %2592 = vmatpush1.msra.mxu0 %v2481
    %2593 = vmatprep.subr.mxu0 %v2484
    %2594 = vmatpush1.msra.mxu0 %v2483
    %2595 = vmatprep.subr.mxu0 %v2486
    %2596 = vmatpush1.msra.mxu0 %v2485
    %2597 = vmatprep.subr.mxu0 %v2488
    %2598 = vmatpush1.msra.mxu0 %v2487
    %2599 = vmatprep.subr.mxu0 %v2490
    %2600 = vmatpush1.msra.mxu0 %v2489
    %2601 = vmatprep.subr.mxu0 %v2492
    %2602 = vmatpush1.msra.mxu0 %v2491
    %2603 = vmatprep.subr.mxu0 0.0
    %2604 = vmatpush1.msra.mxu0 0.0
    %2605 = vmatprep.subr.mxu0 0.0
    %2606 = vmatpush1.msra.mxu0 0.0
    %2607 = vmatprep.subr.mxu0 0.0
    %2608 = vmatpush1.msra.mxu0 0.0
    %2609 = vmatprep.subr.mxu0 0.0
    %2610 = vmatpush1.msra.mxu0 0.0
    %2611 = vmatprep.subr.mxu0 0.0
    %2612 = vmatpush1.msra.mxu0 0.0
    %2613 = vmatprep.subr.mxu0 0.0
    %2614 = vmatpush1.msra.mxu0 0.0
    %2615 = vmatprep.subr.mxu0 0.0
    %2616 = vmatpush1.msra.mxu0 0.0
    %2617 = vmatprep.subr.mxu0 0.0
    %2618 = vmatpush1.msra.mxu0 0.0
    %2619 = vmatprep.subr.mxu0 0.0
    %2620 = vmatpush1.msra.mxu0 0.0
    %2621 = vmatprep.subr.mxu0 0.0
    %2622 = vmatpush1.msra.mxu0 0.0
    %2623 = vmatprep.subr.mxu0 0.0
    %2624 = vmatpush1.msra.mxu0 0.0
    %2625 = vmatprep.subr.mxu0 0.0
    %2626 = vmatpush1.msra.mxu0 0.0
    %2627 = vmatprep.subr.mxu0 0.0
    %2628 = vmatpush1.msra.mxu0 0.0
    %2629 = vmatprep.subr.mxu0 0.0
    %2630 = vmatpush1.msra.mxu0 0.0
    %2631 = vmatprep.subr.mxu0 0.0
    %2632 = vmatpush1.msra.mxu0 0.0
    %2633 = vmatprep.subr.mxu0 0.0
    %2634 = vmatpush1.msra.mxu0 0.0
    %2635 = vmatprep.subr.mxu0 0.0
    %2636 = vmatpush1.msra.mxu0 0.0
    %2637 = vmatprep.subr.mxu0 0.0
    %2638 = vmatpush1.msra.mxu0 0.0
    %2639 = vmatprep.subr.mxu0 0.0
    %2640 = vmatpush1.msra.mxu0 0.0
    %2641 = vmatprep.subr.mxu0 0.0
    %2642 = vmatpush1.msra.mxu0 0.0
    %2643 = vmatprep.subr.mxu0 0.0
    %2644 = vmatpush1.msra.mxu0 0.0
    %2645 = vmatprep.subr.mxu0 0.0
    %2646 = vmatpush1.msra.mxu0 0.0
    %2647 = vmatprep.subr.mxu0 0.0
    %2648 = vmatpush1.msra.mxu0 0.0
    %2649 = vmatprep.subr.mxu0 0.0
    %2650 = vmatpush1.msra.mxu0 0.0
    %2651 = vmatprep.mubr.f32.mxu0 0.0
    %2652 = vmatmul.mubr.f32.gmra.mrb[0].mxu0 %v2585
    %v2653 = vpop.f32.mrb[0].mxu0
    %v2654 = vadd.f32 %v2578, %v2653
    %v2655 = vpop.f32.mrb[0].mxu0
    %v2656 = vadd.f32 %v2580, %v2655
    %2657 = vdwg.mxu0
    %v2658 = vadd.f32 %v2654, %v569
    %v2659 = vadd.f32 %v2656, %v573
    %v2660 = vtanh.pop %v2658
    %v2661 = vtanh.pop %v2659
    %v2662 = vmul.f32 %v2660, 0.5
    %v2663 = vadd.f32 %v2662, 0.5
    %v2664 = vmul.f32 %v2661, 0.5
    %v2665 = vadd.f32 %v2664, 0.5
    %v2666 = vmul.f32 %v2663, %v1971
    %v2667 = vmul.f32 %v2663, %v2661
    %2669 = vrot.lane.b32.xlu0 %v2667, 64
    %v2670 = vpop.permute.xlu0 %2669
    %v2672 = vadd.f32 %v2666, %v2670
    %v2673 = vtanh.pop %v2672
    %v2674 = vmul.f32 %v2665, %v2673
    %2676 = vrot.lane.b32.xlu0 %v2674, 64
    %v2677 = vpop.permute.xlu0 %2676
    %2679 = vst.msk [vmem:[#allocation21 + $0x10] sm:$0xff] %vm229, %v2677
    %v2680 = vld [vmem:[#allocation2 + $0x30] sm:$0xff]
    %v2681 = vld [vmem:[#allocation2 + $0x38] sm:$0xff]
    %v2682 = vld [vmem:[#allocation9] sm:$0xff]
    %v2683 = vld [vmem:[#allocation9 + $0x8] sm:$0xff]
    %v2684 = vld [vmem:[#allocation9 + $0x10] sm:$0xff]
    %v2685 = vld [vmem:[#allocation9 + $0x18] sm:$0xff]
    %v2686 = vld [vmem:[#allocation9 + $0x20] sm:$0xff]
    %v2687 = vld [vmem:[#allocation9 + $0x28] sm:$0xff]
    %v2688 = vld [vmem:[#allocation9 + $0x30] sm:$0xff]
    %v2689 = vld [vmem:[#allocation9 + $0x38] sm:$0xff]
    %v2690 = vld [vmem:[#allocation9 + $0x40] sm:$0xff]
    %v2691 = vld [vmem:[#allocation9 + $0x48] sm:$0xff]
    %v2692 = vld [vmem:[#allocation9 + $0x50] sm:$0xff]
    %v2693 = vld [vmem:[#allocation9 + $0x58] sm:$0xff]
    %v2694 = vld [vmem:[#allocation9 + $0x60] sm:$0xff]
    %v2695 = vld [vmem:[#allocation9 + $0x68] sm:$0xff]
    %v2696 = vld [vmem:[#allocation9 + $0x70] sm:$0xff]
    %v2697 = vld [vmem:[#allocation9 + $0x78] sm:$0xff]
    %2698 = vmatprep.subr.mxu0 %v2683
    %2699 = vmatpush1.msra.mxu0 %v2682
    %2700 = vmatprep.subr.mxu0 %v2685
    %2701 = vmatpush1.msra.mxu0 %v2684
    %2702 = vmatprep.subr.mxu0 %v2687
    %2703 = vmatpush1.msra.mxu0 %v2686
    %2704 = vmatprep.subr.mxu0 %v2689
    %2705 = vmatpush1.msra.mxu0 %v2688
    %2706 = vmatprep.subr.mxu0 %v2691
    %2707 = vmatpush1.msra.mxu0 %v2690
    %2708 = vmatprep.subr.mxu0 %v2693
    %2709 = vmatpush1.msra.mxu0 %v2692
    %2710 = vmatprep.subr.mxu0 %v2695
    %2711 = vmatpush1.msra.mxu0 %v2694
    %2712 = vmatprep.subr.mxu0 %v2697
    %2713 = vmatpush1.msra.mxu0 %v2696
    %2714 = vmatprep.subr.mxu0 0.0
    %2715 = vmatpush1.msra.mxu0 0.0
    %2716 = vmatprep.subr.mxu0 0.0
    %2717 = vmatpush1.msra.mxu0 0.0
    %2718 = vmatprep.subr.mxu0 0.0
    %2719 = vmatpush1.msra.mxu0 0.0
    %2720 = vmatprep.subr.mxu0 0.0
    %2721 = vmatpush1.msra.mxu0 0.0
    %2722 = vmatprep.subr.mxu0 0.0
    %2723 = vmatpush1.msra.mxu0 0.0
    %2724 = vmatprep.subr.mxu0 0.0
    %2725 = vmatpush1.msra.mxu0 0.0
    %2726 = vmatprep.subr.mxu0 0.0
    %2727 = vmatpush1.msra.mxu0 0.0
    %2728 = vmatprep.subr.mxu0 0.0
    %2729 = vmatpush1.msra.mxu0 0.0
    %2730 = vmatprep.subr.mxu0 0.0
    %2731 = vmatpush1.msra.mxu0 0.0
    %2732 = vmatprep.subr.mxu0 0.0
    %2733 = vmatpush1.msra.mxu0 0.0
    %2734 = vmatprep.subr.mxu0 0.0
    %2735 = vmatpush1.msra.mxu0 0.0
    %2736 = vmatprep.subr.mxu0 0.0
    %2737 = vmatpush1.msra.mxu0 0.0
    %2738 = vmatprep.subr.mxu0 0.0
    %2739 = vmatpush1.msra.mxu0 0.0
    %2740 = vmatprep.subr.mxu0 0.0
    %2741 = vmatpush1.msra.mxu0 0.0
    %2742 = vmatprep.subr.mxu0 0.0
    %2743 = vmatpush1.msra.mxu0 0.0
    %2744 = vmatprep.subr.mxu0 0.0
    %2745 = vmatpush1.msra.mxu0 0.0
    %2746 = vmatprep.subr.mxu0 0.0
    %2747 = vmatpush1.msra.mxu0 0.0
    %2748 = vmatprep.subr.mxu0 0.0
    %2749 = vmatpush1.msra.mxu0 0.0
    %2750 = vmatprep.subr.mxu0 0.0
    %2751 = vmatpush1.msra.mxu0 0.0
    %2752 = vmatprep.subr.mxu0 0.0
    %2753 = vmatpush1.msra.mxu0 0.0
    %2754 = vmatprep.subr.mxu0 0.0
    %2755 = vmatpush1.msra.mxu0 0.0
    %2756 = vmatprep.subr.mxu0 0.0
    %2757 = vmatpush1.msra.mxu0 0.0
    %2758 = vmatprep.subr.mxu0 0.0
    %2759 = vmatpush1.msra.mxu0 0.0
    %2760 = vmatprep.subr.mxu0 0.0
    %2761 = vmatpush1.msra.mxu0 0.0
    %2762 = vmatprep.mubr.f32.mxu0 0.0
    %2763 = vmatmul.mubr.f32.gmra.mrb[0].mxu0 %v2191
    %v2764 = vpop.f32.mrb[0].mxu0
    %v2765 = vadd.f32 0.0, %v2764
    %v2766 = vpop.f32.mrb[0].mxu0
    %v2767 = vadd.f32 0.0, %v2766
    %2768 = vdwg.mxu0
    %v2769 = vadd.f32 %v2680, %v2765
    %v2770 = vadd.f32 %v2681, %v2767
    %v2771 = vtanh.pop %v2769
    %v2772 = vtanh.pop %v2770
    %v2773 = vmul.f32 %v2771, 0.5
    %v2774 = vadd.f32 %v2773, 0.5
    %v2775 = vmul.f32 %v2772, 0.5
    %v2776 = vadd.f32 %v2775, 0.5
    %v2777 = vmul.f32 %v2774, %v2082
    %v2778 = vmul.f32 %v2774, %v2772
    %2780 = vrot.lane.b32.xlu0 %v2778, 64
    %v2781 = vpop.permute.xlu0 %2780
    %v2783 = vadd.f32 %v2777, %v2781
    %v2784 = vtanh.pop %v2783
    %v2785 = vmul.f32 %v2776, %v2784
    %v2786 = vld [vmem:[#allocation11] sm:$0xff]
    %v2787 = vld [vmem:[#allocation11 + $0x8] sm:$0xff]
    %v2788 = vld [vmem:[#allocation11 + $0x10] sm:$0xff]
    %v2789 = vld [vmem:[#allocation11 + $0x18] sm:$0xff]
    %v2790 = vld [vmem:[#allocation11 + $0x20] sm:$0xff]
    %v2791 = vld [vmem:[#allocation11 + $0x28] sm:$0xff]
    %v2792 = vld [vmem:[#allocation11 + $0x30] sm:$0xff]
    %v2793 = vld [vmem:[#allocation11 + $0x38] sm:$0xff]
    %v2794 = vld [vmem:[#allocation11 + $0x40] sm:$0xff]
    %v2795 = vld [vmem:[#allocation11 + $0x48] sm:$0xff]
    %v2796 = vld [vmem:[#allocation11 + $0x50] sm:$0xff]
    %v2797 = vld [vmem:[#allocation11 + $0x58] sm:$0xff]
    %v2798 = vld [vmem:[#allocation11 + $0x60] sm:$0xff]
    %v2799 = vld [vmem:[#allocation11 + $0x68] sm:$0xff]
    %v2800 = vld [vmem:[#allocation11 + $0x70] sm:$0xff]
    %v2801 = vld [vmem:[#allocation11 + $0x78] sm:$0xff]
    %v2802 = vld [vmem:[#allocation12] sm:$0xff]
    %v2803 = vld [vmem:[#allocation12 + $0x8] sm:$0xff]
    %v2804 = vld [vmem:[#allocation12 + $0x10] sm:$0xff]
    %v2805 = vld [vmem:[#allocation12 + $0x18] sm:$0xff]
    %v2806 = vld [vmem:[#allocation12 + $0x20] sm:$0xff]
    %v2807 = vld [vmem:[#allocation12 + $0x28] sm:$0xff]
    %v2808 = vld [vmem:[#allocation12 + $0x30] sm:$0xff]
    %v2809 = vld [vmem:[#allocation12 + $0x38] sm:$0xff]
    %v2810 = vld [vmem:[#allocation12 + $0x40] sm:$0xff]
    %v2811 = vld [vmem:[#allocation12 + $0x48] sm:$0xff]
    %v2812 = vld [vmem:[#allocation12 + $0x50] sm:$0xff]
    %v2813 = vld [vmem:[#allocation12 + $0x58] sm:$0xff]
    %v2814 = vld [vmem:[#allocation12 + $0x60] sm:$0xff]
    %v2815 = vld [vmem:[#allocation12 + $0x68] sm:$0xff]
    %v2816 = vld [vmem:[#allocation12 + $0x70] sm:$0xff]
    %v2817 = vld [vmem:[#allocation12 + $0x78] sm:$0xff]
    %2818 = vmatprep.subr.mxu0 %v2803
    %2819 = vmatpush1.msra.mxu0 %v2802
    %2820 = vmatprep.subr.mxu0 %v2805
    %2821 = vmatpush1.msra.mxu0 %v2804
    %2822 = vmatprep.subr.mxu0 %v2807
    %2823 = vmatpush1.msra.mxu0 %v2806
    %2824 = vmatprep.subr.mxu0 %v2809
    %2825 = vmatpush1.msra.mxu0 %v2808
    %2826 = vmatprep.subr.mxu0 %v2811
    %2827 = vmatpush1.msra.mxu0 %v2810
    %2828 = vmatprep.subr.mxu0 %v2813
    %2829 = vmatpush1.msra.mxu0 %v2812
    %2830 = vmatprep.subr.mxu0 %v2815
    %2831 = vmatpush1.msra.mxu0 %v2814
    %2832 = vmatprep.subr.mxu0 %v2817
    %2833 = vmatpush1.msra.mxu0 %v2816
    %2834 = vmatprep.subr.mxu0 0.0
    %2835 = vmatpush1.msra.mxu0 0.0
    %2836 = vmatprep.subr.mxu0 0.0
    %2837 = vmatpush1.msra.mxu0 0.0
    %2838 = vmatprep.subr.mxu0 0.0
    %2839 = vmatpush1.msra.mxu0 0.0
    %2840 = vmatprep.subr.mxu0 0.0
    %2841 = vmatpush1.msra.mxu0 0.0
    %2842 = vmatprep.subr.mxu0 0.0
    %2843 = vmatpush1.msra.mxu0 0.0
    %2844 = vmatprep.subr.mxu0 0.0
    %2845 = vmatpush1.msra.mxu0 0.0
    %2846 = vmatprep.subr.mxu0 0.0
    %2847 = vmatpush1.msra.mxu0 0.0
    %2848 = vmatprep.subr.mxu0 0.0
    %2849 = vmatpush1.msra.mxu0 0.0
    %2850 = vmatprep.subr.mxu0 0.0
    %2851 = vmatpush1.msra.mxu0 0.0
    %2852 = vmatprep.subr.mxu0 0.0
    %2853 = vmatpush1.msra.mxu0 0.0
    %2854 = vmatprep.subr.mxu0 0.0
    %2855 = vmatpush1.msra.mxu0 0.0
    %2856 = vmatprep.subr.mxu0 0.0
    %2857 = vmatpush1.msra.mxu0 0.0
    %2858 = vmatprep.subr.mxu0 0.0
    %2859 = vmatpush1.msra.mxu0 0.0
    %2860 = vmatprep.subr.mxu0 0.0
    %2861 = vmatpush1.msra.mxu0 0.0
    %2862 = vmatprep.subr.mxu0 0.0
    %2863 = vmatpush1.msra.mxu0 0.0
    %2864 = vmatprep.subr.mxu0 0.0
    %2865 = vmatpush1.msra.mxu0 0.0
    %2866 = vmatprep.subr.mxu0 0.0
    %2867 = vmatpush1.msra.mxu0 0.0
    %2868 = vmatprep.subr.mxu0 0.0
    %2869 = vmatpush1.msra.mxu0 0.0
    %2870 = vmatprep.subr.mxu0 0.0
    %2871 = vmatpush1.msra.mxu0 0.0
    %2872 = vmatprep.subr.mxu0 0.0
    %2873 = vmatpush1.msra.mxu0 0.0
    %2874 = vmatprep.subr.mxu0 0.0
    %2875 = vmatpush1.msra.mxu0 0.0
    %2876 = vmatprep.subr.mxu0 0.0
    %2877 = vmatpush1.msra.mxu0 0.0
    %2878 = vmatprep.subr.mxu0 0.0
    %2879 = vmatpush1.msra.mxu0 0.0
    %2880 = vmatprep.subr.mxu0 0.0
    %2881 = vmatpush1.msra.mxu0 0.0
    %2882 = vmatprep.mubr.f32.mxu0 0.0
    %2883 = vmatmul.mubr.f32.gmra.mrb[0].mxu0 %v2387
    %v2884 = vpop.f32.mrb[0].mxu0
    %v2885 = vadd.f32 0.0, %v2884
    %v2886 = vpop.f32.mrb[0].mxu0
    %v2887 = vadd.f32 0.0, %v2886
    %2888 = vdwg.mxu0
    %2890 = vrot.lane.b32.xlu0 %v2785, 64
    %v2891 = vpop.permute.xlu0 %2890
    %v2892 = vsel %vm229, %v2891, 0
    %2894 = vmatprep.subr.mxu0 %v2787
    %2895 = vmatpush1.msra.mxu0 %v2786
    %2896 = vmatprep.subr.mxu0 %v2789
    %2897 = vmatpush1.msra.mxu0 %v2788
    %2898 = vmatprep.subr.mxu0 %v2791
    %2899 = vmatpush1.msra.mxu0 %v2790
    %2900 = vmatprep.subr.mxu0 %v2793
    %2901 = vmatpush1.msra.mxu0 %v2792
    %2902 = vmatprep.subr.mxu0 %v2795
    %2903 = vmatpush1.msra.mxu0 %v2794
    %2904 = vmatprep.subr.mxu0 %v2797
    %2905 = vmatpush1.msra.mxu0 %v2796
    %2906 = vmatprep.subr.mxu0 %v2799
    %2907 = vmatpush1.msra.mxu0 %v2798
    %2908 = vmatprep.subr.mxu0 %v2801
    %2909 = vmatpush1.msra.mxu0 %v2800
    %2910 = vmatprep.subr.mxu0 0.0
    %2911 = vmatpush1.msra.mxu0 0.0
    %2912 = vmatprep.subr.mxu0 0.0
    %2913 = vmatpush1.msra.mxu0 0.0
    %2914 = vmatprep.subr.mxu0 0.0
    %2915 = vmatpush1.msra.mxu0 0.0
    %2916 = vmatprep.subr.mxu0 0.0
    %2917 = vmatpush1.msra.mxu0 0.0
    %2918 = vmatprep.subr.mxu0 0.0
    %2919 = vmatpush1.msra.mxu0 0.0
    %2920 = vmatprep.subr.mxu0 0.0
    %2921 = vmatpush1.msra.mxu0 0.0
    %2922 = vmatprep.subr.mxu0 0.0
    %2923 = vmatpush1.msra.mxu0 0.0
    %2924 = vmatprep.subr.mxu0 0.0
    %2925 = vmatpush1.msra.mxu0 0.0
    %2926 = vmatprep.subr.mxu0 0.0
    %2927 = vmatpush1.msra.mxu0 0.0
    %2928 = vmatprep.subr.mxu0 0.0
    %2929 = vmatpush1.msra.mxu0 0.0
    %2930 = vmatprep.subr.mxu0 0.0
    %2931 = vmatpush1.msra.mxu0 0.0
    %2932 = vmatprep.subr.mxu0 0.0
    %2933 = vmatpush1.msra.mxu0 0.0
    %2934 = vmatprep.subr.mxu0 0.0
    %2935 = vmatpush1.msra.mxu0 0.0
    %2936 = vmatprep.subr.mxu0 0.0
    %2937 = vmatpush1.msra.mxu0 0.0
    %2938 = vmatprep.subr.mxu0 0.0
    %2939 = vmatpush1.msra.mxu0 0.0
    %2940 = vmatprep.subr.mxu0 0.0
    %2941 = vmatpush1.msra.mxu0 0.0
    %2942 = vmatprep.subr.mxu0 0.0
    %2943 = vmatpush1.msra.mxu0 0.0
    %2944 = vmatprep.subr.mxu0 0.0
    %2945 = vmatpush1.msra.mxu0 0.0
    %2946 = vmatprep.subr.mxu0 0.0
    %2947 = vmatpush1.msra.mxu0 0.0
    %2948 = vmatprep.subr.mxu0 0.0
    %2949 = vmatpush1.msra.mxu0 0.0
    %2950 = vmatprep.subr.mxu0 0.0
    %2951 = vmatpush1.msra.mxu0 0.0
    %2952 = vmatprep.subr.mxu0 0.0
    %2953 = vmatpush1.msra.mxu0 0.0
    %2954 = vmatprep.subr.mxu0 0.0
    %2955 = vmatpush1.msra.mxu0 0.0
    %2956 = vmatprep.subr.mxu0 0.0
    %2957 = vmatpush1.msra.mxu0 0.0
    %2958 = vmatprep.mubr.f32.mxu0 0.0
    %2959 = vmatmul.mubr.f32.gmra.mrb[0].mxu0 %v2892
    %v2960 = vpop.f32.mrb[0].mxu0
    %v2961 = vadd.f32 %v2885, %v2960
    %v2962 = vpop.f32.mrb[0].mxu0
    %v2963 = vadd.f32 %v2887, %v2962
    %2964 = vdwg.mxu0
    %v2965 = vadd.f32 %v2961, %v545
    %v2966 = vadd.f32 %v2963, %v549
    %v2967 = vtanh.pop %v2965
    %v2968 = vtanh.pop %v2966
    %v2969 = vmul.f32 %v2967, 0.5
    %v2970 = vadd.f32 %v2969, 0.5
    %v2971 = vmul.f32 %v2968, 0.5
    %v2972 = vadd.f32 %v2971, 0.5
    %v2973 = vmul.f32 %v2970, %v2278
    %v2974 = vmul.f32 %v2970, %v2968
    %2976 = vrot.lane.b32.xlu0 %v2974, 64
    %v2977 = vpop.permute.xlu0 %2976
    %v2979 = vadd.f32 %v2973, %v2977
    %v2980 = vtanh.pop %v2979
    %v2981 = vmul.f32 %v2972, %v2980
    %v2982 = vld [vmem:[#allocation14] sm:$0xff]
    %v2983 = vld [vmem:[#allocation14 + $0x8] sm:$0xff]
    %v2984 = vld [vmem:[#allocation14 + $0x10] sm:$0xff]
    %v2985 = vld [vmem:[#allocation14 + $0x18] sm:$0xff]
    %v2986 = vld [vmem:[#allocation14 + $0x20] sm:$0xff]
    %v2987 = vld [vmem:[#allocation14 + $0x28] sm:$0xff]
    %v2988 = vld [vmem:[#allocation14 + $0x30] sm:$0xff]
    %v2989 = vld [vmem:[#allocation14 + $0x38] sm:$0xff]
    %v2990 = vld [vmem:[#allocation14 + $0x40] sm:$0xff]
    %v2991 = vld [vmem:[#allocation14 + $0x48] sm:$0xff]
    %v2992 = vld [vmem:[#allocation14 + $0x50] sm:$0xff]
    %v2993 = vld [vmem:[#allocation14 + $0x58] sm:$0xff]
    %v2994 = vld [vmem:[#allocation14 + $0x60] sm:$0xff]
    %v2995 = vld [vmem:[#allocation14 + $0x68] sm:$0xff]
    %v2996 = vld [vmem:[#allocation14 + $0x70] sm:$0xff]
    %v2997 = vld [vmem:[#allocation14 + $0x78] sm:$0xff]
    %v2998 = vld [vmem:[#allocation15] sm:$0xff]
    %v2999 = vld [vmem:[#allocation15 + $0x8] sm:$0xff]
    %v3000 = vld [vmem:[#allocation15 + $0x10] sm:$0xff]
    %v3001 = vld [vmem:[#allocation15 + $0x18] sm:$0xff]
    %v3002 = vld [vmem:[#allocation15 + $0x20] sm:$0xff]
    %v3003 = vld [vmem:[#allocation15 + $0x28] sm:$0xff]
    %v3004 = vld [vmem:[#allocation15 + $0x30] sm:$0xff]
    %v3005 = vld [vmem:[#allocation15 + $0x38] sm:$0xff]
    %v3006 = vld [vmem:[#allocation15 + $0x40] sm:$0xff]
    %v3007 = vld [vmem:[#allocation15 + $0x48] sm:$0xff]
    %v3008 = vld [vmem:[#allocation15 + $0x50] sm:$0xff]
    %v3009 = vld [vmem:[#allocation15 + $0x58] sm:$0xff]
    %v3010 = vld [vmem:[#allocation15 + $0x60] sm:$0xff]
    %v3011 = vld [vmem:[#allocation15 + $0x68] sm:$0xff]
    %v3012 = vld [vmem:[#allocation15 + $0x70] sm:$0xff]
    %v3013 = vld [vmem:[#allocation15 + $0x78] sm:$0xff]
    %3014 = vmatprep.subr.mxu0 %v2999
    %3015 = vmatpush1.msra.mxu0 %v2998
    %3016 = vmatprep.subr.mxu0 %v3001
    %3017 = vmatpush1.msra.mxu0 %v3000
    %3018 = vmatprep.subr.mxu0 %v3003
    %3019 = vmatpush1.msra.mxu0 %v3002
    %3020 = vmatprep.subr.mxu0 %v3005
    %3021 = vmatpush1.msra.mxu0 %v3004
    %3022 = vmatprep.subr.mxu0 %v3007
    %3023 = vmatpush1.msra.mxu0 %v3006
    %3024 = vmatprep.subr.mxu0 %v3009
    %3025 = vmatpush1.msra.mxu0 %v3008
    %3026 = vmatprep.subr.mxu0 %v3011
    %3027 = vmatpush1.msra.mxu0 %v3010
    %3028 = vmatprep.subr.mxu0 %v3013
    %3029 = vmatpush1.msra.mxu0 %v3012
    %3030 = vmatprep.subr.mxu0 0.0
    %3031 = vmatpush1.msra.mxu0 0.0
    %3032 = vmatprep.subr.mxu0 0.0
    %3033 = vmatpush1.msra.mxu0 0.0
    %3034 = vmatprep.subr.mxu0 0.0
    %3035 = vmatpush1.msra.mxu0 0.0
    %3036 = vmatprep.subr.mxu0 0.0
    %3037 = vmatpush1.msra.mxu0 0.0
    %3038 = vmatprep.subr.mxu0 0.0
    %3039 = vmatpush1.msra.mxu0 0.0
    %3040 = vmatprep.subr.mxu0 0.0
    %3041 = vmatpush1.msra.mxu0 0.0
    %3042 = vmatprep.subr.mxu0 0.0
    %3043 = vmatpush1.msra.mxu0 0.0
    %3044 = vmatprep.subr.mxu0 0.0
    %3045 = vmatpush1.msra.mxu0 0.0
    %3046 = vmatprep.subr.mxu0 0.0
    %3047 = vmatpush1.msra.mxu0 0.0
    %3048 = vmatprep.subr.mxu0 0.0
    %3049 = vmatpush1.msra.mxu0 0.0
    %3050 = vmatprep.subr.mxu0 0.0
    %3051 = vmatpush1.msra.mxu0 0.0
    %3052 = vmatprep.subr.mxu0 0.0
    %3053 = vmatpush1.msra.mxu0 0.0
    %3054 = vmatprep.subr.mxu0 0.0
    %3055 = vmatpush1.msra.mxu0 0.0
    %3056 = vmatprep.subr.mxu0 0.0
    %3057 = vmatpush1.msra.mxu0 0.0
    %3058 = vmatprep.subr.mxu0 0.0
    %3059 = vmatpush1.msra.mxu0 0.0
    %3060 = vmatprep.subr.mxu0 0.0
    %3061 = vmatpush1.msra.mxu0 0.0
    %3062 = vmatprep.subr.mxu0 0.0
    %3063 = vmatpush1.msra.mxu0 0.0
    %3064 = vmatprep.subr.mxu0 0.0
    %3065 = vmatpush1.msra.mxu0 0.0
    %3066 = vmatprep.subr.mxu0 0.0
    %3067 = vmatpush1.msra.mxu0 0.0
    %3068 = vmatprep.subr.mxu0 0.0
    %3069 = vmatpush1.msra.mxu0 0.0
    %3070 = vmatprep.subr.mxu0 0.0
    %3071 = vmatpush1.msra.mxu0 0.0
    %3072 = vmatprep.subr.mxu0 0.0
    %3073 = vmatpush1.msra.mxu0 0.0
    %3074 = vmatprep.subr.mxu0 0.0
    %3075 = vmatpush1.msra.mxu0 0.0
    %3076 = vmatprep.subr.mxu0 0.0
    %3077 = vmatpush1.msra.mxu0 0.0
    %3078 = vmatprep.mubr.f32.mxu0 0.0
    %3079 = vmatmul.mubr.f32.gmra.mrb[0].mxu0 %v2585
    %v3080 = vpop.f32.mrb[0].mxu0
    %v3081 = vadd.f32 0.0, %v3080
    %v3082 = vpop.f32.mrb[0].mxu0
    %v3083 = vadd.f32 0.0, %v3082
    %3084 = vdwg.mxu0
    %3086 = vrot.lane.b32.xlu0 %v2981, 64
    %v3087 = vpop.permute.xlu0 %3086
    %v3088 = vsel %vm229, %v3087, 0
    %3090 = vmatprep.subr.mxu0 %v2983
    %3091 = vmatpush1.msra.mxu0 %v2982
    %3092 = vmatprep.subr.mxu0 %v2985
    %3093 = vmatpush1.msra.mxu0 %v2984
    %3094 = vmatprep.subr.mxu0 %v2987
    %3095 = vmatpush1.msra.mxu0 %v2986
    %3096 = vmatprep.subr.mxu0 %v2989
    %3097 = vmatpush1.msra.mxu0 %v2988
    %3098 = vmatprep.subr.mxu0 %v2991
    %3099 = vmatpush1.msra.mxu0 %v2990
    %3100 = vmatprep.subr.mxu0 %v2993
    %3101 = vmatpush1.msra.mxu0 %v2992
    %3102 = vmatprep.subr.mxu0 %v2995
    %3103 = vmatpush1.msra.mxu0 %v2994
    %3104 = vmatprep.subr.mxu0 %v2997
    %3105 = vmatpush1.msra.mxu0 %v2996
    %3106 = vmatprep.subr.mxu0 0.0
    %3107 = vmatpush1.msra.mxu0 0.0
    %3108 = vmatprep.subr.mxu0 0.0
    %3109 = vmatpush1.msra.mxu0 0.0
    %3110 = vmatprep.subr.mxu0 0.0
    %3111 = vmatpush1.msra.mxu0 0.0
    %3112 = vmatprep.subr.mxu0 0.0
    %3113 = vmatpush1.msra.mxu0 0.0
    %3114 = vmatprep.subr.mxu0 0.0
    %3115 = vmatpush1.msra.mxu0 0.0
    %3116 = vmatprep.subr.mxu0 0.0
    %3117 = vmatpush1.msra.mxu0 0.0
    %3118 = vmatprep.subr.mxu0 0.0
    %3119 = vmatpush1.msra.mxu0 0.0
    %3120 = vmatprep.subr.mxu0 0.0
    %3121 = vmatpush1.msra.mxu0 0.0
    %3122 = vmatprep.subr.mxu0 0.0
    %3123 = vmatpush1.msra.mxu0 0.0
    %3124 = vmatprep.subr.mxu0 0.0
    %3125 = vmatpush1.msra.mxu0 0.0
    %3126 = vmatprep.subr.mxu0 0.0
    %3127 = vmatpush1.msra.mxu0 0.0
    %3128 = vmatprep.subr.mxu0 0.0
    %3129 = vmatpush1.msra.mxu0 0.0
    %3130 = vmatprep.subr.mxu0 0.0
    %3131 = vmatpush1.msra.mxu0 0.0
    %3132 = vmatprep.subr.mxu0 0.0
    %3133 = vmatpush1.msra.mxu0 0.0
    %3134 = vmatprep.subr.mxu0 0.0
    %3135 = vmatpush1.msra.mxu0 0.0
    %3136 = vmatprep.subr.mxu0 0.0
    %3137 = vmatpush1.msra.mxu0 0.0
    %3138 = vmatprep.subr.mxu0 0.0
    %3139 = vmatpush1.msra.mxu0 0.0
    %3140 = vmatprep.subr.mxu0 0.0
    %3141 = vmatpush1.msra.mxu0 0.0
    %3142 = vmatprep.subr.mxu0 0.0
    %3143 = vmatpush1.msra.mxu0 0.0
    %3144 = vmatprep.subr.mxu0 0.0
    %3145 = vmatpush1.msra.mxu0 0.0
    %3146 = vmatprep.subr.mxu0 0.0
    %3147 = vmatpush1.msra.mxu0 0.0
    %3148 = vmatprep.subr.mxu0 0.0
    %3149 = vmatpush1.msra.mxu0 0.0
    %3150 = vmatprep.subr.mxu0 0.0
    %3151 = vmatpush1.msra.mxu0 0.0
    %3152 = vmatprep.subr.mxu0 0.0
    %3153 = vmatpush1.msra.mxu0 0.0
    %3154 = vmatprep.mubr.f32.mxu0 0.0
    %3155 = vmatmul.mubr.f32.gmra.mrb[0].mxu0 %v3088
    %v3156 = vpop.f32.mrb[0].mxu0
    %v3157 = vadd.f32 %v3081, %v3156
    %v3158 = vpop.f32.mrb[0].mxu0
    %v3159 = vadd.f32 %v3083, %v3158
    %3160 = vdwg.mxu0
    %v3161 = vadd.f32 %v3157, %v557
    %v3162 = vadd.f32 %v3159, %v561
    %v3163 = vtanh.pop %v3161
    %v3164 = vtanh.pop %v3162
    %v3165 = vmul.f32 %v3163, 0.5
    %v3166 = vadd.f32 %v3165, 0.5
    %v3167 = vmul.f32 %v3164, 0.5
    %v3168 = vadd.f32 %v3167, 0.5
    %v3169 = vmul.f32 %v3166, %v2474
    %v3170 = vmul.f32 %v3166, %v3164
    %3172 = vrot.lane.b32.xlu0 %v3170, 64
    %v3173 = vpop.permute.xlu0 %3172
    %v3175 = vadd.f32 %v3169, %v3173
    %v3176 = vtanh.pop %v3175
    %v3177 = vmul.f32 %v3168, %v3176
    %v3178 = vld [vmem:[#allocation17] sm:$0xff]
    %v3179 = vld [vmem:[#allocation17 + $0x8] sm:$0xff]
    %v3180 = vld [vmem:[#allocation17 + $0x10] sm:$0xff]
    %v3181 = vld [vmem:[#allocation17 + $0x18] sm:$0xff]
    %v3182 = vld [vmem:[#allocation17 + $0x20] sm:$0xff]
    %v3183 = vld [vmem:[#allocation17 + $0x28] sm:$0xff]
    %v3184 = vld [vmem:[#allocation17 + $0x30] sm:$0xff]
    %v3185 = vld [vmem:[#allocation17 + $0x38] sm:$0xff]
    %v3186 = vld [vmem:[#allocation17 + $0x40] sm:$0xff]
    %v3187 = vld [vmem:[#allocation17 + $0x48] sm:$0xff]
    %v3188 = vld [vmem:[#allocation17 + $0x50] sm:$0xff]
    %v3189 = vld [vmem:[#allocation17 + $0x58] sm:$0xff]
    %v3190 = vld [vmem:[#allocation17 + $0x60] sm:$0xff]
    %v3191 = vld [vmem:[#allocation17 + $0x68] sm:$0xff]
    %v3192 = vld [vmem:[#allocation17 + $0x70] sm:$0xff]
    %v3193 = vld [vmem:[#allocation17 + $0x78] sm:$0xff]
    %v3194 = vld [vmem:[#allocation18] sm:$0xff]
    %v3195 = vld [vmem:[#allocation18 + $0x8] sm:$0xff]
    %v3196 = vld [vmem:[#allocation18 + $0x10] sm:$0xff]
    %v3197 = vld [vmem:[#allocation18 + $0x18] sm:$0xff]
    %v3198 = vld [vmem:[#allocation18 + $0x20] sm:$0xff]
    %v3199 = vld [vmem:[#allocation18 + $0x28] sm:$0xff]
    %v3200 = vld [vmem:[#allocation18 + $0x30] sm:$0xff]
    %v3201 = vld [vmem:[#allocation18 + $0x38] sm:$0xff]
    %v3202 = vld [vmem:[#allocation18 + $0x40] sm:$0xff]
    %v3203 = vld [vmem:[#allocation18 + $0x48] sm:$0xff]
    %v3204 = vld [vmem:[#allocation18 + $0x50] sm:$0xff]
    %v3205 = vld [vmem:[#allocation18 + $0x58] sm:$0xff]
    %v3206 = vld [vmem:[#allocation18 + $0x60] sm:$0xff]
    %v3207 = vld [vmem:[#allocation18 + $0x68] sm:$0xff]
    %v3208 = vld [vmem:[#allocation18 + $0x70] sm:$0xff]
    %v3209 = vld [vmem:[#allocation18 + $0x78] sm:$0xff]
    %v3210 = vsel %vm229, %v2677, 0
    %3212 = vmatprep.subr.mxu0 %v3195
    %3213 = vmatpush1.msra.mxu0 %v3194
    %3214 = vmatprep.subr.mxu0 %v3197
    %3215 = vmatpush1.msra.mxu0 %v3196
    %3216 = vmatprep.subr.mxu0 %v3199
    %3217 = vmatpush1.msra.mxu0 %v3198
    %3218 = vmatprep.subr.mxu0 %v3201
    %3219 = vmatpush1.msra.mxu0 %v3200
    %3220 = vmatprep.subr.mxu0 %v3203
    %3221 = vmatpush1.msra.mxu0 %v3202
    %3222 = vmatprep.subr.mxu0 %v3205
    %3223 = vmatpush1.msra.mxu0 %v3204
    %3224 = vmatprep.subr.mxu0 %v3207
    %3225 = vmatpush1.msra.mxu0 %v3206
    %3226 = vmatprep.subr.mxu0 %v3209
    %3227 = vmatpush1.msra.mxu0 %v3208
    %3228 = vmatprep.subr.mxu0 0.0
    %3229 = vmatpush1.msra.mxu0 0.0
    %3230 = vmatprep.subr.mxu0 0.0
    %3231 = vmatpush1.msra.mxu0 0.0
    %3232 = vmatprep.subr.mxu0 0.0
    %3233 = vmatpush1.msra.mxu0 0.0
    %3234 = vmatprep.subr.mxu0 0.0
    %3235 = vmatpush1.msra.mxu0 0.0
    %3236 = vmatprep.subr.mxu0 0.0
    %3237 = vmatpush1.msra.mxu0 0.0
    %3238 = vmatprep.subr.mxu0 0.0
    %3239 = vmatpush1.msra.mxu0 0.0
    %3240 = vmatprep.subr.mxu0 0.0
    %3241 = vmatpush1.msra.mxu0 0.0
    %3242 = vmatprep.subr.mxu0 0.0
    %3243 = vmatpush1.msra.mxu0 0.0
    %3244 = vmatprep.subr.mxu0 0.0
    %3245 = vmatpush1.msra.mxu0 0.0
    %3246 = vmatprep.subr.mxu0 0.0
    %3247 = vmatpush1.msra.mxu0 0.0
    %3248 = vmatprep.subr.mxu0 0.0
    %3249 = vmatpush1.msra.mxu0 0.0
    %3250 = vmatprep.subr.mxu0 0.0
    %3251 = vmatpush1.msra.mxu0 0.0
    %3252 = vmatprep.subr.mxu0 0.0
    %3253 = vmatpush1.msra.mxu0 0.0
    %3254 = vmatprep.subr.mxu0 0.0
    %3255 = vmatpush1.msra.mxu0 0.0
    %3256 = vmatprep.subr.mxu0 0.0
    %3257 = vmatpush1.msra.mxu0 0.0
    %3258 = vmatprep.subr.mxu0 0.0
    %3259 = vmatpush1.msra.mxu0 0.0
    %3260 = vmatprep.subr.mxu0 0.0
    %3261 = vmatpush1.msra.mxu0 0.0
    %3262 = vmatprep.subr.mxu0 0.0
    %3263 = vmatpush1.msra.mxu0 0.0
    %3264 = vmatprep.subr.mxu0 0.0
    %3265 = vmatpush1.msra.mxu0 0.0
    %3266 = vmatprep.subr.mxu0 0.0
    %3267 = vmatpush1.msra.mxu0 0.0
    %3268 = vmatprep.subr.mxu0 0.0
    %3269 = vmatpush1.msra.mxu0 0.0
    %3270 = vmatprep.subr.mxu0 0.0
    %3271 = vmatpush1.msra.mxu0 0.0
    %3272 = vmatprep.subr.mxu0 0.0
    %3273 = vmatpush1.msra.mxu0 0.0
    %3274 = vmatprep.subr.mxu0 0.0
    %3275 = vmatpush1.msra.mxu0 0.0
    %3276 = vmatprep.mubr.f32.mxu0 0.0
    %3277 = vmatmul.mubr.f32.gmra.mrb[0].mxu0 %v3210
    %v3278 = vpop.f32.mrb[0].mxu0
    %v3279 = vadd.f32 0.0, %v3278
    %v3280 = vpop.f32.mrb[0].mxu0
    %v3281 = vadd.f32 0.0, %v3280
    %3282 = vdwg.mxu0
    %3284 = vrot.lane.b32.xlu0 %v3177, 64
    %v3285 = vpop.permute.xlu0 %3284
    %v3286 = vsel %vm229, %v3285, 0
    %3288 = vmatprep.subr.mxu0 %v3179
    %3289 = vmatpush1.msra.mxu0 %v3178
    %3290 = vmatprep.subr.mxu0 %v3181
    %3291 = vmatpush1.msra.mxu0 %v3180
    %3292 = vmatprep.subr.mxu0 %v3183
    %3293 = vmatpush1.msra.mxu0 %v3182
    %3294 = vmatprep.subr.mxu0 %v3185
    %3295 = vmatpush1.msra.mxu0 %v3184
    %3296 = vmatprep.subr.mxu0 %v3187
    %3297 = vmatpush1.msra.mxu0 %v3186
    %3298 = vmatprep.subr.mxu0 %v3189
    %3299 = vmatpush1.msra.mxu0 %v3188
    %3300 = vmatprep.subr.mxu0 %v3191
    %3301 = vmatpush1.msra.mxu0 %v3190
    %3302 = vmatprep.subr.mxu0 %v3193
    %3303 = vmatpush1.msra.mxu0 %v3192
    %3304 = vmatprep.subr.mxu0 0.0
    %3305 = vmatpush1.msra.mxu0 0.0
    %3306 = vmatprep.subr.mxu0 0.0
    %3307 = vmatpush1.msra.mxu0 0.0
    %3308 = vmatprep.subr.mxu0 0.0
    %3309 = vmatpush1.msra.mxu0 0.0
    %3310 = vmatprep.subr.mxu0 0.0
    %3311 = vmatpush1.msra.mxu0 0.0
    %3312 = vmatprep.subr.mxu0 0.0
    %3313 = vmatpush1.msra.mxu0 0.0
    %3314 = vmatprep.subr.mxu0 0.0
    %3315 = vmatpush1.msra.mxu0 0.0
    %3316 = vmatprep.subr.mxu0 0.0
    %3317 = vmatpush1.msra.mxu0 0.0
    %3318 = vmatprep.subr.mxu0 0.0
    %3319 = vmatpush1.msra.mxu0 0.0
    %3320 = vmatprep.subr.mxu0 0.0
    %3321 = vmatpush1.msra.mxu0 0.0
    %3322 = vmatprep.subr.mxu0 0.0
    %3323 = vmatpush1.msra.mxu0 0.0
    %3324 = vmatprep.subr.mxu0 0.0
    %3325 = vmatpush1.msra.mxu0 0.0
    %3326 = vmatprep.subr.mxu0 0.0
    %3327 = vmatpush1.msra.mxu0 0.0
    %3328 = vmatprep.subr.mxu0 0.0
    %3329 = vmatpush1.msra.mxu0 0.0
    %3330 = vmatprep.subr.mxu0 0.0
    %3331 = vmatpush1.msra.mxu0 0.0
    %3332 = vmatprep.subr.mxu0 0.0
    %3333 = vmatpush1.msra.mxu0 0.0
    %3334 = vmatprep.subr.mxu0 0.0
    %3335 = vmatpush1.msra.mxu0 0.0
    %3336 = vmatprep.subr.mxu0 0.0
    %3337 = vmatpush1.msra.mxu0 0.0
    %3338 = vmatprep.subr.mxu0 0.0
    %3339 = vmatpush1.msra.mxu0 0.0
    %3340 = vmatprep.subr.mxu0 0.0
    %3341 = vmatpush1.msra.mxu0 0.0
    %3342 = vmatprep.subr.mxu0 0.0
    %3343 = vmatpush1.msra.mxu0 0.0
    %3344 = vmatprep.subr.mxu0 0.0
    %3345 = vmatpush1.msra.mxu0 0.0
    %3346 = vmatprep.subr.mxu0 0.0
    %3347 = vmatpush1.msra.mxu0 0.0
    %3348 = vmatprep.subr.mxu0 0.0
    %3349 = vmatpush1.msra.mxu0 0.0
    %3350 = vmatprep.subr.mxu0 0.0
    %3351 = vmatpush1.msra.mxu0 0.0
    %3352 = vmatprep.mubr.f32.mxu0 0.0
    %3353 = vmatmul.mubr.f32.gmra.mrb[0].mxu0 %v3286
    %v3354 = vpop.f32.mrb[0].mxu0
    %v3355 = vadd.f32 %v3279, %v3354
    %v3356 = vpop.f32.mrb[0].mxu0
    %v3357 = vadd.f32 %v3281, %v3356
    %3358 = vdwg.mxu0
    %v3359 = vadd.f32 %v3355, %v569
    %v3360 = vadd.f32 %v3357, %v573
    %v3361 = vtanh.pop %v3359
    %v3362 = vtanh.pop %v3360
    %v3363 = vmul.f32 %v3361, 0.5
    %v3364 = vadd.f32 %v3363, 0.5
    %v3365 = vmul.f32 %v3362, 0.5
    %v3366 = vadd.f32 %v3365, 0.5
    %v3367 = vmul.f32 %v3364, %v2672
    %v3368 = vmul.f32 %v3364, %v3362
    %3370 = vrot.lane.b32.xlu0 %v3368, 64
    %v3371 = vpop.permute.xlu0 %3370
    %v3373 = vadd.f32 %v3367, %v3371
    %v3374 = vtanh.pop %v3373
    %v3375 = vmul.f32 %v3366, %v3374
    %3377 = vrot.lane.b32.xlu0 %v3375, 64
    %v3378 = vpop.permute.xlu0 %3377
    %3380 = vst.msk [vmem:[#allocation21 + $0x18] sm:$0xff] %vm229, %v3378
    %v3381 = vld [vmem:[#allocation2 + $0x40] sm:$0xff]
    %v3382 = vld [vmem:[#allocation2 + $0x48] sm:$0xff]
    %v3383 = vld [vmem:[#allocation9] sm:$0xff]
    %v3384 = vld [vmem:[#allocation9 + $0x8] sm:$0xff]
    %v3385 = vld [vmem:[#allocation9 + $0x10] sm:$0xff]
    %v3386 = vld [vmem:[#allocation9 + $0x18] sm:$0xff]
    %v3387 = vld [vmem:[#allocation9 + $0x20] sm:$0xff]
    %v3388 = vld [vmem:[#allocation9 + $0x28] sm:$0xff]
    %v3389 = vld [vmem:[#allocation9 + $0x30] sm:$0xff]
    %v3390 = vld [vmem:[#allocation9 + $0x38] sm:$0xff]
    %v3391 = vld [vmem:[#allocation9 + $0x40] sm:$0xff]
    %v3392 = vld [vmem:[#allocation9 + $0x48] sm:$0xff]
    %v3393 = vld [vmem:[#allocation9 + $0x50] sm:$0xff]
    %v3394 = vld [vmem:[#allocation9 + $0x58] sm:$0xff]
    %v3395 = vld [vmem:[#allocation9 + $0x60] sm:$0xff]
    %v3396 = vld [vmem:[#allocation9 + $0x68] sm:$0xff]
    %v3397 = vld [vmem:[#allocation9 + $0x70] sm:$0xff]
    %v3398 = vld [vmem:[#allocation9 + $0x78] sm:$0xff]
    %3399 = vmatprep.subr.mxu0 %v3384
    %3400 = vmatpush1.msra.mxu0 %v3383
    %3401 = vmatprep.subr.mxu0 %v3386
    %3402 = vmatpush1.msra.mxu0 %v3385
    %3403 = vmatprep.subr.mxu0 %v3388
    %3404 = vmatpush1.msra.mxu0 %v3387
    %3405 = vmatprep.subr.mxu0 %v3390
    %3406 = vmatpush1.msra.mxu0 %v3389
    %3407 = vmatprep.subr.mxu0 %v3392
    %3408 = vmatpush1.msra.mxu0 %v3391
    %3409 = vmatprep.subr.mxu0 %v3394
    %3410 = vmatpush1.msra.mxu0 %v3393
    %3411 = vmatprep.subr.mxu0 %v3396
    %3412 = vmatpush1.msra.mxu0 %v3395
    %3413 = vmatprep.subr.mxu0 %v3398
    %3414 = vmatpush1.msra.mxu0 %v3397
    %3415 = vmatprep.subr.mxu0 0.0
    %3416 = vmatpush1.msra.mxu0 0.0
    %3417 = vmatprep.subr.mxu0 0.0
    %3418 = vmatpush1.msra.mxu0 0.0
    %3419 = vmatprep.subr.mxu0 0.0
    %3420 = vmatpush1.msra.mxu0 0.0
    %3421 = vmatprep.subr.mxu0 0.0
    %3422 = vmatpush1.msra.mxu0 0.0
    %3423 = vmatprep.subr.mxu0 0.0
    %3424 = vmatpush1.msra.mxu0 0.0
    %3425 = vmatprep.subr.mxu0 0.0
    %3426 = vmatpush1.msra.mxu0 0.0
    %3427 = vmatprep.subr.mxu0 0.0
    %3428 = vmatpush1.msra.mxu0 0.0
    %3429 = vmatprep.subr.mxu0 0.0
    %3430 = vmatpush1.msra.mxu0 0.0
    %3431 = vmatprep.subr.mxu0 0.0
    %3432 = vmatpush1.msra.mxu0 0.0
    %3433 = vmatprep.subr.mxu0 0.0
    %3434 = vmatpush1.msra.mxu0 0.0
    %3435 = vmatprep.subr.mxu0 0.0
    %3436 = vmatpush1.msra.mxu0 0.0
    %3437 = vmatprep.subr.mxu0 0.0
    %3438 = vmatpush1.msra.mxu0 0.0
    %3439 = vmatprep.subr.mxu0 0.0
    %3440 = vmatpush1.msra.mxu0 0.0
    %3441 = vmatprep.subr.mxu0 0.0
    %3442 = vmatpush1.msra.mxu0 0.0
    %3443 = vmatprep.subr.mxu0 0.0
    %3444 = vmatpush1.msra.mxu0 0.0
    %3445 = vmatprep.subr.mxu0 0.0
    %3446 = vmatpush1.msra.mxu0 0.0
    %3447 = vmatprep.subr.mxu0 0.0
    %3448 = vmatpush1.msra.mxu0 0.0
    %3449 = vmatprep.subr.mxu0 0.0
    %3450 = vmatpush1.msra.mxu0 0.0
    %3451 = vmatprep.subr.mxu0 0.0
    %3452 = vmatpush1.msra.mxu0 0.0
    %3453 = vmatprep.subr.mxu0 0.0
    %3454 = vmatpush1.msra.mxu0 0.0
    %3455 = vmatprep.subr.mxu0 0.0
    %3456 = vmatpush1.msra.mxu0 0.0
    %3457 = vmatprep.subr.mxu0 0.0
    %3458 = vmatpush1.msra.mxu0 0.0
    %3459 = vmatprep.subr.mxu0 0.0
    %3460 = vmatpush1.msra.mxu0 0.0
    %3461 = vmatprep.subr.mxu0 0.0
    %3462 = vmatpush1.msra.mxu0 0.0
    %3463 = vmatprep.mubr.f32.mxu0 0.0
    %3464 = vmatmul.mubr.f32.gmra.mrb[0].mxu0 %v2892
    %v3465 = vpop.f32.mrb[0].mxu0
    %v3466 = vadd.f32 0.0, %v3465
    %v3467 = vpop.f32.mrb[0].mxu0
    %v3468 = vadd.f32 0.0, %v3467
    %3469 = vdwg.mxu0
    %v3470 = vadd.f32 %v3381, %v3466
    %v3471 = vadd.f32 %v3382, %v3468
    %v3472 = vtanh.pop %v3470
    %v3473 = vtanh.pop %v3471
    %v3474 = vmul.f32 %v3472, 0.5
    %v3475 = vadd.f32 %v3474, 0.5
    %v3476 = vmul.f32 %v3473, 0.5
    %v3477 = vadd.f32 %v3476, 0.5
    %v3478 = vmul.f32 %v3475, %v2783
    %v3479 = vmul.f32 %v3475, %v3473
    %3481 = vrot.lane.b32.xlu0 %v3479, 64
    %v3482 = vpop.permute.xlu0 %3481
    %v3484 = vadd.f32 %v3478, %v3482
    %v3485 = vtanh.pop %v3484
    %v3486 = vmul.f32 %v3477, %v3485
    %v3487 = vld [vmem:[#allocation11] sm:$0xff]
    %v3488 = vld [vmem:[#allocation11 + $0x8] sm:$0xff]
    %v3489 = vld [vmem:[#allocation11 + $0x10] sm:$0xff]
    %v3490 = vld [vmem:[#allocation11 + $0x18] sm:$0xff]
    %v3491 = vld [vmem:[#allocation11 + $0x20] sm:$0xff]
    %v3492 = vld [vmem:[#allocation11 + $0x28] sm:$0xff]
    %v3493 = vld [vmem:[#allocation11 + $0x30] sm:$0xff]
    %v3494 = vld [vmem:[#allocation11 + $0x38] sm:$0xff]
    %v3495 = vld [vmem:[#allocation11 + $0x40] sm:$0xff]
    %v3496 = vld [vmem:[#allocation11 + $0x48] sm:$0xff]
    %v3497 = vld [vmem:[#allocation11 + $0x50] sm:$0xff]
    %v3498 = vld [vmem:[#allocation11 + $0x58] sm:$0xff]
    %v3499 = vld [vmem:[#allocation11 + $0x60] sm:$0xff]
    %v3500 = vld [vmem:[#allocation11 + $0x68] sm:$0xff]
    %v3501 = vld [vmem:[#allocation11 + $0x70] sm:$0xff]
    %v3502 = vld [vmem:[#allocation11 + $0x78] sm:$0xff]
    %v3503 = vld [vmem:[#allocation12] sm:$0xff]
    %v3504 = vld [vmem:[#allocation12 + $0x8] sm:$0xff]
    %v3505 = vld [vmem:[#allocation12 + $0x10] sm:$0xff]
    %v3506 = vld [vmem:[#allocation12 + $0x18] sm:$0xff]
    %v3507 = vld [vmem:[#allocation12 + $0x20] sm:$0xff]
    %v3508 = vld [vmem:[#allocation12 + $0x28] sm:$0xff]
    %v3509 = vld [vmem:[#allocation12 + $0x30] sm:$0xff]
    %v3510 = vld [vmem:[#allocation12 + $0x38] sm:$0xff]
    %v3511 = vld [vmem:[#allocation12 + $0x40] sm:$0xff]
    %v3512 = vld [vmem:[#allocation12 + $0x48] sm:$0xff]
    %v3513 = vld [vmem:[#allocation12 + $0x50] sm:$0xff]
    %v3514 = vld [vmem:[#allocation12 + $0x58] sm:$0xff]
    %v3515 = vld [vmem:[#allocation12 + $0x60] sm:$0xff]
    %v3516 = vld [vmem:[#allocation12 + $0x68] sm:$0xff]
    %v3517 = vld [vmem:[#allocation12 + $0x70] sm:$0xff]
    %v3518 = vld [vmem:[#allocation12 + $0x78] sm:$0xff]
    %3519 = vmatprep.subr.mxu0 %v3504
    %3520 = vmatpush1.msra.mxu0 %v3503
    %3521 = vmatprep.subr.mxu0 %v3506
    %3522 = vmatpush1.msra.mxu0 %v3505
    %3523 = vmatprep.subr.mxu0 %v3508
    %3524 = vmatpush1.msra.mxu0 %v3507
    %3525 = vmatprep.subr.mxu0 %v3510
    %3526 = vmatpush1.msra.mxu0 %v3509
    %3527 = vmatprep.subr.mxu0 %v3512
    %3528 = vmatpush1.msra.mxu0 %v3511
    %3529 = vmatprep.subr.mxu0 %v3514
    %3530 = vmatpush1.msra.mxu0 %v3513
    %3531 = vmatprep.subr.mxu0 %v3516
    %3532 = vmatpush1.msra.mxu0 %v3515
    %3533 = vmatprep.subr.mxu0 %v3518
    %3534 = vmatpush1.msra.mxu0 %v3517
    %3535 = vmatprep.subr.mxu0 0.0
    %3536 = vmatpush1.msra.mxu0 0.0
    %3537 = vmatprep.subr.mxu0 0.0
    %3538 = vmatpush1.msra.mxu0 0.0
    %3539 = vmatprep.subr.mxu0 0.0
    %3540 = vmatpush1.msra.mxu0 0.0
    %3541 = vmatprep.subr.mxu0 0.0
    %3542 = vmatpush1.msra.mxu0 0.0
    %3543 = vmatprep.subr.mxu0 0.0
    %3544 = vmatpush1.msra.mxu0 0.0
    %3545 = vmatprep.subr.mxu0 0.0
    %3546 = vmatpush1.msra.mxu0 0.0
    %3547 = vmatprep.subr.mxu0 0.0
    %3548 = vmatpush1.msra.mxu0 0.0
    %3549 = vmatprep.subr.mxu0 0.0
    %3550 = vmatpush1.msra.mxu0 0.0
    %3551 = vmatprep.subr.mxu0 0.0
    %3552 = vmatpush1.msra.mxu0 0.0
    %3553 = vmatprep.subr.mxu0 0.0
    %3554 = vmatpush1.msra.mxu0 0.0
    %3555 = vmatprep.subr.mxu0 0.0
    %3556 = vmatpush1.msra.mxu0 0.0
    %3557 = vmatprep.subr.mxu0 0.0
    %3558 = vmatpush1.msra.mxu0 0.0
    %3559 = vmatprep.subr.mxu0 0.0
    %3560 = vmatpush1.msra.mxu0 0.0
    %3561 = vmatprep.subr.mxu0 0.0
    %3562 = vmatpush1.msra.mxu0 0.0
    %3563 = vmatprep.subr.mxu0 0.0
    %3564 = vmatpush1.msra.mxu0 0.0
    %3565 = vmatprep.subr.mxu0 0.0
    %3566 = vmatpush1.msra.mxu0 0.0
    %3567 = vmatprep.subr.mxu0 0.0
    %3568 = vmatpush1.msra.mxu0 0.0
    %3569 = vmatprep.subr.mxu0 0.0
    %3570 = vmatpush1.msra.mxu0 0.0
    %3571 = vmatprep.subr.mxu0 0.0
    %3572 = vmatpush1.msra.mxu0 0.0
    %3573 = vmatprep.subr.mxu0 0.0
    %3574 = vmatpush1.msra.mxu0 0.0
    %3575 = vmatprep.subr.mxu0 0.0
    %3576 = vmatpush1.msra.mxu0 0.0
    %3577 = vmatprep.subr.mxu0 0.0
    %3578 = vmatpush1.msra.mxu0 0.0
    %3579 = vmatprep.subr.mxu0 0.0
    %3580 = vmatpush1.msra.mxu0 0.0
    %3581 = vmatprep.subr.mxu0 0.0
    %3582 = vmatpush1.msra.mxu0 0.0
    %3583 = vmatprep.mubr.f32.mxu0 0.0
    %3584 = vmatmul.mubr.f32.gmra.mrb[0].mxu0 %v3088
    %v3585 = vpop.f32.mrb[0].mxu0
    %v3586 = vadd.f32 0.0, %v3585
    %v3587 = vpop.f32.mrb[0].mxu0
    %v3588 = vadd.f32 0.0, %v3587
    %3589 = vdwg.mxu0
    %3591 = vrot.lane.b32.xlu0 %v3486, 64
    %v3592 = vpop.permute.xlu0 %3591
    %v3593 = vsel %vm229, %v3592, 0
    %3595 = vmatprep.subr.mxu0 %v3488
    %3596 = vmatpush1.msra.mxu0 %v3487
    %3597 = vmatprep.subr.mxu0 %v3490
    %3598 = vmatpush1.msra.mxu0 %v3489
    %3599 = vmatprep.subr.mxu0 %v3492
    %3600 = vmatpush1.msra.mxu0 %v3491
    %3601 = vmatprep.subr.mxu0 %v3494
    %3602 = vmatpush1.msra.mxu0 %v3493
    %3603 = vmatprep.subr.mxu0 %v3496
    %3604 = vmatpush1.msra.mxu0 %v3495
    %3605 = vmatprep.subr.mxu0 %v3498
    %3606 = vmatpush1.msra.mxu0 %v3497
    %3607 = vmatprep.subr.mxu0 %v3500
    %3608 = vmatpush1.msra.mxu0 %v3499
    %3609 = vmatprep.subr.mxu0 %v3502
    %3610 = vmatpush1.msra.mxu0 %v3501
    %3611 = vmatprep.subr.mxu0 0.0
    %3612 = vmatpush1.msra.mxu0 0.0
    %3613 = vmatprep.subr.mxu0 0.0
    %3614 = vmatpush1.msra.mxu0 0.0
    %3615 = vmatprep.subr.mxu0 0.0
    %3616 = vmatpush1.msra.mxu0 0.0
    %3617 = vmatprep.subr.mxu0 0.0
    %3618 = vmatpush1.msra.mxu0 0.0
    %3619 = vmatprep.subr.mxu0 0.0
    %3620 = vmatpush1.msra.mxu0 0.0
    %3621 = vmatprep.subr.mxu0 0.0
    %3622 = vmatpush1.msra.mxu0 0.0
    %3623 = vmatprep.subr.mxu0 0.0
    %3624 = vmatpush1.msra.mxu0 0.0
    %3625 = vmatprep.subr.mxu0 0.0
    %3626 = vmatpush1.msra.mxu0 0.0
    %3627 = vmatprep.subr.mxu0 0.0
    %3628 = vmatpush1.msra.mxu0 0.0
    %3629 = vmatprep.subr.mxu0 0.0
    %3630 = vmatpush1.msra.mxu0 0.0
    %3631 = vmatprep.subr.mxu0 0.0
    %3632 = vmatpush1.msra.mxu0 0.0
    %3633 = vmatprep.subr.mxu0 0.0
    %3634 = vmatpush1.msra.mxu0 0.0
    %3635 = vmatprep.subr.mxu0 0.0
    %3636 = vmatpush1.msra.mxu0 0.0
    %3637 = vmatprep.subr.mxu0 0.0
    %3638 = vmatpush1.msra.mxu0 0.0
    %3639 = vmatprep.subr.mxu0 0.0
    %3640 = vmatpush1.msra.mxu0 0.0
    %3641 = vmatprep.subr.mxu0 0.0
    %3642 = vmatpush1.msra.mxu0 0.0
    %3643 = vmatprep.subr.mxu0 0.0
    %3644 = vmatpush1.msra.mxu0 0.0
    %3645 = vmatprep.subr.mxu0 0.0
    %3646 = vmatpush1.msra.mxu0 0.0
    %3647 = vmatprep.subr.mxu0 0.0
    %3648 = vmatpush1.msra.mxu0 0.0
    %3649 = vmatprep.subr.mxu0 0.0
    %3650 = vmatpush1.msra.mxu0 0.0
    %3651 = vmatprep.subr.mxu0 0.0
    %3652 = vmatpush1.msra.mxu0 0.0
    %3653 = vmatprep.subr.mxu0 0.0
    %3654 = vmatpush1.msra.mxu0 0.0
    %3655 = vmatprep.subr.mxu0 0.0
    %3656 = vmatpush1.msra.mxu0 0.0
    %3657 = vmatprep.subr.mxu0 0.0
    %3658 = vmatpush1.msra.mxu0 0.0
    %3659 = vmatprep.mubr.f32.mxu0 0.0
    %3660 = vmatmul.mubr.f32.gmra.mrb[0].mxu0 %v3593
    %v3661 = vpop.f32.mrb[0].mxu0
    %v3662 = vadd.f32 %v3586, %v3661
    %v3663 = vpop.f32.mrb[0].mxu0
    %v3664 = vadd.f32 %v3588, %v3663
    %3665 = vdwg.mxu0
    %v3666 = vadd.f32 %v3662, %v545
    %v3667 = vadd.f32 %v3664, %v549
    %v3668 = vtanh.pop %v3666
    %v3669 = vtanh.pop %v3667
    %v3670 = vmul.f32 %v3668, 0.5
    %v3671 = vadd.f32 %v3670, 0.5
    %v3672 = vmul.f32 %v3669, 0.5
    %v3673 = vadd.f32 %v3672, 0.5
    %v3674 = vmul.f32 %v3671, %v2979
    %v3675 = vmul.f32 %v3671, %v3669
    %3677 = vrot.lane.b32.xlu0 %v3675, 64
    %v3678 = vpop.permute.xlu0 %3677
    %v3680 = vadd.f32 %v3674, %v3678
    %v3681 = vtanh.pop %v3680
    %v3682 = vmul.f32 %v3673, %v3681
    %v3683 = vld [vmem:[#allocation14] sm:$0xff]
    %v3684 = vld [vmem:[#allocation14 + $0x8] sm:$0xff]
    %v3685 = vld [vmem:[#allocation14 + $0x10] sm:$0xff]
    %v3686 = vld [vmem:[#allocation14 + $0x18] sm:$0xff]
    %v3687 = vld [vmem:[#allocation14 + $0x20] sm:$0xff]
    %v3688 = vld [vmem:[#allocation14 + $0x28] sm:$0xff]
    %v3689 = vld [vmem:[#allocation14 + $0x30] sm:$0xff]
    %v3690 = vld [vmem:[#allocation14 + $0x38] sm:$0xff]
    %v3691 = vld [vmem:[#allocation14 + $0x40] sm:$0xff]
    %v3692 = vld [vmem:[#allocation14 + $0x48] sm:$0xff]
    %v3693 = vld [vmem:[#allocation14 + $0x50] sm:$0xff]
    %v3694 = vld [vmem:[#allocation14 + $0x58] sm:$0xff]
    %v3695 = vld [vmem:[#allocation14 + $0x60] sm:$0xff]
    %v3696 = vld [vmem:[#allocation14 + $0x68] sm:$0xff]
    %v3697 = vld [vmem:[#allocation14 + $0x70] sm:$0xff]
    %v3698 = vld [vmem:[#allocation14 + $0x78] sm:$0xff]
    %v3699 = vld [vmem:[#allocation15] sm:$0xff]
    %v3700 = vld [vmem:[#allocation15 + $0x8] sm:$0xff]
    %v3701 = vld [vmem:[#allocation15 + $0x10] sm:$0xff]
    %v3702 = vld [vmem:[#allocation15 + $0x18] sm:$0xff]
    %v3703 = vld [vmem:[#allocation15 + $0x20] sm:$0xff]
    %v3704 = vld [vmem:[#allocation15 + $0x28] sm:$0xff]
    %v3705 = vld [vmem:[#allocation15 + $0x30] sm:$0xff]
    %v3706 = vld [vmem:[#allocation15 + $0x38] sm:$0xff]
    %v3707 = vld [vmem:[#allocation15 + $0x40] sm:$0xff]
    %v3708 = vld [vmem:[#allocation15 + $0x48] sm:$0xff]
    %v3709 = vld [vmem:[#allocation15 + $0x50] sm:$0xff]
    %v3710 = vld [vmem:[#allocation15 + $0x58] sm:$0xff]
    %v3711 = vld [vmem:[#allocation15 + $0x60] sm:$0xff]
    %v3712 = vld [vmem:[#allocation15 + $0x68] sm:$0xff]
    %v3713 = vld [vmem:[#allocation15 + $0x70] sm:$0xff]
    %v3714 = vld [vmem:[#allocation15 + $0x78] sm:$0xff]
    %3715 = vmatprep.subr.mxu0 %v3700
    %3716 = vmatpush1.msra.mxu0 %v3699
    %3717 = vmatprep.subr.mxu0 %v3702
    %3718 = vmatpush1.msra.mxu0 %v3701
    %3719 = vmatprep.subr.mxu0 %v3704
    %3720 = vmatpush1.msra.mxu0 %v3703
    %3721 = vmatprep.subr.mxu0 %v3706
    %3722 = vmatpush1.msra.mxu0 %v3705
    %3723 = vmatprep.subr.mxu0 %v3708
    %3724 = vmatpush1.msra.mxu0 %v3707
    %3725 = vmatprep.subr.mxu0 %v3710
    %3726 = vmatpush1.msra.mxu0 %v3709
    %3727 = vmatprep.subr.mxu0 %v3712
    %3728 = vmatpush1.msra.mxu0 %v3711
    %3729 = vmatprep.subr.mxu0 %v3714
    %3730 = vmatpush1.msra.mxu0 %v3713
    %3731 = vmatprep.subr.mxu0 0.0
    %3732 = vmatpush1.msra.mxu0 0.0
    %3733 = vmatprep.subr.mxu0 0.0
    %3734 = vmatpush1.msra.mxu0 0.0
    %3735 = vmatprep.subr.mxu0 0.0
    %3736 = vmatpush1.msra.mxu0 0.0
    %3737 = vmatprep.subr.mxu0 0.0
    %3738 = vmatpush1.msra.mxu0 0.0
    %3739 = vmatprep.subr.mxu0 0.0
    %3740 = vmatpush1.msra.mxu0 0.0
    %3741 = vmatprep.subr.mxu0 0.0
    %3742 = vmatpush1.msra.mxu0 0.0
    %3743 = vmatprep.subr.mxu0 0.0
    %3744 = vmatpush1.msra.mxu0 0.0
    %3745 = vmatprep.subr.mxu0 0.0
    %3746 = vmatpush1.msra.mxu0 0.0
    %3747 = vmatprep.subr.mxu0 0.0
    %3748 = vmatpush1.msra.mxu0 0.0
    %3749 = vmatprep.subr.mxu0 0.0
    %3750 = vmatpush1.msra.mxu0 0.0
    %3751 = vmatprep.subr.mxu0 0.0
    %3752 = vmatpush1.msra.mxu0 0.0
    %3753 = vmatprep.subr.mxu0 0.0
    %3754 = vmatpush1.msra.mxu0 0.0
    %3755 = vmatprep.subr.mxu0 0.0
    %3756 = vmatpush1.msra.mxu0 0.0
    %3757 = vmatprep.subr.mxu0 0.0
    %3758 = vmatpush1.msra.mxu0 0.0
    %3759 = vmatprep.subr.mxu0 0.0
    %3760 = vmatpush1.msra.mxu0 0.0
    %3761 = vmatprep.subr.mxu0 0.0
    %3762 = vmatpush1.msra.mxu0 0.0
    %3763 = vmatprep.subr.mxu0 0.0
    %3764 = vmatpush1.msra.mxu0 0.0
    %3765 = vmatprep.subr.mxu0 0.0
    %3766 = vmatpush1.msra.mxu0 0.0
    %3767 = vmatprep.subr.mxu0 0.0
    %3768 = vmatpush1.msra.mxu0 0.0
    %3769 = vmatprep.subr.mxu0 0.0
    %3770 = vmatpush1.msra.mxu0 0.0
    %3771 = vmatprep.subr.mxu0 0.0
    %3772 = vmatpush1.msra.mxu0 0.0
    %3773 = vmatprep.subr.mxu0 0.0
    %3774 = vmatpush1.msra.mxu0 0.0
    %3775 = vmatprep.subr.mxu0 0.0
    %3776 = vmatpush1.msra.mxu0 0.0
    %3777 = vmatprep.subr.mxu0 0.0
    %3778 = vmatpush1.msra.mxu0 0.0
    %3779 = vmatprep.mubr.f32.mxu0 0.0
    %3780 = vmatmul.mubr.f32.gmra.mrb[0].mxu0 %v3286
    %v3781 = vpop.f32.mrb[0].mxu0
    %v3782 = vadd.f32 0.0, %v3781
    %v3783 = vpop.f32.mrb[0].mxu0
    %v3784 = vadd.f32 0.0, %v3783
    %3785 = vdwg.mxu0
    %3787 = vrot.lane.b32.xlu0 %v3682, 64
    %v3788 = vpop.permute.xlu0 %3787
    %v3789 = vsel %vm229, %v3788, 0
    %3791 = vmatprep.subr.mxu0 %v3684
    %3792 = vmatpush1.msra.mxu0 %v3683
    %3793 = vmatprep.subr.mxu0 %v3686
    %3794 = vmatpush1.msra.mxu0 %v3685
    %3795 = vmatprep.subr.mxu0 %v3688
    %3796 = vmatpush1.msra.mxu0 %v3687
    %3797 = vmatprep.subr.mxu0 %v3690
    %3798 = vmatpush1.msra.mxu0 %v3689
    %3799 = vmatprep.subr.mxu0 %v3692
    %3800 = vmatpush1.msra.mxu0 %v3691
    %3801 = vmatprep.subr.mxu0 %v3694
    %3802 = vmatpush1.msra.mxu0 %v3693
    %3803 = vmatprep.subr.mxu0 %v3696
    %3804 = vmatpush1.msra.mxu0 %v3695
    %3805 = vmatprep.subr.mxu0 %v3698
    %3806 = vmatpush1.msra.mxu0 %v3697
    %3807 = vmatprep.subr.mxu0 0.0
    %3808 = vmatpush1.msra.mxu0 0.0
    %3809 = vmatprep.subr.mxu0 0.0
    %3810 = vmatpush1.msra.mxu0 0.0
    %3811 = vmatprep.subr.mxu0 0.0
    %3812 = vmatpush1.msra.mxu0 0.0
    %3813 = vmatprep.subr.mxu0 0.0
    %3814 = vmatpush1.msra.mxu0 0.0
    %3815 = vmatprep.subr.mxu0 0.0
    %3816 = vmatpush1.msra.mxu0 0.0
    %3817 = vmatprep.subr.mxu0 0.0
    %3818 = vmatpush1.msra.mxu0 0.0
    %3819 = vmatprep.subr.mxu0 0.0
    %3820 = vmatpush1.msra.mxu0 0.0
    %3821 = vmatprep.subr.mxu0 0.0
    %3822 = vmatpush1.msra.mxu0 0.0
    %3823 = vmatprep.subr.mxu0 0.0
    %3824 = vmatpush1.msra.mxu0 0.0
    %3825 = vmatprep.subr.mxu0 0.0
    %3826 = vmatpush1.msra.mxu0 0.0
    %3827 = vmatprep.subr.mxu0 0.0
    %3828 = vmatpush1.msra.mxu0 0.0
    %3829 = vmatprep.subr.mxu0 0.0
    %3830 = vmatpush1.msra.mxu0 0.0
    %3831 = vmatprep.subr.mxu0 0.0
    %3832 = vmatpush1.msra.mxu0 0.0
    %3833 = vmatprep.subr.mxu0 0.0
    %3834 = vmatpush1.msra.mxu0 0.0
    %3835 = vmatprep.subr.mxu0 0.0
    %3836 = vmatpush1.msra.mxu0 0.0
    %3837 = vmatprep.subr.mxu0 0.0
    %3838 = vmatpush1.msra.mxu0 0.0
    %3839 = vmatprep.subr.mxu0 0.0
    %3840 = vmatpush1.msra.mxu0 0.0
    %3841 = vmatprep.subr.mxu0 0.0
    %3842 = vmatpush1.msra.mxu0 0.0
    %3843 = vmatprep.subr.mxu0 0.0
    %3844 = vmatpush1.msra.mxu0 0.0
    %3845 = vmatprep.subr.mxu0 0.0
    %3846 = vmatpush1.msra.mxu0 0.0
    %3847 = vmatprep.subr.mxu0 0.0
    %3848 = vmatpush1.msra.mxu0 0.0
    %3849 = vmatprep.subr.mxu0 0.0
    %3850 = vmatpush1.msra.mxu0 0.0
    %3851 = vmatprep.subr.mxu0 0.0
    %3852 = vmatpush1.msra.mxu0 0.0
    %3853 = vmatprep.subr.mxu0 0.0
    %3854 = vmatpush1.msra.mxu0 0.0
    %3855 = vmatprep.mubr.f32.mxu0 0.0
    %3856 = vmatmul.mubr.f32.gmra.mrb[0].mxu0 %v3789
    %v3857 = vpop.f32.mrb[0].mxu0
    %v3858 = vadd.f32 %v3782, %v3857
    %v3859 = vpop.f32.mrb[0].mxu0
    %v3860 = vadd.f32 %v3784, %v3859
    %3861 = vdwg.mxu0
    %v3862 = vadd.f32 %v3858, %v557
    %v3863 = vadd.f32 %v3860, %v561
    %v3864 = vtanh.pop %v3862
    %v3865 = vtanh.pop %v3863
    %v3866 = vmul.f32 %v3864, 0.5
    %v3867 = vadd.f32 %v3866, 0.5
    %v3868 = vmul.f32 %v3865, 0.5
    %v3869 = vadd.f32 %v3868, 0.5
    %v3870 = vmul.f32 %v3867, %v3175
    %v3871 = vmul.f32 %v3867, %v3865
    %3873 = vrot.lane.b32.xlu0 %v3871, 64
    %v3874 = vpop.permute.xlu0 %3873
    %v3876 = vadd.f32 %v3870, %v3874
    %v3877 = vtanh.pop %v3876
    %v3878 = vmul.f32 %v3869, %v3877
    %v3879 = vld [vmem:[#allocation17] sm:$0xff]
    %v3880 = vld [vmem:[#allocation17 + $0x8] sm:$0xff]
    %v3881 = vld [vmem:[#allocation17 + $0x10] sm:$0xff]
    %v3882 = vld [vmem:[#allocation17 + $0x18] sm:$0xff]
    %v3883 = vld [vmem:[#allocation17 + $0x20] sm:$0xff]
    %v3884 = vld [vmem:[#allocation17 + $0x28] sm:$0xff]
    %v3885 = vld [vmem:[#allocation17 + $0x30] sm:$0xff]
    %v3886 = vld [vmem:[#allocation17 + $0x38] sm:$0xff]
    %v3887 = vld [vmem:[#allocation17 + $0x40] sm:$0xff]
    %v3888 = vld [vmem:[#allocation17 + $0x48] sm:$0xff]
    %v3889 = vld [vmem:[#allocation17 + $0x50] sm:$0xff]
    %v3890 = vld [vmem:[#allocation17 + $0x58] sm:$0xff]
    %v3891 = vld [vmem:[#allocation17 + $0x60] sm:$0xff]
    %v3892 = vld [vmem:[#allocation17 + $0x68] sm:$0xff]
    %v3893 = vld [vmem:[#allocation17 + $0x70] sm:$0xff]
    %v3894 = vld [vmem:[#allocation17 + $0x78] sm:$0xff]
    %v3895 = vld [vmem:[#allocation18] sm:$0xff]
    %v3896 = vld [vmem:[#allocation18 + $0x8] sm:$0xff]
    %v3897 = vld [vmem:[#allocation18 + $0x10] sm:$0xff]
    %v3898 = vld [vmem:[#allocation18 + $0x18] sm:$0xff]
    %v3899 = vld [vmem:[#allocation18 + $0x20] sm:$0xff]
    %v3900 = vld [vmem:[#allocation18 + $0x28] sm:$0xff]
    %v3901 = vld [vmem:[#allocation18 + $0x30] sm:$0xff]
    %v3902 = vld [vmem:[#allocation18 + $0x38] sm:$0xff]
    %v3903 = vld [vmem:[#allocation18 + $0x40] sm:$0xff]
    %v3904 = vld [vmem:[#allocation18 + $0x48] sm:$0xff]
    %v3905 = vld [vmem:[#allocation18 + $0x50] sm:$0xff]
    %v3906 = vld [vmem:[#allocation18 + $0x58] sm:$0xff]
    %v3907 = vld [vmem:[#allocation18 + $0x60] sm:$0xff]
    %v3908 = vld [vmem:[#allocation18 + $0x68] sm:$0xff]
    %v3909 = vld [vmem:[#allocation18 + $0x70] sm:$0xff]
    %v3910 = vld [vmem:[#allocation18 + $0x78] sm:$0xff]
    %v3911 = vsel %vm229, %v3378, 0
    %3913 = vmatprep.subr.mxu0 %v3896
    %3914 = vmatpush1.msra.mxu0 %v3895
    %3915 = vmatprep.subr.mxu0 %v3898
    %3916 = vmatpush1.msra.mxu0 %v3897
    %3917 = vmatprep.subr.mxu0 %v3900
    %3918 = vmatpush1.msra.mxu0 %v3899
    %3919 = vmatprep.subr.mxu0 %v3902
    %3920 = vmatpush1.msra.mxu0 %v3901
    %3921 = vmatprep.subr.mxu0 %v3904
    %3922 = vmatpush1.msra.mxu0 %v3903
    %3923 = vmatprep.subr.mxu0 %v3906
    %3924 = vmatpush1.msra.mxu0 %v3905
    %3925 = vmatprep.subr.mxu0 %v3908
    %3926 = vmatpush1.msra.mxu0 %v3907
    %3927 = vmatprep.subr.mxu0 %v3910
    %3928 = vmatpush1.msra.mxu0 %v3909
    %3929 = vmatprep.subr.mxu0 0.0
    %3930 = vmatpush1.msra.mxu0 0.0
    %3931 = vmatprep.subr.mxu0 0.0
    %3932 = vmatpush1.msra.mxu0 0.0
    %3933 = vmatprep.subr.mxu0 0.0
    %3934 = vmatpush1.msra.mxu0 0.0
    %3935 = vmatprep.subr.mxu0 0.0
    %3936 = vmatpush1.msra.mxu0 0.0
    %3937 = vmatprep.subr.mxu0 0.0
    %3938 = vmatpush1.msra.mxu0 0.0
    %3939 = vmatprep.subr.mxu0 0.0
    %3940 = vmatpush1.msra.mxu0 0.0
    %3941 = vmatprep.subr.mxu0 0.0
    %3942 = vmatpush1.msra.mxu0 0.0
    %3943 = vmatprep.subr.mxu0 0.0
    %3944 = vmatpush1.msra.mxu0 0.0
    %3945 = vmatprep.subr.mxu0 0.0
    %3946 = vmatpush1.msra.mxu0 0.0
    %3947 = vmatprep.subr.mxu0 0.0
    %3948 = vmatpush1.msra.mxu0 0.0
    %3949 = vmatprep.subr.mxu0 0.0
    %3950 = vmatpush1.msra.mxu0 0.0
    %3951 = vmatprep.subr.mxu0 0.0
    %3952 = vmatpush1.msra.mxu0 0.0
    %3953 = vmatprep.subr.mxu0 0.0
    %3954 = vmatpush1.msra.mxu0 0.0
    %3955 = vmatprep.subr.mxu0 0.0
    %3956 = vmatpush1.msra.mxu0 0.0
    %3957 = vmatprep.subr.mxu0 0.0
    %3958 = vmatpush1.msra.mxu0 0.0
    %3959 = vmatprep.subr.mxu0 0.0
    %3960 = vmatpush1.msra.mxu0 0.0
    %3961 = vmatprep.subr.mxu0 0.0
    %3962 = vmatpush1.msra.mxu0 0.0
    %3963 = vmatprep.subr.mxu0 0.0
    %3964 = vmatpush1.msra.mxu0 0.0
    %3965 = vmatprep.subr.mxu0 0.0
    %3966 = vmatpush1.msra.mxu0 0.0
    %3967 = vmatprep.subr.mxu0 0.0
    %3968 = vmatpush1.msra.mxu0 0.0
    %3969 = vmatprep.subr.mxu0 0.0
    %3970 = vmatpush1.msra.mxu0 0.0
    %3971 = vmatprep.subr.mxu0 0.0
    %3972 = vmatpush1.msra.mxu0 0.0
    %3973 = vmatprep.subr.mxu0 0.0
    %3974 = vmatpush1.msra.mxu0 0.0
    %3975 = vmatprep.subr.mxu0 0.0
    %3976 = vmatpush1.msra.mxu0 0.0
    %3977 = vmatprep.mubr.f32.mxu0 0.0
    %3978 = vmatmul.mubr.f32.gmra.mrb[0].mxu0 %v3911
    %v3979 = vpop.f32.mrb[0].mxu0
    %v3980 = vadd.f32 0.0, %v3979
    %v3981 = vpop.f32.mrb[0].mxu0
    %v3982 = vadd.f32 0.0, %v3981
    %3983 = vdwg.mxu0
    %3985 = vrot.lane.b32.xlu0 %v3878, 64
    %v3986 = vpop.permute.xlu0 %3985
    %v3987 = vsel %vm229, %v3986, 0
    %3989 = vmatprep.subr.mxu0 %v3880
    %3990 = vmatpush1.msra.mxu0 %v3879
    %3991 = vmatprep.subr.mxu0 %v3882
    %3992 = vmatpush1.msra.mxu0 %v3881
    %3993 = vmatprep.subr.mxu0 %v3884
    %3994 = vmatpush1.msra.mxu0 %v3883
    %3995 = vmatprep.subr.mxu0 %v3886
    %3996 = vmatpush1.msra.mxu0 %v3885
    %3997 = vmatprep.subr.mxu0 %v3888
    %3998 = vmatpush1.msra.mxu0 %v3887
    %3999 = vmatprep.subr.mxu0 %v3890
    %4000 = vmatpush1.msra.mxu0 %v3889
    %4001 = vmatprep.subr.mxu0 %v3892
    %4002 = vmatpush1.msra.mxu0 %v3891
    %4003 = vmatprep.subr.mxu0 %v3894
    %4004 = vmatpush1.msra.mxu0 %v3893
    %4005 = vmatprep.subr.mxu0 0.0
    %4006 = vmatpush1.msra.mxu0 0.0
    %4007 = vmatprep.subr.mxu0 0.0
    %4008 = vmatpush1.msra.mxu0 0.0
    %4009 = vmatprep.subr.mxu0 0.0
    %4010 = vmatpush1.msra.mxu0 0.0
    %4011 = vmatprep.subr.mxu0 0.0
    %4012 = vmatpush1.msra.mxu0 0.0
    %4013 = vmatprep.subr.mxu0 0.0
    %4014 = vmatpush1.msra.mxu0 0.0
    %4015 = vmatprep.subr.mxu0 0.0
    %4016 = vmatpush1.msra.mxu0 0.0
    %4017 = vmatprep.subr.mxu0 0.0
    %4018 = vmatpush1.msra.mxu0 0.0
    %4019 = vmatprep.subr.mxu0 0.0
    %4020 = vmatpush1.msra.mxu0 0.0
    %4021 = vmatprep.subr.mxu0 0.0
    %4022 = vmatpush1.msra.mxu0 0.0
    %4023 = vmatprep.subr.mxu0 0.0
    %4024 = vmatpush1.msra.mxu0 0.0
    %4025 = vmatprep.subr.mxu0 0.0
    %4026 = vmatpush1.msra.mxu0 0.0
    %4027 = vmatprep.subr.mxu0 0.0
    %4028 = vmatpush1.msra.mxu0 0.0
    %4029 = vmatprep.subr.mxu0 0.0
    %4030 = vmatpush1.msra.mxu0 0.0
    %4031 = vmatprep.subr.mxu0 0.0
    %4032 = vmatpush1.msra.mxu0 0.0
    %4033 = vmatprep.subr.mxu0 0.0
    %4034 = vmatpush1.msra.mxu0 0.0
    %4035 = vmatprep.subr.mxu0 0.0
    %4036 = vmatpush1.msra.mxu0 0.0
    %4037 = vmatprep.subr.mxu0 0.0
    %4038 = vmatpush1.msra.mxu0 0.0
    %4039 = vmatprep.subr.mxu0 0.0
    %4040 = vmatpush1.msra.mxu0 0.0
    %4041 = vmatprep.subr.mxu0 0.0
    %4042 = vmatpush1.msra.mxu0 0.0
    %4043 = vmatprep.subr.mxu0 0.0
    %4044 = vmatpush1.msra.mxu0 0.0
    %4045 = vmatprep.subr.mxu0 0.0
    %4046 = vmatpush1.msra.mxu0 0.0
    %4047 = vmatprep.subr.mxu0 0.0
    %4048 = vmatpush1.msra.mxu0 0.0
    %4049 = vmatprep.subr.mxu0 0.0
    %4050 = vmatpush1.msra.mxu0 0.0
    %4051 = vmatprep.subr.mxu0 0.0
    %4052 = vmatpush1.msra.mxu0 0.0
    %4053 = vmatprep.mubr.f32.mxu0 0.0
    %4054 = vmatmul.mubr.f32.gmra.mrb[0].mxu0 %v3987
    %v4055 = vpop.f32.mrb[0].mxu0
    %v4056 = vadd.f32 %v3980, %v4055
    %v4057 = vpop.f32.mrb[0].mxu0
    %v4058 = vadd.f32 %v3982, %v4057
    %4059 = vdwg.mxu0
    %v4060 = vadd.f32 %v4056, %v569
    %v4061 = vadd.f32 %v4058, %v573
    %v4062 = vtanh.pop %v4060
    %v4063 = vtanh.pop %v4061
    %v4064 = vmul.f32 %v4062, 0.5
    %v4065 = vadd.f32 %v4064, 0.5
    %v4066 = vmul.f32 %v4063, 0.5
    %v4067 = vadd.f32 %v4066, 0.5
    %v4068 = vmul.f32 %v4065, %v3373
    %v4069 = vmul.f32 %v4065, %v4063
    %4071 = vrot.lane.b32.xlu0 %v4069, 64
    %v4072 = vpop.permute.xlu0 %4071
    %v4074 = vadd.f32 %v4068, %v4072
    %v4075 = vtanh.pop %v4074
    %v4076 = vmul.f32 %v4067, %v4075
    %4078 = vrot.lane.b32.xlu0 %v4076, 64
    %v4079 = vpop.permute.xlu0 %4078
    %4081 = vst.msk [vmem:[#allocation21 + $0x20] sm:$0xff] %vm229, %v4079
    %v4082 = vld [vmem:[#allocation2 + $0x50] sm:$0xff]
    %v4083 = vld [vmem:[#allocation2 + $0x58] sm:$0xff]
    %v4084 = vld [vmem:[#allocation9] sm:$0xff]
    %v4085 = vld [vmem:[#allocation9 + $0x8] sm:$0xff]
    %v4086 = vld [vmem:[#allocation9 + $0x10] sm:$0xff]
    %v4087 = vld [vmem:[#allocation9 + $0x18] sm:$0xff]
    %v4088 = vld [vmem:[#allocation9 + $0x20] sm:$0xff]
    %v4089 = vld [vmem:[#allocation9 + $0x28] sm:$0xff]
    %v4090 = vld [vmem:[#allocation9 + $0x30] sm:$0xff]
    %v4091 = vld [vmem:[#allocation9 + $0x38] sm:$0xff]
    %v4092 = vld [vmem:[#allocation9 + $0x40] sm:$0xff]
    %v4093 = vld [vmem:[#allocation9 + $0x48] sm:$0xff]
    %v4094 = vld [vmem:[#allocation9 + $0x50] sm:$0xff]
    %v4095 = vld [vmem:[#allocation9 + $0x58] sm:$0xff]
    %v4096 = vld [vmem:[#allocation9 + $0x60] sm:$0xff]
    %v4097 = vld [vmem:[#allocation9 + $0x68] sm:$0xff]
    %v4098 = vld [vmem:[#allocation9 + $0x70] sm:$0xff]
    %v4099 = vld [vmem:[#allocation9 + $0x78] sm:$0xff]
    %4100 = vmatprep.subr.mxu0 %v4085
    %4101 = vmatpush1.msra.mxu0 %v4084
    %4102 = vmatprep.subr.mxu0 %v4087
    %4103 = vmatpush1.msra.mxu0 %v4086
    %4104 = vmatprep.subr.mxu0 %v4089
    %4105 = vmatpush1.msra.mxu0 %v4088
    %4106 = vmatprep.subr.mxu0 %v4091
    %4107 = vmatpush1.msra.mxu0 %v4090
    %4108 = vmatprep.subr.mxu0 %v4093
    %4109 = vmatpush1.msra.mxu0 %v4092
    %4110 = vmatprep.subr.mxu0 %v4095
    %4111 = vmatpush1.msra.mxu0 %v4094
    %4112 = vmatprep.subr.mxu0 %v4097
    %4113 = vmatpush1.msra.mxu0 %v4096
    %4114 = vmatprep.subr.mxu0 %v4099
    %4115 = vmatpush1.msra.mxu0 %v4098
    %4116 = vmatprep.subr.mxu0 0.0
    %4117 = vmatpush1.msra.mxu0 0.0
    %4118 = vmatprep.subr.mxu0 0.0
    %4119 = vmatpush1.msra.mxu0 0.0
    %4120 = vmatprep.subr.mxu0 0.0
    %4121 = vmatpush1.msra.mxu0 0.0
    %4122 = vmatprep.subr.mxu0 0.0
    %4123 = vmatpush1.msra.mxu0 0.0
    %4124 = vmatprep.subr.mxu0 0.0
    %4125 = vmatpush1.msra.mxu0 0.0
    %4126 = vmatprep.subr.mxu0 0.0
    %4127 = vmatpush1.msra.mxu0 0.0
    %4128 = vmatprep.subr.mxu0 0.0
    %4129 = vmatpush1.msra.mxu0 0.0
    %4130 = vmatprep.subr.mxu0 0.0
    %4131 = vmatpush1.msra.mxu0 0.0
    %4132 = vmatprep.subr.mxu0 0.0
    %4133 = vmatpush1.msra.mxu0 0.0
    %4134 = vmatprep.subr.mxu0 0.0
    %4135 = vmatpush1.msra.mxu0 0.0
    %4136 = vmatprep.subr.mxu0 0.0
    %4137 = vmatpush1.msra.mxu0 0.0
    %4138 = vmatprep.subr.mxu0 0.0
    %4139 = vmatpush1.msra.mxu0 0.0
    %4140 = vmatprep.subr.mxu0 0.0
    %4141 = vmatpush1.msra.mxu0 0.0
    %4142 = vmatprep.subr.mxu0 0.0
    %4143 = vmatpush1.msra.mxu0 0.0
    %4144 = vmatprep.subr.mxu0 0.0
    %4145 = vmatpush1.msra.mxu0 0.0
    %4146 = vmatprep.subr.mxu0 0.0
    %4147 = vmatpush1.msra.mxu0 0.0
    %4148 = vmatprep.subr.mxu0 0.0
    %4149 = vmatpush1.msra.mxu0 0.0
    %4150 = vmatprep.subr.mxu0 0.0
    %4151 = vmatpush1.msra.mxu0 0.0
    %4152 = vmatprep.subr.mxu0 0.0
    %4153 = vmatpush1.msra.mxu0 0.0
    %4154 = vmatprep.subr.mxu0 0.0
    %4155 = vmatpush1.msra.mxu0 0.0
    %4156 = vmatprep.subr.mxu0 0.0
    %4157 = vmatpush1.msra.mxu0 0.0
    %4158 = vmatprep.subr.mxu0 0.0
    %4159 = vmatpush1.msra.mxu0 0.0
    %4160 = vmatprep.subr.mxu0 0.0
    %4161 = vmatpush1.msra.mxu0 0.0
    %4162 = vmatprep.subr.mxu0 0.0
    %4163 = vmatpush1.msra.mxu0 0.0
    %4164 = vmatprep.mubr.f32.mxu0 0.0
    %4165 = vmatmul.mubr.f32.gmra.mrb[0].mxu0 %v3593
    %v4166 = vpop.f32.mrb[0].mxu0
    %v4167 = vadd.f32 0.0, %v4166
    %v4168 = vpop.f32.mrb[0].mxu0
    %v4169 = vadd.f32 0.0, %v4168
    %4170 = vdwg.mxu0
    %v4171 = vadd.f32 %v4082, %v4167
    %v4172 = vadd.f32 %v4083, %v4169
    %v4173 = vtanh.pop %v4171
    %v4174 = vtanh.pop %v4172
    %v4175 = vmul.f32 %v4173, 0.5
    %v4176 = vadd.f32 %v4175, 0.5
    %v4177 = vmul.f32 %v4174, 0.5
    %v4178 = vadd.f32 %v4177, 0.5
    %v4179 = vmul.f32 %v4176, %v3484
    %v4180 = vmul.f32 %v4176, %v4174
    %4182 = vrot.lane.b32.xlu0 %v4180, 64
    %v4183 = vpop.permute.xlu0 %4182
    %v4185 = vadd.f32 %v4179, %v4183
    %v4186 = vtanh.pop %v4185
    %v4187 = vmul.f32 %v4178, %v4186
    %v4188 = vld [vmem:[#allocation11] sm:$0xff]
    %v4189 = vld [vmem:[#allocation11 + $0x8] sm:$0xff]
    %v4190 = vld [vmem:[#allocation11 + $0x10] sm:$0xff]
    %v4191 = vld [vmem:[#allocation11 + $0x18] sm:$0xff]
    %v4192 = vld [vmem:[#allocation11 + $0x20] sm:$0xff]
    %v4193 = vld [vmem:[#allocation11 + $0x28] sm:$0xff]
    %v4194 = vld [vmem:[#allocation11 + $0x30] sm:$0xff]
    %v4195 = vld [vmem:[#allocation11 + $0x38] sm:$0xff]
    %v4196 = vld [vmem:[#allocation11 + $0x40] sm:$0xff]
    %v4197 = vld [vmem:[#allocation11 + $0x48] sm:$0xff]
    %v4198 = vld [vmem:[#allocation11 + $0x50] sm:$0xff]
    %v4199 = vld [vmem:[#allocation11 + $0x58] sm:$0xff]
    %v4200 = vld [vmem:[#allocation11 + $0x60] sm:$0xff]
    %v4201 = vld [vmem:[#allocation11 + $0x68] sm:$0xff]
    %v4202 = vld [vmem:[#allocation11 + $0x70] sm:$0xff]
    %v4203 = vld [vmem:[#allocation11 + $0x78] sm:$0xff]
    %v4204 = vld [vmem:[#allocation12] sm:$0xff]
    %v4205 = vld [vmem:[#allocation12 + $0x8] sm:$0xff]
    %v4206 = vld [vmem:[#allocation12 + $0x10] sm:$0xff]
    %v4207 = vld [vmem:[#allocation12 + $0x18] sm:$0xff]
    %v4208 = vld [vmem:[#allocation12 + $0x20] sm:$0xff]
    %v4209 = vld [vmem:[#allocation12 + $0x28] sm:$0xff]
    %v4210 = vld [vmem:[#allocation12 + $0x30] sm:$0xff]
    %v4211 = vld [vmem:[#allocation12 + $0x38] sm:$0xff]
    %v4212 = vld [vmem:[#allocation12 + $0x40] sm:$0xff]
    %v4213 = vld [vmem:[#allocation12 + $0x48] sm:$0xff]
    %v4214 = vld [vmem:[#allocation12 + $0x50] sm:$0xff]
    %v4215 = vld [vmem:[#allocation12 + $0x58] sm:$0xff]
    %v4216 = vld [vmem:[#allocation12 + $0x60] sm:$0xff]
    %v4217 = vld [vmem:[#allocation12 + $0x68] sm:$0xff]
    %v4218 = vld [vmem:[#allocation12 + $0x70] sm:$0xff]
    %v4219 = vld [vmem:[#allocation12 + $0x78] sm:$0xff]
    %4220 = vmatprep.subr.mxu0 %v4205
    %4221 = vmatpush1.msra.mxu0 %v4204
    %4222 = vmatprep.subr.mxu0 %v4207
    %4223 = vmatpush1.msra.mxu0 %v4206
    %4224 = vmatprep.subr.mxu0 %v4209
    %4225 = vmatpush1.msra.mxu0 %v4208
    %4226 = vmatprep.subr.mxu0 %v4211
    %4227 = vmatpush1.msra.mxu0 %v4210
    %4228 = vmatprep.subr.mxu0 %v4213
    %4229 = vmatpush1.msra.mxu0 %v4212
    %4230 = vmatprep.subr.mxu0 %v4215
    %4231 = vmatpush1.msra.mxu0 %v4214
    %4232 = vmatprep.subr.mxu0 %v4217
    %4233 = vmatpush1.msra.mxu0 %v4216
    %4234 = vmatprep.subr.mxu0 %v4219
    %4235 = vmatpush1.msra.mxu0 %v4218
    %4236 = vmatprep.subr.mxu0 0.0
    %4237 = vmatpush1.msra.mxu0 0.0
    %4238 = vmatprep.subr.mxu0 0.0
    %4239 = vmatpush1.msra.mxu0 0.0
    %4240 = vmatprep.subr.mxu0 0.0
    %4241 = vmatpush1.msra.mxu0 0.0
    %4242 = vmatprep.subr.mxu0 0.0
    %4243 = vmatpush1.msra.mxu0 0.0
    %4244 = vmatprep.subr.mxu0 0.0
    %4245 = vmatpush1.msra.mxu0 0.0
    %4246 = vmatprep.subr.mxu0 0.0
    %4247 = vmatpush1.msra.mxu0 0.0
    %4248 = vmatprep.subr.mxu0 0.0
    %4249 = vmatpush1.msra.mxu0 0.0
    %4250 = vmatprep.subr.mxu0 0.0
    %4251 = vmatpush1.msra.mxu0 0.0
    %4252 = vmatprep.subr.mxu0 0.0
    %4253 = vmatpush1.msra.mxu0 0.0
    %4254 = vmatprep.subr.mxu0 0.0
    %4255 = vmatpush1.msra.mxu0 0.0
    %4256 = vmatprep.subr.mxu0 0.0
    %4257 = vmatpush1.msra.mxu0 0.0
    %4258 = vmatprep.subr.mxu0 0.0
    %4259 = vmatpush1.msra.mxu0 0.0
    %4260 = vmatprep.subr.mxu0 0.0
    %4261 = vmatpush1.msra.mxu0 0.0
    %4262 = vmatprep.subr.mxu0 0.0
    %4263 = vmatpush1.msra.mxu0 0.0
    %4264 = vmatprep.subr.mxu0 0.0
    %4265 = vmatpush1.msra.mxu0 0.0
    %4266 = vmatprep.subr.mxu0 0.0
    %4267 = vmatpush1.msra.mxu0 0.0
    %4268 = vmatprep.subr.mxu0 0.0
    %4269 = vmatpush1.msra.mxu0 0.0
    %4270 = vmatprep.subr.mxu0 0.0
    %4271 = vmatpush1.msra.mxu0 0.0
    %4272 = vmatprep.subr.mxu0 0.0
    %4273 = vmatpush1.msra.mxu0 0.0
    %4274 = vmatprep.subr.mxu0 0.0
    %4275 = vmatpush1.msra.mxu0 0.0
    %4276 = vmatprep.subr.mxu0 0.0
    %4277 = vmatpush1.msra.mxu0 0.0
    %4278 = vmatprep.subr.mxu0 0.0
    %4279 = vmatpush1.msra.mxu0 0.0
    %4280 = vmatprep.subr.mxu0 0.0
    %4281 = vmatpush1.msra.mxu0 0.0
    %4282 = vmatprep.subr.mxu0 0.0
    %4283 = vmatpush1.msra.mxu0 0.0
    %4284 = vmatprep.mubr.f32.mxu0 0.0
    %4285 = vmatmul.mubr.f32.gmra.mrb[0].mxu0 %v3789
    %v4286 = vpop.f32.mrb[0].mxu0
    %v4287 = vadd.f32 0.0, %v4286
    %v4288 = vpop.f32.mrb[0].mxu0
    %v4289 = vadd.f32 0.0, %v4288
    %4290 = vdwg.mxu0
    %4292 = vrot.lane.b32.xlu0 %v4187, 64
    %v4293 = vpop.permute.xlu0 %4292
    %v4294 = vsel %vm229, %v4293, 0
    %4296 = vmatprep.subr.mxu0 %v4189
    %4297 = vmatpush1.msra.mxu0 %v4188
    %4298 = vmatprep.subr.mxu0 %v4191
    %4299 = vmatpush1.msra.mxu0 %v4190
    %4300 = vmatprep.subr.mxu0 %v4193
    %4301 = vmatpush1.msra.mxu0 %v4192
    %4302 = vmatprep.subr.mxu0 %v4195
    %4303 = vmatpush1.msra.mxu0 %v4194
    %4304 = vmatprep.subr.mxu0 %v4197
    %4305 = vmatpush1.msra.mxu0 %v4196
    %4306 = vmatprep.subr.mxu0 %v4199
    %4307 = vmatpush1.msra.mxu0 %v4198
    %4308 = vmatprep.subr.mxu0 %v4201
    %4309 = vmatpush1.msra.mxu0 %v4200
    %4310 = vmatprep.subr.mxu0 %v4203
    %4311 = vmatpush1.msra.mxu0 %v4202
    %4312 = vmatprep.subr.mxu0 0.0
    %4313 = vmatpush1.msra.mxu0 0.0
    %4314 = vmatprep.subr.mxu0 0.0
    %4315 = vmatpush1.msra.mxu0 0.0
    %4316 = vmatprep.subr.mxu0 0.0
    %4317 = vmatpush1.msra.mxu0 0.0
    %4318 = vmatprep.subr.mxu0 0.0
    %4319 = vmatpush1.msra.mxu0 0.0
    %4320 = vmatprep.subr.mxu0 0.0
    %4321 = vmatpush1.msra.mxu0 0.0
    %4322 = vmatprep.subr.mxu0 0.0
    %4323 = vmatpush1.msra.mxu0 0.0
    %4324 = vmatprep.subr.mxu0 0.0
    %4325 = vmatpush1.msra.mxu0 0.0
    %4326 = vmatprep.subr.mxu0 0.0
    %4327 = vmatpush1.msra.mxu0 0.0
    %4328 = vmatprep.subr.mxu0 0.0
    %4329 = vmatpush1.msra.mxu0 0.0
    %4330 = vmatprep.subr.mxu0 0.0
    %4331 = vmatpush1.msra.mxu0 0.0
    %4332 = vmatprep.subr.mxu0 0.0
    %4333 = vmatpush1.msra.mxu0 0.0
    %4334 = vmatprep.subr.mxu0 0.0
    %4335 = vmatpush1.msra.mxu0 0.0
    %4336 = vmatprep.subr.mxu0 0.0
    %4337 = vmatpush1.msra.mxu0 0.0
    %4338 = vmatprep.subr.mxu0 0.0
    %4339 = vmatpush1.msra.mxu0 0.0
    %4340 = vmatprep.subr.mxu0 0.0
    %4341 = vmatpush1.msra.mxu0 0.0
    %4342 = vmatprep.subr.mxu0 0.0
    %4343 = vmatpush1.msra.mxu0 0.0
    %4344 = vmatprep.subr.mxu0 0.0
    %4345 = vmatpush1.msra.mxu0 0.0
    %4346 = vmatprep.subr.mxu0 0.0
    %4347 = vmatpush1.msra.mxu0 0.0
    %4348 = vmatprep.subr.mxu0 0.0
    %4349 = vmatpush1.msra.mxu0 0.0
    %4350 = vmatprep.subr.mxu0 0.0
    %4351 = vmatpush1.msra.mxu0 0.0
    %4352 = vmatprep.subr.mxu0 0.0
    %4353 = vmatpush1.msra.mxu0 0.0
    %4354 = vmatprep.subr.mxu0 0.0
    %4355 = vmatpush1.msra.mxu0 0.0
    %4356 = vmatprep.subr.mxu0 0.0
    %4357 = vmatpush1.msra.mxu0 0.0
    %4358 = vmatprep.subr.mxu0 0.0
    %4359 = vmatpush1.msra.mxu0 0.0
    %4360 = vmatprep.mubr.f32.mxu0 0.0
    %4361 = vmatmul.mubr.f32.gmra.mrb[0].mxu0 %v4294
    %v4362 = vpop.f32.mrb[0].mxu0
    %v4363 = vadd.f32 %v4287, %v4362
    %v4364 = vpop.f32.mrb[0].mxu0
    %v4365 = vadd.f32 %v4289, %v4364
    %4366 = vdwg.mxu0
    %v4367 = vadd.f32 %v4363, %v545
    %v4368 = vadd.f32 %v4365, %v549
    %v4369 = vtanh.pop %v4367
    %v4370 = vtanh.pop %v4368
    %v4371 = vmul.f32 %v4369, 0.5
    %v4372 = vadd.f32 %v4371, 0.5
    %v4373 = vmul.f32 %v4370, 0.5
    %v4374 = vadd.f32 %v4373, 0.5
    %v4375 = vmul.f32 %v4372, %v3680
    %v4376 = vmul.f32 %v4372, %v4370
    %4378 = vrot.lane.b32.xlu0 %v4376, 64
    %v4379 = vpop.permute.xlu0 %4378
    %v4381 = vadd.f32 %v4375, %v4379
    %v4382 = vtanh.pop %v4381
    %v4383 = vmul.f32 %v4374, %v4382
    %v4384 = vld [vmem:[#allocation14] sm:$0xff]
    %v4385 = vld [vmem:[#allocation14 + $0x8] sm:$0xff]
    %v4386 = vld [vmem:[#allocation14 + $0x10] sm:$0xff]
    %v4387 = vld [vmem:[#allocation14 + $0x18] sm:$0xff]
    %v4388 = vld [vmem:[#allocation14 + $0x20] sm:$0xff]
    %v4389 = vld [vmem:[#allocation14 + $0x28] sm:$0xff]
    %v4390 = vld [vmem:[#allocation14 + $0x30] sm:$0xff]
    %v4391 = vld [vmem:[#allocation14 + $0x38] sm:$0xff]
    %v4392 = vld [vmem:[#allocation14 + $0x40] sm:$0xff]
    %v4393 = vld [vmem:[#allocation14 + $0x48] sm:$0xff]
    %v4394 = vld [vmem:[#allocation14 + $0x50] sm:$0xff]
    %v4395 = vld [vmem:[#allocation14 + $0x58] sm:$0xff]
    %v4396 = vld [vmem:[#allocation14 + $0x60] sm:$0xff]
    %v4397 = vld [vmem:[#allocation14 + $0x68] sm:$0xff]
    %v4398 = vld [vmem:[#allocation14 + $0x70] sm:$0xff]
    %v4399 = vld [vmem:[#allocation14 + $0x78] sm:$0xff]
    %v4400 = vld [vmem:[#allocation15] sm:$0xff]
    %v4401 = vld [vmem:[#allocation15 + $0x8] sm:$0xff]
    %v4402 = vld [vmem:[#allocation15 + $0x10] sm:$0xff]
    %v4403 = vld [vmem:[#allocation15 + $0x18] sm:$0xff]
    %v4404 = vld [vmem:[#allocation15 + $0x20] sm:$0xff]
    %v4405 = vld [vmem:[#allocation15 + $0x28] sm:$0xff]
    %v4406 = vld [vmem:[#allocation15 + $0x30] sm:$0xff]
    %v4407 = vld [vmem:[#allocation15 + $0x38] sm:$0xff]
    %v4408 = vld [vmem:[#allocation15 + $0x40] sm:$0xff]
    %v4409 = vld [vmem:[#allocation15 + $0x48] sm:$0xff]
    %v4410 = vld [vmem:[#allocation15 + $0x50] sm:$0xff]
    %v4411 = vld [vmem:[#allocation15 + $0x58] sm:$0xff]
    %v4412 = vld [vmem:[#allocation15 + $0x60] sm:$0xff]
    %v4413 = vld [vmem:[#allocation15 + $0x68] sm:$0xff]
    %v4414 = vld [vmem:[#allocation15 + $0x70] sm:$0xff]
    %v4415 = vld [vmem:[#allocation15 + $0x78] sm:$0xff]
    %4416 = vmatprep.subr.mxu0 %v4401
    %4417 = vmatpush1.msra.mxu0 %v4400
    %4418 = vmatprep.subr.mxu0 %v4403
    %4419 = vmatpush1.msra.mxu0 %v4402
    %4420 = vmatprep.subr.mxu0 %v4405
    %4421 = vmatpush1.msra.mxu0 %v4404
    %4422 = vmatprep.subr.mxu0 %v4407
    %4423 = vmatpush1.msra.mxu0 %v4406
    %4424 = vmatprep.subr.mxu0 %v4409
    %4425 = vmatpush1.msra.mxu0 %v4408
    %4426 = vmatprep.subr.mxu0 %v4411
    %4427 = vmatpush1.msra.mxu0 %v4410
    %4428 = vmatprep.subr.mxu0 %v4413
    %4429 = vmatpush1.msra.mxu0 %v4412
    %4430 = vmatprep.subr.mxu0 %v4415
    %4431 = vmatpush1.msra.mxu0 %v4414
    %4432 = vmatprep.subr.mxu0 0.0
    %4433 = vmatpush1.msra.mxu0 0.0
    %4434 = vmatprep.subr.mxu0 0.0
    %4435 = vmatpush1.msra.mxu0 0.0
    %4436 = vmatprep.subr.mxu0 0.0
    %4437 = vmatpush1.msra.mxu0 0.0
    %4438 = vmatprep.subr.mxu0 0.0
    %4439 = vmatpush1.msra.mxu0 0.0
    %4440 = vmatprep.subr.mxu0 0.0
    %4441 = vmatpush1.msra.mxu0 0.0
    %4442 = vmatprep.subr.mxu0 0.0
    %4443 = vmatpush1.msra.mxu0 0.0
    %4444 = vmatprep.subr.mxu0 0.0
    %4445 = vmatpush1.msra.mxu0 0.0
    %4446 = vmatprep.subr.mxu0 0.0
    %4447 = vmatpush1.msra.mxu0 0.0
    %4448 = vmatprep.subr.mxu0 0.0
    %4449 = vmatpush1.msra.mxu0 0.0
    %4450 = vmatprep.subr.mxu0 0.0
    %4451 = vmatpush1.msra.mxu0 0.0
    %4452 = vmatprep.subr.mxu0 0.0
    %4453 = vmatpush1.msra.mxu0 0.0
    %4454 = vmatprep.subr.mxu0 0.0
    %4455 = vmatpush1.msra.mxu0 0.0
    %4456 = vmatprep.subr.mxu0 0.0
    %4457 = vmatpush1.msra.mxu0 0.0
    %4458 = vmatprep.subr.mxu0 0.0
    %4459 = vmatpush1.msra.mxu0 0.0
    %4460 = vmatprep.subr.mxu0 0.0
    %4461 = vmatpush1.msra.mxu0 0.0
    %4462 = vmatprep.subr.mxu0 0.0
    %4463 = vmatpush1.msra.mxu0 0.0
    %4464 = vmatprep.subr.mxu0 0.0
    %4465 = vmatpush1.msra.mxu0 0.0
    %4466 = vmatprep.subr.mxu0 0.0
    %4467 = vmatpush1.msra.mxu0 0.0
    %4468 = vmatprep.subr.mxu0 0.0
    %4469 = vmatpush1.msra.mxu0 0.0
    %4470 = vmatprep.subr.mxu0 0.0
    %4471 = vmatpush1.msra.mxu0 0.0
    %4472 = vmatprep.subr.mxu0 0.0
    %4473 = vmatpush1.msra.mxu0 0.0
    %4474 = vmatprep.subr.mxu0 0.0
    %4475 = vmatpush1.msra.mxu0 0.0
    %4476 = vmatprep.subr.mxu0 0.0
    %4477 = vmatpush1.msra.mxu0 0.0
    %4478 = vmatprep.subr.mxu0 0.0
    %4479 = vmatpush1.msra.mxu0 0.0
    %4480 = vmatprep.mubr.f32.mxu0 0.0
    %4481 = vmatmul.mubr.f32.gmra.mrb[0].mxu0 %v3987
    %v4482 = vpop.f32.mrb[0].mxu0
    %v4483 = vadd.f32 0.0, %v4482
    %v4484 = vpop.f32.mrb[0].mxu0
    %v4485 = vadd.f32 0.0, %v4484
    %4486 = vdwg.mxu0
    %4488 = vrot.lane.b32.xlu0 %v4383, 64
    %v4489 = vpop.permute.xlu0 %4488
    %v4490 = vsel %vm229, %v4489, 0
    %4492 = vmatprep.subr.mxu0 %v4385
    %4493 = vmatpush1.msra.mxu0 %v4384
    %4494 = vmatprep.subr.mxu0 %v4387
    %4495 = vmatpush1.msra.mxu0 %v4386
    %4496 = vmatprep.subr.mxu0 %v4389
    %4497 = vmatpush1.msra.mxu0 %v4388
    %4498 = vmatprep.subr.mxu0 %v4391
    %4499 = vmatpush1.msra.mxu0 %v4390
    %4500 = vmatprep.subr.mxu0 %v4393
    %4501 = vmatpush1.msra.mxu0 %v4392
    %4502 = vmatprep.subr.mxu0 %v4395
    %4503 = vmatpush1.msra.mxu0 %v4394
    %4504 = vmatprep.subr.mxu0 %v4397
    %4505 = vmatpush1.msra.mxu0 %v4396
    %4506 = vmatprep.subr.mxu0 %v4399
    %4507 = vmatpush1.msra.mxu0 %v4398
    %4508 = vmatprep.subr.mxu0 0.0
    %4509 = vmatpush1.msra.mxu0 0.0
    %4510 = vmatprep.subr.mxu0 0.0
    %4511 = vmatpush1.msra.mxu0 0.0
    %4512 = vmatprep.subr.mxu0 0.0
    %4513 = vmatpush1.msra.mxu0 0.0
    %4514 = vmatprep.subr.mxu0 0.0
    %4515 = vmatpush1.msra.mxu0 0.0
    %4516 = vmatprep.subr.mxu0 0.0
    %4517 = vmatpush1.msra.mxu0 0.0
    %4518 = vmatprep.subr.mxu0 0.0
    %4519 = vmatpush1.msra.mxu0 0.0
    %4520 = vmatprep.subr.mxu0 0.0
    %4521 = vmatpush1.msra.mxu0 0.0
    %4522 = vmatprep.subr.mxu0 0.0
    %4523 = vmatpush1.msra.mxu0 0.0
    %4524 = vmatprep.subr.mxu0 0.0
    %4525 = vmatpush1.msra.mxu0 0.0
    %4526 = vmatprep.subr.mxu0 0.0
    %4527 = vmatpush1.msra.mxu0 0.0
    %4528 = vmatprep.subr.mxu0 0.0
    %4529 = vmatpush1.msra.mxu0 0.0
    %4530 = vmatprep.subr.mxu0 0.0
    %4531 = vmatpush1.msra.mxu0 0.0
    %4532 = vmatprep.subr.mxu0 0.0
    %4533 = vmatpush1.msra.mxu0 0.0
    %4534 = vmatprep.subr.mxu0 0.0
    %4535 = vmatpush1.msra.mxu0 0.0
    %4536 = vmatprep.subr.mxu0 0.0
    %4537 = vmatpush1.msra.mxu0 0.0
    %4538 = vmatprep.subr.mxu0 0.0
    %4539 = vmatpush1.msra.mxu0 0.0
    %4540 = vmatprep.subr.mxu0 0.0
    %4541 = vmatpush1.msra.mxu0 0.0
    %4542 = vmatprep.subr.mxu0 0.0
    %4543 = vmatpush1.msra.mxu0 0.0
    %4544 = vmatprep.subr.mxu0 0.0
    %4545 = vmatpush1.msra.mxu0 0.0
    %4546 = vmatprep.subr.mxu0 0.0
    %4547 = vmatpush1.msra.mxu0 0.0
    %4548 = vmatprep.subr.mxu0 0.0
    %4549 = vmatpush1.msra.mxu0 0.0
    %4550 = vmatprep.subr.mxu0 0.0
    %4551 = vmatpush1.msra.mxu0 0.0
    %4552 = vmatprep.subr.mxu0 0.0
    %4553 = vmatpush1.msra.mxu0 0.0
    %4554 = vmatprep.subr.mxu0 0.0
    %4555 = vmatpush1.msra.mxu0 0.0
    %4556 = vmatprep.mubr.f32.mxu0 0.0
    %4557 = vmatmul.mubr.f32.gmra.mrb[0].mxu0 %v4490
    %v4558 = vpop.f32.mrb[0].mxu0
    %v4559 = vadd.f32 %v4483, %v4558
    %v4560 = vpop.f32.mrb[0].mxu0
    %v4561 = vadd.f32 %v4485, %v4560
    %4562 = vdwg.mxu0
    %v4563 = vadd.f32 %v4559, %v557
    %v4564 = vadd.f32 %v4561, %v561
    %v4565 = vtanh.pop %v4563
    %v4566 = vtanh.pop %v4564
    %v4567 = vmul.f32 %v4565, 0.5
    %v4568 = vadd.f32 %v4567, 0.5
    %v4569 = vmul.f32 %v4566, 0.5
    %v4570 = vadd.f32 %v4569, 0.5
    %v4571 = vmul.f32 %v4568, %v3876
    %v4572 = vmul.f32 %v4568, %v4566
    %4574 = vrot.lane.b32.xlu0 %v4572, 64
    %v4575 = vpop.permute.xlu0 %4574
    %v4577 = vadd.f32 %v4571, %v4575
    %v4578 = vtanh.pop %v4577
    %v4579 = vmul.f32 %v4570, %v4578
    %v4580 = vld [vmem:[#allocation17] sm:$0xff]
    %v4581 = vld [vmem:[#allocation17 + $0x8] sm:$0xff]
    %v4582 = vld [vmem:[#allocation17 + $0x10] sm:$0xff]
    %v4583 = vld [vmem:[#allocation17 + $0x18] sm:$0xff]
    %v4584 = vld [vmem:[#allocation17 + $0x20] sm:$0xff]
    %v4585 = vld [vmem:[#allocation17 + $0x28] sm:$0xff]
    %v4586 = vld [vmem:[#allocation17 + $0x30] sm:$0xff]
    %v4587 = vld [vmem:[#allocation17 + $0x38] sm:$0xff]
    %v4588 = vld [vmem:[#allocation17 + $0x40] sm:$0xff]
    %v4589 = vld [vmem:[#allocation17 + $0x48] sm:$0xff]
    %v4590 = vld [vmem:[#allocation17 + $0x50] sm:$0xff]
    %v4591 = vld [vmem:[#allocation17 + $0x58] sm:$0xff]
    %v4592 = vld [vmem:[#allocation17 + $0x60] sm:$0xff]
    %v4593 = vld [vmem:[#allocation17 + $0x68] sm:$0xff]
    %v4594 = vld [vmem:[#allocation17 + $0x70] sm:$0xff]
    %v4595 = vld [vmem:[#allocation17 + $0x78] sm:$0xff]
    %v4596 = vld [vmem:[#allocation18] sm:$0xff]
    %v4597 = vld [vmem:[#allocation18 + $0x8] sm:$0xff]
    %v4598 = vld [vmem:[#allocation18 + $0x10] sm:$0xff]
    %v4599 = vld [vmem:[#allocation18 + $0x18] sm:$0xff]
    %v4600 = vld [vmem:[#allocation18 + $0x20] sm:$0xff]
    %v4601 = vld [vmem:[#allocation18 + $0x28] sm:$0xff]
    %v4602 = vld [vmem:[#allocation18 + $0x30] sm:$0xff]
    %v4603 = vld [vmem:[#allocation18 + $0x38] sm:$0xff]
    %v4604 = vld [vmem:[#allocation18 + $0x40] sm:$0xff]
    %v4605 = vld [vmem:[#allocation18 + $0x48] sm:$0xff]
    %v4606 = vld [vmem:[#allocation18 + $0x50] sm:$0xff]
    %v4607 = vld [vmem:[#allocation18 + $0x58] sm:$0xff]
    %v4608 = vld [vmem:[#allocation18 + $0x60] sm:$0xff]
    %v4609 = vld [vmem:[#allocation18 + $0x68] sm:$0xff]
    %v4610 = vld [vmem:[#allocation18 + $0x70] sm:$0xff]
    %v4611 = vld [vmem:[#allocation18 + $0x78] sm:$0xff]
    %v4612 = vsel %vm229, %v4079, 0
    %4614 = vmatprep.subr.mxu0 %v4597
    %4615 = vmatpush1.msra.mxu0 %v4596
    %4616 = vmatprep.subr.mxu0 %v4599
    %4617 = vmatpush1.msra.mxu0 %v4598
    %4618 = vmatprep.subr.mxu0 %v4601
    %4619 = vmatpush1.msra.mxu0 %v4600
    %4620 = vmatprep.subr.mxu0 %v4603
    %4621 = vmatpush1.msra.mxu0 %v4602
    %4622 = vmatprep.subr.mxu0 %v4605
    %4623 = vmatpush1.msra.mxu0 %v4604
    %4624 = vmatprep.subr.mxu0 %v4607
    %4625 = vmatpush1.msra.mxu0 %v4606
    %4626 = vmatprep.subr.mxu0 %v4609
    %4627 = vmatpush1.msra.mxu0 %v4608
    %4628 = vmatprep.subr.mxu0 %v4611
    %4629 = vmatpush1.msra.mxu0 %v4610
    %4630 = vmatprep.subr.mxu0 0.0
    %4631 = vmatpush1.msra.mxu0 0.0
    %4632 = vmatprep.subr.mxu0 0.0
    %4633 = vmatpush1.msra.mxu0 0.0
    %4634 = vmatprep.subr.mxu0 0.0
    %4635 = vmatpush1.msra.mxu0 0.0
    %4636 = vmatprep.subr.mxu0 0.0
    %4637 = vmatpush1.msra.mxu0 0.0
    %4638 = vmatprep.subr.mxu0 0.0
    %4639 = vmatpush1.msra.mxu0 0.0
    %4640 = vmatprep.subr.mxu0 0.0
    %4641 = vmatpush1.msra.mxu0 0.0
    %4642 = vmatprep.subr.mxu0 0.0
    %4643 = vmatpush1.msra.mxu0 0.0
    %4644 = vmatprep.subr.mxu0 0.0
    %4645 = vmatpush1.msra.mxu0 0.0
    %4646 = vmatprep.subr.mxu0 0.0
    %4647 = vmatpush1.msra.mxu0 0.0
    %4648 = vmatprep.subr.mxu0 0.0
    %4649 = vmatpush1.msra.mxu0 0.0
    %4650 = vmatprep.subr.mxu0 0.0
    %4651 = vmatpush1.msra.mxu0 0.0
    %4652 = vmatprep.subr.mxu0 0.0
    %4653 = vmatpush1.msra.mxu0 0.0
    %4654 = vmatprep.subr.mxu0 0.0
    %4655 = vmatpush1.msra.mxu0 0.0
    %4656 = vmatprep.subr.mxu0 0.0
    %4657 = vmatpush1.msra.mxu0 0.0
    %4658 = vmatprep.subr.mxu0 0.0
    %4659 = vmatpush1.msra.mxu0 0.0
    %4660 = vmatprep.subr.mxu0 0.0
    %4661 = vmatpush1.msra.mxu0 0.0
    %4662 = vmatprep.subr.mxu0 0.0
    %4663 = vmatpush1.msra.mxu0 0.0
    %4664 = vmatprep.subr.mxu0 0.0
    %4665 = vmatpush1.msra.mxu0 0.0
    %4666 = vmatprep.subr.mxu0 0.0
    %4667 = vmatpush1.msra.mxu0 0.0
    %4668 = vmatprep.subr.mxu0 0.0
    %4669 = vmatpush1.msra.mxu0 0.0
    %4670 = vmatprep.subr.mxu0 0.0
    %4671 = vmatpush1.msra.mxu0 0.0
    %4672 = vmatprep.subr.mxu0 0.0
    %4673 = vmatpush1.msra.mxu0 0.0
    %4674 = vmatprep.subr.mxu0 0.0
    %4675 = vmatpush1.msra.mxu0 0.0
    %4676 = vmatprep.subr.mxu0 0.0
    %4677 = vmatpush1.msra.mxu0 0.0
    %4678 = vmatprep.mubr.f32.mxu0 0.0
    %4679 = vmatmul.mubr.f32.gmra.mrb[0].mxu0 %v4612
    %v4680 = vpop.f32.mrb[0].mxu0
    %v4681 = vadd.f32 0.0, %v4680
    %v4682 = vpop.f32.mrb[0].mxu0
    %v4683 = vadd.f32 0.0, %v4682
    %4684 = vdwg.mxu0
    %4686 = vrot.lane.b32.xlu0 %v4579, 64
    %v4687 = vpop.permute.xlu0 %4686
    %v4688 = vsel %vm229, %v4687, 0
    %4690 = vmatprep.subr.mxu0 %v4581
    %4691 = vmatpush1.msra.mxu0 %v4580
    %4692 = vmatprep.subr.mxu0 %v4583
    %4693 = vmatpush1.msra.mxu0 %v4582
    %4694 = vmatprep.subr.mxu0 %v4585
    %4695 = vmatpush1.msra.mxu0 %v4584
    %4696 = vmatprep.subr.mxu0 %v4587
    %4697 = vmatpush1.msra.mxu0 %v4586
    %4698 = vmatprep.subr.mxu0 %v4589
    %4699 = vmatpush1.msra.mxu0 %v4588
    %4700 = vmatprep.subr.mxu0 %v4591
    %4701 = vmatpush1.msra.mxu0 %v4590
    %4702 = vmatprep.subr.mxu0 %v4593
    %4703 = vmatpush1.msra.mxu0 %v4592
    %4704 = vmatprep.subr.mxu0 %v4595
    %4705 = vmatpush1.msra.mxu0 %v4594
    %4706 = vmatprep.subr.mxu0 0.0
    %4707 = vmatpush1.msra.mxu0 0.0
    %4708 = vmatprep.subr.mxu0 0.0
    %4709 = vmatpush1.msra.mxu0 0.0
    %4710 = vmatprep.subr.mxu0 0.0
    %4711 = vmatpush1.msra.mxu0 0.0
    %4712 = vmatprep.subr.mxu0 0.0
    %4713 = vmatpush1.msra.mxu0 0.0
    %4714 = vmatprep.subr.mxu0 0.0
    %4715 = vmatpush1.msra.mxu0 0.0
    %4716 = vmatprep.subr.mxu0 0.0
    %4717 = vmatpush1.msra.mxu0 0.0
    %4718 = vmatprep.subr.mxu0 0.0
    %4719 = vmatpush1.msra.mxu0 0.0
    %4720 = vmatprep.subr.mxu0 0.0
    %4721 = vmatpush1.msra.mxu0 0.0
    %4722 = vmatprep.subr.mxu0 0.0
    %4723 = vmatpush1.msra.mxu0 0.0
    %4724 = vmatprep.subr.mxu0 0.0
    %4725 = vmatpush1.msra.mxu0 0.0
    %4726 = vmatprep.subr.mxu0 0.0
    %4727 = vmatpush1.msra.mxu0 0.0
    %4728 = vmatprep.subr.mxu0 0.0
    %4729 = vmatpush1.msra.mxu0 0.0
    %4730 = vmatprep.subr.mxu0 0.0
    %4731 = vmatpush1.msra.mxu0 0.0
    %4732 = vmatprep.subr.mxu0 0.0
    %4733 = vmatpush1.msra.mxu0 0.0
    %4734 = vmatprep.subr.mxu0 0.0
    %4735 = vmatpush1.msra.mxu0 0.0
    %4736 = vmatprep.subr.mxu0 0.0
    %4737 = vmatpush1.msra.mxu0 0.0
    %4738 = vmatprep.subr.mxu0 0.0
    %4739 = vmatpush1.msra.mxu0 0.0
    %4740 = vmatprep.subr.mxu0 0.0
    %4741 = vmatpush1.msra.mxu0 0.0
    %4742 = vmatprep.subr.mxu0 0.0
    %4743 = vmatpush1.msra.mxu0 0.0
    %4744 = vmatprep.subr.mxu0 0.0
    %4745 = vmatpush1.msra.mxu0 0.0
    %4746 = vmatprep.subr.mxu0 0.0
    %4747 = vmatpush1.msra.mxu0 0.0
    %4748 = vmatprep.subr.mxu0 0.0
    %4749 = vmatpush1.msra.mxu0 0.0
    %4750 = vmatprep.subr.mxu0 0.0
    %4751 = vmatpush1.msra.mxu0 0.0
    %4752 = vmatprep.subr.mxu0 0.0
    %4753 = vmatpush1.msra.mxu0 0.0
    %4754 = vmatprep.mubr.f32.mxu0 0.0
    %4755 = vmatmul.mubr.f32.gmra.mrb[0].mxu0 %v4688
    %v4756 = vpop.f32.mrb[0].mxu0
    %v4757 = vadd.f32 %v4681, %v4756
    %v4758 = vpop.f32.mrb[0].mxu0
    %v4759 = vadd.f32 %v4683, %v4758
    %4760 = vdwg.mxu0
    %v4761 = vadd.f32 %v4757, %v569
    %v4762 = vadd.f32 %v4759, %v573
    %v4763 = vtanh.pop %v4761
    %v4764 = vtanh.pop %v4762
    %v4765 = vmul.f32 %v4763, 0.5
    %v4766 = vadd.f32 %v4765, 0.5
    %v4767 = vmul.f32 %v4764, 0.5
    %v4768 = vadd.f32 %v4767, 0.5
    %v4769 = vmul.f32 %v4766, %v4074
    %v4770 = vmul.f32 %v4766, %v4764
    %4772 = vrot.lane.b32.xlu0 %v4770, 64
    %v4773 = vpop.permute.xlu0 %4772
    %v4775 = vadd.f32 %v4769, %v4773
    %v4776 = vtanh.pop %v4775
    %v4777 = vmul.f32 %v4768, %v4776
    %4779 = vrot.lane.b32.xlu0 %v4777, 64
    %v4780 = vpop.permute.xlu0 %4779
    %4782 = vst.msk [vmem:[#allocation21 + $0x28] sm:$0xff] %vm229, %v4780
    %v4783 = vld [vmem:[#allocation2 + $0x60] sm:$0xff]
    %v4784 = vld [vmem:[#allocation2 + $0x68] sm:$0xff]
    %v4785 = vld [vmem:[#allocation9] sm:$0xff]
    %v4786 = vld [vmem:[#allocation9 + $0x8] sm:$0xff]
    %v4787 = vld [vmem:[#allocation9 + $0x10] sm:$0xff]
    %v4788 = vld [vmem:[#allocation9 + $0x18] sm:$0xff]
    %v4789 = vld [vmem:[#allocation9 + $0x20] sm:$0xff]
    %v4790 = vld [vmem:[#allocation9 + $0x28] sm:$0xff]
    %v4791 = vld [vmem:[#allocation9 + $0x30] sm:$0xff]
    %v4792 = vld [vmem:[#allocation9 + $0x38] sm:$0xff]
    %v4793 = vld [vmem:[#allocation9 + $0x40] sm:$0xff]
    %v4794 = vld [vmem:[#allocation9 + $0x48] sm:$0xff]
    %v4795 = vld [vmem:[#allocation9 + $0x50] sm:$0xff]
    %v4796 = vld [vmem:[#allocation9 + $0x58] sm:$0xff]
    %v4797 = vld [vmem:[#allocation9 + $0x60] sm:$0xff]
    %v4798 = vld [vmem:[#allocation9 + $0x68] sm:$0xff]
    %v4799 = vld [vmem:[#allocation9 + $0x70] sm:$0xff]
    %v4800 = vld [vmem:[#allocation9 + $0x78] sm:$0xff]
    %4801 = vmatprep.subr.mxu0 %v4786
    %4802 = vmatpush1.msra.mxu0 %v4785
    %4803 = vmatprep.subr.mxu0 %v4788
    %4804 = vmatpush1.msra.mxu0 %v4787
    %4805 = vmatprep.subr.mxu0 %v4790
    %4806 = vmatpush1.msra.mxu0 %v4789
    %4807 = vmatprep.subr.mxu0 %v4792
    %4808 = vmatpush1.msra.mxu0 %v4791
    %4809 = vmatprep.subr.mxu0 %v4794
    %4810 = vmatpush1.msra.mxu0 %v4793
    %4811 = vmatprep.subr.mxu0 %v4796
    %4812 = vmatpush1.msra.mxu0 %v4795
    %4813 = vmatprep.subr.mxu0 %v4798
    %4814 = vmatpush1.msra.mxu0 %v4797
    %4815 = vmatprep.subr.mxu0 %v4800
    %4816 = vmatpush1.msra.mxu0 %v4799
    %4817 = vmatprep.subr.mxu0 0.0
    %4818 = vmatpush1.msra.mxu0 0.0
    %4819 = vmatprep.subr.mxu0 0.0
    %4820 = vmatpush1.msra.mxu0 0.0
    %4821 = vmatprep.subr.mxu0 0.0
    %4822 = vmatpush1.msra.mxu0 0.0
    %4823 = vmatprep.subr.mxu0 0.0
    %4824 = vmatpush1.msra.mxu0 0.0
    %4825 = vmatprep.subr.mxu0 0.0
    %4826 = vmatpush1.msra.mxu0 0.0
    %4827 = vmatprep.subr.mxu0 0.0
    %4828 = vmatpush1.msra.mxu0 0.0
    %4829 = vmatprep.subr.mxu0 0.0
    %4830 = vmatpush1.msra.mxu0 0.0
    %4831 = vmatprep.subr.mxu0 0.0
    %4832 = vmatpush1.msra.mxu0 0.0
    %4833 = vmatprep.subr.mxu0 0.0
    %4834 = vmatpush1.msra.mxu0 0.0
    %4835 = vmatprep.subr.mxu0 0.0
    %4836 = vmatpush1.msra.mxu0 0.0
    %4837 = vmatprep.subr.mxu0 0.0
    %4838 = vmatpush1.msra.mxu0 0.0
    %4839 = vmatprep.subr.mxu0 0.0
    %4840 = vmatpush1.msra.mxu0 0.0
    %4841 = vmatprep.subr.mxu0 0.0
    %4842 = vmatpush1.msra.mxu0 0.0
    %4843 = vmatprep.subr.mxu0 0.0
    %4844 = vmatpush1.msra.mxu0 0.0
    %4845 = vmatprep.subr.mxu0 0.0
    %4846 = vmatpush1.msra.mxu0 0.0
    %4847 = vmatprep.subr.mxu0 0.0
    %4848 = vmatpush1.msra.mxu0 0.0
    %4849 = vmatprep.subr.mxu0 0.0
    %4850 = vmatpush1.msra.mxu0 0.0
    %4851 = vmatprep.subr.mxu0 0.0
    %4852 = vmatpush1.msra.mxu0 0.0
    %4853 = vmatprep.subr.mxu0 0.0
    %4854 = vmatpush1.msra.mxu0 0.0
    %4855 = vmatprep.subr.mxu0 0.0
    %4856 = vmatpush1.msra.mxu0 0.0
    %4857 = vmatprep.subr.mxu0 0.0
    %4858 = vmatpush1.msra.mxu0 0.0
    %4859 = vmatprep.subr.mxu0 0.0
    %4860 = vmatpush1.msra.mxu0 0.0
    %4861 = vmatprep.subr.mxu0 0.0
    %4862 = vmatpush1.msra.mxu0 0.0
    %4863 = vmatprep.subr.mxu0 0.0
    %4864 = vmatpush1.msra.mxu0 0.0
    %4865 = vmatprep.mubr.f32.mxu0 0.0
    %4866 = vmatmul.mubr.f32.gmra.mrb[0].mxu0 %v4294
    %v4867 = vpop.f32.mrb[0].mxu0
    %v4868 = vadd.f32 0.0, %v4867
    %v4869 = vpop.f32.mrb[0].mxu0
    %v4870 = vadd.f32 0.0, %v4869
    %4871 = vdwg.mxu0
    %v4872 = vadd.f32 %v4783, %v4868
    %v4873 = vadd.f32 %v4784, %v4870
    %v4874 = vtanh.pop %v4872
    %v4875 = vtanh.pop %v4873
    %v4876 = vmul.f32 %v4874, 0.5
    %v4877 = vadd.f32 %v4876, 0.5
    %v4878 = vmul.f32 %v4875, 0.5
    %v4879 = vadd.f32 %v4878, 0.5
    %v4880 = vmul.f32 %v4877, %v4185
    %v4881 = vmul.f32 %v4877, %v4875
    %4883 = vrot.lane.b32.xlu0 %v4881, 64
    %v4884 = vpop.permute.xlu0 %4883
    %v4886 = vadd.f32 %v4880, %v4884
    %v4887 = vtanh.pop %v4886
    %v4888 = vmul.f32 %v4879, %v4887
    %v4889 = vld [vmem:[#allocation11] sm:$0xff]
    %v4890 = vld [vmem:[#allocation11 + $0x8] sm:$0xff]
    %v4891 = vld [vmem:[#allocation11 + $0x10] sm:$0xff]
    %v4892 = vld [vmem:[#allocation11 + $0x18] sm:$0xff]
    %v4893 = vld [vmem:[#allocation11 + $0x20] sm:$0xff]
    %v4894 = vld [vmem:[#allocation11 + $0x28] sm:$0xff]
    %v4895 = vld [vmem:[#allocation11 + $0x30] sm:$0xff]
    %v4896 = vld [vmem:[#allocation11 + $0x38] sm:$0xff]
    %v4897 = vld [vmem:[#allocation11 + $0x40] sm:$0xff]
    %v4898 = vld [vmem:[#allocation11 + $0x48] sm:$0xff]
    %v4899 = vld [vmem:[#allocation11 + $0x50] sm:$0xff]
    %v4900 = vld [vmem:[#allocation11 + $0x58] sm:$0xff]
    %v4901 = vld [vmem:[#allocation11 + $0x60] sm:$0xff]
    %v4902 = vld [vmem:[#allocation11 + $0x68] sm:$0xff]
    %v4903 = vld [vmem:[#allocation11 + $0x70] sm:$0xff]
    %v4904 = vld [vmem:[#allocation11 + $0x78] sm:$0xff]
    %v4905 = vld [vmem:[#allocation12] sm:$0xff]
    %v4906 = vld [vmem:[#allocation12 + $0x8] sm:$0xff]
    %v4907 = vld [vmem:[#allocation12 + $0x10] sm:$0xff]
    %v4908 = vld [vmem:[#allocation12 + $0x18] sm:$0xff]
    %v4909 = vld [vmem:[#allocation12 + $0x20] sm:$0xff]
    %v4910 = vld [vmem:[#allocation12 + $0x28] sm:$0xff]
    %v4911 = vld [vmem:[#allocation12 + $0x30] sm:$0xff]
    %v4912 = vld [vmem:[#allocation12 + $0x38] sm:$0xff]
    %v4913 = vld [vmem:[#allocation12 + $0x40] sm:$0xff]
    %v4914 = vld [vmem:[#allocation12 + $0x48] sm:$0xff]
    %v4915 = vld [vmem:[#allocation12 + $0x50] sm:$0xff]
    %v4916 = vld [vmem:[#allocation12 + $0x58] sm:$0xff]
    %v4917 = vld [vmem:[#allocation12 + $0x60] sm:$0xff]
    %v4918 = vld [vmem:[#allocation12 + $0x68] sm:$0xff]
    %v4919 = vld [vmem:[#allocation12 + $0x70] sm:$0xff]
    %v4920 = vld [vmem:[#allocation12 + $0x78] sm:$0xff]
    %4921 = vmatprep.subr.mxu0 %v4906
    %4922 = vmatpush1.msra.mxu0 %v4905
    %4923 = vmatprep.subr.mxu0 %v4908
    %4924 = vmatpush1.msra.mxu0 %v4907
    %4925 = vmatprep.subr.mxu0 %v4910
    %4926 = vmatpush1.msra.mxu0 %v4909
    %4927 = vmatprep.subr.mxu0 %v4912
    %4928 = vmatpush1.msra.mxu0 %v4911
    %4929 = vmatprep.subr.mxu0 %v4914
    %4930 = vmatpush1.msra.mxu0 %v4913
    %4931 = vmatprep.subr.mxu0 %v4916
    %4932 = vmatpush1.msra.mxu0 %v4915
    %4933 = vmatprep.subr.mxu0 %v4918
    %4934 = vmatpush1.msra.mxu0 %v4917
    %4935 = vmatprep.subr.mxu0 %v4920
    %4936 = vmatpush1.msra.mxu0 %v4919
    %4937 = vmatprep.subr.mxu0 0.0
    %4938 = vmatpush1.msra.mxu0 0.0
    %4939 = vmatprep.subr.mxu0 0.0
    %4940 = vmatpush1.msra.mxu0 0.0
    %4941 = vmatprep.subr.mxu0 0.0
    %4942 = vmatpush1.msra.mxu0 0.0
    %4943 = vmatprep.subr.mxu0 0.0
    %4944 = vmatpush1.msra.mxu0 0.0
    %4945 = vmatprep.subr.mxu0 0.0
    %4946 = vmatpush1.msra.mxu0 0.0
    %4947 = vmatprep.subr.mxu0 0.0
    %4948 = vmatpush1.msra.mxu0 0.0
    %4949 = vmatprep.subr.mxu0 0.0
    %4950 = vmatpush1.msra.mxu0 0.0
    %4951 = vmatprep.subr.mxu0 0.0
    %4952 = vmatpush1.msra.mxu0 0.0
    %4953 = vmatprep.subr.mxu0 0.0
    %4954 = vmatpush1.msra.mxu0 0.0
    %4955 = vmatprep.subr.mxu0 0.0
    %4956 = vmatpush1.msra.mxu0 0.0
    %4957 = vmatprep.subr.mxu0 0.0
    %4958 = vmatpush1.msra.mxu0 0.0
    %4959 = vmatprep.subr.mxu0 0.0
    %4960 = vmatpush1.msra.mxu0 0.0
    %4961 = vmatprep.subr.mxu0 0.0
    %4962 = vmatpush1.msra.mxu0 0.0
    %4963 = vmatprep.subr.mxu0 0.0
    %4964 = vmatpush1.msra.mxu0 0.0
    %4965 = vmatprep.subr.mxu0 0.0
    %4966 = vmatpush1.msra.mxu0 0.0
    %4967 = vmatprep.subr.mxu0 0.0
    %4968 = vmatpush1.msra.mxu0 0.0
    %4969 = vmatprep.subr.mxu0 0.0
    %4970 = vmatpush1.msra.mxu0 0.0
    %4971 = vmatprep.subr.mxu0 0.0
    %4972 = vmatpush1.msra.mxu0 0.0
    %4973 = vmatprep.subr.mxu0 0.0
    %4974 = vmatpush1.msra.mxu0 0.0
    %4975 = vmatprep.subr.mxu0 0.0
    %4976 = vmatpush1.msra.mxu0 0.0
    %4977 = vmatprep.subr.mxu0 0.0
    %4978 = vmatpush1.msra.mxu0 0.0
    %4979 = vmatprep.subr.mxu0 0.0
    %4980 = vmatpush1.msra.mxu0 0.0
    %4981 = vmatprep.subr.mxu0 0.0
    %4982 = vmatpush1.msra.mxu0 0.0
    %4983 = vmatprep.subr.mxu0 0.0
    %4984 = vmatpush1.msra.mxu0 0.0
    %4985 = vmatprep.mubr.f32.mxu0 0.0
    %4986 = vmatmul.mubr.f32.gmra.mrb[0].mxu0 %v4490
    %v4987 = vpop.f32.mrb[0].mxu0
    %v4988 = vadd.f32 0.0, %v4987
    %v4989 = vpop.f32.mrb[0].mxu0
    %v4990 = vadd.f32 0.0, %v4989
    %4991 = vdwg.mxu0
    %4993 = vrot.lane.b32.xlu0 %v4888, 64
    %v4994 = vpop.permute.xlu0 %4993
    %v4995 = vsel %vm229, %v4994, 0
    %4997 = vmatprep.subr.mxu0 %v4890
    %4998 = vmatpush1.msra.mxu0 %v4889
    %4999 = vmatprep.subr.mxu0 %v4892
    %5000 = vmatpush1.msra.mxu0 %v4891
    %5001 = vmatprep.subr.mxu0 %v4894
    %5002 = vmatpush1.msra.mxu0 %v4893
    %5003 = vmatprep.subr.mxu0 %v4896
    %5004 = vmatpush1.msra.mxu0 %v4895
    %5005 = vmatprep.subr.mxu0 %v4898
    %5006 = vmatpush1.msra.mxu0 %v4897
    %5007 = vmatprep.subr.mxu0 %v4900
    %5008 = vmatpush1.msra.mxu0 %v4899
    %5009 = vmatprep.subr.mxu0 %v4902
    %5010 = vmatpush1.msra.mxu0 %v4901
    %5011 = vmatprep.subr.mxu0 %v4904
    %5012 = vmatpush1.msra.mxu0 %v4903
    %5013 = vmatprep.subr.mxu0 0.0
    %5014 = vmatpush1.msra.mxu0 0.0
    %5015 = vmatprep.subr.mxu0 0.0
    %5016 = vmatpush1.msra.mxu0 0.0
    %5017 = vmatprep.subr.mxu0 0.0
    %5018 = vmatpush1.msra.mxu0 0.0
    %5019 = vmatprep.subr.mxu0 0.0
    %5020 = vmatpush1.msra.mxu0 0.0
    %5021 = vmatprep.subr.mxu0 0.0
    %5022 = vmatpush1.msra.mxu0 0.0
    %5023 = vmatprep.subr.mxu0 0.0
    %5024 = vmatpush1.msra.mxu0 0.0
    %5025 = vmatprep.subr.mxu0 0.0
    %5026 = vmatpush1.msra.mxu0 0.0
    %5027 = vmatprep.subr.mxu0 0.0
    %5028 = vmatpush1.msra.mxu0 0.0
    %5029 = vmatprep.subr.mxu0 0.0
    %5030 = vmatpush1.msra.mxu0 0.0
    %5031 = vmatprep.subr.mxu0 0.0
    %5032 = vmatpush1.msra.mxu0 0.0
    %5033 = vmatprep.subr.mxu0 0.0
    %5034 = vmatpush1.msra.mxu0 0.0
    %5035 = vmatprep.subr.mxu0 0.0
    %5036 = vmatpush1.msra.mxu0 0.0
    %5037 = vmatprep.subr.mxu0 0.0
    %5038 = vmatpush1.msra.mxu0 0.0
    %5039 = vmatprep.subr.mxu0 0.0
    %5040 = vmatpush1.msra.mxu0 0.0
    %5041 = vmatprep.subr.mxu0 0.0
    %5042 = vmatpush1.msra.mxu0 0.0
    %5043 = vmatprep.subr.mxu0 0.0
    %5044 = vmatpush1.msra.mxu0 0.0
    %5045 = vmatprep.subr.mxu0 0.0
    %5046 = vmatpush1.msra.mxu0 0.0
    %5047 = vmatprep.subr.mxu0 0.0
    %5048 = vmatpush1.msra.mxu0 0.0
    %5049 = vmatprep.subr.mxu0 0.0
    %5050 = vmatpush1.msra.mxu0 0.0
    %5051 = vmatprep.subr.mxu0 0.0
    %5052 = vmatpush1.msra.mxu0 0.0
    %5053 = vmatprep.subr.mxu0 0.0
    %5054 = vmatpush1.msra.mxu0 0.0
    %5055 = vmatprep.subr.mxu0 0.0
    %5056 = vmatpush1.msra.mxu0 0.0
    %5057 = vmatprep.subr.mxu0 0.0
    %5058 = vmatpush1.msra.mxu0 0.0
    %5059 = vmatprep.subr.mxu0 0.0
    %5060 = vmatpush1.msra.mxu0 0.0
    %5061 = vmatprep.mubr.f32.mxu0 0.0
    %5062 = vmatmul.mubr.f32.gmra.mrb[0].mxu0 %v4995
    %v5063 = vpop.f32.mrb[0].mxu0
    %v5064 = vadd.f32 %v4988, %v5063
    %v5065 = vpop.f32.mrb[0].mxu0
    %v5066 = vadd.f32 %v4990, %v5065
    %5067 = vdwg.mxu0
    %v5068 = vadd.f32 %v5064, %v545
    %v5069 = vadd.f32 %v5066, %v549
    %v5070 = vtanh.pop %v5068
    %v5071 = vtanh.pop %v5069
    %v5072 = vmul.f32 %v5070, 0.5
    %v5073 = vadd.f32 %v5072, 0.5
    %v5074 = vmul.f32 %v5071, 0.5
    %v5075 = vadd.f32 %v5074, 0.5
    %v5076 = vmul.f32 %v5073, %v4381
    %v5077 = vmul.f32 %v5073, %v5071
    %5079 = vrot.lane.b32.xlu0 %v5077, 64
    %v5080 = vpop.permute.xlu0 %5079
    %v5082 = vadd.f32 %v5076, %v5080
    %v5083 = vtanh.pop %v5082
    %v5084 = vmul.f32 %v5075, %v5083
    %v5085 = vld [vmem:[#allocation14] sm:$0xff]
    %v5086 = vld [vmem:[#allocation14 + $0x8] sm:$0xff]
    %v5087 = vld [vmem:[#allocation14 + $0x10] sm:$0xff]
    %v5088 = vld [vmem:[#allocation14 + $0x18] sm:$0xff]
    %v5089 = vld [vmem:[#allocation14 + $0x20] sm:$0xff]
    %v5090 = vld [vmem:[#allocation14 + $0x28] sm:$0xff]
    %v5091 = vld [vmem:[#allocation14 + $0x30] sm:$0xff]
    %v5092 = vld [vmem:[#allocation14 + $0x38] sm:$0xff]
    %v5093 = vld [vmem:[#allocation14 + $0x40] sm:$0xff]
    %v5094 = vld [vmem:[#allocation14 + $0x48] sm:$0xff]
    %v5095 = vld [vmem:[#allocation14 + $0x50] sm:$0xff]
    %v5096 = vld [vmem:[#allocation14 + $0x58] sm:$0xff]
    %v5097 = vld [vmem:[#allocation14 + $0x60] sm:$0xff]
    %v5098 = vld [vmem:[#allocation14 + $0x68] sm:$0xff]
    %v5099 = vld [vmem:[#allocation14 + $0x70] sm:$0xff]
    %v5100 = vld [vmem:[#allocation14 + $0x78] sm:$0xff]
    %v5101 = vld [vmem:[#allocation15] sm:$0xff]
    %v5102 = vld [vmem:[#allocation15 + $0x8] sm:$0xff]
    %v5103 = vld [vmem:[#allocation15 + $0x10] sm:$0xff]
    %v5104 = vld [vmem:[#allocation15 + $0x18] sm:$0xff]
    %v5105 = vld [vmem:[#allocation15 + $0x20] sm:$0xff]
    %v5106 = vld [vmem:[#allocation15 + $0x28] sm:$0xff]
    %v5107 = vld [vmem:[#allocation15 + $0x30] sm:$0xff]
    %v5108 = vld [vmem:[#allocation15 + $0x38] sm:$0xff]
    %v5109 = vld [vmem:[#allocation15 + $0x40] sm:$0xff]
    %v5110 = vld [vmem:[#allocation15 + $0x48] sm:$0xff]
    %v5111 = vld [vmem:[#allocation15 + $0x50] sm:$0xff]
    %v5112 = vld [vmem:[#allocation15 + $0x58] sm:$0xff]
    %v5113 = vld [vmem:[#allocation15 + $0x60] sm:$0xff]
    %v5114 = vld [vmem:[#allocation15 + $0x68] sm:$0xff]
    %v5115 = vld [vmem:[#allocation15 + $0x70] sm:$0xff]
    %v5116 = vld [vmem:[#allocation15 + $0x78] sm:$0xff]
    %5117 = vmatprep.subr.mxu0 %v5102
    %5118 = vmatpush1.msra.mxu0 %v5101
    %5119 = vmatprep.subr.mxu0 %v5104
    %5120 = vmatpush1.msra.mxu0 %v5103
    %5121 = vmatprep.subr.mxu0 %v5106
    %5122 = vmatpush1.msra.mxu0 %v5105
    %5123 = vmatprep.subr.mxu0 %v5108
    %5124 = vmatpush1.msra.mxu0 %v5107
    %5125 = vmatprep.subr.mxu0 %v5110
    %5126 = vmatpush1.msra.mxu0 %v5109
    %5127 = vmatprep.subr.mxu0 %v5112
    %5128 = vmatpush1.msra.mxu0 %v5111
    %5129 = vmatprep.subr.mxu0 %v5114
    %5130 = vmatpush1.msra.mxu0 %v5113
    %5131 = vmatprep.subr.mxu0 %v5116
    %5132 = vmatpush1.msra.mxu0 %v5115
    %5133 = vmatprep.subr.mxu0 0.0
    %5134 = vmatpush1.msra.mxu0 0.0
    %5135 = vmatprep.subr.mxu0 0.0
    %5136 = vmatpush1.msra.mxu0 0.0
    %5137 = vmatprep.subr.mxu0 0.0
    %5138 = vmatpush1.msra.mxu0 0.0
    %5139 = vmatprep.subr.mxu0 0.0
    %5140 = vmatpush1.msra.mxu0 0.0
    %5141 = vmatprep.subr.mxu0 0.0
    %5142 = vmatpush1.msra.mxu0 0.0
    %5143 = vmatprep.subr.mxu0 0.0
    %5144 = vmatpush1.msra.mxu0 0.0
    %5145 = vmatprep.subr.mxu0 0.0
    %5146 = vmatpush1.msra.mxu0 0.0
    %5147 = vmatprep.subr.mxu0 0.0
    %5148 = vmatpush1.msra.mxu0 0.0
    %5149 = vmatprep.subr.mxu0 0.0
    %5150 = vmatpush1.msra.mxu0 0.0
    %5151 = vmatprep.subr.mxu0 0.0
    %5152 = vmatpush1.msra.mxu0 0.0
    %5153 = vmatprep.subr.mxu0 0.0
    %5154 = vmatpush1.msra.mxu0 0.0
    %5155 = vmatprep.subr.mxu0 0.0
    %5156 = vmatpush1.msra.mxu0 0.0
    %5157 = vmatprep.subr.mxu0 0.0
    %5158 = vmatpush1.msra.mxu0 0.0
    %5159 = vmatprep.subr.mxu0 0.0
    %5160 = vmatpush1.msra.mxu0 0.0
    %5161 = vmatprep.subr.mxu0 0.0
    %5162 = vmatpush1.msra.mxu0 0.0
    %5163 = vmatprep.subr.mxu0 0.0
    %5164 = vmatpush1.msra.mxu0 0.0
    %5165 = vmatprep.subr.mxu0 0.0
    %5166 = vmatpush1.msra.mxu0 0.0
    %5167 = vmatprep.subr.mxu0 0.0
    %5168 = vmatpush1.msra.mxu0 0.0
    %5169 = vmatprep.subr.mxu0 0.0
    %5170 = vmatpush1.msra.mxu0 0.0
    %5171 = vmatprep.subr.mxu0 0.0
    %5172 = vmatpush1.msra.mxu0 0.0
    %5173 = vmatprep.subr.mxu0 0.0
    %5174 = vmatpush1.msra.mxu0 0.0
    %5175 = vmatprep.subr.mxu0 0.0
    %5176 = vmatpush1.msra.mxu0 0.0
    %5177 = vmatprep.subr.mxu0 0.0
    %5178 = vmatpush1.msra.mxu0 0.0
    %5179 = vmatprep.subr.mxu0 0.0
    %5180 = vmatpush1.msra.mxu0 0.0
    %5181 = vmatprep.mubr.f32.mxu0 0.0
    %5182 = vmatmul.mubr.f32.gmra.mrb[0].mxu0 %v4688
    %v5183 = vpop.f32.mrb[0].mxu0
    %v5184 = vadd.f32 0.0, %v5183
    %v5185 = vpop.f32.mrb[0].mxu0
    %v5186 = vadd.f32 0.0, %v5185
    %5187 = vdwg.mxu0
    %5189 = vrot.lane.b32.xlu0 %v5084, 64
    %v5190 = vpop.permute.xlu0 %5189
    %v5191 = vsel %vm229, %v5190, 0
    %5193 = vmatprep.subr.mxu0 %v5086
    %5194 = vmatpush1.msra.mxu0 %v5085
    %5195 = vmatprep.subr.mxu0 %v5088
    %5196 = vmatpush1.msra.mxu0 %v5087
    %5197 = vmatprep.subr.mxu0 %v5090
    %5198 = vmatpush1.msra.mxu0 %v5089
    %5199 = vmatprep.subr.mxu0 %v5092
    %5200 = vmatpush1.msra.mxu0 %v5091
    %5201 = vmatprep.subr.mxu0 %v5094
    %5202 = vmatpush1.msra.mxu0 %v5093
    %5203 = vmatprep.subr.mxu0 %v5096
    %5204 = vmatpush1.msra.mxu0 %v5095
    %5205 = vmatprep.subr.mxu0 %v5098
    %5206 = vmatpush1.msra.mxu0 %v5097
    %5207 = vmatprep.subr.mxu0 %v5100
    %5208 = vmatpush1.msra.mxu0 %v5099
    %5209 = vmatprep.subr.mxu0 0.0
    %5210 = vmatpush1.msra.mxu0 0.0
    %5211 = vmatprep.subr.mxu0 0.0
    %5212 = vmatpush1.msra.mxu0 0.0
    %5213 = vmatprep.subr.mxu0 0.0
    %5214 = vmatpush1.msra.mxu0 0.0
    %5215 = vmatprep.subr.mxu0 0.0
    %5216 = vmatpush1.msra.mxu0 0.0
    %5217 = vmatprep.subr.mxu0 0.0
    %5218 = vmatpush1.msra.mxu0 0.0
    %5219 = vmatprep.subr.mxu0 0.0
    %5220 = vmatpush1.msra.mxu0 0.0
    %5221 = vmatprep.subr.mxu0 0.0
    %5222 = vmatpush1.msra.mxu0 0.0
    %5223 = vmatprep.subr.mxu0 0.0
    %5224 = vmatpush1.msra.mxu0 0.0
    %5225 = vmatprep.subr.mxu0 0.0
    %5226 = vmatpush1.msra.mxu0 0.0
    %5227 = vmatprep.subr.mxu0 0.0
    %5228 = vmatpush1.msra.mxu0 0.0
    %5229 = vmatprep.subr.mxu0 0.0
    %5230 = vmatpush1.msra.mxu0 0.0
    %5231 = vmatprep.subr.mxu0 0.0
    %5232 = vmatpush1.msra.mxu0 0.0
    %5233 = vmatprep.subr.mxu0 0.0
    %5234 = vmatpush1.msra.mxu0 0.0
    %5235 = vmatprep.subr.mxu0 0.0
    %5236 = vmatpush1.msra.mxu0 0.0
    %5237 = vmatprep.subr.mxu0 0.0
    %5238 = vmatpush1.msra.mxu0 0.0
    %5239 = vmatprep.subr.mxu0 0.0
    %5240 = vmatpush1.msra.mxu0 0.0
    %5241 = vmatprep.subr.mxu0 0.0
    %5242 = vmatpush1.msra.mxu0 0.0
    %5243 = vmatprep.subr.mxu0 0.0
    %5244 = vmatpush1.msra.mxu0 0.0
    %5245 = vmatprep.subr.mxu0 0.0
    %5246 = vmatpush1.msra.mxu0 0.0
    %5247 = vmatprep.subr.mxu0 0.0
    %5248 = vmatpush1.msra.mxu0 0.0
    %5249 = vmatprep.subr.mxu0 0.0
    %5250 = vmatpush1.msra.mxu0 0.0
    %5251 = vmatprep.subr.mxu0 0.0
    %5252 = vmatpush1.msra.mxu0 0.0
    %5253 = vmatprep.subr.mxu0 0.0
    %5254 = vmatpush1.msra.mxu0 0.0
    %5255 = vmatprep.subr.mxu0 0.0
    %5256 = vmatpush1.msra.mxu0 0.0
    %5257 = vmatprep.mubr.f32.mxu0 0.0
    %5258 = vmatmul.mubr.f32.gmra.mrb[0].mxu0 %v5191
    %v5259 = vpop.f32.mrb[0].mxu0
    %v5260 = vadd.f32 %v5184, %v5259
    %v5261 = vpop.f32.mrb[0].mxu0
    %v5262 = vadd.f32 %v5186, %v5261
    %5263 = vdwg.mxu0
    %v5264 = vadd.f32 %v5260, %v557
    %v5265 = vadd.f32 %v5262, %v561
    %v5266 = vtanh.pop %v5264
    %v5267 = vtanh.pop %v5265
    %v5268 = vmul.f32 %v5266, 0.5
    %v5269 = vadd.f32 %v5268, 0.5
    %v5270 = vmul.f32 %v5267, 0.5
    %v5271 = vadd.f32 %v5270, 0.5
    %v5272 = vmul.f32 %v5269, %v4577
    %v5273 = vmul.f32 %v5269, %v5267
    %5275 = vrot.lane.b32.xlu0 %v5273, 64
    %v5276 = vpop.permute.xlu0 %5275
    %v5278 = vadd.f32 %v5272, %v5276
    %v5279 = vtanh.pop %v5278
    %v5280 = vmul.f32 %v5271, %v5279
    %v5281 = vld [vmem:[#allocation17] sm:$0xff]
    %v5282 = vld [vmem:[#allocation17 + $0x8] sm:$0xff]
    %v5283 = vld [vmem:[#allocation17 + $0x10] sm:$0xff]
    %v5284 = vld [vmem:[#allocation17 + $0x18] sm:$0xff]
    %v5285 = vld [vmem:[#allocation17 + $0x20] sm:$0xff]
    %v5286 = vld [vmem:[#allocation17 + $0x28] sm:$0xff]
    %v5287 = vld [vmem:[#allocation17 + $0x30] sm:$0xff]
    %v5288 = vld [vmem:[#allocation17 + $0x38] sm:$0xff]
    %v5289 = vld [vmem:[#allocation17 + $0x40] sm:$0xff]
    %v5290 = vld [vmem:[#allocation17 + $0x48] sm:$0xff]
    %v5291 = vld [vmem:[#allocation17 + $0x50] sm:$0xff]
    %v5292 = vld [vmem:[#allocation17 + $0x58] sm:$0xff]
    %v5293 = vld [vmem:[#allocation17 + $0x60] sm:$0xff]
    %v5294 = vld [vmem:[#allocation17 + $0x68] sm:$0xff]
    %v5295 = vld [vmem:[#allocation17 + $0x70] sm:$0xff]
    %v5296 = vld [vmem:[#allocation17 + $0x78] sm:$0xff]
    %v5297 = vld [vmem:[#allocation18] sm:$0xff]
    %v5298 = vld [vmem:[#allocation18 + $0x8] sm:$0xff]
    %v5299 = vld [vmem:[#allocation18 + $0x10] sm:$0xff]
    %v5300 = vld [vmem:[#allocation18 + $0x18] sm:$0xff]
    %v5301 = vld [vmem:[#allocation18 + $0x20] sm:$0xff]
    %v5302 = vld [vmem:[#allocation18 + $0x28] sm:$0xff]
    %v5303 = vld [vmem:[#allocation18 + $0x30] sm:$0xff]
    %v5304 = vld [vmem:[#allocation18 + $0x38] sm:$0xff]
    %v5305 = vld [vmem:[#allocation18 + $0x40] sm:$0xff]
    %v5306 = vld [vmem:[#allocation18 + $0x48] sm:$0xff]
    %v5307 = vld [vmem:[#allocation18 + $0x50] sm:$0xff]
    %v5308 = vld [vmem:[#allocation18 + $0x58] sm:$0xff]
    %v5309 = vld [vmem:[#allocation18 + $0x60] sm:$0xff]
    %v5310 = vld [vmem:[#allocation18 + $0x68] sm:$0xff]
    %v5311 = vld [vmem:[#allocation18 + $0x70] sm:$0xff]
    %v5312 = vld [vmem:[#allocation18 + $0x78] sm:$0xff]
    %v5313 = vsel %vm229, %v4780, 0
    %5315 = vmatprep.subr.mxu0 %v5298
    %5316 = vmatpush1.msra.mxu0 %v5297
    %5317 = vmatprep.subr.mxu0 %v5300
    %5318 = vmatpush1.msra.mxu0 %v5299
    %5319 = vmatprep.subr.mxu0 %v5302
    %5320 = vmatpush1.msra.mxu0 %v5301
    %5321 = vmatprep.subr.mxu0 %v5304
    %5322 = vmatpush1.msra.mxu0 %v5303
    %5323 = vmatprep.subr.mxu0 %v5306
    %5324 = vmatpush1.msra.mxu0 %v5305
    %5325 = vmatprep.subr.mxu0 %v5308
    %5326 = vmatpush1.msra.mxu0 %v5307
    %5327 = vmatprep.subr.mxu0 %v5310
    %5328 = vmatpush1.msra.mxu0 %v5309
    %5329 = vmatprep.subr.mxu0 %v5312
    %5330 = vmatpush1.msra.mxu0 %v5311
    %5331 = vmatprep.subr.mxu0 0.0
    %5332 = vmatpush1.msra.mxu0 0.0
    %5333 = vmatprep.subr.mxu0 0.0
    %5334 = vmatpush1.msra.mxu0 0.0
    %5335 = vmatprep.subr.mxu0 0.0
    %5336 = vmatpush1.msra.mxu0 0.0
    %5337 = vmatprep.subr.mxu0 0.0
    %5338 = vmatpush1.msra.mxu0 0.0
    %5339 = vmatprep.subr.mxu0 0.0
    %5340 = vmatpush1.msra.mxu0 0.0
    %5341 = vmatprep.subr.mxu0 0.0
    %5342 = vmatpush1.msra.mxu0 0.0
    %5343 = vmatprep.subr.mxu0 0.0
    %5344 = vmatpush1.msra.mxu0 0.0
    %5345 = vmatprep.subr.mxu0 0.0
    %5346 = vmatpush1.msra.mxu0 0.0
    %5347 = vmatprep.subr.mxu0 0.0
    %5348 = vmatpush1.msra.mxu0 0.0
    %5349 = vmatprep.subr.mxu0 0.0
    %5350 = vmatpush1.msra.mxu0 0.0
    %5351 = vmatprep.subr.mxu0 0.0
    %5352 = vmatpush1.msra.mxu0 0.0
    %5353 = vmatprep.subr.mxu0 0.0
    %5354 = vmatpush1.msra.mxu0 0.0
    %5355 = vmatprep.subr.mxu0 0.0
    %5356 = vmatpush1.msra.mxu0 0.0
    %5357 = vmatprep.subr.mxu0 0.0
    %5358 = vmatpush1.msra.mxu0 0.0
    %5359 = vmatprep.subr.mxu0 0.0
    %5360 = vmatpush1.msra.mxu0 0.0
    %5361 = vmatprep.subr.mxu0 0.0
    %5362 = vmatpush1.msra.mxu0 0.0
    %5363 = vmatprep.subr.mxu0 0.0
    %5364 = vmatpush1.msra.mxu0 0.0
    %5365 = vmatprep.subr.mxu0 0.0
    %5366 = vmatpush1.msra.mxu0 0.0
    %5367 = vmatprep.subr.mxu0 0.0
    %5368 = vmatpush1.msra.mxu0 0.0
    %5369 = vmatprep.subr.mxu0 0.0
    %5370 = vmatpush1.msra.mxu0 0.0
    %5371 = vmatprep.subr.mxu0 0.0
    %5372 = vmatpush1.msra.mxu0 0.0
    %5373 = vmatprep.subr.mxu0 0.0
    %5374 = vmatpush1.msra.mxu0 0.0
    %5375 = vmatprep.subr.mxu0 0.0
    %5376 = vmatpush1.msra.mxu0 0.0
    %5377 = vmatprep.subr.mxu0 0.0
    %5378 = vmatpush1.msra.mxu0 0.0
    %5379 = vmatprep.mubr.f32.mxu0 0.0
    %5380 = vmatmul.mubr.f32.gmra.mrb[0].mxu0 %v5313
    %v5381 = vpop.f32.mrb[0].mxu0
    %v5382 = vadd.f32 0.0, %v5381
    %v5383 = vpop.f32.mrb[0].mxu0
    %v5384 = vadd.f32 0.0, %v5383
    %5385 = vdwg.mxu0
    %5387 = vrot.lane.b32.xlu0 %v5280, 64
    %v5388 = vpop.permute.xlu0 %5387
    %v5389 = vsel %vm229, %v5388, 0
    %5391 = vmatprep.subr.mxu0 %v5282
    %5392 = vmatpush1.msra.mxu0 %v5281
    %5393 = vmatprep.subr.mxu0 %v5284
    %5394 = vmatpush1.msra.mxu0 %v5283
    %5395 = vmatprep.subr.mxu0 %v5286
    %5396 = vmatpush1.msra.mxu0 %v5285
    %5397 = vmatprep.subr.mxu0 %v5288
    %5398 = vmatpush1.msra.mxu0 %v5287
    %5399 = vmatprep.subr.mxu0 %v5290
    %5400 = vmatpush1.msra.mxu0 %v5289
    %5401 = vmatprep.subr.mxu0 %v5292
    %5402 = vmatpush1.msra.mxu0 %v5291
    %5403 = vmatprep.subr.mxu0 %v5294
    %5404 = vmatpush1.msra.mxu0 %v5293
    %5405 = vmatprep.subr.mxu0 %v5296
    %5406 = vmatpush1.msra.mxu0 %v5295
    %5407 = vmatprep.subr.mxu0 0.0
    %5408 = vmatpush1.msra.mxu0 0.0
    %5409 = vmatprep.subr.mxu0 0.0
    %5410 = vmatpush1.msra.mxu0 0.0
    %5411 = vmatprep.subr.mxu0 0.0
    %5412 = vmatpush1.msra.mxu0 0.0
    %5413 = vmatprep.subr.mxu0 0.0
    %5414 = vmatpush1.msra.mxu0 0.0
    %5415 = vmatprep.subr.mxu0 0.0
    %5416 = vmatpush1.msra.mxu0 0.0
    %5417 = vmatprep.subr.mxu0 0.0
    %5418 = vmatpush1.msra.mxu0 0.0
    %5419 = vmatprep.subr.mxu0 0.0
    %5420 = vmatpush1.msra.mxu0 0.0
    %5421 = vmatprep.subr.mxu0 0.0
    %5422 = vmatpush1.msra.mxu0 0.0
    %5423 = vmatprep.subr.mxu0 0.0
    %5424 = vmatpush1.msra.mxu0 0.0
    %5425 = vmatprep.subr.mxu0 0.0
    %5426 = vmatpush1.msra.mxu0 0.0
    %5427 = vmatprep.subr.mxu0 0.0
    %5428 = vmatpush1.msra.mxu0 0.0
    %5429 = vmatprep.subr.mxu0 0.0
    %5430 = vmatpush1.msra.mxu0 0.0
    %5431 = vmatprep.subr.mxu0 0.0
    %5432 = vmatpush1.msra.mxu0 0.0
    %5433 = vmatprep.subr.mxu0 0.0
    %5434 = vmatpush1.msra.mxu0 0.0
    %5435 = vmatprep.subr.mxu0 0.0
    %5436 = vmatpush1.msra.mxu0 0.0
    %5437 = vmatprep.subr.mxu0 0.0
    %5438 = vmatpush1.msra.mxu0 0.0
    %5439 = vmatprep.subr.mxu0 0.0
    %5440 = vmatpush1.msra.mxu0 0.0
    %5441 = vmatprep.subr.mxu0 0.0
    %5442 = vmatpush1.msra.mxu0 0.0
    %5443 = vmatprep.subr.mxu0 0.0
    %5444 = vmatpush1.msra.mxu0 0.0
    %5445 = vmatprep.subr.mxu0 0.0
    %5446 = vmatpush1.msra.mxu0 0.0
    %5447 = vmatprep.subr.mxu0 0.0
    %5448 = vmatpush1.msra.mxu0 0.0
    %5449 = vmatprep.subr.mxu0 0.0
    %5450 = vmatpush1.msra.mxu0 0.0
    %5451 = vmatprep.subr.mxu0 0.0
    %5452 = vmatpush1.msra.mxu0 0.0
    %5453 = vmatprep.subr.mxu0 0.0
    %5454 = vmatpush1.msra.mxu0 0.0
    %5455 = vmatprep.mubr.f32.mxu0 0.0
    %5456 = vmatmul.mubr.f32.gmra.mrb[0].mxu0 %v5389
    %v5457 = vpop.f32.mrb[0].mxu0
    %v5458 = vadd.f32 %v5382, %v5457
    %v5459 = vpop.f32.mrb[0].mxu0
    %v5460 = vadd.f32 %v5384, %v5459
    %5461 = vdwg.mxu0
    %v5462 = vadd.f32 %v5458, %v569
    %v5463 = vadd.f32 %v5460, %v573
    %v5464 = vtanh.pop %v5462
    %v5465 = vtanh.pop %v5463
    %v5466 = vmul.f32 %v5464, 0.5
    %v5467 = vadd.f32 %v5466, 0.5
    %v5468 = vmul.f32 %v5465, 0.5
    %v5469 = vadd.f32 %v5468, 0.5
    %v5470 = vmul.f32 %v5467, %v4775
    %v5471 = vmul.f32 %v5467, %v5465
    %5473 = vrot.lane.b32.xlu0 %v5471, 64
    %v5474 = vpop.permute.xlu0 %5473
    %v5476 = vadd.f32 %v5470, %v5474
    %v5477 = vtanh.pop %v5476
    %v5478 = vmul.f32 %v5469, %v5477
    %5480 = vrot.lane.b32.xlu0 %v5478, 64
    %v5481 = vpop.permute.xlu0 %5480
    %5483 = vst.msk [vmem:[#allocation21 + $0x30] sm:$0xff] %vm229, %v5481
    %v5484 = vld [vmem:[#allocation2 + $0x70] sm:$0xff]
    %v5485 = vld [vmem:[#allocation2 + $0x78] sm:$0xff]
    %v5486 = vld [vmem:[#allocation9] sm:$0xff]
    %v5487 = vld [vmem:[#allocation9 + $0x8] sm:$0xff]
    %v5488 = vld [vmem:[#allocation9 + $0x10] sm:$0xff]
    %v5489 = vld [vmem:[#allocation9 + $0x18] sm:$0xff]
    %v5490 = vld [vmem:[#allocation9 + $0x20] sm:$0xff]
    %v5491 = vld [vmem:[#allocation9 + $0x28] sm:$0xff]
    %v5492 = vld [vmem:[#allocation9 + $0x30] sm:$0xff]
    %v5493 = vld [vmem:[#allocation9 + $0x38] sm:$0xff]
    %v5494 = vld [vmem:[#allocation9 + $0x40] sm:$0xff]
    %v5495 = vld [vmem:[#allocation9 + $0x48] sm:$0xff]
    %v5496 = vld [vmem:[#allocation9 + $0x50] sm:$0xff]
    %v5497 = vld [vmem:[#allocation9 + $0x58] sm:$0xff]
    %v5498 = vld [vmem:[#allocation9 + $0x60] sm:$0xff]
    %v5499 = vld [vmem:[#allocation9 + $0x68] sm:$0xff]
    %v5500 = vld [vmem:[#allocation9 + $0x70] sm:$0xff]
    %v5501 = vld [vmem:[#allocation9 + $0x78] sm:$0xff]
    %5502 = vmatprep.subr.mxu0 %v5487
    %5503 = vmatpush1.msra.mxu0 %v5486
    %5504 = vmatprep.subr.mxu0 %v5489
    %5505 = vmatpush1.msra.mxu0 %v5488
    %5506 = vmatprep.subr.mxu0 %v5491
    %5507 = vmatpush1.msra.mxu0 %v5490
    %5508 = vmatprep.subr.mxu0 %v5493
    %5509 = vmatpush1.msra.mxu0 %v5492
    %5510 = vmatprep.subr.mxu0 %v5495
    %5511 = vmatpush1.msra.mxu0 %v5494
    %5512 = vmatprep.subr.mxu0 %v5497
    %5513 = vmatpush1.msra.mxu0 %v5496
    %5514 = vmatprep.subr.mxu0 %v5499
    %5515 = vmatpush1.msra.mxu0 %v5498
    %5516 = vmatprep.subr.mxu0 %v5501
    %5517 = vmatpush1.msra.mxu0 %v5500
    %5518 = vmatprep.subr.mxu0 0.0
    %5519 = vmatpush1.msra.mxu0 0.0
    %5520 = vmatprep.subr.mxu0 0.0
    %5521 = vmatpush1.msra.mxu0 0.0
    %5522 = vmatprep.subr.mxu0 0.0
    %5523 = vmatpush1.msra.mxu0 0.0
    %5524 = vmatprep.subr.mxu0 0.0
    %5525 = vmatpush1.msra.mxu0 0.0
    %5526 = vmatprep.subr.mxu0 0.0
    %5527 = vmatpush1.msra.mxu0 0.0
    %5528 = vmatprep.subr.mxu0 0.0
    %5529 = vmatpush1.msra.mxu0 0.0
    %5530 = vmatprep.subr.mxu0 0.0
    %5531 = vmatpush1.msra.mxu0 0.0
    %5532 = vmatprep.subr.mxu0 0.0
    %5533 = vmatpush1.msra.mxu0 0.0
    %5534 = vmatprep.subr.mxu0 0.0
    %5535 = vmatpush1.msra.mxu0 0.0
    %5536 = vmatprep.subr.mxu0 0.0
    %5537 = vmatpush1.msra.mxu0 0.0
    %5538 = vmatprep.subr.mxu0 0.0
    %5539 = vmatpush1.msra.mxu0 0.0
    %5540 = vmatprep.subr.mxu0 0.0
    %5541 = vmatpush1.msra.mxu0 0.0
    %5542 = vmatprep.subr.mxu0 0.0
    %5543 = vmatpush1.msra.mxu0 0.0
    %5544 = vmatprep.subr.mxu0 0.0
    %5545 = vmatpush1.msra.mxu0 0.0
    %5546 = vmatprep.subr.mxu0 0.0
    %5547 = vmatpush1.msra.mxu0 0.0
    %5548 = vmatprep.subr.mxu0 0.0
    %5549 = vmatpush1.msra.mxu0 0.0
    %5550 = vmatprep.subr.mxu0 0.0
    %5551 = vmatpush1.msra.mxu0 0.0
    %5552 = vmatprep.subr.mxu0 0.0
    %5553 = vmatpush1.msra.mxu0 0.0
    %5554 = vmatprep.subr.mxu0 0.0
    %5555 = vmatpush1.msra.mxu0 0.0
    %5556 = vmatprep.subr.mxu0 0.0
    %5557 = vmatpush1.msra.mxu0 0.0
    %5558 = vmatprep.subr.mxu0 0.0
    %5559 = vmatpush1.msra.mxu0 0.0
    %5560 = vmatprep.subr.mxu0 0.0
    %5561 = vmatpush1.msra.mxu0 0.0
    %5562 = vmatprep.subr.mxu0 0.0
    %5563 = vmatpush1.msra.mxu0 0.0
    %5564 = vmatprep.subr.mxu0 0.0
    %5565 = vmatpush1.msra.mxu0 0.0
    %5566 = vmatprep.mubr.f32.mxu0 0.0
    %5567 = vmatmul.mubr.f32.gmra.mrb[0].mxu0 %v4995
    %v5568 = vpop.f32.mrb[0].mxu0
    %v5569 = vadd.f32 0.0, %v5568
    %v5570 = vpop.f32.mrb[0].mxu0
    %v5571 = vadd.f32 0.0, %v5570
    %5572 = vdwg.mxu0
    %v5573 = vadd.f32 %v5484, %v5569
    %v5574 = vadd.f32 %v5485, %v5571
    %v5575 = vtanh.pop %v5573
    %v5576 = vtanh.pop %v5574
    %v5577 = vmul.f32 %v5575, 0.5
    %v5578 = vadd.f32 %v5577, 0.5
    %v5579 = vmul.f32 %v5576, 0.5
    %v5580 = vadd.f32 %v5579, 0.5
    %v5581 = vmul.f32 %v5578, %v4886
    %v5582 = vmul.f32 %v5578, %v5576
    %5584 = vrot.lane.b32.xlu0 %v5582, 64
    %v5585 = vpop.permute.xlu0 %5584
    %v5587 = vadd.f32 %v5581, %v5585
    %v5588 = vtanh.pop %v5587
    %v5589 = vmul.f32 %v5580, %v5588
    %v5590 = vld [vmem:[#allocation11] sm:$0xff]
    %v5591 = vld [vmem:[#allocation11 + $0x8] sm:$0xff]
    %v5592 = vld [vmem:[#allocation11 + $0x10] sm:$0xff]
    %v5593 = vld [vmem:[#allocation11 + $0x18] sm:$0xff]
    %v5594 = vld [vmem:[#allocation11 + $0x20] sm:$0xff]
    %v5595 = vld [vmem:[#allocation11 + $0x28] sm:$0xff]
    %v5596 = vld [vmem:[#allocation11 + $0x30] sm:$0xff]
    %v5597 = vld [vmem:[#allocation11 + $0x38] sm:$0xff]
    %v5598 = vld [vmem:[#allocation11 + $0x40] sm:$0xff]
    %v5599 = vld [vmem:[#allocation11 + $0x48] sm:$0xff]
    %v5600 = vld [vmem:[#allocation11 + $0x50] sm:$0xff]
    %v5601 = vld [vmem:[#allocation11 + $0x58] sm:$0xff]
    %v5602 = vld [vmem:[#allocation11 + $0x60] sm:$0xff]
    %v5603 = vld [vmem:[#allocation11 + $0x68] sm:$0xff]
    %v5604 = vld [vmem:[#allocation11 + $0x70] sm:$0xff]
    %v5605 = vld [vmem:[#allocation11 + $0x78] sm:$0xff]
    %v5606 = vld [vmem:[#allocation12] sm:$0xff]
    %v5607 = vld [vmem:[#allocation12 + $0x8] sm:$0xff]
    %v5608 = vld [vmem:[#allocation12 + $0x10] sm:$0xff]
    %v5609 = vld [vmem:[#allocation12 + $0x18] sm:$0xff]
    %v5610 = vld [vmem:[#allocation12 + $0x20] sm:$0xff]
    %v5611 = vld [vmem:[#allocation12 + $0x28] sm:$0xff]
    %v5612 = vld [vmem:[#allocation12 + $0x30] sm:$0xff]
    %v5613 = vld [vmem:[#allocation12 + $0x38] sm:$0xff]
    %v5614 = vld [vmem:[#allocation12 + $0x40] sm:$0xff]
    %v5615 = vld [vmem:[#allocation12 + $0x48] sm:$0xff]
    %v5616 = vld [vmem:[#allocation12 + $0x50] sm:$0xff]
    %v5617 = vld [vmem:[#allocation12 + $0x58] sm:$0xff]
    %v5618 = vld [vmem:[#allocation12 + $0x60] sm:$0xff]
    %v5619 = vld [vmem:[#allocation12 + $0x68] sm:$0xff]
    %v5620 = vld [vmem:[#allocation12 + $0x70] sm:$0xff]
    %v5621 = vld [vmem:[#allocation12 + $0x78] sm:$0xff]
    %5622 = vmatprep.subr.mxu0 %v5607
    %5623 = vmatpush1.msra.mxu0 %v5606
    %5624 = vmatprep.subr.mxu0 %v5609
    %5625 = vmatpush1.msra.mxu0 %v5608
    %5626 = vmatprep.subr.mxu0 %v5611
    %5627 = vmatpush1.msra.mxu0 %v5610
    %5628 = vmatprep.subr.mxu0 %v5613
    %5629 = vmatpush1.msra.mxu0 %v5612
    %5630 = vmatprep.subr.mxu0 %v5615
    %5631 = vmatpush1.msra.mxu0 %v5614
    %5632 = vmatprep.subr.mxu0 %v5617
    %5633 = vmatpush1.msra.mxu0 %v5616
    %5634 = vmatprep.subr.mxu0 %v5619
    %5635 = vmatpush1.msra.mxu0 %v5618
    %5636 = vmatprep.subr.mxu0 %v5621
    %5637 = vmatpush1.msra.mxu0 %v5620
    %5638 = vmatprep.subr.mxu0 0.0
    %5639 = vmatpush1.msra.mxu0 0.0
    %5640 = vmatprep.subr.mxu0 0.0
    %5641 = vmatpush1.msra.mxu0 0.0
    %5642 = vmatprep.subr.mxu0 0.0
    %5643 = vmatpush1.msra.mxu0 0.0
    %5644 = vmatprep.subr.mxu0 0.0
    %5645 = vmatpush1.msra.mxu0 0.0
    %5646 = vmatprep.subr.mxu0 0.0
    %5647 = vmatpush1.msra.mxu0 0.0
    %5648 = vmatprep.subr.mxu0 0.0
    %5649 = vmatpush1.msra.mxu0 0.0
    %5650 = vmatprep.subr.mxu0 0.0
    %5651 = vmatpush1.msra.mxu0 0.0
    %5652 = vmatprep.subr.mxu0 0.0
    %5653 = vmatpush1.msra.mxu0 0.0
    %5654 = vmatprep.subr.mxu0 0.0
    %5655 = vmatpush1.msra.mxu0 0.0
    %5656 = vmatprep.subr.mxu0 0.0
    %5657 = vmatpush1.msra.mxu0 0.0
    %5658 = vmatprep.subr.mxu0 0.0
    %5659 = vmatpush1.msra.mxu0 0.0
    %5660 = vmatprep.subr.mxu0 0.0
    %5661 = vmatpush1.msra.mxu0 0.0
    %5662 = vmatprep.subr.mxu0 0.0
    %5663 = vmatpush1.msra.mxu0 0.0
    %5664 = vmatprep.subr.mxu0 0.0
    %5665 = vmatpush1.msra.mxu0 0.0
    %5666 = vmatprep.subr.mxu0 0.0
    %5667 = vmatpush1.msra.mxu0 0.0
    %5668 = vmatprep.subr.mxu0 0.0
    %5669 = vmatpush1.msra.mxu0 0.0
    %5670 = vmatprep.subr.mxu0 0.0
    %5671 = vmatpush1.msra.mxu0 0.0
    %5672 = vmatprep.subr.mxu0 0.0
    %5673 = vmatpush1.msra.mxu0 0.0
    %5674 = vmatprep.subr.mxu0 0.0
    %5675 = vmatpush1.msra.mxu0 0.0
    %5676 = vmatprep.subr.mxu0 0.0
    %5677 = vmatpush1.msra.mxu0 0.0
    %5678 = vmatprep.subr.mxu0 0.0
    %5679 = vmatpush1.msra.mxu0 0.0
    %5680 = vmatprep.subr.mxu0 0.0
    %5681 = vmatpush1.msra.mxu0 0.0
    %5682 = vmatprep.subr.mxu0 0.0
    %5683 = vmatpush1.msra.mxu0 0.0
    %5684 = vmatprep.subr.mxu0 0.0
    %5685 = vmatpush1.msra.mxu0 0.0
    %5686 = vmatprep.mubr.f32.mxu0 0.0
    %5687 = vmatmul.mubr.f32.gmra.mrb[0].mxu0 %v5191
    %v5688 = vpop.f32.mrb[0].mxu0
    %v5689 = vadd.f32 0.0, %v5688
    %v5690 = vpop.f32.mrb[0].mxu0
    %v5691 = vadd.f32 0.0, %v5690
    %5692 = vdwg.mxu0
    %5694 = vrot.lane.b32.xlu0 %v5589, 64
    %v5695 = vpop.permute.xlu0 %5694
    %v5696 = vsel %vm229, %v5695, 0
    %5698 = vmatprep.subr.mxu0 %v5591
    %5699 = vmatpush1.msra.mxu0 %v5590
    %5700 = vmatprep.subr.mxu0 %v5593
    %5701 = vmatpush1.msra.mxu0 %v5592
    %5702 = vmatprep.subr.mxu0 %v5595
    %5703 = vmatpush1.msra.mxu0 %v5594
    %5704 = vmatprep.subr.mxu0 %v5597
    %5705 = vmatpush1.msra.mxu0 %v5596
    %5706 = vmatprep.subr.mxu0 %v5599
    %5707 = vmatpush1.msra.mxu0 %v5598
    %5708 = vmatprep.subr.mxu0 %v5601
    %5709 = vmatpush1.msra.mxu0 %v5600
    %5710 = vmatprep.subr.mxu0 %v5603
    %5711 = vmatpush1.msra.mxu0 %v5602
    %5712 = vmatprep.subr.mxu0 %v5605
    %5713 = vmatpush1.msra.mxu0 %v5604
    %5714 = vmatprep.subr.mxu0 0.0
    %5715 = vmatpush1.msra.mxu0 0.0
    %5716 = vmatprep.subr.mxu0 0.0
    %5717 = vmatpush1.msra.mxu0 0.0
    %5718 = vmatprep.subr.mxu0 0.0
    %5719 = vmatpush1.msra.mxu0 0.0
    %5720 = vmatprep.subr.mxu0 0.0
    %5721 = vmatpush1.msra.mxu0 0.0
    %5722 = vmatprep.subr.mxu0 0.0
    %5723 = vmatpush1.msra.mxu0 0.0
    %5724 = vmatprep.subr.mxu0 0.0
    %5725 = vmatpush1.msra.mxu0 0.0
    %5726 = vmatprep.subr.mxu0 0.0
    %5727 = vmatpush1.msra.mxu0 0.0
    %5728 = vmatprep.subr.mxu0 0.0
    %5729 = vmatpush1.msra.mxu0 0.0
    %5730 = vmatprep.subr.mxu0 0.0
    %5731 = vmatpush1.msra.mxu0 0.0
    %5732 = vmatprep.subr.mxu0 0.0
    %5733 = vmatpush1.msra.mxu0 0.0
    %5734 = vmatprep.subr.mxu0 0.0
    %5735 = vmatpush1.msra.mxu0 0.0
    %5736 = vmatprep.subr.mxu0 0.0
    %5737 = vmatpush1.msra.mxu0 0.0
    %5738 = vmatprep.subr.mxu0 0.0
    %5739 = vmatpush1.msra.mxu0 0.0
    %5740 = vmatprep.subr.mxu0 0.0
    %5741 = vmatpush1.msra.mxu0 0.0
    %5742 = vmatprep.subr.mxu0 0.0
    %5743 = vmatpush1.msra.mxu0 0.0
    %5744 = vmatprep.subr.mxu0 0.0
    %5745 = vmatpush1.msra.mxu0 0.0
    %5746 = vmatprep.subr.mxu0 0.0
    %5747 = vmatpush1.msra.mxu0 0.0
    %5748 = vmatprep.subr.mxu0 0.0
    %5749 = vmatpush1.msra.mxu0 0.0
    %5750 = vmatprep.subr.mxu0 0.0
    %5751 = vmatpush1.msra.mxu0 0.0
    %5752 = vmatprep.subr.mxu0 0.0
    %5753 = vmatpush1.msra.mxu0 0.0
    %5754 = vmatprep.subr.mxu0 0.0
    %5755 = vmatpush1.msra.mxu0 0.0
    %5756 = vmatprep.subr.mxu0 0.0
    %5757 = vmatpush1.msra.mxu0 0.0
    %5758 = vmatprep.subr.mxu0 0.0
    %5759 = vmatpush1.msra.mxu0 0.0
    %5760 = vmatprep.subr.mxu0 0.0
    %5761 = vmatpush1.msra.mxu0 0.0
    %5762 = vmatprep.mubr.f32.mxu0 0.0
    %5763 = vmatmul.mubr.f32.gmra.mrb[0].mxu0 %v5696
    %v5764 = vpop.f32.mrb[0].mxu0
    %v5765 = vadd.f32 %v5689, %v5764
    %v5766 = vpop.f32.mrb[0].mxu0
    %v5767 = vadd.f32 %v5691, %v5766
    %5768 = vdwg.mxu0
    %v5769 = vadd.f32 %v5765, %v545
    %v5770 = vadd.f32 %v5767, %v549
    %v5771 = vtanh.pop %v5769
    %v5772 = vtanh.pop %v5770
    %v5773 = vmul.f32 %v5771, 0.5
    %v5774 = vadd.f32 %v5773, 0.5
    %v5775 = vmul.f32 %v5772, 0.5
    %v5776 = vadd.f32 %v5775, 0.5
    %v5777 = vmul.f32 %v5774, %v5082
    %v5778 = vmul.f32 %v5774, %v5772
    %5780 = vrot.lane.b32.xlu0 %v5778, 64
    %v5781 = vpop.permute.xlu0 %5780
    %v5783 = vadd.f32 %v5777, %v5781
    %v5784 = vtanh.pop %v5783
    %v5785 = vmul.f32 %v5776, %v5784
    %v5786 = vld [vmem:[#allocation14] sm:$0xff]
    %v5787 = vld [vmem:[#allocation14 + $0x8] sm:$0xff]
    %v5788 = vld [vmem:[#allocation14 + $0x10] sm:$0xff]
    %v5789 = vld [vmem:[#allocation14 + $0x18] sm:$0xff]
    %v5790 = vld [vmem:[#allocation14 + $0x20] sm:$0xff]
    %v5791 = vld [vmem:[#allocation14 + $0x28] sm:$0xff]
    %v5792 = vld [vmem:[#allocation14 + $0x30] sm:$0xff]
    %v5793 = vld [vmem:[#allocation14 + $0x38] sm:$0xff]
    %v5794 = vld [vmem:[#allocation14 + $0x40] sm:$0xff]
    %v5795 = vld [vmem:[#allocation14 + $0x48] sm:$0xff]
    %v5796 = vld [vmem:[#allocation14 + $0x50] sm:$0xff]
    %v5797 = vld [vmem:[#allocation14 + $0x58] sm:$0xff]
    %v5798 = vld [vmem:[#allocation14 + $0x60] sm:$0xff]
    %v5799 = vld [vmem:[#allocation14 + $0x68] sm:$0xff]
    %v5800 = vld [vmem:[#allocation14 + $0x70] sm:$0xff]
    %v5801 = vld [vmem:[#allocation14 + $0x78] sm:$0xff]
    %v5802 = vld [vmem:[#allocation15] sm:$0xff]
    %v5803 = vld [vmem:[#allocation15 + $0x8] sm:$0xff]
    %v5804 = vld [vmem:[#allocation15 + $0x10] sm:$0xff]
    %v5805 = vld [vmem:[#allocation15 + $0x18] sm:$0xff]
    %v5806 = vld [vmem:[#allocation15 + $0x20] sm:$0xff]
    %v5807 = vld [vmem:[#allocation15 + $0x28] sm:$0xff]
    %v5808 = vld [vmem:[#allocation15 + $0x30] sm:$0xff]
    %v5809 = vld [vmem:[#allocation15 + $0x38] sm:$0xff]
    %v5810 = vld [vmem:[#allocation15 + $0x40] sm:$0xff]
    %v5811 = vld [vmem:[#allocation15 + $0x48] sm:$0xff]
    %v5812 = vld [vmem:[#allocation15 + $0x50] sm:$0xff]
    %v5813 = vld [vmem:[#allocation15 + $0x58] sm:$0xff]
    %v5814 = vld [vmem:[#allocation15 + $0x60] sm:$0xff]
    %v5815 = vld [vmem:[#allocation15 + $0x68] sm:$0xff]
    %v5816 = vld [vmem:[#allocation15 + $0x70] sm:$0xff]
    %v5817 = vld [vmem:[#allocation15 + $0x78] sm:$0xff]
    %5818 = vmatprep.subr.mxu0 %v5803
    %5819 = vmatpush1.msra.mxu0 %v5802
    %5820 = vmatprep.subr.mxu0 %v5805
    %5821 = vmatpush1.msra.mxu0 %v5804
    %5822 = vmatprep.subr.mxu0 %v5807
    %5823 = vmatpush1.msra.mxu0 %v5806
    %5824 = vmatprep.subr.mxu0 %v5809
    %5825 = vmatpush1.msra.mxu0 %v5808
    %5826 = vmatprep.subr.mxu0 %v5811
    %5827 = vmatpush1.msra.mxu0 %v5810
    %5828 = vmatprep.subr.mxu0 %v5813
    %5829 = vmatpush1.msra.mxu0 %v5812
    %5830 = vmatprep.subr.mxu0 %v5815
    %5831 = vmatpush1.msra.mxu0 %v5814
    %5832 = vmatprep.subr.mxu0 %v5817
    %5833 = vmatpush1.msra.mxu0 %v5816
    %5834 = vmatprep.subr.mxu0 0.0
    %5835 = vmatpush1.msra.mxu0 0.0
    %5836 = vmatprep.subr.mxu0 0.0
    %5837 = vmatpush1.msra.mxu0 0.0
    %5838 = vmatprep.subr.mxu0 0.0
    %5839 = vmatpush1.msra.mxu0 0.0
    %5840 = vmatprep.subr.mxu0 0.0
    %5841 = vmatpush1.msra.mxu0 0.0
    %5842 = vmatprep.subr.mxu0 0.0
    %5843 = vmatpush1.msra.mxu0 0.0
    %5844 = vmatprep.subr.mxu0 0.0
    %5845 = vmatpush1.msra.mxu0 0.0
    %5846 = vmatprep.subr.mxu0 0.0
    %5847 = vmatpush1.msra.mxu0 0.0
    %5848 = vmatprep.subr.mxu0 0.0
    %5849 = vmatpush1.msra.mxu0 0.0
    %5850 = vmatprep.subr.mxu0 0.0
    %5851 = vmatpush1.msra.mxu0 0.0
    %5852 = vmatprep.subr.mxu0 0.0
    %5853 = vmatpush1.msra.mxu0 0.0
    %5854 = vmatprep.subr.mxu0 0.0
    %5855 = vmatpush1.msra.mxu0 0.0
    %5856 = vmatprep.subr.mxu0 0.0
    %5857 = vmatpush1.msra.mxu0 0.0
    %5858 = vmatprep.subr.mxu0 0.0
    %5859 = vmatpush1.msra.mxu0 0.0
    %5860 = vmatprep.subr.mxu0 0.0
    %5861 = vmatpush1.msra.mxu0 0.0
    %5862 = vmatprep.subr.mxu0 0.0
    %5863 = vmatpush1.msra.mxu0 0.0
    %5864 = vmatprep.subr.mxu0 0.0
    %5865 = vmatpush1.msra.mxu0 0.0
    %5866 = vmatprep.subr.mxu0 0.0
    %5867 = vmatpush1.msra.mxu0 0.0
    %5868 = vmatprep.subr.mxu0 0.0
    %5869 = vmatpush1.msra.mxu0 0.0
    %5870 = vmatprep.subr.mxu0 0.0
    %5871 = vmatpush1.msra.mxu0 0.0
    %5872 = vmatprep.subr.mxu0 0.0
    %5873 = vmatpush1.msra.mxu0 0.0
    %5874 = vmatprep.subr.mxu0 0.0
    %5875 = vmatpush1.msra.mxu0 0.0
    %5876 = vmatprep.subr.mxu0 0.0
    %5877 = vmatpush1.msra.mxu0 0.0
    %5878 = vmatprep.subr.mxu0 0.0
    %5879 = vmatpush1.msra.mxu0 0.0
    %5880 = vmatprep.subr.mxu0 0.0
    %5881 = vmatpush1.msra.mxu0 0.0
    %5882 = vmatprep.mubr.f32.mxu0 0.0
    %5883 = vmatmul.mubr.f32.gmra.mrb[0].mxu0 %v5389
    %v5884 = vpop.f32.mrb[0].mxu0
    %v5885 = vadd.f32 0.0, %v5884
    %v5886 = vpop.f32.mrb[0].mxu0
    %v5887 = vadd.f32 0.0, %v5886
    %5888 = vdwg.mxu0
    %5890 = vrot.lane.b32.xlu0 %v5785, 64
    %v5891 = vpop.permute.xlu0 %5890
    %v5892 = vsel %vm229, %v5891, 0
    %5894 = vmatprep.subr.mxu0 %v5787
    %5895 = vmatpush1.msra.mxu0 %v5786
    %5896 = vmatprep.subr.mxu0 %v5789
    %5897 = vmatpush1.msra.mxu0 %v5788
    %5898 = vmatprep.subr.mxu0 %v5791
    %5899 = vmatpush1.msra.mxu0 %v5790
    %5900 = vmatprep.subr.mxu0 %v5793
    %5901 = vmatpush1.msra.mxu0 %v5792
    %5902 = vmatprep.subr.mxu0 %v5795
    %5903 = vmatpush1.msra.mxu0 %v5794
    %5904 = vmatprep.subr.mxu0 %v5797
    %5905 = vmatpush1.msra.mxu0 %v5796
    %5906 = vmatprep.subr.mxu0 %v5799
    %5907 = vmatpush1.msra.mxu0 %v5798
    %5908 = vmatprep.subr.mxu0 %v5801
    %5909 = vmatpush1.msra.mxu0 %v5800
    %5910 = vmatprep.subr.mxu0 0.0
    %5911 = vmatpush1.msra.mxu0 0.0
    %5912 = vmatprep.subr.mxu0 0.0
    %5913 = vmatpush1.msra.mxu0 0.0
    %5914 = vmatprep.subr.mxu0 0.0
    %5915 = vmatpush1.msra.mxu0 0.0
    %5916 = vmatprep.subr.mxu0 0.0
    %5917 = vmatpush1.msra.mxu0 0.0
    %5918 = vmatprep.subr.mxu0 0.0
    %5919 = vmatpush1.msra.mxu0 0.0
    %5920 = vmatprep.subr.mxu0 0.0
    %5921 = vmatpush1.msra.mxu0 0.0
    %5922 = vmatprep.subr.mxu0 0.0
    %5923 = vmatpush1.msra.mxu0 0.0
    %5924 = vmatprep.subr.mxu0 0.0
    %5925 = vmatpush1.msra.mxu0 0.0
    %5926 = vmatprep.subr.mxu0 0.0
    %5927 = vmatpush1.msra.mxu0 0.0
    %5928 = vmatprep.subr.mxu0 0.0
    %5929 = vmatpush1.msra.mxu0 0.0
    %5930 = vmatprep.subr.mxu0 0.0
    %5931 = vmatpush1.msra.mxu0 0.0
    %5932 = vmatprep.subr.mxu0 0.0
    %5933 = vmatpush1.msra.mxu0 0.0
    %5934 = vmatprep.subr.mxu0 0.0
    %5935 = vmatpush1.msra.mxu0 0.0
    %5936 = vmatprep.subr.mxu0 0.0
    %5937 = vmatpush1.msra.mxu0 0.0
    %5938 = vmatprep.subr.mxu0 0.0
    %5939 = vmatpush1.msra.mxu0 0.0
    %5940 = vmatprep.subr.mxu0 0.0
    %5941 = vmatpush1.msra.mxu0 0.0
    %5942 = vmatprep.subr.mxu0 0.0
    %5943 = vmatpush1.msra.mxu0 0.0
    %5944 = vmatprep.subr.mxu0 0.0
    %5945 = vmatpush1.msra.mxu0 0.0
    %5946 = vmatprep.subr.mxu0 0.0
    %5947 = vmatpush1.msra.mxu0 0.0
    %5948 = vmatprep.subr.mxu0 0.0
    %5949 = vmatpush1.msra.mxu0 0.0
    %5950 = vmatprep.subr.mxu0 0.0
    %5951 = vmatpush1.msra.mxu0 0.0
    %5952 = vmatprep.subr.mxu0 0.0
    %5953 = vmatpush1.msra.mxu0 0.0
    %5954 = vmatprep.subr.mxu0 0.0
    %5955 = vmatpush1.msra.mxu0 0.0
    %5956 = vmatprep.subr.mxu0 0.0
    %5957 = vmatpush1.msra.mxu0 0.0
    %5958 = vmatprep.mubr.f32.mxu0 0.0
    %5959 = vmatmul.mubr.f32.gmra.mrb[0].mxu0 %v5892
    %v5960 = vpop.f32.mrb[0].mxu0
    %v5961 = vadd.f32 %v5885, %v5960
    %v5962 = vpop.f32.mrb[0].mxu0
    %v5963 = vadd.f32 %v5887, %v5962
    %5964 = vdwg.mxu0
    %v5965 = vadd.f32 %v5961, %v557
    %v5966 = vadd.f32 %v5963, %v561
    %v5967 = vtanh.pop %v5965
    %v5968 = vtanh.pop %v5966
    %v5969 = vmul.f32 %v5967, 0.5
    %v5970 = vadd.f32 %v5969, 0.5
    %v5971 = vmul.f32 %v5968, 0.5
    %v5972 = vadd.f32 %v5971, 0.5
    %v5973 = vmul.f32 %v5970, %v5278
    %v5974 = vmul.f32 %v5970, %v5968
    %5976 = vrot.lane.b32.xlu0 %v5974, 64
    %v5977 = vpop.permute.xlu0 %5976
    %v5979 = vadd.f32 %v5973, %v5977
    %v5980 = vtanh.pop %v5979
    %v5981 = vmul.f32 %v5972, %v5980
    %v5982 = vld [vmem:[#allocation17] sm:$0xff]
    %v5983 = vld [vmem:[#allocation17 + $0x8] sm:$0xff]
    %v5984 = vld [vmem:[#allocation17 + $0x10] sm:$0xff]
    %v5985 = vld [vmem:[#allocation17 + $0x18] sm:$0xff]
    %v5986 = vld [vmem:[#allocation17 + $0x20] sm:$0xff]
    %v5987 = vld [vmem:[#allocation17 + $0x28] sm:$0xff]
    %v5988 = vld [vmem:[#allocation17 + $0x30] sm:$0xff]
    %v5989 = vld [vmem:[#allocation17 + $0x38] sm:$0xff]
    %v5990 = vld [vmem:[#allocation17 + $0x40] sm:$0xff]
    %v5991 = vld [vmem:[#allocation17 + $0x48] sm:$0xff]
    %v5992 = vld [vmem:[#allocation17 + $0x50] sm:$0xff]
    %v5993 = vld [vmem:[#allocation17 + $0x58] sm:$0xff]
    %v5994 = vld [vmem:[#allocation17 + $0x60] sm:$0xff]
    %v5995 = vld [vmem:[#allocation17 + $0x68] sm:$0xff]
    %v5996 = vld [vmem:[#allocation17 + $0x70] sm:$0xff]
    %v5997 = vld [vmem:[#allocation17 + $0x78] sm:$0xff]
    %v5998 = vld [vmem:[#allocation18] sm:$0xff]
    %v5999 = vld [vmem:[#allocation18 + $0x8] sm:$0xff]
    %v6000 = vld [vmem:[#allocation18 + $0x10] sm:$0xff]
    %v6001 = vld [vmem:[#allocation18 + $0x18] sm:$0xff]
    %v6002 = vld [vmem:[#allocation18 + $0x20] sm:$0xff]
    %v6003 = vld [vmem:[#allocation18 + $0x28] sm:$0xff]
    %v6004 = vld [vmem:[#allocation18 + $0x30] sm:$0xff]
    %v6005 = vld [vmem:[#allocation18 + $0x38] sm:$0xff]
    %v6006 = vld [vmem:[#allocation18 + $0x40] sm:$0xff]
    %v6007 = vld [vmem:[#allocation18 + $0x48] sm:$0xff]
    %v6008 = vld [vmem:[#allocation18 + $0x50] sm:$0xff]
    %v6009 = vld [vmem:[#allocation18 + $0x58] sm:$0xff]
    %v6010 = vld [vmem:[#allocation18 + $0x60] sm:$0xff]
    %v6011 = vld [vmem:[#allocation18 + $0x68] sm:$0xff]
    %v6012 = vld [vmem:[#allocation18 + $0x70] sm:$0xff]
    %v6013 = vld [vmem:[#allocation18 + $0x78] sm:$0xff]
    %v6014 = vsel %vm229, %v5481, 0
    %6016 = vmatprep.subr.mxu0 %v5999
    %6017 = vmatpush1.msra.mxu0 %v5998
    %6018 = vmatprep.subr.mxu0 %v6001
    %6019 = vmatpush1.msra.mxu0 %v6000
    %6020 = vmatprep.subr.mxu0 %v6003
    %6021 = vmatpush1.msra.mxu0 %v6002
    %6022 = vmatprep.subr.mxu0 %v6005
    %6023 = vmatpush1.msra.mxu0 %v6004
    %6024 = vmatprep.subr.mxu0 %v6007
    %6025 = vmatpush1.msra.mxu0 %v6006
    %6026 = vmatprep.subr.mxu0 %v6009
    %6027 = vmatpush1.msra.mxu0 %v6008
    %6028 = vmatprep.subr.mxu0 %v6011
    %6029 = vmatpush1.msra.mxu0 %v6010
    %6030 = vmatprep.subr.mxu0 %v6013
    %6031 = vmatpush1.msra.mxu0 %v6012
    %6032 = vmatprep.subr.mxu0 0.0
    %6033 = vmatpush1.msra.mxu0 0.0
    %6034 = vmatprep.subr.mxu0 0.0
    %6035 = vmatpush1.msra.mxu0 0.0
    %6036 = vmatprep.subr.mxu0 0.0
    %6037 = vmatpush1.msra.mxu0 0.0
    %6038 = vmatprep.subr.mxu0 0.0
    %6039 = vmatpush1.msra.mxu0 0.0
    %6040 = vmatprep.subr.mxu0 0.0
    %6041 = vmatpush1.msra.mxu0 0.0
    %6042 = vmatprep.subr.mxu0 0.0
    %6043 = vmatpush1.msra.mxu0 0.0
    %6044 = vmatprep.subr.mxu0 0.0
    %6045 = vmatpush1.msra.mxu0 0.0
    %6046 = vmatprep.subr.mxu0 0.0
    %6047 = vmatpush1.msra.mxu0 0.0
    %6048 = vmatprep.subr.mxu0 0.0
    %6049 = vmatpush1.msra.mxu0 0.0
    %6050 = vmatprep.subr.mxu0 0.0
    %6051 = vmatpush1.msra.mxu0 0.0
    %6052 = vmatprep.subr.mxu0 0.0
    %6053 = vmatpush1.msra.mxu0 0.0
    %6054 = vmatprep.subr.mxu0 0.0
    %6055 = vmatpush1.msra.mxu0 0.0
    %6056 = vmatprep.subr.mxu0 0.0
    %6057 = vmatpush1.msra.mxu0 0.0
    %6058 = vmatprep.subr.mxu0 0.0
    %6059 = vmatpush1.msra.mxu0 0.0
    %6060 = vmatprep.subr.mxu0 0.0
    %6061 = vmatpush1.msra.mxu0 0.0
    %6062 = vmatprep.subr.mxu0 0.0
    %6063 = vmatpush1.msra.mxu0 0.0
    %6064 = vmatprep.subr.mxu0 0.0
    %6065 = vmatpush1.msra.mxu0 0.0
    %6066 = vmatprep.subr.mxu0 0.0
    %6067 = vmatpush1.msra.mxu0 0.0
    %6068 = vmatprep.subr.mxu0 0.0
    %6069 = vmatpush1.msra.mxu0 0.0
    %6070 = vmatprep.subr.mxu0 0.0
    %6071 = vmatpush1.msra.mxu0 0.0
    %6072 = vmatprep.subr.mxu0 0.0
    %6073 = vmatpush1.msra.mxu0 0.0
    %6074 = vmatprep.subr.mxu0 0.0
    %6075 = vmatpush1.msra.mxu0 0.0
    %6076 = vmatprep.subr.mxu0 0.0
    %6077 = vmatpush1.msra.mxu0 0.0
    %6078 = vmatprep.subr.mxu0 0.0
    %6079 = vmatpush1.msra.mxu0 0.0
    %6080 = vmatprep.mubr.f32.mxu0 0.0
    %6081 = vmatmul.mubr.f32.gmra.mrb[0].mxu0 %v6014
    %v6082 = vpop.f32.mrb[0].mxu0
    %v6083 = vadd.f32 0.0, %v6082
    %v6084 = vpop.f32.mrb[0].mxu0
    %v6085 = vadd.f32 0.0, %v6084
    %6086 = vdwg.mxu0
    %6088 = vrot.lane.b32.xlu0 %v5981, 64
    %v6089 = vpop.permute.xlu0 %6088
    %v6090 = vsel %vm229, %v6089, 0
    %6092 = vmatprep.subr.mxu0 %v5983
    %6093 = vmatpush1.msra.mxu0 %v5982
    %6094 = vmatprep.subr.mxu0 %v5985
    %6095 = vmatpush1.msra.mxu0 %v5984
    %6096 = vmatprep.subr.mxu0 %v5987
    %6097 = vmatpush1.msra.mxu0 %v5986
    %6098 = vmatprep.subr.mxu0 %v5989
    %6099 = vmatpush1.msra.mxu0 %v5988
    %6100 = vmatprep.subr.mxu0 %v5991
    %6101 = vmatpush1.msra.mxu0 %v5990
    %6102 = vmatprep.subr.mxu0 %v5993
    %6103 = vmatpush1.msra.mxu0 %v5992
    %6104 = vmatprep.subr.mxu0 %v5995
    %6105 = vmatpush1.msra.mxu0 %v5994
    %6106 = vmatprep.subr.mxu0 %v5997
    %6107 = vmatpush1.msra.mxu0 %v5996
    %6108 = vmatprep.subr.mxu0 0.0
    %6109 = vmatpush1.msra.mxu0 0.0
    %6110 = vmatprep.subr.mxu0 0.0
    %6111 = vmatpush1.msra.mxu0 0.0
    %6112 = vmatprep.subr.mxu0 0.0
    %6113 = vmatpush1.msra.mxu0 0.0
    %6114 = vmatprep.subr.mxu0 0.0
    %6115 = vmatpush1.msra.mxu0 0.0
    %6116 = vmatprep.subr.mxu0 0.0
    %6117 = vmatpush1.msra.mxu0 0.0
    %6118 = vmatprep.subr.mxu0 0.0
    %6119 = vmatpush1.msra.mxu0 0.0
    %6120 = vmatprep.subr.mxu0 0.0
    %6121 = vmatpush1.msra.mxu0 0.0
    %6122 = vmatprep.subr.mxu0 0.0
    %6123 = vmatpush1.msra.mxu0 0.0
    %6124 = vmatprep.subr.mxu0 0.0
    %6125 = vmatpush1.msra.mxu0 0.0
    %6126 = vmatprep.subr.mxu0 0.0
    %6127 = vmatpush1.msra.mxu0 0.0
    %6128 = vmatprep.subr.mxu0 0.0
    %6129 = vmatpush1.msra.mxu0 0.0
    %6130 = vmatprep.subr.mxu0 0.0
    %6131 = vmatpush1.msra.mxu0 0.0
    %6132 = vmatprep.subr.mxu0 0.0
    %6133 = vmatpush1.msra.mxu0 0.0
    %6134 = vmatprep.subr.mxu0 0.0
    %6135 = vmatpush1.msra.mxu0 0.0
    %6136 = vmatprep.subr.mxu0 0.0
    %6137 = vmatpush1.msra.mxu0 0.0
    %6138 = vmatprep.subr.mxu0 0.0
    %6139 = vmatpush1.msra.mxu0 0.0
    %6140 = vmatprep.subr.mxu0 0.0
    %6141 = vmatpush1.msra.mxu0 0.0
    %6142 = vmatprep.subr.mxu0 0.0
    %6143 = vmatpush1.msra.mxu0 0.0
    %6144 = vmatprep.subr.mxu0 0.0
    %6145 = vmatpush1.msra.mxu0 0.0
    %6146 = vmatprep.subr.mxu0 0.0
    %6147 = vmatpush1.msra.mxu0 0.0
    %6148 = vmatprep.subr.mxu0 0.0
    %6149 = vmatpush1.msra.mxu0 0.0
    %6150 = vmatprep.subr.mxu0 0.0
    %6151 = vmatpush1.msra.mxu0 0.0
    %6152 = vmatprep.subr.mxu0 0.0
    %6153 = vmatpush1.msra.mxu0 0.0
    %6154 = vmatprep.subr.mxu0 0.0
    %6155 = vmatpush1.msra.mxu0 0.0
    %6156 = vmatprep.mubr.f32.mxu0 0.0
    %6157 = vmatmul.mubr.f32.gmra.mrb[0].mxu0 %v6090
    %v6158 = vpop.f32.mrb[0].mxu0
    %v6159 = vadd.f32 %v6083, %v6158
    %v6160 = vpop.f32.mrb[0].mxu0
    %v6161 = vadd.f32 %v6085, %v6160
    %6162 = vdwg.mxu0
    %v6163 = vadd.f32 %v6159, %v569
    %v6164 = vadd.f32 %v6161, %v573
    %v6165 = vtanh.pop %v6163
    %v6166 = vtanh.pop %v6164
    %v6167 = vmul.f32 %v6165, 0.5
    %v6168 = vadd.f32 %v6167, 0.5
    %v6169 = vmul.f32 %v6166, 0.5
    %v6170 = vadd.f32 %v6169, 0.5
    %v6171 = vmul.f32 %v6168, %v5476
    %v6172 = vmul.f32 %v6168, %v6166
    %6174 = vrot.lane.b32.xlu0 %v6172, 64
    %v6175 = vpop.permute.xlu0 %6174
    %v6177 = vadd.f32 %v6171, %v6175
    %v6178 = vtanh.pop %v6177
    %v6179 = vmul.f32 %v6170, %v6178
    %6181 = vrot.lane.b32.xlu0 %v6179, 64
    %v6182 = vpop.permute.xlu0 %6181
    %6184 = vst.msk [vmem:[#allocation21 + $0x38] sm:$0xff] %vm229, %v6182
    %v6185 = vld [vmem:[#allocation21] sm:$0xff]
    %v6186 = vld [vmem:[#allocation21 + $0x8] sm:$0xff]
    %v6187 = vld [vmem:[#allocation21 + $0x10] sm:$0xff]
    %v6188 = vld [vmem:[#allocation21 + $0x18] sm:$0xff]
    %v6189 = vld [vmem:[#allocation21 + $0x20] sm:$0xff]
    %v6190 = vld [vmem:[#allocation21 + $0x28] sm:$0xff]
    %v6191 = vld [vmem:[#allocation21 + $0x30] sm:$0xff]
    %v6192 = vld [vmem:[#allocation21 + $0x38] sm:$0xff]
    %v6193 = vld [vmem:[#allocation20] sm:$0xff]
    %v6194 = vld [vmem:[#allocation20 + $0x8] sm:$0xff]
    %v6195 = vld [vmem:[#allocation20 + $0x10] sm:$0xff]
    %v6196 = vld [vmem:[#allocation20 + $0x18] sm:$0xff]
    %v6197 = vld [vmem:[#allocation20 + $0x20] sm:$0xff]
    %v6198 = vld [vmem:[#allocation20 + $0x28] sm:$0xff]
    %v6199 = vld [vmem:[#allocation20 + $0x30] sm:$0xff]
    %v6200 = vld [vmem:[#allocation20 + $0x38] sm:$0xff]
    %v6201 = vld [vmem:[%s16] sm:$0x1]
    %v6203 = vlaneseq
    %v6204 = vshrl.u32 %v6203, 7
    %v6205 = vsub.s32 0, %v6204
    %v6206 = vrot.slane %v6201, %v6205
    %v6209 = vsel %vm229, %v6185, 0
    %v6212 = vsel %vm229, %v6186, 0
    %v6215 = vsel %vm229, %v6187, 0
    %v6218 = vsel %vm229, %v6188, 0
    %v6221 = vsel %vm229, %v6189, 0
    %v6224 = vsel %vm229, %v6190, 0
    %v6227 = vsel %vm229, %v6191, 0
    %v6230 = vsel %vm229, %v6192, 0
    %6232 = vmatprep.subr.mxu0 0.0
    %6233 = vmatpush1.msra.mxu0 %v6193
    %6234 = vmatprep.subr.mxu0 0.0
    %6235 = vmatpush1.msra.mxu0 %v6194
    %6236 = vmatprep.subr.mxu0 0.0
    %6237 = vmatpush1.msra.mxu0 %v6195
    %6238 = vmatprep.subr.mxu0 0.0
    %6239 = vmatpush1.msra.mxu0 %v6196
    %6240 = vmatprep.subr.mxu0 0.0
    %6241 = vmatpush1.msra.mxu0 %v6197
    %6242 = vmatprep.subr.mxu0 0.0
    %6243 = vmatpush1.msra.mxu0 %v6198
    %6244 = vmatprep.subr.mxu0 0.0
    %6245 = vmatpush1.msra.mxu0 %v6199
    %6246 = vmatprep.subr.mxu0 0.0
    %6247 = vmatpush1.msra.mxu0 %v6200
    %6248 = vmatprep.subr.mxu0 0.0
    %6249 = vmatpush1.msra.mxu0 0.0
    %6250 = vmatprep.subr.mxu0 0.0
    %6251 = vmatpush1.msra.mxu0 0.0
    %6252 = vmatprep.subr.mxu0 0.0
    %6253 = vmatpush1.msra.mxu0 0.0
    %6254 = vmatprep.subr.mxu0 0.0
    %6255 = vmatpush1.msra.mxu0 0.0
    %6256 = vmatprep.subr.mxu0 0.0
    %6257 = vmatpush1.msra.mxu0 0.0
    %6258 = vmatprep.subr.mxu0 0.0
    %6259 = vmatpush1.msra.mxu0 0.0
    %6260 = vmatprep.subr.mxu0 0.0
    %6261 = vmatpush1.msra.mxu0 0.0
    %6262 = vmatprep.subr.mxu0 0.0
    %6263 = vmatpush1.msra.mxu0 0.0
    %6264 = vmatprep.subr.mxu0 0.0
    %6265 = vmatpush1.msra.mxu0 0.0
    %6266 = vmatprep.subr.mxu0 0.0
    %6267 = vmatpush1.msra.mxu0 0.0
    %6268 = vmatprep.subr.mxu0 0.0
    %6269 = vmatpush1.msra.mxu0 0.0
    %6270 = vmatprep.subr.mxu0 0.0
    %6271 = vmatpush1.msra.mxu0 0.0
    %6272 = vmatprep.subr.mxu0 0.0
    %6273 = vmatpush1.msra.mxu0 0.0
    %6274 = vmatprep.subr.mxu0 0.0
    %6275 = vmatpush1.msra.mxu0 0.0
    %6276 = vmatprep.subr.mxu0 0.0
    %6277 = vmatpush1.msra.mxu0 0.0
    %6278 = vmatprep.subr.mxu0 0.0
    %6279 = vmatpush1.msra.mxu0 0.0
    %6280 = vmatprep.subr.mxu0 0.0
    %6281 = vmatpush1.msra.mxu0 0.0
    %6282 = vmatprep.subr.mxu0 0.0
    %6283 = vmatpush1.msra.mxu0 0.0
    %6284 = vmatprep.subr.mxu0 0.0
    %6285 = vmatpush1.msra.mxu0 0.0
    %6286 = vmatprep.subr.mxu0 0.0
    %6287 = vmatpush1.msra.mxu0 0.0
    %6288 = vmatprep.subr.mxu0 0.0
    %6289 = vmatpush1.msra.mxu0 0.0
    %6290 = vmatprep.subr.mxu0 0.0
    %6291 = vmatpush1.msra.mxu0 0.0
    %6292 = vmatprep.subr.mxu0 0.0
    %6293 = vmatpush1.msra.mxu0 0.0
    %6294 = vmatprep.subr.mxu0 0.0
    %6295 = vmatpush1.msra.mxu0 0.0
    %6296 = vmatprep.mubr.f32.mxu0 0.0
    %6297 = vmatmul.mubr.f32.gmra.mrb[0].mxu0 %v6209
    %v6298 = vpop.f32.mrb[0].mxu0
    %v6299 = vadd.f32 %v6206, %v6298
    %v6300 = vpop.f32.mrb[0].mxu0
    %6301 = vmatprep.mubr.f32.mxu0 0.0
    %6302 = vmatmul.mubr.f32.gmra.mrb[0].mxu0 %v6212
    %v6303 = vpop.f32.mrb[0].mxu0
    %v6304 = vadd.f32 %v6206, %v6303
    %v6305 = vpop.f32.mrb[0].mxu0
    %6306 = vmatprep.mubr.f32.mxu0 0.0
    %6307 = vmatmul.mubr.f32.gmra.mrb[0].mxu0 %v6215
    %v6308 = vpop.f32.mrb[0].mxu0
    %v6309 = vadd.f32 %v6206, %v6308
    %v6310 = vpop.f32.mrb[0].mxu0
    %6311 = vmatprep.mubr.f32.mxu0 0.0
    %6312 = vmatmul.mubr.f32.gmra.mrb[0].mxu0 %v6218
    %v6313 = vpop.f32.mrb[0].mxu0
    %v6314 = vadd.f32 %v6206, %v6313
    %v6315 = vpop.f32.mrb[0].mxu0
    %6316 = vmatprep.mubr.f32.mxu0 0.0
    %6317 = vmatmul.mubr.f32.gmra.mrb[0].mxu0 %v6221
    %v6318 = vpop.f32.mrb[0].mxu0
    %v6319 = vadd.f32 %v6206, %v6318
    %v6320 = vpop.f32.mrb[0].mxu0
    %6321 = vmatprep.mubr.f32.mxu0 0.0
    %6322 = vmatmul.mubr.f32.gmra.mrb[0].mxu0 %v6224
    %v6323 = vpop.f32.mrb[0].mxu0
    %v6324 = vadd.f32 %v6206, %v6323
    %v6325 = vpop.f32.mrb[0].mxu0
    %6326 = vmatprep.mubr.f32.mxu0 0.0
    %6327 = vmatmul.mubr.f32.gmra.mrb[0].mxu0 %v6227
    %v6328 = vpop.f32.mrb[0].mxu0
    %v6329 = vadd.f32 %v6206, %v6328
    %v6330 = vpop.f32.mrb[0].mxu0
    %6331 = vmatprep.mubr.f32.mxu0 0.0
    %6332 = vmatmul.mubr.f32.gmra.mrb[0].mxu0 %v6230
    %v6333 = vpop.f32.mrb[0].mxu0
    %v6334 = vadd.f32 %v6206, %v6333
    %v6335 = vpop.f32.mrb[0].mxu0
    %6336 = vdwg.mxu0
    %6337 = vst.msk [vmem:[#allocation21] sm:$0xff] %vm229, %v6299
    %6338 = vst.msk [vmem:[#allocation21 + $0x8] sm:$0xff] %vm229, %v6304
    %6339 = vst.msk [vmem:[#allocation21 + $0x10] sm:$0xff] %vm229, %v6309
    %6340 = vst.msk [vmem:[#allocation21 + $0x18] sm:$0xff] %vm229, %v6314
    %6341 = vst.msk [vmem:[#allocation21 + $0x20] sm:$0xff] %vm229, %v6319
    %6342 = vst.msk [vmem:[#allocation21 + $0x28] sm:$0xff] %vm229, %v6324
    %6343 = vst.msk [vmem:[#allocation21 + $0x30] sm:$0xff] %vm229, %v6329
    %6344 = vst.msk [vmem:[#allocation21 + $0x38] sm:$0xff] %vm229, %v6334
    // Predicated region
    $region114: #{tpu_custom_call.1} parent=1 // pred_check
      _
    $region115: #{tpu_custom_call.1} parent=1 // pred_check_branch
      %6346 = sbr.rel (0) target = $region117
    $region116: #{tpu_custom_call.1} parent=1 // pred_region
      %s6348 = ssub.s32 1024, 1024
      %6349 = vsyncadd [#allocation5], %s6348
      %s6350 = sshll.u32 [#allocation21], 4
      %s6351 = int_to_ptr.vmem [resolvable:$true] %s6350
      %6356 = dma.vmem_to_hbm [thread:$0]  %s6351, 1024, %s17, [#allocation5], 128, 128, 8
    $region117: #{tpu_custom_call.1} parent=1 // pred_fallthru
      _
    // Predicated region
    $region118: #{tpu_custom_call.1} parent=1 // pred_check
      _
    $region119: #{tpu_custom_call.1} parent=1 // pred_check_branch
      %6358 = sbr.rel (0) target = $region121
    $region120: #{tpu_custom_call.1} parent=1 // pred_region
      %6359 = dma.done [#allocation5], 1024
    $region121: #{tpu_custom_call.1} parent=1 // pred_fallthru
      _
    %6360 = vsyncpa [#allocation4], 1
    %6361 = vsyncpa [#allocation7], 1
    %6362 = vsyncpa [#allocation10], 1
    %6363 = vsyncpa [#allocation13], 1
    %6364 = vsyncpa [#allocation16], 1
    %6365 = vsyncpa [#allocation19], 1
    %6366 = vsyncpa [#allocation5], 1

</llo_original>
